<compile_context>
chip_gen: v5e
topology: v5e:2x2
jax: 0.10.0
libtpu: 0.0.40
codegen_flags: <defaults>
</compile_context>

<pallas_src>
import jax
import jax.numpy as jnp
from jax.experimental import pallas as pl
from jax.experimental.pallas import tpu as pltpu


# ----------------------------------------------------------------------------
# Fused decoder kernel (one grid step == one (n, d) slice of the batch).
# ----------------------------------------------------------------------------
def _make_decoder_kernel(n_pre, n_mid, out_cols, col_chunk):
    """Ref order:
       x_im2col, w_conv, a1t, a2t,
       [shift_i, weight_i] * (n_pre + n_mid),
       shift_last, w_tail, b_tail, out
    """

    def kernel(*refs):
        x_ref, wconv_ref, a1t_ref, a2t_ref = refs[:4]
        idx = 4
        pre = refs[idx:idx + 2 * n_pre]
        idx += 2 * n_pre
        mid = refs[idx:idx + 2 * n_mid]
        idx += 2 * n_mid
        c_last_ref, wtail_ref, btail_ref = refs[idx:idx + 3]
        o_ref = refs[idx + 3]

        # 3x3x3 ConvTranspose3d (stride 1, pad 1, no bias) == one matmul over
        # the im2col'd input.  BN1's scale is pre-folded into wconv.
        h = jnp.dot(wconv_ref[...], x_ref[0],
                    preferred_element_type=jnp.float32)             # (C0, H*W)

        # _ReduceBlock 1 + _UpTransition 1 conv:  h <- W_l^T @ relu(h + c_l)
        for l in range(n_pre):
            c_ref, w_ref = pre[2 * l], pre[2 * l + 1]
            h = jnp.dot(w_ref[...], jnp.maximum(h + c_ref[...], 0.0),
                        preferred_element_type=jnp.float32)

        # trilinear Upsample(scale=(1, p1, p1), align_corners=True) as a
        # matmul on the lane (space) axis:  (C, H*W) @ (H*W, H1*W1)
        h = jnp.dot(h, a1t_ref[...], preferred_element_type=jnp.float32)

        # _ReduceBlock 2
        for l in range(n_mid):
            c_ref, w_ref = mid[2 * l], mid[2 * l + 1]
            h = jnp.dot(w_ref[...], jnp.maximum(h + c_ref[...], 0.0),
                        preferred_element_type=jnp.float32)

        # _UpTransition 2 + conv_transpose1/2 (+ biases) + sigmoid, fused:
        #   out = sigmoid( Up2(relu(h + c8)) @ (W_t2 @ W1h @ W2h) + b_tail )
        # The channel reduction is done after the upsample matmul with a
        # sublane reduce so every intermediate / the output stays lane-dense.
        a = jnp.maximum(h + c_last_ref[...], 0.0)                   # (C8, H1*W1)
        wtail = wtail_ref[...]                                      # (C8, 1)
        btail = btail_ref[...]                                      # (1, 1)
        for j in range(out_cols // col_chunk):
            cols = a2t_ref[:, j * col_chunk:(j + 1) * col_chunk]
            blk = jnp.dot(a, cols, preferred_element_type=jnp.float32)
            row = jnp.sum(blk * wtail, axis=0, keepdims=True) + btail
            o_ref[0, :, j * col_chunk:(j + 1) * col_chunk] = jax.nn.sigmoid(row)

    return kernel


# ----------------------------------------------------------------------------
# Wrapper-side helpers (layout plumbing / weight folding, plain JAX).
# ----------------------------------------------------------------------------
def _interp_matrix(n_in, n_out):
    """Linear interpolation matrix (align_corners=True), shape (n_out, n_in)."""
    if n_in == 1:
        return jnp.ones((n_out, 1), jnp.float32)
    src = jnp.arange(n_out, dtype=jnp.float32) * (n_in - 1) / (n_out - 1)
    lo = jnp.clip(jnp.floor(src).astype(jnp.int32), 0, n_in - 2)
    frac = src - lo.astype(jnp.float32)
    return (jax.nn.one_hot(lo, n_in, dtype=jnp.float32) * (1.0 - frac)[:, None]
            + jax.nn.one_hot(lo + 1, n_in, dtype=jnp.float32) * frac[:, None])


def _bn_scale_shift(gamma, beta, mean, var, eps=1e-5):
    s = gamma / jnp.sqrt(var + eps)
    return s, beta - mean * s


def decoder_forward(x, params, pool_size=(3, 2)):
    """x: (N, D, C, H, W)  ->  (N, D, 1, H*p1*p2, W*p1*p2) (PyTorch layout)."""
    # TODO(synk): BatchNorm3d is implemented in inference mode (running
    # stats); training-mode batch statistics are not reproduced.
    N, D, C, H, W = x.shape
    p1, p2 = pool_size
    H1, W1 = H * p1, W * p1
    H2, W2 = H1 * p2, W1 * p2
    x = x.astype(jnp.float32)

    # ---- im2col of the (stride-1, pad-1) 3x3x3 transposed conv -------------
    xp = jnp.pad(x, ((0, 0), (1, 1), (0, 0), (1, 1), (1, 1)))
    taps = [xp[:, kz:kz + D, :, ky:ky + H, kx:kx + W]
            for kz in range(3) for ky in range(3) for kx in range(3)]
    col = jnp.stack(taps, axis=2).reshape(N * D, 27 * C, H * W)

    # ---- fold BatchNorm affines / head convs into the weights --------------
    layers = (list(params['blocks'][0]) + [params['transitions'][0]]
              + list(params['blocks'][1]) + [params['transitions'][1]])
    ss, cs = zip(*[_bn_scale_shift(g, b, m, v) for (g, b, m, v, _) in layers])
    ws = [w for (_, _, _, _, w) in layers]

    # equivalent cross-correlation weights of the transposed conv, flattened,
    # with BN1's scale folded into the output channels.
    wflip = jnp.transpose(jnp.flip(params['conv0_w'], axis=(2, 3, 4)),
                          (2, 3, 4, 0, 1))                  # (3,3,3,Cin,Cout)
    wconv_t = ss[0][:, None] * wflip.reshape(27 * C, C).T   # (C, 27*C)

    n_pre = len(params['blocks'][0]) + 1          # block1 layers + transition1
    n_mid = len(params['blocks'][1])              # block2 layers
    lay_inputs = []
    for i in range(n_pre + n_mid):
        lay_inputs.append(cs[i].reshape(-1, 1))               # BN shift
        lay_inputs.append(ss[i + 1][:, None] * ws[i].T)       # W^T * next scale
    c_last = cs[-1].reshape(-1, 1)
    # trans2 conv + conv_transpose1 + conv_transpose2 (with biases) folded:
    wtail = ws[-1] @ params['head_w1'] @ params['head_w2']    # (C8, 1)
    btail = (params['head_b1'] @ params['head_w2']
             + params['head_b2']).reshape(1, 1)

    # ---- trilinear (align_corners=True) upsample matrices ------------------
    a1t = jnp.kron(_interp_matrix(H, H1), _interp_matrix(W, W1)).T    # (HW, H1W1)
    a2t = jnp.kron(_interp_matrix(H1, H2), _interp_matrix(W1, W2)).T  # (H1W1, H2W2)

    inputs = [col, wconv_t, a1t, a2t] + lay_inputs + [c_last, wtail, btail]

    out_cols = H2 * W2
    col_chunk = 256 if out_cols % 256 == 0 else out_cols
    kernel = _make_decoder_kernel(n_pre, n_mid, out_cols, col_chunk)

    def _const_spec(a):
        return pl.BlockSpec(a.shape, lambda i, _r=a.ndim: (0,) * _r)

    in_specs = [pl.BlockSpec((1, 27 * C, H * W), lambda i: (i, 0, 0))]
    in_specs += [_const_spec(a) for a in inputs[1:]]

    out = pl.pallas_call(
        kernel,
        out_shape=jax.ShapeDtypeStruct((N * D, 1, out_cols), jnp.float32),
        grid_spec=pltpu.PrefetchScalarGridSpec(
            num_scalar_prefetch=0,
            grid=(N * D,),
            in_specs=in_specs,
            out_specs=pl.BlockSpec((1, 1, out_cols), lambda i: (i, 0, 0)),
        ),
        compiler_params=pltpu.CompilerParams(
            dimension_semantics=("parallel",),
            vmem_limit_bytes=32 * 1024 * 1024),
    )(*inputs)

    # back to PyTorch output layout (N, D, C_out=1, H', W')
    return out.reshape(N, D, H2, W2)[:, :, None, :, :]


# ----------------------------------------------------------------------------
# Deterministic parameter construction (matches the PyTorch module structure).
# ----------------------------------------------------------------------------
def _bn_init(key, c):
    k1, k2, k3, k4 = jax.random.split(key, 4)
    gamma = 1.0 + 0.1 * jax.random.normal(k1, (c,), jnp.float32)
    beta = 0.1 * jax.random.normal(k2, (c,), jnp.float32)
    mean = 0.1 * jax.random.normal(k3, (c,), jnp.float32)
    var = 1.0 + 0.1 * jax.random.uniform(k4, (c,), jnp.float32)
    return gamma, beta, mean, var


def build_params(key, init_feature=48, reduce_rate=3, theta=0.5,
                 reduce_config=(2, 4)):
    keys = iter(jax.random.split(key, 64))
    params = {}
    F = init_feature
    params['conv0_w'] = 0.05 * jax.random.normal(
        next(keys), (F, F, 3, 3, 3), jnp.float32)       # PyTorch (Cin,Cout,3,3,3)
    num = F
    blocks, transitions = [], []
    for bi, num_layers in enumerate(reduce_config):
        layers = []
        for li in range(num_layers):
            cin = num - reduce_rate * li
            cout = cin - reduce_rate
            g, b, m, v = _bn_init(next(keys), cin)
            w = 0.1 * jax.random.normal(next(keys), (cin, cout), jnp.float32)
            layers.append((g, b, m, v, w))
        blocks.append(layers)
        num = num - reduce_rate * num_layers
        if bi < 2:
            cout = int(num * theta)
            g, b, m, v = _bn_init(next(keys), num)
            w = 0.1 * jax.random.normal(next(keys), (num, cout), jnp.float32)
            transitions.append((g, b, m, v, w))
            num = cout
    params['blocks'] = blocks
    params['transitions'] = transitions
    # conv_transpose1 / conv_transpose2 default to bias=True in PyTorch.
    params['head_w1'] = 0.1 * jax.random.normal(next(keys), (num, 16), jnp.float32)
    params['head_b1'] = 0.05 * jax.random.normal(next(keys), (16,), jnp.float32)
    params['head_w2'] = 0.1 * jax.random.normal(next(keys), (16, 1), jnp.float32)
    params['head_b2'] = 0.05 * jax.random.normal(next(keys), (1,), jnp.float32)
    return params


if __name__ == "__main__":
    key = jax.random.PRNGKey(0)
    k_in, k_par = jax.random.split(key)
    N, D, C, H, W = 2, 4, 48, 8, 8          # init_feature = 48
    x = jax.random.normal(k_in, (N, D, C, H, W), jnp.float32)
    params = build_params(k_par, init_feature=C)
    fwd = jax.jit(decoder_forward)
    out = jax.block_until_ready(fwd(x, params))
    assert out.shape == (N, D, 1, H * 6, W * 6), out.shape
    assert bool(jnp.all(jnp.isfinite(out)))
    assert bool(jnp.all((out >= 0.0) & (out <= 1.0)))
    print("KERNEL_OK")
</pallas_src>

<mosaic_0001>
module attributes {stable_mosaic.version = 11 : i64} {
  func.func @kernel(%arg0: i32, %arg1: memref<1x1296x64xf32, #tpu.memory_space<vmem>>, %arg2: memref<48x1296xf32, #tpu.memory_space<vmem>>, %arg3: memref<64x576xf32, #tpu.memory_space<vmem>>, %arg4: memref<576x2304xf32, #tpu.memory_space<vmem>>, %arg5: memref<48x1xf32, #tpu.memory_space<vmem>>, %arg6: memref<45x48xf32, #tpu.memory_space<vmem>>, %arg7: memref<45x1xf32, #tpu.memory_space<vmem>>, %arg8: memref<42x45xf32, #tpu.memory_space<vmem>>, %arg9: memref<42x1xf32, #tpu.memory_space<vmem>>, %arg10: memref<21x42xf32, #tpu.memory_space<vmem>>, %arg11: memref<21x1xf32, #tpu.memory_space<vmem>>, %arg12: memref<18x21xf32, #tpu.memory_space<vmem>>, %arg13: memref<18x1xf32, #tpu.memory_space<vmem>>, %arg14: memref<15x18xf32, #tpu.memory_space<vmem>>, %arg15: memref<15x1xf32, #tpu.memory_space<vmem>>, %arg16: memref<12x15xf32, #tpu.memory_space<vmem>>, %arg17: memref<12x1xf32, #tpu.memory_space<vmem>>, %arg18: memref<9x12xf32, #tpu.memory_space<vmem>>, %arg19: memref<9x1xf32, #tpu.memory_space<vmem>>, %arg20: memref<9x1xf32, #tpu.memory_space<vmem>>, %arg21: memref<1x1xf32, #tpu.memory_space<vmem>>, %arg22: memref<1x1x2304xf32, #tpu.memory_space<vmem>>) attributes {dimension_semantics = [#tpu.dimension_semantics<parallel>], iteration_bounds = array<i64: 8>, scalar_prefetch = 0 : i64, scratch_operands = 0 : i64, tpu.core_type = #tpu.core_type<tc>, window_params = [{transform_indices = @transform_0, window_bounds = array<i64: 1, 1296, 64>}, {pipeline_mode = #tpu.pipeline_mode<synchronous>, transform_indices = @transform_1, window_bounds = array<i64: 48, 1296>}, {pipeline_mode = #tpu.pipeline_mode<synchronous>, transform_indices = @transform_2, window_bounds = array<i64: 64, 576>}, {pipeline_mode = #tpu.pipeline_mode<synchronous>, transform_indices = @transform_3, window_bounds = array<i64: 576, 2304>}, {pipeline_mode = #tpu.pipeline_mode<synchronous>, transform_indices = @transform_4, window_bounds = array<i64: 48, 1>}, {pipeline_mode = #tpu.pipeline_mode<synchronous>, transform_indices = @transform_5, window_bounds = array<i64: 45, 48>}, {pipeline_mode = #tpu.pipeline_mode<synchronous>, transform_indices = @transform_6, window_bounds = array<i64: 45, 1>}, {pipeline_mode = #tpu.pipeline_mode<synchronous>, transform_indices = @transform_7, window_bounds = array<i64: 42, 45>}, {pipeline_mode = #tpu.pipeline_mode<synchronous>, transform_indices = @transform_8, window_bounds = array<i64: 42, 1>}, {pipeline_mode = #tpu.pipeline_mode<synchronous>, transform_indices = @transform_9, window_bounds = array<i64: 21, 42>}, {pipeline_mode = #tpu.pipeline_mode<synchronous>, transform_indices = @transform_10, window_bounds = array<i64: 21, 1>}, {pipeline_mode = #tpu.pipeline_mode<synchronous>, transform_indices = @transform_11, window_bounds = array<i64: 18, 21>}, {pipeline_mode = #tpu.pipeline_mode<synchronous>, transform_indices = @transform_12, window_bounds = array<i64: 18, 1>}, {pipeline_mode = #tpu.pipeline_mode<synchronous>, transform_indices = @transform_13, window_bounds = array<i64: 15, 18>}, {pipeline_mode = #tpu.pipeline_mode<synchronous>, transform_indices = @transform_14, window_bounds = array<i64: 15, 1>}, {pipeline_mode = #tpu.pipeline_mode<synchronous>, transform_indices = @transform_15, window_bounds = array<i64: 12, 15>}, {pipeline_mode = #tpu.pipeline_mode<synchronous>, transform_indices = @transform_16, window_bounds = array<i64: 12, 1>}, {pipeline_mode = #tpu.pipeline_mode<synchronous>, transform_indices = @transform_17, window_bounds = array<i64: 9, 12>}, {pipeline_mode = #tpu.pipeline_mode<synchronous>, transform_indices = @transform_18, window_bounds = array<i64: 9, 1>}, {pipeline_mode = #tpu.pipeline_mode<synchronous>, transform_indices = @transform_19, window_bounds = array<i64: 9, 1>}, {pipeline_mode = #tpu.pipeline_mode<synchronous>, transform_indices = @transform_20, window_bounds = array<i64: 1, 1>}, {transform_indices = @transform_21, window_bounds = array<i64: 1, 1, 2304>}]} {
    %c0 = arith.constant 0 : index
    %c0_0 = arith.constant 0 : index
    %0 = vector.load %arg2[%c0, %c0_0] : memref<48x1296xf32, #tpu.memory_space<vmem>>, vector<48x1296xf32>
    %c0_1 = arith.constant 0 : index
    %c0_2 = arith.constant 0 : index
    %c0_3 = arith.constant 0 : index
    %1 = vector.load %arg1[%c0_1, %c0_2, %c0_3] : memref<1x1296x64xf32, #tpu.memory_space<vmem>>, vector<1x1296x64xf32>
    %2 = vector.shape_cast %1 : vector<1x1296x64xf32> to vector<1296x64xf32>
    %cst = arith.constant dense<0.000000e+00> : vector<48x64xf32>
    %3 = tpu.matmul %0, %2, %cst {dimension_numbers = #tpu.dot_dimension_numbers<[1], [0], [0], [1], [0, 0, 1, 1], [], []>} : vector<48x1296xf32>, vector<1296x64xf32>, vector<48x64xf32> -> vector<48x64xf32>
    %c0_4 = arith.constant 0 : index
    %c0_5 = arith.constant 0 : index
    %4 = vector.load %arg6[%c0_4, %c0_5] : memref<45x48xf32, #tpu.memory_space<vmem>>, vector<45x48xf32>
    %c0_6 = arith.constant 0 : index
    %c0_7 = arith.constant 0 : index
    %5 = vector.load %arg5[%c0_6, %c0_7] : memref<48x1xf32, #tpu.memory_space<vmem>>, vector<48x1xf32>
    %6 = vector.broadcast %5 : vector<48x1xf32> to vector<48x64xf32>
    %7 = arith.addf %3, %6 : vector<48x64xf32>
    %cst_8 = arith.constant 0.000000e+00 : f32
    %8 = vector.broadcast %cst_8 : f32 to vector<48x64xf32>
    %9 = arith.maximumf %7, %8 : vector<48x64xf32>
    %cst_9 = arith.constant dense<0.000000e+00> : vector<45x64xf32>
    %10 = tpu.matmul %4, %9, %cst_9 {dimension_numbers = #tpu.dot_dimension_numbers<[1], [0], [0], [1], [0, 0, 1, 1], [], []>} : vector<45x48xf32>, vector<48x64xf32>, vector<45x64xf32> -> vector<45x64xf32>
    %c0_10 = arith.constant 0 : index
    %c0_11 = arith.constant 0 : index
    %11 = vector.load %arg8[%c0_10, %c0_11] : memref<42x45xf32, #tpu.memory_space<vmem>>, vector<42x45xf32>
    %c0_12 = arith.constant 0 : index
    %c0_13 = arith.constant 0 : index
    %12 = vector.load %arg7[%c0_12, %c0_13] : memref<45x1xf32, #tpu.memory_space<vmem>>, vector<45x1xf32>
    %13 = vector.broadcast %12 : vector<45x1xf32> to vector<45x64xf32>
    %14 = arith.addf %10, %13 : vector<45x64xf32>
    %cst_14 = arith.constant 0.000000e+00 : f32
    %15 = vector.broadcast %cst_14 : f32 to vector<45x64xf32>
    %16 = arith.maximumf %14, %15 : vector<45x64xf32>
    %cst_15 = arith.constant dense<0.000000e+00> : vector<42x64xf32>
    %17 = tpu.matmul %11, %16, %cst_15 {dimension_numbers = #tpu.dot_dimension_numbers<[1], [0], [0], [1], [0, 0, 1, 1], [], []>} : vector<42x45xf32>, vector<45x64xf32>, vector<42x64xf32> -> vector<42x64xf32>
    %c0_16 = arith.constant 0 : index
    %c0_17 = arith.constant 0 : index
    %18 = vector.load %arg10[%c0_16, %c0_17] : memref<21x42xf32, #tpu.memory_space<vmem>>, vector<21x42xf32>
    %c0_18 = arith.constant 0 : index
    %c0_19 = arith.constant 0 : index
    %19 = vector.load %arg9[%c0_18, %c0_19] : memref<42x1xf32, #tpu.memory_space<vmem>>, vector<42x1xf32>
    %20 = vector.broadcast %19 : vector<42x1xf32> to vector<42x64xf32>
    %21 = arith.addf %17, %20 : vector<42x64xf32>
    %cst_20 = arith.constant 0.000000e+00 : f32
    %22 = vector.broadcast %cst_20 : f32 to vector<42x64xf32>
    %23 = arith.maximumf %21, %22 : vector<42x64xf32>
    %cst_21 = arith.constant dense<0.000000e+00> : vector<21x64xf32>
    %24 = tpu.matmul %18, %23, %cst_21 {dimension_numbers = #tpu.dot_dimension_numbers<[1], [0], [0], [1], [0, 0, 1, 1], [], []>} : vector<21x42xf32>, vector<42x64xf32>, vector<21x64xf32> -> vector<21x64xf32>
    %c0_22 = arith.constant 0 : index
    %c0_23 = arith.constant 0 : index
    %25 = vector.load %arg3[%c0_22, %c0_23] : memref<64x576xf32, #tpu.memory_space<vmem>>, vector<64x576xf32>
    %cst_24 = arith.constant dense<0.000000e+00> : vector<21x576xf32>
    %26 = tpu.matmul %24, %25, %cst_24 {dimension_numbers = #tpu.dot_dimension_numbers<[1], [0], [0], [1], [0, 0, 1, 1], [], []>} : vector<21x64xf32>, vector<64x576xf32>, vector<21x576xf32> -> vector<21x576xf32>
    %c0_25 = arith.constant 0 : index
    %c0_26 = arith.constant 0 : index
    %27 = vector.load %arg12[%c0_25, %c0_26] : memref<18x21xf32, #tpu.memory_space<vmem>>, vector<18x21xf32>
    %c0_27 = arith.constant 0 : index
    %c0_28 = arith.constant 0 : index
    %28 = vector.load %arg11[%c0_27, %c0_28] : memref<21x1xf32, #tpu.memory_space<vmem>>, vector<21x1xf32>
    %29 = vector.broadcast %28 : vector<21x1xf32> to vector<21x576xf32>
    %30 = arith.addf %26, %29 : vector<21x576xf32>
    %cst_29 = arith.constant 0.000000e+00 : f32
    %31 = vector.broadcast %cst_29 : f32 to vector<21x576xf32>
    %32 = arith.maximumf %30, %31 : vector<21x576xf32>
    %cst_30 = arith.constant dense<0.000000e+00> : vector<18x576xf32>
    %33 = tpu.matmul %27, %32, %cst_30 {dimension_numbers = #tpu.dot_dimension_numbers<[1], [0], [0], [1], [0, 0, 1, 1], [], []>} : vector<18x21xf32>, vector<21x576xf32>, vector<18x576xf32> -> vector<18x576xf32>
    %c0_31 = arith.constant 0 : index
    %c0_32 = arith.constant 0 : index
    %34 = vector.load %arg14[%c0_31, %c0_32] : memref<15x18xf32, #tpu.memory_space<vmem>>, vector<15x18xf32>
    %c0_33 = arith.constant 0 : index
    %c0_34 = arith.constant 0 : index
    %35 = vector.load %arg13[%c0_33, %c0_34] : memref<18x1xf32, #tpu.memory_space<vmem>>, vector<18x1xf32>
    %36 = vector.broadcast %35 : vector<18x1xf32> to vector<18x576xf32>
    %37 = arith.addf %33, %36 : vector<18x576xf32>
    %cst_35 = arith.constant 0.000000e+00 : f32
    %38 = vector.broadcast %cst_35 : f32 to vector<18x576xf32>
    %39 = arith.maximumf %37, %38 : vector<18x576xf32>
    %cst_36 = arith.constant dense<0.000000e+00> : vector<15x576xf32>
    %40 = tpu.matmul %34, %39, %cst_36 {dimension_numbers = #tpu.dot_dimension_numbers<[1], [0], [0], [1], [0, 0, 1, 1], [], []>} : vector<15x18xf32>, vector<18x576xf32>, vector<15x576xf32> -> vector<15x576xf32>
    %c0_37 = arith.constant 0 : index
    %c0_38 = arith.constant 0 : index
    %41 = vector.load %arg16[%c0_37, %c0_38] : memref<12x15xf32, #tpu.memory_space<vmem>>, vector<12x15xf32>
    %c0_39 = arith.constant 0 : index
    %c0_40 = arith.constant 0 : index
    %42 = vector.load %arg15[%c0_39, %c0_40] : memref<15x1xf32, #tpu.memory_space<vmem>>, vector<15x1xf32>
    %43 = vector.broadcast %42 : vector<15x1xf32> to vector<15x576xf32>
    %44 = arith.addf %40, %43 : vector<15x576xf32>
    %cst_41 = arith.constant 0.000000e+00 : f32
    %45 = vector.broadcast %cst_41 : f32 to vector<15x576xf32>
    %46 = arith.maximumf %44, %45 : vector<15x576xf32>
    %cst_42 = arith.constant dense<0.000000e+00> : vector<12x576xf32>
    %47 = tpu.matmul %41, %46, %cst_42 {dimension_numbers = #tpu.dot_dimension_numbers<[1], [0], [0], [1], [0, 0, 1, 1], [], []>} : vector<12x15xf32>, vector<15x576xf32>, vector<12x576xf32> -> vector<12x576xf32>
    %c0_43 = arith.constant 0 : index
    %c0_44 = arith.constant 0 : index
    %48 = vector.load %arg18[%c0_43, %c0_44] : memref<9x12xf32, #tpu.memory_space<vmem>>, vector<9x12xf32>
    %c0_45 = arith.constant 0 : index
    %c0_46 = arith.constant 0 : index
    %49 = vector.load %arg17[%c0_45, %c0_46] : memref<12x1xf32, #tpu.memory_space<vmem>>, vector<12x1xf32>
    %50 = vector.broadcast %49 : vector<12x1xf32> to vector<12x576xf32>
    %51 = arith.addf %47, %50 : vector<12x576xf32>
    %cst_47 = arith.constant 0.000000e+00 : f32
    %52 = vector.broadcast %cst_47 : f32 to vector<12x576xf32>
    %53 = arith.maximumf %51, %52 : vector<12x576xf32>
    %cst_48 = arith.constant dense<0.000000e+00> : vector<9x576xf32>
    %54 = tpu.matmul %48, %53, %cst_48 {dimension_numbers = #tpu.dot_dimension_numbers<[1], [0], [0], [1], [0, 0, 1, 1], [], []>} : vector<9x12xf32>, vector<12x576xf32>, vector<9x576xf32> -> vector<9x576xf32>
    %c0_49 = arith.constant 0 : index
    %c0_50 = arith.constant 0 : index
    %55 = vector.load %arg19[%c0_49, %c0_50] : memref<9x1xf32, #tpu.memory_space<vmem>>, vector<9x1xf32>
    %56 = vector.broadcast %55 : vector<9x1xf32> to vector<9x576xf32>
    %57 = arith.addf %54, %56 : vector<9x576xf32>
    %cst_51 = arith.constant 0.000000e+00 : f32
    %58 = vector.broadcast %cst_51 : f32 to vector<9x576xf32>
    %59 = arith.maximumf %57, %58 : vector<9x576xf32>
    %c0_52 = arith.constant 0 : index
    %c0_53 = arith.constant 0 : index
    %60 = vector.load %arg20[%c0_52, %c0_53] : memref<9x1xf32, #tpu.memory_space<vmem>>, vector<9x1xf32>
    %c0_54 = arith.constant 0 : index
    %c0_55 = arith.constant 0 : index
    %61 = vector.load %arg21[%c0_54, %c0_55] : memref<1x1xf32, #tpu.memory_space<vmem>>, vector<1x1xf32>
    %c0_56 = arith.constant 0 : index
    %c0_57 = arith.constant 0 : index
    %62 = vector.load %arg4[%c0_56, %c0_57] : memref<576x2304xf32, #tpu.memory_space<vmem>>, vector<576x256xf32>
    %cst_58 = arith.constant dense<0.000000e+00> : vector<9x256xf32>
    %63 = tpu.matmul %59, %62, %cst_58 {dimension_numbers = #tpu.dot_dimension_numbers<[1], [0], [0], [1], [0, 0, 1, 1], [], []>} : vector<9x576xf32>, vector<576x256xf32>, vector<9x256xf32> -> vector<9x256xf32>
    %64 = vector.broadcast %60 : vector<9x1xf32> to vector<9x256xf32>
    %65 = arith.mulf %63, %64 : vector<9x256xf32>
    %cst_59 = arith.constant dense<0.000000e+00> : vector<256xf32>
    %66 = vector.multi_reduction <add>, %65, %cst_59 [0] : vector<9x256xf32> to vector<256xf32>
    %67 = vector.shape_cast %66 : vector<256xf32> to vector<1x256xf32>
    %68 = vector.broadcast %61 : vector<1x1xf32> to vector<1x256xf32>
    %69 = arith.addf %67, %68 : vector<1x256xf32>
    %70 = arith.negf %69 : vector<1x256xf32>
    %71 = math.exp %70 : vector<1x256xf32>
    %cst_60 = arith.constant 1.000000e+00 : f32
    %72 = vector.broadcast %cst_60 : f32 to vector<1x256xf32>
    %73 = arith.addf %72, %71 : vector<1x256xf32>
    %74 = arith.divf %72, %73 : vector<1x256xf32>
    %c0_61 = arith.constant 0 : index
    %c0_62 = arith.constant 0 : index
    %c0_63 = arith.constant 0 : index
    %75 = vector.load %arg22[%c0_61, %c0_62, %c0_63] : memref<1x1x2304xf32, #tpu.memory_space<vmem>>, vector<1x1x256xf32>
    %76 = vector.shape_cast %75 : vector<1x1x256xf32> to vector<1x256xf32>
    %77 = vector.shape_cast %74 : vector<1x256xf32> to vector<1x1x256xf32>
    tpu.vector_store %arg22[%c0_61, %c0_62, %c0_63], %77 {strides = array<i32>} : memref<1x1x2304xf32, #tpu.memory_space<vmem>>, vector<1x1x256xf32>,
    %c0_64 = arith.constant 0 : index
    %c256 = arith.constant 256 : index
    %78 = vector.load %arg4[%c0_64, %c256] : memref<576x2304xf32, #tpu.memory_space<vmem>>, vector<576x256xf32>
    %cst_65 = arith.constant dense<0.000000e+00> : vector<9x256xf32>
    %79 = tpu.matmul %59, %78, %cst_65 {dimension_numbers = #tpu.dot_dimension_numbers<[1], [0], [0], [1], [0, 0, 1, 1], [], []>} : vector<9x576xf32>, vector<576x256xf32>, vector<9x256xf32> -> vector<9x256xf32>
    %80 = vector.broadcast %60 : vector<9x1xf32> to vector<9x256xf32>
    %81 = arith.mulf %79, %80 : vector<9x256xf32>
    %cst_66 = arith.constant dense<0.000000e+00> : vector<256xf32>
    %82 = vector.multi_reduction <add>, %81, %cst_66 [0] : vector<9x256xf32> to vector<256xf32>
    %83 = vector.shape_cast %82 : vector<256xf32> to vector<1x256xf32>
    %84 = vector.broadcast %61 : vector<1x1xf32> to vector<1x256xf32>
    %85 = arith.addf %83, %84 : vector<1x256xf32>
    %86 = arith.negf %85 : vector<1x256xf32>
    %87 = math.exp %86 : vector<1x256xf32>
    %cst_67 = arith.constant 1.000000e+00 : f32
    %88 = vector.broadcast %cst_67 : f32 to vector<1x256xf32>
    %89 = arith.addf %88, %87 : vector<1x256xf32>
    %90 = arith.divf %88, %89 : vector<1x256xf32>
    %c0_68 = arith.constant 0 : index
    %c0_69 = arith.constant 0 : index
    %c256_70 = arith.constant 256 : index
    %91 = vector.load %arg22[%c0_68, %c0_69, %c256_70] : memref<1x1x2304xf32, #tpu.memory_space<vmem>>, vector<1x1x256xf32>
    %92 = vector.shape_cast %91 : vector<1x1x256xf32> to vector<1x256xf32>
    %93 = vector.shape_cast %90 : vector<1x256xf32> to vector<1x1x256xf32>
    tpu.vector_store %arg22[%c0_68, %c0_69, %c256_70], %93 {strides = array<i32>} : memref<1x1x2304xf32, #tpu.memory_space<vmem>>, vector<1x1x256xf32>,
    %c0_71 = arith.constant 0 : index
    %c512 = arith.constant 512 : index
    %94 = vector.load %arg4[%c0_71, %c512] : memref<576x2304xf32, #tpu.memory_space<vmem>>, vector<576x256xf32>
    %cst_72 = arith.constant dense<0.000000e+00> : vector<9x256xf32>
    %95 = tpu.matmul %59, %94, %cst_72 {dimension_numbers = #tpu.dot_dimension_numbers<[1], [0], [0], [1], [0, 0, 1, 1], [], []>} : vector<9x576xf32>, vector<576x256xf32>, vector<9x256xf32> -> vector<9x256xf32>
    %96 = vector.broadcast %60 : vector<9x1xf32> to vector<9x256xf32>
    %97 = arith.mulf %95, %96 : vector<9x256xf32>
    %cst_73 = arith.constant dense<0.000000e+00> : vector<256xf32>
    %98 = vector.multi_reduction <add>, %97, %cst_73 [0] : vector<9x256xf32> to vector<256xf32>
    %99 = vector.shape_cast %98 : vector<256xf32> to vector<1x256xf32>
    %100 = vector.broadcast %61 : vector<1x1xf32> to vector<1x256xf32>
    %101 = arith.addf %99, %100 : vector<1x256xf32>
    %102 = arith.negf %101 : vector<1x256xf32>
    %103 = math.exp %102 : vector<1x256xf32>
    %cst_74 = arith.constant 1.000000e+00 : f32
    %104 = vector.broadcast %cst_74 : f32 to vector<1x256xf32>
    %105 = arith.addf %104, %103 : vector<1x256xf32>
    %106 = arith.divf %104, %105 : vector<1x256xf32>
    %c0_75 = arith.constant 0 : index
    %c0_76 = arith.constant 0 : index
    %c512_77 = arith.constant 512 : index
    %107 = vector.load %arg22[%c0_75, %c0_76, %c512_77] : memref<1x1x2304xf32, #tpu.memory_space<vmem>>, vector<1x1x256xf32>
    %108 = vector.shape_cast %107 : vector<1x1x256xf32> to vector<1x256xf32>
    %109 = vector.shape_cast %106 : vector<1x256xf32> to vector<1x1x256xf32>
    tpu.vector_store %arg22[%c0_75, %c0_76, %c512_77], %109 {strides = array<i32>} : memref<1x1x2304xf32, #tpu.memory_space<vmem>>, vector<1x1x256xf32>,
    %c0_78 = arith.constant 0 : index
    %c768 = arith.constant 768 : index
    %110 = vector.load %arg4[%c0_78, %c768] : memref<576x2304xf32, #tpu.memory_space<vmem>>, vector<576x256xf32>
    %cst_79 = arith.constant dense<0.000000e+00> : vector<9x256xf32>
    %111 = tpu.matmul %59, %110, %cst_79 {dimension_numbers = #tpu.dot_dimension_numbers<[1], [0], [0], [1], [0, 0, 1, 1], [], []>} : vector<9x576xf32>, vector<576x256xf32>, vector<9x256xf32> -> vector<9x256xf32>
    %112 = vector.broadcast %60 : vector<9x1xf32> to vector<9x256xf32>
    %113 = arith.mulf %111, %112 : vector<9x256xf32>
    %cst_80 = arith.constant dense<0.000000e+00> : vector<256xf32>
    %114 = vector.multi_reduction <add>, %113, %cst_80 [0] : vector<9x256xf32> to vector<256xf32>
    %115 = vector.shape_cast %114 : vector<256xf32> to vector<1x256xf32>
    %116 = vector.broadcast %61 : vector<1x1xf32> to vector<1x256xf32>
    %117 = arith.addf %115, %116 : vector<1x256xf32>
    %118 = arith.negf %117 : vector<1x256xf32>
    %119 = math.exp %118 : vector<1x256xf32>
    %cst_81 = arith.constant 1.000000e+00 : f32
    %120 = vector.broadcast %cst_81 : f32 to vector<1x256xf32>
    %121 = arith.addf %120, %119 : vector<1x256xf32>
    %122 = arith.divf %120, %121 : vector<1x256xf32>
    %c0_82 = arith.constant 0 : index
    %c0_83 = arith.constant 0 : index
    %c768_84 = arith.constant 768 : index
    %123 = vector.load %arg22[%c0_82, %c0_83, %c768_84] : memref<1x1x2304xf32, #tpu.memory_space<vmem>>, vector<1x1x256xf32>
    %124 = vector.shape_cast %123 : vector<1x1x256xf32> to vector<1x256xf32>
    %125 = vector.shape_cast %122 : vector<1x256xf32> to vector<1x1x256xf32>
    tpu.vector_store %arg22[%c0_82, %c0_83, %c768_84], %125 {strides = array<i32>} : memref<1x1x2304xf32, #tpu.memory_space<vmem>>, vector<1x1x256xf32>,
    %c0_85 = arith.constant 0 : index
    %c1024 = arith.constant 1024 : index
    %126 = vector.load %arg4[%c0_85, %c1024] : memref<576x2304xf32, #tpu.memory_space<vmem>>, vector<576x256xf32>
    %cst_86 = arith.constant dense<0.000000e+00> : vector<9x256xf32>
    %127 = tpu.matmul %59, %126, %cst_86 {dimension_numbers = #tpu.dot_dimension_numbers<[1], [0], [0], [1], [0, 0, 1, 1], [], []>} : vector<9x576xf32>, vector<576x256xf32>, vector<9x256xf32> -> vector<9x256xf32>
    %128 = vector.broadcast %60 : vector<9x1xf32> to vector<9x256xf32>
    %129 = arith.mulf %127, %128 : vector<9x256xf32>
    %cst_87 = arith.constant dense<0.000000e+00> : vector<256xf32>
    %130 = vector.multi_reduction <add>, %129, %cst_87 [0] : vector<9x256xf32> to vector<256xf32>
    %131 = vector.shape_cast %130 : vector<256xf32> to vector<1x256xf32>
    %132 = vector.broadcast %61 : vector<1x1xf32> to vector<1x256xf32>
    %133 = arith.addf %131, %132 : vector<1x256xf32>
    %134 = arith.negf %133 : vector<1x256xf32>
    %135 = math.exp %134 : vector<1x256xf32>
    %cst_88 = arith.constant 1.000000e+00 : f32
    %136 = vector.broadcast %cst_88 : f32 to vector<1x256xf32>
    %137 = arith.addf %136, %135 : vector<1x256xf32>
    %138 = arith.divf %136, %137 : vector<1x256xf32>
    %c0_89 = arith.constant 0 : index
    %c0_90 = arith.constant 0 : index
    %c1024_91 = arith.constant 1024 : index
    %139 = vector.load %arg22[%c0_89, %c0_90, %c1024_91] : memref<1x1x2304xf32, #tpu.memory_space<vmem>>, vector<1x1x256xf32>
    %140 = vector.shape_cast %139 : vector<1x1x256xf32> to vector<1x256xf32>
    %141 = vector.shape_cast %138 : vector<1x256xf32> to vector<1x1x256xf32>
    tpu.vector_store %arg22[%c0_89, %c0_90, %c1024_91], %141 {strides = array<i32>} : memref<1x1x2304xf32, #tpu.memory_space<vmem>>, vector<1x1x256xf32>,
    %c0_92 = arith.constant 0 : index
    %c1280 = arith.constant 1280 : index
    %142 = vector.load %arg4[%c0_92, %c1280] : memref<576x2304xf32, #tpu.memory_space<vmem>>, vector<576x256xf32>
    %cst_93 = arith.constant dense<0.000000e+00> : vector<9x256xf32>
    %143 = tpu.matmul %59, %142, %cst_93 {dimension_numbers = #tpu.dot_dimension_numbers<[1], [0], [0], [1], [0, 0, 1, 1], [], []>} : vector<9x576xf32>, vector<576x256xf32>, vector<9x256xf32> -> vector<9x256xf32>
    %144 = vector.broadcast %60 : vector<9x1xf32> to vector<9x256xf32>
    %145 = arith.mulf %143, %144 : vector<9x256xf32>
    %cst_94 = arith.constant dense<0.000000e+00> : vector<256xf32>
    %146 = vector.multi_reduction <add>, %145, %cst_94 [0] : vector<9x256xf32> to vector<256xf32>
    %147 = vector.shape_cast %146 : vector<256xf32> to vector<1x256xf32>
    %148 = vector.broadcast %61 : vector<1x1xf32> to vector<1x256xf32>
    %149 = arith.addf %147, %148 : vector<1x256xf32>
    %150 = arith.negf %149 : vector<1x256xf32>
    %151 = math.exp %150 : vector<1x256xf32>
    %cst_95 = arith.constant 1.000000e+00 : f32
    %152 = vector.broadcast %cst_95 : f32 to vector<1x256xf32>
    %153 = arith.addf %152, %151 : vector<1x256xf32>
    %154 = arith.divf %152, %153 : vector<1x256xf32>
    %c0_96 = arith.constant 0 : index
    %c0_97 = arith.constant 0 : index
    %c1280_98 = arith.constant 1280 : index
    %155 = vector.load %arg22[%c0_96, %c0_97, %c1280_98] : memref<1x1x2304xf32, #tpu.memory_space<vmem>>, vector<1x1x256xf32>
    %156 = vector.shape_cast %155 : vector<1x1x256xf32> to vector<1x256xf32>
    %157 = vector.shape_cast %154 : vector<1x256xf32> to vector<1x1x256xf32>
    tpu.vector_store %arg22[%c0_96, %c0_97, %c1280_98], %157 {strides = array<i32>} : memref<1x1x2304xf32, #tpu.memory_space<vmem>>, vector<1x1x256xf32>,
    %c0_99 = arith.constant 0 : index
    %c1536 = arith.constant 1536 : index
    %158 = vector.load %arg4[%c0_99, %c1536] : memref<576x2304xf32, #tpu.memory_space<vmem>>, vector<576x256xf32>
    %cst_100 = arith.constant dense<0.000000e+00> : vector<9x256xf32>
    %159 = tpu.matmul %59, %158, %cst_100 {dimension_numbers = #tpu.dot_dimension_numbers<[1], [0], [0], [1], [0, 0, 1, 1], [], []>} : vector<9x576xf32>, vector<576x256xf32>, vector<9x256xf32> -> vector<9x256xf32>
    %160 = vector.broadcast %60 : vector<9x1xf32> to vector<9x256xf32>
    %161 = arith.mulf %159, %160 : vector<9x256xf32>
    %cst_101 = arith.constant dense<0.000000e+00> : vector<256xf32>
    %162 = vector.multi_reduction <add>, %161, %cst_101 [0] : vector<9x256xf32> to vector<256xf32>
    %163 = vector.shape_cast %162 : vector<256xf32> to vector<1x256xf32>
    %164 = vector.broadcast %61 : vector<1x1xf32> to vector<1x256xf32>
    %165 = arith.addf %163, %164 : vector<1x256xf32>
    %166 = arith.negf %165 : vector<1x256xf32>
    %167 = math.exp %166 : vector<1x256xf32>
    %cst_102 = arith.constant 1.000000e+00 : f32
    %168 = vector.broadcast %cst_102 : f32 to vector<1x256xf32>
    %169 = arith.addf %168, %167 : vector<1x256xf32>
    %170 = arith.divf %168, %169 : vector<1x256xf32>
    %c0_103 = arith.constant 0 : index
    %c0_104 = arith.constant 0 : index
    %c1536_105 = arith.constant 1536 : index
    %171 = vector.load %arg22[%c0_103, %c0_104, %c1536_105] : memref<1x1x2304xf32, #tpu.memory_space<vmem>>, vector<1x1x256xf32>
    %172 = vector.shape_cast %171 : vector<1x1x256xf32> to vector<1x256xf32>
    %173 = vector.shape_cast %170 : vector<1x256xf32> to vector<1x1x256xf32>
    tpu.vector_store %arg22[%c0_103, %c0_104, %c1536_105], %173 {strides = array<i32>} : memref<1x1x2304xf32, #tpu.memory_space<vmem>>, vector<1x1x256xf32>,
    %c0_106 = arith.constant 0 : index
    %c1792 = arith.constant 1792 : index
    %174 = vector.load %arg4[%c0_106, %c1792] : memref<576x2304xf32, #tpu.memory_space<vmem>>, vector<576x256xf32>
    %cst_107 = arith.constant dense<0.000000e+00> : vector<9x256xf32>
    %175 = tpu.matmul %59, %174, %cst_107 {dimension_numbers = #tpu.dot_dimension_numbers<[1], [0], [0], [1], [0, 0, 1, 1], [], []>} : vector<9x576xf32>, vector<576x256xf32>, vector<9x256xf32> -> vector<9x256xf32>
    %176 = vector.broadcast %60 : vector<9x1xf32> to vector<9x256xf32>
    %177 = arith.mulf %175, %176 : vector<9x256xf32>
    %cst_108 = arith.constant dense<0.000000e+00> : vector<256xf32>
    %178 = vector.multi_reduction <add>, %177, %cst_108 [0] : vector<9x256xf32> to vector<256xf32>
    %179 = vector.shape_cast %178 : vector<256xf32> to vector<1x256xf32>
    %180 = vector.broadcast %61 : vector<1x1xf32> to vector<1x256xf32>
    %181 = arith.addf %179, %180 : vector<1x256xf32>
    %182 = arith.negf %181 : vector<1x256xf32>
    %183 = math.exp %182 : vector<1x256xf32>
    %cst_109 = arith.constant 1.000000e+00 : f32
    %184 = vector.broadcast %cst_109 : f32 to vector<1x256xf32>
    %185 = arith.addf %184, %183 : vector<1x256xf32>
    %186 = arith.divf %184, %185 : vector<1x256xf32>
    %c0_110 = arith.constant 0 : index
    %c0_111 = arith.constant 0 : index
    %c1792_112 = arith.constant 1792 : index
    %187 = vector.load %arg22[%c0_110, %c0_111, %c1792_112] : memref<1x1x2304xf32, #tpu.memory_space<vmem>>, vector<1x1x256xf32>
    %188 = vector.shape_cast %187 : vector<1x1x256xf32> to vector<1x256xf32>
    %189 = vector.shape_cast %186 : vector<1x256xf32> to vector<1x1x256xf32>
    tpu.vector_store %arg22[%c0_110, %c0_111, %c1792_112], %189 {strides = array<i32>} : memref<1x1x2304xf32, #tpu.memory_space<vmem>>, vector<1x1x256xf32>,
    %c0_113 = arith.constant 0 : index
    %c2048 = arith.constant 2048 : index
    %190 = vector.load %arg4[%c0_113, %c2048] : memref<576x2304xf32, #tpu.memory_space<vmem>>, vector<576x256xf32>
    %cst_114 = arith.constant dense<0.000000e+00> : vector<9x256xf32>
    %191 = tpu.matmul %59, %190, %cst_114 {dimension_numbers = #tpu.dot_dimension_numbers<[1], [0], [0], [1], [0, 0, 1, 1], [], []>} : vector<9x576xf32>, vector<576x256xf32>, vector<9x256xf32> -> vector<9x256xf32>
    %192 = vector.broadcast %60 : vector<9x1xf32> to vector<9x256xf32>
    %193 = arith.mulf %191, %192 : vector<9x256xf32>
    %cst_115 = arith.constant dense<0.000000e+00> : vector<256xf32>
    %194 = vector.multi_reduction <add>, %193, %cst_115 [0] : vector<9x256xf32> to vector<256xf32>
    %195 = vector.shape_cast %194 : vector<256xf32> to vector<1x256xf32>
    %196 = vector.broadcast %61 : vector<1x1xf32> to vector<1x256xf32>
    %197 = arith.addf %195, %196 : vector<1x256xf32>
    %198 = arith.negf %197 : vector<1x256xf32>
    %199 = math.exp %198 : vector<1x256xf32>
    %cst_116 = arith.constant 1.000000e+00 : f32
    %200 = vector.broadcast %cst_116 : f32 to vector<1x256xf32>
    %201 = arith.addf %200, %199 : vector<1x256xf32>
    %202 = arith.divf %200, %201 : vector<1x256xf32>
    %c0_117 = arith.constant 0 : index
    %c0_118 = arith.constant 0 : index
    %c2048_119 = arith.constant 2048 : index
    %203 = vector.load %arg22[%c0_117, %c0_118, %c2048_119] : memref<1x1x2304xf32, #tpu.memory_space<vmem>>, vector<1x1x256xf32>
    %204 = vector.shape_cast %203 : vector<1x1x256xf32> to vector<1x256xf32>
    %205 = vector.shape_cast %202 : vector<1x256xf32> to vector<1x1x256xf32>
    tpu.vector_store %arg22[%c0_117, %c0_118, %c2048_119], %205 {strides = array<i32>} : memref<1x1x2304xf32, #tpu.memory_space<vmem>>, vector<1x1x256xf32>,
    return
  }
  func.func @transform_0(%arg0: i32) -> (i32, i32, i32) {
    %c0_i32 = arith.constant 0 : i32
    %c0_i32_0 = arith.constant 0 : i32
    %c0_i32_1 = arith.constant 0 : i32
    return %arg0, %c0_i32, %c0_i32_0 : i32, i32, i32
  }
  func.func @transform_1(%arg0: i32) -> (i32, i32) {
    %c0_i32 = arith.constant 0 : i32
    %c0_i32_0 = arith.constant 0 : i32
    %c0_i32_1 = arith.constant 0 : i32
    return %c0_i32, %c0_i32_0 : i32, i32
  }
  func.func @transform_2(%arg0: i32) -> (i32, i32) {
    %c0_i32 = arith.constant 0 : i32
    %c0_i32_0 = arith.constant 0 : i32
    %c0_i32_1 = arith.constant 0 : i32
    return %c0_i32, %c0_i32_0 : i32, i32
  }
  func.func @transform_3(%arg0: i32) -> (i32, i32) {
    %c0_i32 = arith.constant 0 : i32
    %c0_i32_0 = arith.constant 0 : i32
    %c0_i32_1 = arith.constant 0 : i32
    return %c0_i32, %c0_i32_0 : i32, i32
  }
  func.func @transform_4(%arg0: i32) -> (i32, i32) {
    %c0_i32 = arith.constant 0 : i32
    %c0_i32_0 = arith.constant 0 : i32
    %c0_i32_1 = arith.constant 0 : i32
    return %c0_i32, %c0_i32_0 : i32, i32
  }
  func.func @transform_5(%arg0: i32) -> (i32, i32) {
    %c0_i32 = arith.constant 0 : i32
    %c0_i32_0 = arith.constant 0 : i32
    %c0_i32_1 = arith.constant 0 : i32
    return %c0_i32, %c0_i32_0 : i32, i32
  }
  func.func @transform_6(%arg0: i32) -> (i32, i32) {
    %c0_i32 = arith.constant 0 : i32
    %c0_i32_0 = arith.constant 0 : i32
    %c0_i32_1 = arith.constant 0 : i32
    return %c0_i32, %c0_i32_0 : i32, i32
  }
  func.func @transform_7(%arg0: i32) -> (i32, i32) {
    %c0_i32 = arith.constant 0 : i32
    %c0_i32_0 = arith.constant 0 : i32
    %c0_i32_1 = arith.constant 0 : i32
    return %c0_i32, %c0_i32_0 : i32, i32
  }
  func.func @transform_8(%arg0: i32) -> (i32, i32) {
    %c0_i32 = arith.constant 0 : i32
    %c0_i32_0 = arith.constant 0 : i32
    %c0_i32_1 = arith.constant 0 : i32
    return %c0_i32, %c0_i32_0 : i32, i32
  }
  func.func @transform_9(%arg0: i32) -> (i32, i32) {
    %c0_i32 = arith.constant 0 : i32
    %c0_i32_0 = arith.constant 0 : i32
    %c0_i32_1 = arith.constant 0 : i32
    return %c0_i32, %c0_i32_0 : i32, i32
  }
  func.func @transform_10(%arg0: i32) -> (i32, i32) {
    %c0_i32 = arith.constant 0 : i32
    %c0_i32_0 = arith.constant 0 : i32
    %c0_i32_1 = arith.constant 0 : i32
    return %c0_i32, %c0_i32_0 : i32, i32
  }
  func.func @transform_11(%arg0: i32) -> (i32, i32) {
    %c0_i32 = arith.constant 0 : i32
    %c0_i32_0 = arith.constant 0 : i32
    %c0_i32_1 = arith.constant 0 : i32
    return %c0_i32, %c0_i32_0 : i32, i32
  }
  func.func @transform_12(%arg0: i32) -> (i32, i32) {
    %c0_i32 = arith.constant 0 : i32
    %c0_i32_0 = arith.constant 0 : i32
    %c0_i32_1 = arith.constant 0 : i32
    return %c0_i32, %c0_i32_0 : i32, i32
  }
  func.func @transform_13(%arg0: i32) -> (i32, i32) {
    %c0_i32 = arith.constant 0 : i32
    %c0_i32_0 = arith.constant 0 : i32
    %c0_i32_1 = arith.constant 0 : i32
    return %c0_i32, %c0_i32_0 : i32, i32
  }
  func.func @transform_14(%arg0: i32) -> (i32, i32) {
    %c0_i32 = arith.constant 0 : i32
    %c0_i32_0 = arith.constant 0 : i32
    %c0_i32_1 = arith.constant 0 : i32
    return %c0_i32, %c0_i32_0 : i32, i32
  }
  func.func @transform_15(%arg0: i32) -> (i32, i32) {
    %c0_i32 = arith.constant 0 : i32
    %c0_i32_0 = arith.constant 0 : i32
    %c0_i32_1 = arith.constant 0 : i32
    return %c0_i32, %c0_i32_0 : i32, i32
  }
  func.func @transform_16(%arg0: i32) -> (i32, i32) {
    %c0_i32 = arith.constant 0 : i32
    %c0_i32_0 = arith.constant 0 : i32
    %c0_i32_1 = arith.constant 0 : i32
    return %c0_i32, %c0_i32_0 : i32, i32
  }
  func.func @transform_17(%arg0: i32) -> (i32, i32) {
    %c0_i32 = arith.constant 0 : i32
    %c0_i32_0 = arith.constant 0 : i32
    %c0_i32_1 = arith.constant 0 : i32
    return %c0_i32, %c0_i32_0 : i32, i32
  }
  func.func @transform_18(%arg0: i32) -> (i32, i32) {
    %c0_i32 = arith.constant 0 : i32
    %c0_i32_0 = arith.constant 0 : i32
    %c0_i32_1 = arith.constant 0 : i32
    return %c0_i32, %c0_i32_0 : i32, i32
  }
  func.func @transform_19(%arg0: i32) -> (i32, i32) {
    %c0_i32 = arith.constant 0 : i32
    %c0_i32_0 = arith.constant 0 : i32
    %c0_i32_1 = arith.constant 0 : i32
    return %c0_i32, %c0_i32_0 : i32, i32
  }
  func.func @transform_20(%arg0: i32) -> (i32, i32) {
    %c0_i32 = arith.constant 0 : i32
    %c0_i32_0 = arith.constant 0 : i32
    %c0_i32_1 = arith.constant 0 : i32
    return %c0_i32, %c0_i32_0 : i32, i32
  }
  func.func @transform_21(%arg0: i32) -> (i32, i32, i32) {
    %c0_i32 = arith.constant 0 : i32
    %c0_i32_0 = arith.constant 0 : i32
    %c0_i32_1 = arith.constant 0 : i32
    return %arg0, %c0_i32, %c0_i32_0 : i32, i32, i32
  }
}

</mosaic_0001>

<llo_original>
// kernel: decoder_forward.1
$region0: #{decoder_forward.1}
  #allocation0 [shape = 'u32[]', space=smem, size = 0x4, offset = 0x4, fixed_abs, tag = 'smem constant byte address 0x4 - core index']
  #allocation1 [shape = 'u32[72,128]{1,0:T(1,128)}', space=vmem, size = 0x9000, scoped, tag = 'internal scratch']
  #allocation2 [shape = 'f32[1,1]{1,0:T(1,128)S(1)}', space=vmem, size = 0x200, scoped, tag = 'scoped memory for decoder_forward.1']
  %s0 = inlined_call_operand.vmem [shape: f32[8,1296,64], index: 0, kind: input, shape index: {}]
  %s1 = inlined_call_operand.vmem [shape: f32[48,1296], index: 1, kind: input, shape index: {}]
  %s2 = inlined_call_operand.vmem [shape: f32[64,576], index: 2, kind: input, shape index: {}]
  %s3 = inlined_call_operand.vmem [shape: f32[576,2304], index: 3, kind: input, shape index: {}]
  %s4 = inlined_call_operand.vmem [shape: f32[48,1], index: 4, kind: input, shape index: {}]
  %s5 = inlined_call_operand.vmem [shape: f32[45,48], index: 5, kind: input, shape index: {}]
  %s6 = inlined_call_operand.vmem [shape: f32[45,1], index: 6, kind: input, shape index: {}]
  %s7 = inlined_call_operand.vmem [shape: f32[42,45], index: 7, kind: input, shape index: {}]
  %s8 = inlined_call_operand.vmem [shape: f32[42,1], index: 8, kind: input, shape index: {}]
  %s9 = inlined_call_operand.vmem [shape: f32[21,42], index: 9, kind: input, shape index: {}]
  %s10 = inlined_call_operand.vmem [shape: f32[21,1], index: 10, kind: input, shape index: {}]
  %s11 = inlined_call_operand.vmem [shape: f32[18,21], index: 11, kind: input, shape index: {}]
  %s12 = inlined_call_operand.vmem [shape: f32[18,1], index: 12, kind: input, shape index: {}]
  %s13 = inlined_call_operand.vmem [shape: f32[15,18], index: 13, kind: input, shape index: {}]
  %s14 = inlined_call_operand.vmem [shape: f32[15,1], index: 14, kind: input, shape index: {}]
  %s15 = inlined_call_operand.vmem [shape: f32[12,15], index: 15, kind: input, shape index: {}]
  %s16 = inlined_call_operand.vmem [shape: f32[12,1], index: 16, kind: input, shape index: {}]
  %s17 = inlined_call_operand.vmem [shape: f32[9,12], index: 17, kind: input, shape index: {}]
  %s18 = inlined_call_operand.vmem [shape: f32[9,1], index: 18, kind: input, shape index: {}]
  %s19 = inlined_call_operand.vmem [shape: f32[9,1], index: 19, kind: input, shape index: {}]
  %s20 = inlined_call_operand.<no memory space> [shape: f32[1,1], index: 20, kind: input, shape index: {}]
  %s21 = inlined_call_operand.vmem [shape: f32[8,1,2304], index: 21, kind: output, shape index: {}]
  %s22 = sld [smem:[#allocation0]]
  $region117: #{decoder_forward.1} parent=0
    _
  %s24 = ssub.s32 1, %s22
  %s25 = scalar_select 0, %s24, %s22
  %v26 = vstv %s20
  %27 = vst [vmem:[#allocation2] sm:$0x1] %v26
  loop: start=0, step=1, limit=10
  $region2: #{decoder_forward.1} parent=0 // loop_pre_header
    _
  $region3: #{decoder_forward.1} parent=0 // loop_header
    %s29 = sphi 0, %s33
    %p30 = scmp.ge.s32.totalorder %s29, 10
    %s39 = sphi 0, %s41
    %s42 = sphi 0, %s39
    %s43 = sphi 0, %s42
    %s59 = sphi 0, %s43
    %s63 = sphi 0, %s63
    %s65 = sphi 0, %s63
    %s66 = sphi 0, %s65
    %s80 = sphi 0, %s66
    %s84 = sphi 0, %s84
    %s86 = sphi 0, %s84
    %s87 = sphi 0, %s86
    %s101 = sphi 0, %s87
    %s105 = sphi 0, %s105
    %s107 = sphi 0, %s105
    %s108 = sphi 0, %s107
    %s122 = sphi 0, %s108
    %s126 = sphi 0, %s126
    %s128 = sphi 0, %s126
    %s129 = sphi 0, %s128
    %s143 = sphi 0, %s129
    %s147 = sphi 0, %s147
    %s149 = sphi 0, %s147
    %s150 = sphi 0, %s149
    %s164 = sphi 0, %s150
    %s168 = sphi 0, %s168
    %s170 = sphi 0, %s168
    %s171 = sphi 0, %s170
    %s185 = sphi 0, %s171
    %s189 = sphi 0, %s189
    %s191 = sphi 0, %s189
    %s192 = sphi 0, %s191
    %s206 = sphi 0, %s192
    %s210 = sphi 0, %s210
    %s212 = sphi 0, %s210
    %s213 = sphi 0, %s212
    %s227 = sphi 0, %s213
    %s231 = sphi 0, %s231
    %s233 = sphi 0, %s231
    %s234 = sphi 0, %s233
    %s248 = sphi 0, %s234
    %s252 = sphi 0, %s252
    %s254 = sphi 0, %s252
    %s255 = sphi 0, %s254
    %s269 = sphi 0, %s255
    %s273 = sphi 0, %s273
    %s275 = sphi 0, %s273
    %s276 = sphi 0, %s275
    %s290 = sphi 0, %s276
    %s294 = sphi 0, %s294
    %s296 = sphi 0, %s294
    %s297 = sphi 0, %s296
    %s311 = sphi 0, %s297
    %s315 = sphi 0, %s315
    %s317 = sphi 0, %s315
    %s318 = sphi 0, %s317
    %s332 = sphi 0, %s318
    %s336 = sphi 0, %s336
    %s338 = sphi 0, %s336
    %s339 = sphi 0, %s338
    %s353 = sphi 0, %s339
    %s357 = sphi 0, %s357
    %s359 = sphi 0, %s357
    %s360 = sphi 0, %s359
    %s374 = sphi 0, %s360
    %s378 = sphi 0, %s378
    %s380 = sphi 0, %s378
    %s381 = sphi 0, %s380
    %s395 = sphi 0, %s381
    %s399 = sphi 0, %s399
    %s401 = sphi 0, %s399
    %s402 = sphi 0, %s401
    %s416 = sphi 0, %s402
    %s420 = sphi 0, %s420
    %s422 = sphi 0, %s420
    %s423 = sphi 0, %s422
    %s437 = sphi 0, %s423
    %s441 = sphi 0, %s441
    %s443 = sphi 0, %s441
    %s444 = sphi 0, %s443
    %s458 = sphi 0, %s444
    %s462 = sphi 0, %s462
    %s464 = sphi 0, %s462
    %s465 = sphi 0, %s464
    %s479 = sphi 0, %s465
    %s485 = sphi 0, %s487
    %s488 = sphi 0, %s485
    %s489 = sphi 0, %s488
    %s505 = sphi 0, %s489
  $region4: #{decoder_forward.1} parent=0 // loop_header_branch
    %32 = sbr.rel (%p30) target = $region8
  $region5: #{decoder_forward.1} parent=0 // loop_body
    %s34 = ssub.s32 %s29, 1
    %s35 = ssub.s32 %s29, 2
    %s36 = sadd.s32 %s29, 1
    %s37 = ssub.s32 %s29, %s36
    %p38 = scmp.eq.s32.totalorder %s37, 0
    %s40 = sadd.s32 %s39, 1
    %s41 = scalar_select %p38, %s39, %s40
    %p44 = pneg %p38
    %p45 = scmp.eq.s32.totalorder %s29, 7
    %p46 = por %p44, %p45
    %p47 = scmp.ne.s32.totalorder %s39, %s42
    %p48 = scmp.eq.s32.totalorder %s29, 0
    %p49 = por %p47, %p48
    %p50 = scmp.ne.s32.totalorder %s39, %s42
    %p51 = scmp.eq.s32.totalorder %s34, 7
    %p52 = por %p50, %p51
    %p53 = scmp.ne.s32.totalorder %s42, %s43
    %p54 = scmp.eq.s32.totalorder %s34, 0
    %p55 = por %p53, %p54
    %p56 = scmp.ne.s32.totalorder %s42, %s43
    %p57 = scmp.eq.s32.totalorder %s35, 7
    %p58 = por %p56, %p57
    %p60 = scmp.ne.s32.totalorder %s43, %s59
    %p61 = scmp.eq.s32.totalorder %s35, 0
    %p62 = por %p60, %p61
    %s64 = sadd.s32 %s63, 1
    %p67 = scmp.eq.s32.totalorder %s29, 7
    %p68 = scmp.ne.s32.totalorder %s63, %s65
    %p69 = scmp.eq.s32.totalorder %s29, 0
    %p70 = por %p68, %p69
    %p71 = scmp.ne.s32.totalorder %s63, %s65
    %p72 = scmp.eq.s32.totalorder %s34, 7
    %p73 = por %p71, %p72
    %p74 = scmp.ne.s32.totalorder %s65, %s66
    %p75 = scmp.eq.s32.totalorder %s34, 0
    %p76 = por %p74, %p75
    %p77 = scmp.ne.s32.totalorder %s65, %s66
    %p78 = scmp.eq.s32.totalorder %s35, 7
    %p79 = por %p77, %p78
    %p81 = scmp.ne.s32.totalorder %s66, %s80
    %p82 = scmp.eq.s32.totalorder %s35, 0
    %p83 = por %p81, %p82
    %s85 = sadd.s32 %s84, 1
    %p88 = scmp.eq.s32.totalorder %s29, 7
    %p89 = scmp.ne.s32.totalorder %s84, %s86
    %p90 = scmp.eq.s32.totalorder %s29, 0
    %p91 = por %p89, %p90
    %p92 = scmp.ne.s32.totalorder %s84, %s86
    %p93 = scmp.eq.s32.totalorder %s34, 7
    %p94 = por %p92, %p93
    %p95 = scmp.ne.s32.totalorder %s86, %s87
    %p96 = scmp.eq.s32.totalorder %s34, 0
    %p97 = por %p95, %p96
    %p98 = scmp.ne.s32.totalorder %s86, %s87
    %p99 = scmp.eq.s32.totalorder %s35, 7
    %p100 = por %p98, %p99
    %p102 = scmp.ne.s32.totalorder %s87, %s101
    %p103 = scmp.eq.s32.totalorder %s35, 0
    %p104 = por %p102, %p103
    %s106 = sadd.s32 %s105, 1
    %p109 = scmp.eq.s32.totalorder %s29, 7
    %p110 = scmp.ne.s32.totalorder %s105, %s107
    %p111 = scmp.eq.s32.totalorder %s29, 0
    %p112 = por %p110, %p111
    %p113 = scmp.ne.s32.totalorder %s105, %s107
    %p114 = scmp.eq.s32.totalorder %s34, 7
    %p115 = por %p113, %p114
    %p116 = scmp.ne.s32.totalorder %s107, %s108
    %p117 = scmp.eq.s32.totalorder %s34, 0
    %p118 = por %p116, %p117
    %p119 = scmp.ne.s32.totalorder %s107, %s108
    %p120 = scmp.eq.s32.totalorder %s35, 7
    %p121 = por %p119, %p120
    %p123 = scmp.ne.s32.totalorder %s108, %s122
    %p124 = scmp.eq.s32.totalorder %s35, 0
    %p125 = por %p123, %p124
    %s127 = sadd.s32 %s126, 1
    %p130 = scmp.eq.s32.totalorder %s29, 7
    %p131 = scmp.ne.s32.totalorder %s126, %s128
    %p132 = scmp.eq.s32.totalorder %s29, 0
    %p133 = por %p131, %p132
    %p134 = scmp.ne.s32.totalorder %s126, %s128
    %p135 = scmp.eq.s32.totalorder %s34, 7
    %p136 = por %p134, %p135
    %p137 = scmp.ne.s32.totalorder %s128, %s129
    %p138 = scmp.eq.s32.totalorder %s34, 0
    %p139 = por %p137, %p138
    %p140 = scmp.ne.s32.totalorder %s128, %s129
    %p141 = scmp.eq.s32.totalorder %s35, 7
    %p142 = por %p140, %p141
    %p144 = scmp.ne.s32.totalorder %s129, %s143
    %p145 = scmp.eq.s32.totalorder %s35, 0
    %p146 = por %p144, %p145
    %s148 = sadd.s32 %s147, 1
    %p151 = scmp.eq.s32.totalorder %s29, 7
    %p152 = scmp.ne.s32.totalorder %s147, %s149
    %p153 = scmp.eq.s32.totalorder %s29, 0
    %p154 = por %p152, %p153
    %p155 = scmp.ne.s32.totalorder %s147, %s149
    %p156 = scmp.eq.s32.totalorder %s34, 7
    %p157 = por %p155, %p156
    %p158 = scmp.ne.s32.totalorder %s149, %s150
    %p159 = scmp.eq.s32.totalorder %s34, 0
    %p160 = por %p158, %p159
    %p161 = scmp.ne.s32.totalorder %s149, %s150
    %p162 = scmp.eq.s32.totalorder %s35, 7
    %p163 = por %p161, %p162
    %p165 = scmp.ne.s32.totalorder %s150, %s164
    %p166 = scmp.eq.s32.totalorder %s35, 0
    %p167 = por %p165, %p166
    %s169 = sadd.s32 %s168, 1
    %p172 = scmp.eq.s32.totalorder %s29, 7
    %p173 = scmp.ne.s32.totalorder %s168, %s170
    %p174 = scmp.eq.s32.totalorder %s29, 0
    %p175 = por %p173, %p174
    %p176 = scmp.ne.s32.totalorder %s168, %s170
    %p177 = scmp.eq.s32.totalorder %s34, 7
    %p178 = por %p176, %p177
    %p179 = scmp.ne.s32.totalorder %s170, %s171
    %p180 = scmp.eq.s32.totalorder %s34, 0
    %p181 = por %p179, %p180
    %p182 = scmp.ne.s32.totalorder %s170, %s171
    %p183 = scmp.eq.s32.totalorder %s35, 7
    %p184 = por %p182, %p183
    %p186 = scmp.ne.s32.totalorder %s171, %s185
    %p187 = scmp.eq.s32.totalorder %s35, 0
    %p188 = por %p186, %p187
    %s190 = sadd.s32 %s189, 1
    %p193 = scmp.eq.s32.totalorder %s29, 7
    %p194 = scmp.ne.s32.totalorder %s189, %s191
    %p195 = scmp.eq.s32.totalorder %s29, 0
    %p196 = por %p194, %p195
    %p197 = scmp.ne.s32.totalorder %s189, %s191
    %p198 = scmp.eq.s32.totalorder %s34, 7
    %p199 = por %p197, %p198
    %p200 = scmp.ne.s32.totalorder %s191, %s192
    %p201 = scmp.eq.s32.totalorder %s34, 0
    %p202 = por %p200, %p201
    %p203 = scmp.ne.s32.totalorder %s191, %s192
    %p204 = scmp.eq.s32.totalorder %s35, 7
    %p205 = por %p203, %p204
    %p207 = scmp.ne.s32.totalorder %s192, %s206
    %p208 = scmp.eq.s32.totalorder %s35, 0
    %p209 = por %p207, %p208
    %s211 = sadd.s32 %s210, 1
    %p214 = scmp.eq.s32.totalorder %s29, 7
    %p215 = scmp.ne.s32.totalorder %s210, %s212
    %p216 = scmp.eq.s32.totalorder %s29, 0
    %p217 = por %p215, %p216
    %p218 = scmp.ne.s32.totalorder %s210, %s212
    %p219 = scmp.eq.s32.totalorder %s34, 7
    %p220 = por %p218, %p219
    %p221 = scmp.ne.s32.totalorder %s212, %s213
    %p222 = scmp.eq.s32.totalorder %s34, 0
    %p223 = por %p221, %p222
    %p224 = scmp.ne.s32.totalorder %s212, %s213
    %p225 = scmp.eq.s32.totalorder %s35, 7
    %p226 = por %p224, %p225
    %p228 = scmp.ne.s32.totalorder %s213, %s227
    %p229 = scmp.eq.s32.totalorder %s35, 0
    %p230 = por %p228, %p229
    %s232 = sadd.s32 %s231, 1
    %p235 = scmp.eq.s32.totalorder %s29, 7
    %p236 = scmp.ne.s32.totalorder %s231, %s233
    %p237 = scmp.eq.s32.totalorder %s29, 0
    %p238 = por %p236, %p237
    %p239 = scmp.ne.s32.totalorder %s231, %s233
    %p240 = scmp.eq.s32.totalorder %s34, 7
    %p241 = por %p239, %p240
    %p242 = scmp.ne.s32.totalorder %s233, %s234
    %p243 = scmp.eq.s32.totalorder %s34, 0
    %p244 = por %p242, %p243
    %p245 = scmp.ne.s32.totalorder %s233, %s234
    %p246 = scmp.eq.s32.totalorder %s35, 7
    %p247 = por %p245, %p246
    %p249 = scmp.ne.s32.totalorder %s234, %s248
    %p250 = scmp.eq.s32.totalorder %s35, 0
    %p251 = por %p249, %p250
    %s253 = sadd.s32 %s252, 1
    %p256 = scmp.eq.s32.totalorder %s29, 7
    %p257 = scmp.ne.s32.totalorder %s252, %s254
    %p258 = scmp.eq.s32.totalorder %s29, 0
    %p259 = por %p257, %p258
    %p260 = scmp.ne.s32.totalorder %s252, %s254
    %p261 = scmp.eq.s32.totalorder %s34, 7
    %p262 = por %p260, %p261
    %p263 = scmp.ne.s32.totalorder %s254, %s255
    %p264 = scmp.eq.s32.totalorder %s34, 0
    %p265 = por %p263, %p264
    %p266 = scmp.ne.s32.totalorder %s254, %s255
    %p267 = scmp.eq.s32.totalorder %s35, 7
    %p268 = por %p266, %p267
    %p270 = scmp.ne.s32.totalorder %s255, %s269
    %p271 = scmp.eq.s32.totalorder %s35, 0
    %p272 = por %p270, %p271
    %s274 = sadd.s32 %s273, 1
    %p277 = scmp.eq.s32.totalorder %s29, 7
    %p278 = scmp.ne.s32.totalorder %s273, %s275
    %p279 = scmp.eq.s32.totalorder %s29, 0
    %p280 = por %p278, %p279
    %p281 = scmp.ne.s32.totalorder %s273, %s275
    %p282 = scmp.eq.s32.totalorder %s34, 7
    %p283 = por %p281, %p282
    %p284 = scmp.ne.s32.totalorder %s275, %s276
    %p285 = scmp.eq.s32.totalorder %s34, 0
    %p286 = por %p284, %p285
    %p287 = scmp.ne.s32.totalorder %s275, %s276
    %p288 = scmp.eq.s32.totalorder %s35, 7
    %p289 = por %p287, %p288
    %p291 = scmp.ne.s32.totalorder %s276, %s290
    %p292 = scmp.eq.s32.totalorder %s35, 0
    %p293 = por %p291, %p292
    %s295 = sadd.s32 %s294, 1
    %p298 = scmp.eq.s32.totalorder %s29, 7
    %p299 = scmp.ne.s32.totalorder %s294, %s296
    %p300 = scmp.eq.s32.totalorder %s29, 0
    %p301 = por %p299, %p300
    %p302 = scmp.ne.s32.totalorder %s294, %s296
    %p303 = scmp.eq.s32.totalorder %s34, 7
    %p304 = por %p302, %p303
    %p305 = scmp.ne.s32.totalorder %s296, %s297
    %p306 = scmp.eq.s32.totalorder %s34, 0
    %p307 = por %p305, %p306
    %p308 = scmp.ne.s32.totalorder %s296, %s297
    %p309 = scmp.eq.s32.totalorder %s35, 7
    %p310 = por %p308, %p309
    %p312 = scmp.ne.s32.totalorder %s297, %s311
    %p313 = scmp.eq.s32.totalorder %s35, 0
    %p314 = por %p312, %p313
    %s316 = sadd.s32 %s315, 1
    %p319 = scmp.eq.s32.totalorder %s29, 7
    %p320 = scmp.ne.s32.totalorder %s315, %s317
    %p321 = scmp.eq.s32.totalorder %s29, 0
    %p322 = por %p320, %p321
    %p323 = scmp.ne.s32.totalorder %s315, %s317
    %p324 = scmp.eq.s32.totalorder %s34, 7
    %p325 = por %p323, %p324
    %p326 = scmp.ne.s32.totalorder %s317, %s318
    %p327 = scmp.eq.s32.totalorder %s34, 0
    %p328 = por %p326, %p327
    %p329 = scmp.ne.s32.totalorder %s317, %s318
    %p330 = scmp.eq.s32.totalorder %s35, 7
    %p331 = por %p329, %p330
    %p333 = scmp.ne.s32.totalorder %s318, %s332
    %p334 = scmp.eq.s32.totalorder %s35, 0
    %p335 = por %p333, %p334
    %s337 = sadd.s32 %s336, 1
    %p340 = scmp.eq.s32.totalorder %s29, 7
    %p341 = scmp.ne.s32.totalorder %s336, %s338
    %p342 = scmp.eq.s32.totalorder %s29, 0
    %p343 = por %p341, %p342
    %p344 = scmp.ne.s32.totalorder %s336, %s338
    %p345 = scmp.eq.s32.totalorder %s34, 7
    %p346 = por %p344, %p345
    %p347 = scmp.ne.s32.totalorder %s338, %s339
    %p348 = scmp.eq.s32.totalorder %s34, 0
    %p349 = por %p347, %p348
    %p350 = scmp.ne.s32.totalorder %s338, %s339
    %p351 = scmp.eq.s32.totalorder %s35, 7
    %p352 = por %p350, %p351
    %p354 = scmp.ne.s32.totalorder %s339, %s353
    %p355 = scmp.eq.s32.totalorder %s35, 0
    %p356 = por %p354, %p355
    %s358 = sadd.s32 %s357, 1
    %p361 = scmp.eq.s32.totalorder %s29, 7
    %p362 = scmp.ne.s32.totalorder %s357, %s359
    %p363 = scmp.eq.s32.totalorder %s29, 0
    %p364 = por %p362, %p363
    %p365 = scmp.ne.s32.totalorder %s357, %s359
    %p366 = scmp.eq.s32.totalorder %s34, 7
    %p367 = por %p365, %p366
    %p368 = scmp.ne.s32.totalorder %s359, %s360
    %p369 = scmp.eq.s32.totalorder %s34, 0
    %p370 = por %p368, %p369
    %p371 = scmp.ne.s32.totalorder %s359, %s360
    %p372 = scmp.eq.s32.totalorder %s35, 7
    %p373 = por %p371, %p372
    %p375 = scmp.ne.s32.totalorder %s360, %s374
    %p376 = scmp.eq.s32.totalorder %s35, 0
    %p377 = por %p375, %p376
    %s379 = sadd.s32 %s378, 1
    %p382 = scmp.eq.s32.totalorder %s29, 7
    %p383 = scmp.ne.s32.totalorder %s378, %s380
    %p384 = scmp.eq.s32.totalorder %s29, 0
    %p385 = por %p383, %p384
    %p386 = scmp.ne.s32.totalorder %s378, %s380
    %p387 = scmp.eq.s32.totalorder %s34, 7
    %p388 = por %p386, %p387
    %p389 = scmp.ne.s32.totalorder %s380, %s381
    %p390 = scmp.eq.s32.totalorder %s34, 0
    %p391 = por %p389, %p390
    %p392 = scmp.ne.s32.totalorder %s380, %s381
    %p393 = scmp.eq.s32.totalorder %s35, 7
    %p394 = por %p392, %p393
    %p396 = scmp.ne.s32.totalorder %s381, %s395
    %p397 = scmp.eq.s32.totalorder %s35, 0
    %p398 = por %p396, %p397
    %s400 = sadd.s32 %s399, 1
    %p403 = scmp.eq.s32.totalorder %s29, 7
    %p404 = scmp.ne.s32.totalorder %s399, %s401
    %p405 = scmp.eq.s32.totalorder %s29, 0
    %p406 = por %p404, %p405
    %p407 = scmp.ne.s32.totalorder %s399, %s401
    %p408 = scmp.eq.s32.totalorder %s34, 7
    %p409 = por %p407, %p408
    %p410 = scmp.ne.s32.totalorder %s401, %s402
    %p411 = scmp.eq.s32.totalorder %s34, 0
    %p412 = por %p410, %p411
    %p413 = scmp.ne.s32.totalorder %s401, %s402
    %p414 = scmp.eq.s32.totalorder %s35, 7
    %p415 = por %p413, %p414
    %p417 = scmp.ne.s32.totalorder %s402, %s416
    %p418 = scmp.eq.s32.totalorder %s35, 0
    %p419 = por %p417, %p418
    %s421 = sadd.s32 %s420, 1
    %p424 = scmp.eq.s32.totalorder %s29, 7
    %p425 = scmp.ne.s32.totalorder %s420, %s422
    %p426 = scmp.eq.s32.totalorder %s29, 0
    %p427 = por %p425, %p426
    %p428 = scmp.ne.s32.totalorder %s420, %s422
    %p429 = scmp.eq.s32.totalorder %s34, 7
    %p430 = por %p428, %p429
    %p431 = scmp.ne.s32.totalorder %s422, %s423
    %p432 = scmp.eq.s32.totalorder %s34, 0
    %p433 = por %p431, %p432
    %p434 = scmp.ne.s32.totalorder %s422, %s423
    %p435 = scmp.eq.s32.totalorder %s35, 7
    %p436 = por %p434, %p435
    %p438 = scmp.ne.s32.totalorder %s423, %s437
    %p439 = scmp.eq.s32.totalorder %s35, 0
    %p440 = por %p438, %p439
    %s442 = sadd.s32 %s441, 1
    %p445 = scmp.eq.s32.totalorder %s29, 7
    %p446 = scmp.ne.s32.totalorder %s441, %s443
    %p447 = scmp.eq.s32.totalorder %s29, 0
    %p448 = por %p446, %p447
    %p449 = scmp.ne.s32.totalorder %s441, %s443
    %p450 = scmp.eq.s32.totalorder %s34, 7
    %p451 = por %p449, %p450
    %p452 = scmp.ne.s32.totalorder %s443, %s444
    %p453 = scmp.eq.s32.totalorder %s34, 0
    %p454 = por %p452, %p453
    %p455 = scmp.ne.s32.totalorder %s443, %s444
    %p456 = scmp.eq.s32.totalorder %s35, 7
    %p457 = por %p455, %p456
    %p459 = scmp.ne.s32.totalorder %s444, %s458
    %p460 = scmp.eq.s32.totalorder %s35, 0
    %p461 = por %p459, %p460
    %s463 = sadd.s32 %s462, 1
    %p466 = scmp.eq.s32.totalorder %s29, 7
    %p467 = scmp.ne.s32.totalorder %s462, %s464
    %p468 = scmp.eq.s32.totalorder %s29, 0
    %p469 = por %p467, %p468
    %p470 = scmp.ne.s32.totalorder %s462, %s464
    %p471 = scmp.eq.s32.totalorder %s34, 7
    %p472 = por %p470, %p471
    %p473 = scmp.ne.s32.totalorder %s464, %s465
    %p474 = scmp.eq.s32.totalorder %s34, 0
    %p475 = por %p473, %p474
    %p476 = scmp.ne.s32.totalorder %s464, %s465
    %p477 = scmp.eq.s32.totalorder %s35, 7
    %p478 = por %p476, %p477
    %p480 = scmp.ne.s32.totalorder %s465, %s479
    %p481 = scmp.eq.s32.totalorder %s35, 0
    %p482 = por %p480, %p481
    %s483 = ssub.s32 %s29, %s36
    %p484 = scmp.eq.s32.totalorder %s483, 0
    %s486 = sadd.s32 %s485, 1
    %s487 = scalar_select %p484, %s485, %s486
    %p490 = pneg %p484
    %p491 = scmp.eq.s32.totalorder %s29, 7
    %p492 = por %p490, %p491
    %p493 = scmp.ne.s32.totalorder %s485, %s488
    %p494 = scmp.eq.s32.totalorder %s29, 0
    %p495 = por %p493, %p494
    %p496 = scmp.ne.s32.totalorder %s485, %s488
    %p497 = scmp.eq.s32.totalorder %s34, 7
    %p498 = por %p496, %p497
    %p499 = scmp.ne.s32.totalorder %s488, %s489
    %p500 = scmp.eq.s32.totalorder %s34, 0
    %p501 = por %p499, %p500
    %p502 = scmp.ne.s32.totalorder %s488, %s489
    %p503 = scmp.eq.s32.totalorder %s35, 7
    %p504 = por %p502, %p503
    %p506 = scmp.ne.s32.totalorder %s489, %s505
    %p507 = scmp.eq.s32.totalorder %s35, 0
    %p508 = por %p506, %p507
    %p509 = scmp.le.s32.totalorder 1, %s29
    %p510 = scmp.lt.s32.totalorder %s29, 9
    %p511 = pnand %p509, %p510
    %p512 = pneg %p511
    // Predicated region
    $region9: #{decoder_forward.1} parent=5 // pred_check
      _
    $region10: #{decoder_forward.1} parent=5 // pred_check_branch
      %514 = sbr.rel (%p511) target = $region12
    $region11: #{decoder_forward.1} parent=5 // pred_region
      %s515 = ssub.s32 %s29, 1
      // Predicated region
      $region13: #{decoder_forward.1} parent=11 // pred_check
        %p516 = pneg %p76
      $region14: #{decoder_forward.1} parent=11 // pred_check_branch
        %518 = sbr.rel (%p516) target = $region16
      $region15: #{decoder_forward.1} parent=11 // pred_region
        _
      $region16: #{decoder_forward.1} parent=11 // pred_fallthru
        _
      // Predicated region
      $region17: #{decoder_forward.1} parent=11 // pred_check
        %p519 = pneg %p97
      $region18: #{decoder_forward.1} parent=11 // pred_check_branch
        %521 = sbr.rel (%p519) target = $region20
      $region19: #{decoder_forward.1} parent=11 // pred_region
        _
      $region20: #{decoder_forward.1} parent=11 // pred_fallthru
        _
      // Predicated region
      $region21: #{decoder_forward.1} parent=11 // pred_check
        %p522 = pneg %p118
      $region22: #{decoder_forward.1} parent=11 // pred_check_branch
        %524 = sbr.rel (%p522) target = $region24
      $region23: #{decoder_forward.1} parent=11 // pred_region
        _
      $region24: #{decoder_forward.1} parent=11 // pred_fallthru
        _
      // Predicated region
      $region25: #{decoder_forward.1} parent=11 // pred_check
        %p525 = pneg %p139
      $region26: #{decoder_forward.1} parent=11 // pred_check_branch
        %527 = sbr.rel (%p525) target = $region28
      $region27: #{decoder_forward.1} parent=11 // pred_region
        _
      $region28: #{decoder_forward.1} parent=11 // pred_fallthru
        _
      // Predicated region
      $region29: #{decoder_forward.1} parent=11 // pred_check
        %p528 = pneg %p160
      $region30: #{decoder_forward.1} parent=11 // pred_check_branch
        %530 = sbr.rel (%p528) target = $region32
      $region31: #{decoder_forward.1} parent=11 // pred_region
        _
      $region32: #{decoder_forward.1} parent=11 // pred_fallthru
        _
      // Predicated region
      $region33: #{decoder_forward.1} parent=11 // pred_check
        %p531 = pneg %p181
      $region34: #{decoder_forward.1} parent=11 // pred_check_branch
        %533 = sbr.rel (%p531) target = $region36
      $region35: #{decoder_forward.1} parent=11 // pred_region
        _
      $region36: #{decoder_forward.1} parent=11 // pred_fallthru
        _
      // Predicated region
      $region37: #{decoder_forward.1} parent=11 // pred_check
        %p534 = pneg %p202
      $region38: #{decoder_forward.1} parent=11 // pred_check_branch
        %536 = sbr.rel (%p534) target = $region40
      $region39: #{decoder_forward.1} parent=11 // pred_region
        _
      $region40: #{decoder_forward.1} parent=11 // pred_fallthru
        _
      // Predicated region
      $region41: #{decoder_forward.1} parent=11 // pred_check
        %p537 = pneg %p223
      $region42: #{decoder_forward.1} parent=11 // pred_check_branch
        %539 = sbr.rel (%p537) target = $region44
      $region43: #{decoder_forward.1} parent=11 // pred_region
        _
      $region44: #{decoder_forward.1} parent=11 // pred_fallthru
        _
      // Predicated region
      $region45: #{decoder_forward.1} parent=11 // pred_check
        %p540 = pneg %p244
      $region46: #{decoder_forward.1} parent=11 // pred_check_branch
        %542 = sbr.rel (%p540) target = $region48
      $region47: #{decoder_forward.1} parent=11 // pred_region
        _
      $region48: #{decoder_forward.1} parent=11 // pred_fallthru
        _
      // Predicated region
      $region49: #{decoder_forward.1} parent=11 // pred_check
        %p543 = pneg %p265
      $region50: #{decoder_forward.1} parent=11 // pred_check_branch
        %545 = sbr.rel (%p543) target = $region52
      $region51: #{decoder_forward.1} parent=11 // pred_region
        _
      $region52: #{decoder_forward.1} parent=11 // pred_fallthru
        _
      // Predicated region
      $region53: #{decoder_forward.1} parent=11 // pred_check
        %p546 = pneg %p286
      $region54: #{decoder_forward.1} parent=11 // pred_check_branch
        %548 = sbr.rel (%p546) target = $region56
      $region55: #{decoder_forward.1} parent=11 // pred_region
        _
      $region56: #{decoder_forward.1} parent=11 // pred_fallthru
        _
      // Predicated region
      $region57: #{decoder_forward.1} parent=11 // pred_check
        %p549 = pneg %p307
      $region58: #{decoder_forward.1} parent=11 // pred_check_branch
        %551 = sbr.rel (%p549) target = $region60
      $region59: #{decoder_forward.1} parent=11 // pred_region
        _
      $region60: #{decoder_forward.1} parent=11 // pred_fallthru
        _
      // Predicated region
      $region61: #{decoder_forward.1} parent=11 // pred_check
        %p552 = pneg %p328
      $region62: #{decoder_forward.1} parent=11 // pred_check_branch
        %554 = sbr.rel (%p552) target = $region64
      $region63: #{decoder_forward.1} parent=11 // pred_region
        _
      $region64: #{decoder_forward.1} parent=11 // pred_fallthru
        _
      // Predicated region
      $region65: #{decoder_forward.1} parent=11 // pred_check
        %p555 = pneg %p349
      $region66: #{decoder_forward.1} parent=11 // pred_check_branch
        %557 = sbr.rel (%p555) target = $region68
      $region67: #{decoder_forward.1} parent=11 // pred_region
        _
      $region68: #{decoder_forward.1} parent=11 // pred_fallthru
        _
      // Predicated region
      $region69: #{decoder_forward.1} parent=11 // pred_check
        %p558 = pneg %p370
      $region70: #{decoder_forward.1} parent=11 // pred_check_branch
        %560 = sbr.rel (%p558) target = $region72
      $region71: #{decoder_forward.1} parent=11 // pred_region
        _
      $region72: #{decoder_forward.1} parent=11 // pred_fallthru
        _
      // Predicated region
      $region73: #{decoder_forward.1} parent=11 // pred_check
        %p561 = pneg %p391
      $region74: #{decoder_forward.1} parent=11 // pred_check_branch
        %563 = sbr.rel (%p561) target = $region76
      $region75: #{decoder_forward.1} parent=11 // pred_region
        _
      $region76: #{decoder_forward.1} parent=11 // pred_fallthru
        _
      // Predicated region
      $region77: #{decoder_forward.1} parent=11 // pred_check
        %p564 = pneg %p412
      $region78: #{decoder_forward.1} parent=11 // pred_check_branch
        %566 = sbr.rel (%p564) target = $region80
      $region79: #{decoder_forward.1} parent=11 // pred_region
        _
      $region80: #{decoder_forward.1} parent=11 // pred_fallthru
        _
      // Predicated region
      $region81: #{decoder_forward.1} parent=11 // pred_check
        %p567 = pneg %p433
      $region82: #{decoder_forward.1} parent=11 // pred_check_branch
        %569 = sbr.rel (%p567) target = $region84
      $region83: #{decoder_forward.1} parent=11 // pred_region
        _
      $region84: #{decoder_forward.1} parent=11 // pred_fallthru
        _
      // Predicated region
      $region85: #{decoder_forward.1} parent=11 // pred_check
        %p570 = pneg %p454
      $region86: #{decoder_forward.1} parent=11 // pred_check_branch
        %572 = sbr.rel (%p570) target = $region88
      $region87: #{decoder_forward.1} parent=11 // pred_region
        _
      $region88: #{decoder_forward.1} parent=11 // pred_fallthru
        _
      // Predicated region
      $region89: #{decoder_forward.1} parent=11 // pred_check
        %p573 = pneg %p475
      $region90: #{decoder_forward.1} parent=11 // pred_check_branch
        %575 = sbr.rel (%p573) target = $region92
      $region91: #{decoder_forward.1} parent=11 // pred_region
        _
      $region92: #{decoder_forward.1} parent=11 // pred_fallthru
        _
    $region12: #{decoder_forward.1} parent=5 // pred_fallthru
      _
    %p576 = scmp.lt.s32.totalorder %s29, 8
    // Predicated region
    $region93: #{decoder_forward.1} parent=5 // pred_check
      %p577 = pneg %p576
    $region94: #{decoder_forward.1} parent=5 // pred_check_branch
      %579 = sbr.rel (%p577) target = $region96
    $region95: #{decoder_forward.1} parent=5 // pred_region
      // Predicated region
      $region97: #{decoder_forward.1} parent=95 // pred_check
        %p580 = pneg %p49
      $region98: #{decoder_forward.1} parent=95 // pred_check_branch
        %582 = sbr.rel (%p580) target = $region100
      $region99: #{decoder_forward.1} parent=95 // pred_region
        %p583 = scmp.lt.s32.totalorder %s29, 7
        %s584 = scalar_select %p583, %s29, 7
        %s585 = smul.addr %s584, 162
        %s586 = smul.addr %s585, 8
        %s587 = scalar_lea.vmem %s0, %s586
      $region100: #{decoder_forward.1} parent=95 // pred_fallthru
        _
    $region96: #{decoder_forward.1} parent=5 // pred_fallthru
      _
    %p588 = scmp.le.s32.totalorder 1, %s29
    %p589 = scmp.lt.s32.totalorder %s29, 9
    %p590 = pnand %p588, %p589
    %p591 = pneg %p590
    // Predicated region
    $region101: #{decoder_forward.1} parent=5 // pred_check
      _
    $region102: #{decoder_forward.1} parent=5 // pred_check_branch
      %593 = sbr.rel (%p590) target = $region104
    $region103: #{decoder_forward.1} parent=5 // pred_region
      %s594 = ssub.s32 %s29, 1
      %p595 = scmp.lt.s32.totalorder %s34, 7
      %s596 = scalar_select %p595, %s34, 7
      %s597 = smul.addr %s596, 162
      %s598 = smul.addr %s597, 8
      %s599 = scalar_lea.vmem %s0, %s598
      %p600 = pneg %p55
      %p601 = pneg %p52
      %p602 = pneg %p76
      %p603 = pneg %p73
      %p604 = pneg %p97
      %p605 = pneg %p94
      %p606 = pneg %p118
      %p607 = pneg %p115
      %p608 = pneg %p139
      %p609 = pneg %p136
      %p610 = pneg %p160
      %p611 = pneg %p157
      %p612 = pneg %p181
      %p613 = pneg %p178
      %p614 = pneg %p202
      %p615 = pneg %p199
      %p616 = pneg %p223
      %p617 = pneg %p220
      %p618 = pneg %p244
      %p619 = pneg %p241
      %p620 = pneg %p265
      %p621 = pneg %p262
      %p622 = pneg %p286
      %p623 = pneg %p283
      %p624 = pneg %p307
      %p625 = pneg %p304
      %p626 = pneg %p328
      %p627 = pneg %p325
      %p628 = pneg %p349
      %p629 = pneg %p346
      %p630 = pneg %p370
      %p631 = pneg %p367
      %p632 = pneg %p391
      %p633 = pneg %p388
      %p634 = pneg %p412
      %p635 = pneg %p409
      %p636 = pneg %p433
      %p637 = pneg %p430
      %p638 = pneg %p454
      %p639 = pneg %p451
      %p640 = pneg %p475
      %p641 = pneg %p472
      %p642 = pneg %p501
      %p643 = pneg %p498
      %p644 = scmp.lt.s32.totalorder %s34, 7
      %s645 = scalar_select %p644, %s34, 7
      %s646 = smul.addr %s645, 18
      %s647 = scalar_lea.vmem %s21, %s646
      %p648 = scmp.lt.s32.totalorder %s34, 7
      %s649 = scalar_select %p648, %s34, 7
      %s650 = smul.addr %s649, 162
      %s651 = smul.addr %s650, 8
      %s652 = scalar_lea.vmem %s0, %s651
      %p653 = scmp.lt.s32.totalorder %s34, 7
      %s654 = scalar_select %p653, %s34, 7
      %s655 = smul.addr %s654, 18
      %s656 = scalar_lea.vmem %s21, %s655
      %v657 = vld [vmem:[%s1] sm:$0xff]
      %v658 = vld [vmem:[%s1 + $0x8] sm:$0xff]
      %v659 = vld [vmem:[%s1 + $0x10] sm:$0xff]
      %v660 = vld [vmem:[%s1 + $0x18] sm:$0xff]
      %v661 = vld [vmem:[%s1 + $0x20] sm:$0xff]
      %v662 = vld [vmem:[%s1 + $0x28] sm:$0xff]
      %v663 = vld [vmem:[%s1 + $0x30] sm:$0xff]
      %v664 = vld [vmem:[%s1 + $0x38] sm:$0xff]
      %v665 = vld [vmem:[%s1 + $0x40] sm:$0xff]
      %v666 = vld [vmem:[%s1 + $0x48] sm:$0xff]
      %v667 = vld [vmem:[%s1 + $0x50] sm:$0xff]
      %v668 = vld [vmem:[%s1 + $0x58] sm:$0xff]
      %v669 = vld [vmem:[%s1 + $0x60] sm:$0xff]
      %v670 = vld [vmem:[%s1 + $0x68] sm:$0xff]
      %v671 = vld [vmem:[%s1 + $0x70] sm:$0xff]
      %v672 = vld [vmem:[%s1 + $0x78] sm:$0xff]
      %v673 = vld [vmem:[%s1 + $0x80] sm:$0xff]
      %v674 = vld [vmem:[%s1 + $0x88] sm:$0xff]
      %v675 = vld [vmem:[%s1 + $0x90] sm:$0xff]
      %v676 = vld [vmem:[%s1 + $0x98] sm:$0xff]
      %v677 = vld [vmem:[%s1 + $0xa0] sm:$0xff]
      %v678 = vld [vmem:[%s1 + $0xa8] sm:$0xff]
      %v679 = vld [vmem:[%s1 + $0xb0] sm:$0xff]
      %v680 = vld [vmem:[%s1 + $0xb8] sm:$0xff]
      %v681 = vld [vmem:[%s1 + $0xc0] sm:$0xff]
      %v682 = vld [vmem:[%s1 + $0xc8] sm:$0xff]
      %v683 = vld [vmem:[%s1 + $0xd0] sm:$0xff]
      %v684 = vld [vmem:[%s1 + $0xd8] sm:$0xff]
      %v685 = vld [vmem:[%s1 + $0xe0] sm:$0xff]
      %v686 = vld [vmem:[%s1 + $0xe8] sm:$0xff]
      %v687 = vld [vmem:[%s1 + $0xf0] sm:$0xff]
      %v688 = vld [vmem:[%s1 + $0xf8] sm:$0xff]
      %v689 = vld [vmem:[%s1 + $0x100] sm:$0xff]
      %v690 = vld [vmem:[%s1 + $0x108] sm:$0xff]
      %v691 = vld [vmem:[%s1 + $0x110] sm:$0xff]
      %v692 = vld [vmem:[%s1 + $0x118] sm:$0xff]
      %v693 = vld [vmem:[%s1 + $0x120] sm:$0xff]
      %v694 = vld [vmem:[%s1 + $0x128] sm:$0xff]
      %v695 = vld [vmem:[%s1 + $0x130] sm:$0xff]
      %v696 = vld [vmem:[%s1 + $0x138] sm:$0xff]
      %v697 = vld [vmem:[%s1 + $0x140] sm:$0xff]
      %v698 = vld [vmem:[%s1 + $0x148] sm:$0xff]
      %v699 = vld [vmem:[%s1 + $0x150] sm:$0xff]
      %v700 = vld [vmem:[%s1 + $0x158] sm:$0xff]
      %v701 = vld [vmem:[%s1 + $0x160] sm:$0xff]
      %v702 = vld [vmem:[%s1 + $0x168] sm:$0xff]
      %v703 = vld [vmem:[%s1 + $0x170] sm:$0xff]
      %v704 = vld [vmem:[%s1 + $0x178] sm:$0xff]
      %v705 = vld [vmem:[%s1 + $0x180] sm:$0xff]
      %v706 = vld [vmem:[%s1 + $0x188] sm:$0xff]
      %v707 = vld [vmem:[%s1 + $0x190] sm:$0xff]
      %v708 = vld [vmem:[%s1 + $0x198] sm:$0xff]
      %v709 = vld [vmem:[%s1 + $0x1a0] sm:$0xff]
      %v710 = vld [vmem:[%s1 + $0x1a8] sm:$0xff]
      %v711 = vld [vmem:[%s1 + $0x1b0] sm:$0xff]
      %v712 = vld [vmem:[%s1 + $0x1b8] sm:$0xff]
      %v713 = vld [vmem:[%s1 + $0x1c0] sm:$0xff]
      %v714 = vld [vmem:[%s1 + $0x1c8] sm:$0xff]
      %v715 = vld [vmem:[%s1 + $0x1d0] sm:$0xff]
      %v716 = vld [vmem:[%s1 + $0x1d8] sm:$0xff]
      %v717 = vld [vmem:[%s1 + $0x1e0] sm:$0xff]
      %v718 = vld [vmem:[%s1 + $0x1e8] sm:$0xff]
      %v719 = vld [vmem:[%s1 + $0x1f0] sm:$0xff]
      %v720 = vld [vmem:[%s1 + $0x1f8] sm:$0xff]
      %v721 = vld [vmem:[%s1 + $0x200] sm:$0xff]
      %v722 = vld [vmem:[%s1 + $0x208] sm:$0xff]
      %v723 = vld [vmem:[%s652] sm:$0xff]
      %v724 = vld [vmem:[%s652 + $0x8] sm:$0xff]
      %v725 = vld [vmem:[%s652 + $0x10] sm:$0xff]
      %v726 = vld [vmem:[%s652 + $0x18] sm:$0xff]
      %v727 = vld [vmem:[%s652 + $0x20] sm:$0xff]
      %v728 = vld [vmem:[%s652 + $0x28] sm:$0xff]
      %v729 = vld [vmem:[%s652 + $0x30] sm:$0xff]
      %v730 = vld [vmem:[%s652 + $0x38] sm:$0xff]
      %v731 = vld [vmem:[%s652 + $0x40] sm:$0xff]
      %v732 = vld [vmem:[%s652 + $0x48] sm:$0xff]
      %v733 = vld [vmem:[%s652 + $0x50] sm:$0xff]
      %v734 = vld [vmem:[%s652 + $0x58] sm:$0xff]
      %v735 = vld [vmem:[%s652 + $0x60] sm:$0xff]
      %v736 = vld [vmem:[%s652 + $0x68] sm:$0xff]
      %v737 = vld [vmem:[%s652 + $0x70] sm:$0xff]
      %v738 = vld [vmem:[%s652 + $0x78] sm:$0xff]
      %v739 = vld [vmem:[%s652 + $0x80] sm:$0xff]
      %v740 = vld [vmem:[%s652 + $0x88] sm:$0xff]
      %v741 = vld [vmem:[%s652 + $0x90] sm:$0xff]
      %v742 = vld [vmem:[%s652 + $0x98] sm:$0xff]
      %v743 = vld [vmem:[%s652 + $0xa0] sm:$0xff]
      %v744 = vld [vmem:[%s652 + $0xa8] sm:$0xff]
      %v745 = vld [vmem:[%s652 + $0xb0] sm:$0xff]
      %v746 = vld [vmem:[%s652 + $0xb8] sm:$0xff]
      %v747 = vld [vmem:[%s652 + $0xc0] sm:$0xff]
      %v748 = vld [vmem:[%s652 + $0xc8] sm:$0xff]
      %v749 = vld [vmem:[%s652 + $0xd0] sm:$0xff]
      %v750 = vld [vmem:[%s652 + $0xd8] sm:$0xff]
      %v751 = vld [vmem:[%s652 + $0xe0] sm:$0xff]
      %v752 = vld [vmem:[%s652 + $0xe8] sm:$0xff]
      %v753 = vld [vmem:[%s652 + $0xf0] sm:$0xff]
      %v754 = vld [vmem:[%s652 + $0xf8] sm:$0xff]
      %v755 = vld [vmem:[%s652 + $0x100] sm:$0xff]
      %v756 = vld [vmem:[%s652 + $0x108] sm:$0xff]
      %v757 = vld [vmem:[%s652 + $0x110] sm:$0xff]
      %v758 = vld [vmem:[%s652 + $0x118] sm:$0xff]
      %v759 = vld [vmem:[%s652 + $0x120] sm:$0xff]
      %v760 = vld [vmem:[%s652 + $0x128] sm:$0xff]
      %v761 = vld [vmem:[%s652 + $0x130] sm:$0xff]
      %v762 = vld [vmem:[%s652 + $0x138] sm:$0xff]
      %v763 = vld [vmem:[%s652 + $0x140] sm:$0xff]
      %v764 = vld [vmem:[%s652 + $0x148] sm:$0xff]
      %v765 = vld [vmem:[%s652 + $0x150] sm:$0xff]
      %v766 = vld [vmem:[%s652 + $0x158] sm:$0xff]
      %v767 = vld [vmem:[%s652 + $0x160] sm:$0xff]
      %v768 = vld [vmem:[%s652 + $0x168] sm:$0xff]
      %v769 = vld [vmem:[%s652 + $0x170] sm:$0xff]
      %v770 = vld [vmem:[%s652 + $0x178] sm:$0xff]
      %v771 = vld [vmem:[%s652 + $0x180] sm:$0xff]
      %v772 = vld [vmem:[%s652 + $0x188] sm:$0xff]
      %v773 = vld [vmem:[%s652 + $0x190] sm:$0xff]
      %v774 = vld [vmem:[%s652 + $0x198] sm:$0xff]
      %v775 = vld [vmem:[%s652 + $0x1a0] sm:$0xff]
      %v776 = vld [vmem:[%s652 + $0x1a8] sm:$0xff]
      %v777 = vld [vmem:[%s652 + $0x1b0] sm:$0xff]
      %v778 = vld [vmem:[%s652 + $0x1b8] sm:$0xff]
      %v779 = vld [vmem:[%s652 + $0x1c0] sm:$0xff]
      %v780 = vld [vmem:[%s652 + $0x1c8] sm:$0xff]
      %v781 = vld [vmem:[%s652 + $0x1d0] sm:$0xff]
      %v782 = vld [vmem:[%s652 + $0x1d8] sm:$0xff]
      %v783 = vld [vmem:[%s652 + $0x1e0] sm:$0xff]
      %v784 = vld [vmem:[%s652 + $0x1e8] sm:$0xff]
      %v785 = vld [vmem:[%s652 + $0x1f0] sm:$0xff]
      %v786 = vld [vmem:[%s652 + $0x1f8] sm:$0xff]
      %v787 = vld [vmem:[%s652 + $0x200] sm:$0xff]
      %v788 = vld [vmem:[%s652 + $0x208] sm:$0xff]
      %v789 = vld [vmem:[%s652 + $0x210] sm:$0xff]
      %v790 = vld [vmem:[%s652 + $0x218] sm:$0xff]
      %v791 = vld [vmem:[%s652 + $0x220] sm:$0xff]
      %v792 = vld [vmem:[%s652 + $0x228] sm:$0xff]
      %v793 = vld [vmem:[%s652 + $0x230] sm:$0xff]
      %v794 = vld [vmem:[%s652 + $0x238] sm:$0xff]
      %v795 = vld [vmem:[%s652 + $0x240] sm:$0xff]
      %v796 = vld [vmem:[%s652 + $0x248] sm:$0xff]
      %v797 = vld [vmem:[%s652 + $0x250] sm:$0xff]
      %v798 = vld [vmem:[%s652 + $0x258] sm:$0xff]
      %v799 = vld [vmem:[%s652 + $0x260] sm:$0xff]
      %v800 = vld [vmem:[%s652 + $0x268] sm:$0xff]
      %v801 = vld [vmem:[%s652 + $0x270] sm:$0xff]
      %v802 = vld [vmem:[%s652 + $0x278] sm:$0xff]
      %v803 = vld [vmem:[%s652 + $0x280] sm:$0xff]
      %v804 = vld [vmem:[%s652 + $0x288] sm:$0xff]
      %v805 = vld [vmem:[%s652 + $0x290] sm:$0xff]
      %v806 = vld [vmem:[%s652 + $0x298] sm:$0xff]
      %v807 = vld [vmem:[%s652 + $0x2a0] sm:$0xff]
      %v808 = vld [vmem:[%s652 + $0x2a8] sm:$0xff]
      %v809 = vld [vmem:[%s652 + $0x2b0] sm:$0xff]
      %v810 = vld [vmem:[%s652 + $0x2b8] sm:$0xff]
      %v811 = vld [vmem:[%s652 + $0x2c0] sm:$0xff]
      %v812 = vld [vmem:[%s652 + $0x2c8] sm:$0xff]
      %v813 = vld [vmem:[%s652 + $0x2d0] sm:$0xff]
      %v814 = vld [vmem:[%s652 + $0x2d8] sm:$0xff]
      %v815 = vld [vmem:[%s652 + $0x2e0] sm:$0xff]
      %v816 = vld [vmem:[%s652 + $0x2e8] sm:$0xff]
      %v817 = vld [vmem:[%s652 + $0x2f0] sm:$0xff]
      %v818 = vld [vmem:[%s652 + $0x2f8] sm:$0xff]
      %v819 = vld [vmem:[%s652 + $0x300] sm:$0xff]
      %v820 = vld [vmem:[%s652 + $0x308] sm:$0xff]
      %v821 = vld [vmem:[%s652 + $0x310] sm:$0xff]
      %v822 = vld [vmem:[%s652 + $0x318] sm:$0xff]
      %v823 = vld [vmem:[%s652 + $0x320] sm:$0xff]
      %v824 = vld [vmem:[%s652 + $0x328] sm:$0xff]
      %v825 = vld [vmem:[%s652 + $0x330] sm:$0xff]
      %v826 = vld [vmem:[%s652 + $0x338] sm:$0xff]
      %v827 = vld [vmem:[%s652 + $0x340] sm:$0xff]
      %v828 = vld [vmem:[%s652 + $0x348] sm:$0xff]
      %v829 = vld [vmem:[%s652 + $0x350] sm:$0xff]
      %v830 = vld [vmem:[%s652 + $0x358] sm:$0xff]
      %v831 = vld [vmem:[%s652 + $0x360] sm:$0xff]
      %v832 = vld [vmem:[%s652 + $0x368] sm:$0xff]
      %v833 = vld [vmem:[%s652 + $0x370] sm:$0xff]
      %v834 = vld [vmem:[%s652 + $0x378] sm:$0xff]
      %v835 = vld [vmem:[%s652 + $0x380] sm:$0xff]
      %v836 = vld [vmem:[%s652 + $0x388] sm:$0xff]
      %v837 = vld [vmem:[%s652 + $0x390] sm:$0xff]
      %v838 = vld [vmem:[%s652 + $0x398] sm:$0xff]
      %v839 = vld [vmem:[%s652 + $0x3a0] sm:$0xff]
      %v840 = vld [vmem:[%s652 + $0x3a8] sm:$0xff]
      %v841 = vld [vmem:[%s652 + $0x3b0] sm:$0xff]
      %v842 = vld [vmem:[%s652 + $0x3b8] sm:$0xff]
      %v843 = vld [vmem:[%s652 + $0x3c0] sm:$0xff]
      %v844 = vld [vmem:[%s652 + $0x3c8] sm:$0xff]
      %v845 = vld [vmem:[%s652 + $0x3d0] sm:$0xff]
      %v846 = vld [vmem:[%s652 + $0x3d8] sm:$0xff]
      %v847 = vld [vmem:[%s652 + $0x3e0] sm:$0xff]
      %v848 = vld [vmem:[%s652 + $0x3e8] sm:$0xff]
      %v849 = vld [vmem:[%s652 + $0x3f0] sm:$0xff]
      %v850 = vld [vmem:[%s652 + $0x3f8] sm:$0xff]
      %v851 = vld [vmem:[%s652 + $0x400] sm:$0xff]
      %v852 = vld [vmem:[%s652 + $0x408] sm:$0xff]
      %v853 = vld [vmem:[%s652 + $0x410] sm:$0xff]
      %v854 = vld [vmem:[%s652 + $0x418] sm:$0xff]
      %v855 = vld [vmem:[%s652 + $0x420] sm:$0xff]
      %v856 = vld [vmem:[%s652 + $0x428] sm:$0xff]
      %v857 = vld [vmem:[%s652 + $0x430] sm:$0xff]
      %v858 = vld [vmem:[%s652 + $0x438] sm:$0xff]
      %v859 = vld [vmem:[%s652 + $0x440] sm:$0xff]
      %v860 = vld [vmem:[%s652 + $0x448] sm:$0xff]
      %v861 = vld [vmem:[%s652 + $0x450] sm:$0xff]
      %v862 = vld [vmem:[%s652 + $0x458] sm:$0xff]
      %v863 = vld [vmem:[%s652 + $0x460] sm:$0xff]
      %v864 = vld [vmem:[%s652 + $0x468] sm:$0xff]
      %v865 = vld [vmem:[%s652 + $0x470] sm:$0xff]
      %v866 = vld [vmem:[%s652 + $0x478] sm:$0xff]
      %v867 = vld [vmem:[%s652 + $0x480] sm:$0xff]
      %v868 = vld [vmem:[%s652 + $0x488] sm:$0xff]
      %v869 = vld [vmem:[%s652 + $0x490] sm:$0xff]
      %v870 = vld [vmem:[%s652 + $0x498] sm:$0xff]
      %v871 = vld [vmem:[%s652 + $0x4a0] sm:$0xff]
      %v872 = vld [vmem:[%s652 + $0x4a8] sm:$0xff]
      %v873 = vld [vmem:[%s652 + $0x4b0] sm:$0xff]
      %v874 = vld [vmem:[%s652 + $0x4b8] sm:$0xff]
      %v875 = vld [vmem:[%s652 + $0x4c0] sm:$0xff]
      %v876 = vld [vmem:[%s652 + $0x4c8] sm:$0xff]
      %v877 = vld [vmem:[%s652 + $0x4d0] sm:$0xff]
      %v878 = vld [vmem:[%s652 + $0x4d8] sm:$0xff]
      %v879 = vld [vmem:[%s652 + $0x4e0] sm:$0xff]
      %v880 = vld [vmem:[%s652 + $0x4e8] sm:$0xff]
      %v881 = vld [vmem:[%s652 + $0x4f0] sm:$0xff]
      %v882 = vld [vmem:[%s652 + $0x4f8] sm:$0xff]
      %v883 = vld [vmem:[%s652 + $0x500] sm:$0xff]
      %v884 = vld [vmem:[%s652 + $0x508] sm:$0xff]
      %v885 = vld [vmem:[%s5] sm:$0xff]
      %v886 = vld [vmem:[%s5 + $0x8] sm:$0xff]
      %v887 = vld [vmem:[%s5 + $0x10] sm:$0xff]
      %v888 = vld [vmem:[%s5 + $0x18] sm:$0xff]
      %v889 = vld [vmem:[%s5 + $0x20] sm:$0xff]
      %v890 = vld [vmem:[%s5 + $0x28] sm:$0x1f]
      %v891 = vld [vmem:[%s4] sm:$0xff]
      %v892 = vld [vmem:[%s4 + $0x8] sm:$0xff]
      %v893 = vld [vmem:[%s4 + $0x10] sm:$0xff]
      %v894 = vld [vmem:[%s4 + $0x18] sm:$0xff]
      %v895 = vld [vmem:[%s4 + $0x20] sm:$0xff]
      %v896 = vld [vmem:[%s4 + $0x28] sm:$0xff]
      %898 = vset.pattern.permute.xlu0 0
      %899 = vperm.xlu0 %898, %v891
      %v900 = vpop.permute.xlu0 %899
      %903 = vset.pattern.permute.xlu0 0
      %904 = vperm.xlu0 %903, %v892
      %v905 = vpop.permute.xlu0 %904
      %908 = vset.pattern.permute.xlu0 0
      %909 = vperm.xlu0 %908, %v893
      %v910 = vpop.permute.xlu0 %909
      %913 = vset.pattern.permute.xlu0 0
      %914 = vperm.xlu0 %913, %v894
      %v915 = vpop.permute.xlu0 %914
      %918 = vset.pattern.permute.xlu0 0
      %919 = vperm.xlu0 %918, %v895
      %v920 = vpop.permute.xlu0 %919
      %923 = vset.pattern.permute.xlu0 0
      %924 = vperm.xlu0 %923, %v896
      %v925 = vpop.permute.xlu0 %924
      %vm927 = vcmask 130048
      %v929 = vsel %vm927, %v667, 0
      %v932 = vsel %vm927, %v678, 0
      %v935 = vsel %vm927, %v689, 0
      %v938 = vsel %vm927, %v700, 0
      %v941 = vsel %vm927, %v711, 0
      %v944 = vsel %vm927, %v722, 0
      %946 = vmatpush.msra.mxu0 %v738
      %947 = vmatpush.msra.mxu0 %v737
      %948 = vmatpush.msra.mxu0 %v736
      %949 = vmatpush.msra.mxu0 %v735
      %950 = vmatpush.msra.mxu0 %v734
      %951 = vmatpush.msra.mxu0 %v733
      %952 = vmatpush.msra.mxu0 %v732
      %953 = vmatpush.msra.mxu0 %v731
      %954 = vmatpush.msra.mxu0 %v730
      %955 = vmatpush.msra.mxu0 %v729
      %956 = vmatpush.msra.mxu0 %v728
      %957 = vmatpush.msra.mxu0 %v727
      %958 = vmatpush.msra.mxu0 %v726
      %959 = vmatpush.msra.mxu0 %v725
      %960 = vmatpush.msra.mxu0 %v724
      %961 = vmatpush.msra.mxu0 %v723
      %962 = vmatmul.f32.gmra.mxu0 %v657
      %v963 = vpop.f32.mrf.mxu0
      %v964 = vadd.f32 %v900, %v963
      %965 = vmatmul.f32.gmra.mxu0 %v668
      %v966 = vpop.f32.mrf.mxu0
      %v967 = vadd.f32 %v905, %v966
      %968 = vmatmul.f32.gmra.mxu0 %v679
      %v969 = vpop.f32.mrf.mxu0
      %v970 = vadd.f32 %v910, %v969
      %971 = vmatmul.f32.gmra.mxu0 %v690
      %v972 = vpop.f32.mrf.mxu0
      %v973 = vadd.f32 %v915, %v972
      %974 = vmatmul.f32.gmra.mxu0 %v701
      %v975 = vpop.f32.mrf.mxu0
      %v976 = vadd.f32 %v920, %v975
      %977 = vmatmul.f32.gmra.mxu0 %v712
      %v978 = vpop.f32.mrf.mxu0
      %v979 = vadd.f32 %v925, %v978
      %980 = vdwg.mxu0
      %981 = vmatpush.msra.mxu0 %v754
      %982 = vmatpush.msra.mxu0 %v753
      %983 = vmatpush.msra.mxu0 %v752
      %984 = vmatpush.msra.mxu0 %v751
      %985 = vmatpush.msra.mxu0 %v750
      %986 = vmatpush.msra.mxu0 %v749
      %987 = vmatpush.msra.mxu0 %v748
      %988 = vmatpush.msra.mxu0 %v747
      %989 = vmatpush.msra.mxu0 %v746
      %990 = vmatpush.msra.mxu0 %v745
      %991 = vmatpush.msra.mxu0 %v744
      %992 = vmatpush.msra.mxu0 %v743
      %993 = vmatpush.msra.mxu0 %v742
      %994 = vmatpush.msra.mxu0 %v741
      %995 = vmatpush.msra.mxu0 %v740
      %996 = vmatpush.msra.mxu0 %v739
      %997 = vmatmul.f32.gmra.mxu0 %v658
      %v998 = vpop.f32.mrf.mxu0
      %v999 = vadd.f32 %v964, %v998
      %1000 = vmatmul.f32.gmra.mxu0 %v669
      %v1001 = vpop.f32.mrf.mxu0
      %v1002 = vadd.f32 %v967, %v1001
      %1003 = vmatmul.f32.gmra.mxu0 %v680
      %v1004 = vpop.f32.mrf.mxu0
      %v1005 = vadd.f32 %v970, %v1004
      %1006 = vmatmul.f32.gmra.mxu0 %v691
      %v1007 = vpop.f32.mrf.mxu0
      %v1008 = vadd.f32 %v973, %v1007
      %1009 = vmatmul.f32.gmra.mxu0 %v702
      %v1010 = vpop.f32.mrf.mxu0
      %v1011 = vadd.f32 %v976, %v1010
      %1012 = vmatmul.f32.gmra.mxu0 %v713
      %v1013 = vpop.f32.mrf.mxu0
      %v1014 = vadd.f32 %v979, %v1013
      %1015 = vdwg.mxu0
      %1016 = vmatpush.msra.mxu0 %v770
      %1017 = vmatpush.msra.mxu0 %v769
      %1018 = vmatpush.msra.mxu0 %v768
      %1019 = vmatpush.msra.mxu0 %v767
      %1020 = vmatpush.msra.mxu0 %v766
      %1021 = vmatpush.msra.mxu0 %v765
      %1022 = vmatpush.msra.mxu0 %v764
      %1023 = vmatpush.msra.mxu0 %v763
      %1024 = vmatpush.msra.mxu0 %v762
      %1025 = vmatpush.msra.mxu0 %v761
      %1026 = vmatpush.msra.mxu0 %v760
      %1027 = vmatpush.msra.mxu0 %v759
      %1028 = vmatpush.msra.mxu0 %v758
      %1029 = vmatpush.msra.mxu0 %v757
      %1030 = vmatpush.msra.mxu0 %v756
      %1031 = vmatpush.msra.mxu0 %v755
      %1032 = vmatmul.f32.gmra.mxu0 %v659
      %v1033 = vpop.f32.mrf.mxu0
      %v1034 = vadd.f32 %v999, %v1033
      %1035 = vmatmul.f32.gmra.mxu0 %v670
      %v1036 = vpop.f32.mrf.mxu0
      %v1037 = vadd.f32 %v1002, %v1036
      %1038 = vmatmul.f32.gmra.mxu0 %v681
      %v1039 = vpop.f32.mrf.mxu0
      %v1040 = vadd.f32 %v1005, %v1039
      %1041 = vmatmul.f32.gmra.mxu0 %v692
      %v1042 = vpop.f32.mrf.mxu0
      %v1043 = vadd.f32 %v1008, %v1042
      %1044 = vmatmul.f32.gmra.mxu0 %v703
      %v1045 = vpop.f32.mrf.mxu0
      %v1046 = vadd.f32 %v1011, %v1045
      %1047 = vmatmul.f32.gmra.mxu0 %v714
      %v1048 = vpop.f32.mrf.mxu0
      %v1049 = vadd.f32 %v1014, %v1048
      %1050 = vdwg.mxu0
      %1051 = vmatpush.msra.mxu0 %v786
      %1052 = vmatpush.msra.mxu0 %v785
      %1053 = vmatpush.msra.mxu0 %v784
      %1054 = vmatpush.msra.mxu0 %v783
      %1055 = vmatpush.msra.mxu0 %v782
      %1056 = vmatpush.msra.mxu0 %v781
      %1057 = vmatpush.msra.mxu0 %v780
      %1058 = vmatpush.msra.mxu0 %v779
      %1059 = vmatpush.msra.mxu0 %v778
      %1060 = vmatpush.msra.mxu0 %v777
      %1061 = vmatpush.msra.mxu0 %v776
      %1062 = vmatpush.msra.mxu0 %v775
      %1063 = vmatpush.msra.mxu0 %v774
      %1064 = vmatpush.msra.mxu0 %v773
      %1065 = vmatpush.msra.mxu0 %v772
      %1066 = vmatpush.msra.mxu0 %v771
      %1067 = vmatmul.f32.gmra.mxu0 %v660
      %v1068 = vpop.f32.mrf.mxu0
      %v1069 = vadd.f32 %v1034, %v1068
      %1070 = vmatmul.f32.gmra.mxu0 %v671
      %v1071 = vpop.f32.mrf.mxu0
      %v1072 = vadd.f32 %v1037, %v1071
      %1073 = vmatmul.f32.gmra.mxu0 %v682
      %v1074 = vpop.f32.mrf.mxu0
      %v1075 = vadd.f32 %v1040, %v1074
      %1076 = vmatmul.f32.gmra.mxu0 %v693
      %v1077 = vpop.f32.mrf.mxu0
      %v1078 = vadd.f32 %v1043, %v1077
      %1079 = vmatmul.f32.gmra.mxu0 %v704
      %v1080 = vpop.f32.mrf.mxu0
      %v1081 = vadd.f32 %v1046, %v1080
      %1082 = vmatmul.f32.gmra.mxu0 %v715
      %v1083 = vpop.f32.mrf.mxu0
      %v1084 = vadd.f32 %v1049, %v1083
      %1085 = vdwg.mxu0
      %1086 = vmatpush.msra.mxu0 %v802
      %1087 = vmatpush.msra.mxu0 %v801
      %1088 = vmatpush.msra.mxu0 %v800
      %1089 = vmatpush.msra.mxu0 %v799
      %1090 = vmatpush.msra.mxu0 %v798
      %1091 = vmatpush.msra.mxu0 %v797
      %1092 = vmatpush.msra.mxu0 %v796
      %1093 = vmatpush.msra.mxu0 %v795
      %1094 = vmatpush.msra.mxu0 %v794
      %1095 = vmatpush.msra.mxu0 %v793
      %1096 = vmatpush.msra.mxu0 %v792
      %1097 = vmatpush.msra.mxu0 %v791
      %1098 = vmatpush.msra.mxu0 %v790
      %1099 = vmatpush.msra.mxu0 %v789
      %1100 = vmatpush.msra.mxu0 %v788
      %1101 = vmatpush.msra.mxu0 %v787
      %1102 = vmatmul.f32.gmra.mxu0 %v661
      %v1103 = vpop.f32.mrf.mxu0
      %v1104 = vadd.f32 %v1069, %v1103
      %1105 = vmatmul.f32.gmra.mxu0 %v672
      %v1106 = vpop.f32.mrf.mxu0
      %v1107 = vadd.f32 %v1072, %v1106
      %1108 = vmatmul.f32.gmra.mxu0 %v683
      %v1109 = vpop.f32.mrf.mxu0
      %v1110 = vadd.f32 %v1075, %v1109
      %1111 = vmatmul.f32.gmra.mxu0 %v694
      %v1112 = vpop.f32.mrf.mxu0
      %v1113 = vadd.f32 %v1078, %v1112
      %1114 = vmatmul.f32.gmra.mxu0 %v705
      %v1115 = vpop.f32.mrf.mxu0
      %v1116 = vadd.f32 %v1081, %v1115
      %1117 = vmatmul.f32.gmra.mxu0 %v716
      %v1118 = vpop.f32.mrf.mxu0
      %v1119 = vadd.f32 %v1084, %v1118
      %1120 = vdwg.mxu0
      %1121 = vmatpush.msra.mxu0 %v818
      %1122 = vmatpush.msra.mxu0 %v817
      %1123 = vmatpush.msra.mxu0 %v816
      %1124 = vmatpush.msra.mxu0 %v815
      %1125 = vmatpush.msra.mxu0 %v814
      %1126 = vmatpush.msra.mxu0 %v813
      %1127 = vmatpush.msra.mxu0 %v812
      %1128 = vmatpush.msra.mxu0 %v811
      %1129 = vmatpush.msra.mxu0 %v810
      %1130 = vmatpush.msra.mxu0 %v809
      %1131 = vmatpush.msra.mxu0 %v808
      %1132 = vmatpush.msra.mxu0 %v807
      %1133 = vmatpush.msra.mxu0 %v806
      %1134 = vmatpush.msra.mxu0 %v805
      %1135 = vmatpush.msra.mxu0 %v804
      %1136 = vmatpush.msra.mxu0 %v803
      %1137 = vmatmul.f32.gmra.mxu0 %v662
      %v1138 = vpop.f32.mrf.mxu0
      %v1139 = vadd.f32 %v1104, %v1138
      %1140 = vmatmul.f32.gmra.mxu0 %v673
      %v1141 = vpop.f32.mrf.mxu0
      %v1142 = vadd.f32 %v1107, %v1141
      %1143 = vmatmul.f32.gmra.mxu0 %v684
      %v1144 = vpop.f32.mrf.mxu0
      %v1145 = vadd.f32 %v1110, %v1144
      %1146 = vmatmul.f32.gmra.mxu0 %v695
      %v1147 = vpop.f32.mrf.mxu0
      %v1148 = vadd.f32 %v1113, %v1147
      %1149 = vmatmul.f32.gmra.mxu0 %v706
      %v1150 = vpop.f32.mrf.mxu0
      %v1151 = vadd.f32 %v1116, %v1150
      %1152 = vmatmul.f32.gmra.mxu0 %v717
      %v1153 = vpop.f32.mrf.mxu0
      %v1154 = vadd.f32 %v1119, %v1153
      %1155 = vdwg.mxu0
      %1156 = vmatpush.msra.mxu0 %v834
      %1157 = vmatpush.msra.mxu0 %v833
      %1158 = vmatpush.msra.mxu0 %v832
      %1159 = vmatpush.msra.mxu0 %v831
      %1160 = vmatpush.msra.mxu0 %v830
      %1161 = vmatpush.msra.mxu0 %v829
      %1162 = vmatpush.msra.mxu0 %v828
      %1163 = vmatpush.msra.mxu0 %v827
      %1164 = vmatpush.msra.mxu0 %v826
      %1165 = vmatpush.msra.mxu0 %v825
      %1166 = vmatpush.msra.mxu0 %v824
      %1167 = vmatpush.msra.mxu0 %v823
      %1168 = vmatpush.msra.mxu0 %v822
      %1169 = vmatpush.msra.mxu0 %v821
      %1170 = vmatpush.msra.mxu0 %v820
      %1171 = vmatpush.msra.mxu0 %v819
      %1172 = vmatmul.f32.gmra.mxu0 %v663
      %v1173 = vpop.f32.mrf.mxu0
      %v1174 = vadd.f32 %v1139, %v1173
      %1175 = vmatmul.f32.gmra.mxu0 %v674
      %v1176 = vpop.f32.mrf.mxu0
      %v1177 = vadd.f32 %v1142, %v1176
      %1178 = vmatmul.f32.gmra.mxu0 %v685
      %v1179 = vpop.f32.mrf.mxu0
      %v1180 = vadd.f32 %v1145, %v1179
      %1181 = vmatmul.f32.gmra.mxu0 %v696
      %v1182 = vpop.f32.mrf.mxu0
      %v1183 = vadd.f32 %v1148, %v1182
      %1184 = vmatmul.f32.gmra.mxu0 %v707
      %v1185 = vpop.f32.mrf.mxu0
      %v1186 = vadd.f32 %v1151, %v1185
      %1187 = vmatmul.f32.gmra.mxu0 %v718
      %v1188 = vpop.f32.mrf.mxu0
      %v1189 = vadd.f32 %v1154, %v1188
      %1190 = vdwg.mxu0
      %1191 = vmatpush.msra.mxu0 %v850
      %1192 = vmatpush.msra.mxu0 %v849
      %1193 = vmatpush.msra.mxu0 %v848
      %1194 = vmatpush.msra.mxu0 %v847
      %1195 = vmatpush.msra.mxu0 %v846
      %1196 = vmatpush.msra.mxu0 %v845
      %1197 = vmatpush.msra.mxu0 %v844
      %1198 = vmatpush.msra.mxu0 %v843
      %1199 = vmatpush.msra.mxu0 %v842
      %1200 = vmatpush.msra.mxu0 %v841
      %1201 = vmatpush.msra.mxu0 %v840
      %1202 = vmatpush.msra.mxu0 %v839
      %1203 = vmatpush.msra.mxu0 %v838
      %1204 = vmatpush.msra.mxu0 %v837
      %1205 = vmatpush.msra.mxu0 %v836
      %1206 = vmatpush.msra.mxu0 %v835
      %1207 = vmatmul.f32.gmra.mxu0 %v664
      %v1208 = vpop.f32.mrf.mxu0
      %v1209 = vadd.f32 %v1174, %v1208
      %1210 = vmatmul.f32.gmra.mxu0 %v675
      %v1211 = vpop.f32.mrf.mxu0
      %v1212 = vadd.f32 %v1177, %v1211
      %1213 = vmatmul.f32.gmra.mxu0 %v686
      %v1214 = vpop.f32.mrf.mxu0
      %v1215 = vadd.f32 %v1180, %v1214
      %1216 = vmatmul.f32.gmra.mxu0 %v697
      %v1217 = vpop.f32.mrf.mxu0
      %v1218 = vadd.f32 %v1183, %v1217
      %1219 = vmatmul.f32.gmra.mxu0 %v708
      %v1220 = vpop.f32.mrf.mxu0
      %v1221 = vadd.f32 %v1186, %v1220
      %1222 = vmatmul.f32.gmra.mxu0 %v719
      %v1223 = vpop.f32.mrf.mxu0
      %v1224 = vadd.f32 %v1189, %v1223
      %1225 = vdwg.mxu0
      %1226 = vmatpush.msra.mxu0 %v866
      %1227 = vmatpush.msra.mxu0 %v865
      %1228 = vmatpush.msra.mxu0 %v864
      %1229 = vmatpush.msra.mxu0 %v863
      %1230 = vmatpush.msra.mxu0 %v862
      %1231 = vmatpush.msra.mxu0 %v861
      %1232 = vmatpush.msra.mxu0 %v860
      %1233 = vmatpush.msra.mxu0 %v859
      %1234 = vmatpush.msra.mxu0 %v858
      %1235 = vmatpush.msra.mxu0 %v857
      %1236 = vmatpush.msra.mxu0 %v856
      %1237 = vmatpush.msra.mxu0 %v855
      %1238 = vmatpush.msra.mxu0 %v854
      %1239 = vmatpush.msra.mxu0 %v853
      %1240 = vmatpush.msra.mxu0 %v852
      %1241 = vmatpush.msra.mxu0 %v851
      %1242 = vmatmul.f32.gmra.mxu0 %v665
      %v1243 = vpop.f32.mrf.mxu0
      %v1244 = vadd.f32 %v1209, %v1243
      %1245 = vmatmul.f32.gmra.mxu0 %v676
      %v1246 = vpop.f32.mrf.mxu0
      %v1247 = vadd.f32 %v1212, %v1246
      %1248 = vmatmul.f32.gmra.mxu0 %v687
      %v1249 = vpop.f32.mrf.mxu0
      %v1250 = vadd.f32 %v1215, %v1249
      %1251 = vmatmul.f32.gmra.mxu0 %v698
      %v1252 = vpop.f32.mrf.mxu0
      %v1253 = vadd.f32 %v1218, %v1252
      %1254 = vmatmul.f32.gmra.mxu0 %v709
      %v1255 = vpop.f32.mrf.mxu0
      %v1256 = vadd.f32 %v1221, %v1255
      %1257 = vmatmul.f32.gmra.mxu0 %v720
      %v1258 = vpop.f32.mrf.mxu0
      %v1259 = vadd.f32 %v1224, %v1258
      %1260 = vdwg.mxu0
      %1261 = vmatpush.msra.mxu0 %v882
      %1262 = vmatpush.msra.mxu0 %v881
      %1263 = vmatpush.msra.mxu0 %v880
      %1264 = vmatpush.msra.mxu0 %v879
      %1265 = vmatpush.msra.mxu0 %v878
      %1266 = vmatpush.msra.mxu0 %v877
      %1267 = vmatpush.msra.mxu0 %v876
      %1268 = vmatpush.msra.mxu0 %v875
      %1269 = vmatpush.msra.mxu0 %v874
      %1270 = vmatpush.msra.mxu0 %v873
      %1271 = vmatpush.msra.mxu0 %v872
      %1272 = vmatpush.msra.mxu0 %v871
      %1273 = vmatpush.msra.mxu0 %v870
      %1274 = vmatpush.msra.mxu0 %v869
      %1275 = vmatpush.msra.mxu0 %v868
      %1276 = vmatpush.msra.mxu0 %v867
      %1277 = vmatmul.f32.gmra.mxu0 %v666
      %v1278 = vpop.f32.mrf.mxu0
      %v1279 = vadd.f32 %v1244, %v1278
      %1280 = vmatmul.f32.gmra.mxu0 %v677
      %v1281 = vpop.f32.mrf.mxu0
      %v1282 = vadd.f32 %v1247, %v1281
      %1283 = vmatmul.f32.gmra.mxu0 %v688
      %v1284 = vpop.f32.mrf.mxu0
      %v1285 = vadd.f32 %v1250, %v1284
      %1286 = vmatmul.f32.gmra.mxu0 %v699
      %v1287 = vpop.f32.mrf.mxu0
      %v1288 = vadd.f32 %v1253, %v1287
      %1289 = vmatmul.f32.gmra.mxu0 %v710
      %v1290 = vpop.f32.mrf.mxu0
      %v1291 = vadd.f32 %v1256, %v1290
      %1292 = vmatmul.f32.gmra.mxu0 %v721
      %v1293 = vpop.f32.mrf.mxu0
      %v1294 = vadd.f32 %v1259, %v1293
      %1295 = vdwg.mxu0
      %1296 = vmatpush.msra.mxu0 0.0
      %1297 = vmatpush.msra.mxu0 0.0
      %1298 = vmatpush.msra.mxu0 0.0
      %1299 = vmatpush.msra.mxu0 0.0
      %1300 = vmatpush.msra.mxu0 0.0
      %1301 = vmatpush.msra.mxu0 0.0
      %1302 = vmatpush.msra.mxu0 0.0
      %1303 = vmatpush.msra.mxu0 0.0
      %1304 = vmatpush.msra.mxu0 0.0
      %1305 = vmatpush.msra.mxu0 0.0
      %1306 = vmatpush.msra.mxu0 0.0
      %1307 = vmatpush.msra.mxu0 0.0
      %1308 = vmatpush.msra.mxu0 0.0
      %1309 = vmatpush.msra.mxu0 0.0
      %1310 = vmatpush.msra.mxu0 %v884
      %1311 = vmatpush.msra.mxu0 %v883
      %1312 = vmatmul.f32.gmra.mxu0 %v929
      %v1313 = vpop.f32.mrf.mxu0
      %v1314 = vadd.f32 %v1279, %v1313
      %1315 = vmatmul.f32.gmra.mxu0 %v932
      %v1316 = vpop.f32.mrf.mxu0
      %v1317 = vadd.f32 %v1282, %v1316
      %1318 = vmatmul.f32.gmra.mxu0 %v935
      %v1319 = vpop.f32.mrf.mxu0
      %v1320 = vadd.f32 %v1285, %v1319
      %1321 = vmatmul.f32.gmra.mxu0 %v938
      %v1322 = vpop.f32.mrf.mxu0
      %v1323 = vadd.f32 %v1288, %v1322
      %1324 = vmatmul.f32.gmra.mxu0 %v941
      %v1325 = vpop.f32.mrf.mxu0
      %v1326 = vadd.f32 %v1291, %v1325
      %1327 = vmatmul.f32.gmra.mxu0 %v944
      %v1328 = vpop.f32.mrf.mxu0
      %v1329 = vadd.f32 %v1294, %v1328
      %1330 = vdwg.mxu0
      %v1331 = vmax.f32 %v1314, 0.0
      %v1332 = vmax.f32 %v1317, 0.0
      %v1333 = vmax.f32 %v1320, 0.0
      %v1334 = vmax.f32 %v1323, 0.0
      %v1335 = vmax.f32 %v1326, 0.0
      %v1336 = vmax.f32 %v1329, 0.0
      %v1337 = vld [vmem:[%s7] sm:$0xff]
      %v1338 = vld [vmem:[%s7 + $0x8] sm:$0xff]
      %v1339 = vld [vmem:[%s7 + $0x10] sm:$0xff]
      %v1340 = vld [vmem:[%s7 + $0x18] sm:$0xff]
      %v1341 = vld [vmem:[%s7 + $0x20] sm:$0xff]
      %v1342 = vld [vmem:[%s7 + $0x28] sm:$0x3]
      %v1343 = vld [vmem:[%s6] sm:$0xff]
      %v1344 = vld [vmem:[%s6 + $0x8] sm:$0xff]
      %v1345 = vld [vmem:[%s6 + $0x10] sm:$0xff]
      %v1346 = vld [vmem:[%s6 + $0x18] sm:$0xff]
      %v1347 = vld [vmem:[%s6 + $0x20] sm:$0xff]
      %v1348 = vld [vmem:[%s6 + $0x28] sm:$0x1f]
      %1350 = vset.pattern.permute.xlu0 0
      %1351 = vperm.xlu0 %1350, %v1343
      %v1352 = vpop.permute.xlu0 %1351
      %1355 = vset.pattern.permute.xlu0 0
      %1356 = vperm.xlu0 %1355, %v1344
      %v1357 = vpop.permute.xlu0 %1356
      %1360 = vset.pattern.permute.xlu0 0
      %1361 = vperm.xlu0 %1360, %v1345
      %v1362 = vpop.permute.xlu0 %1361
      %1365 = vset.pattern.permute.xlu0 0
      %1366 = vperm.xlu0 %1365, %v1346
      %v1367 = vpop.permute.xlu0 %1366
      %1370 = vset.pattern.permute.xlu0 0
      %1371 = vperm.xlu0 %1370, %v1347
      %v1372 = vpop.permute.xlu0 %1371
      %1375 = vset.pattern.permute.xlu0 0
      %1376 = vperm.xlu0 %1375, %v1348
      %v1377 = vpop.permute.xlu0 %1376
      %vm1379 = vcmask 392192
      %v1381 = vsel %vm1379, %v885, 0
      %v1384 = vsel %vm1379, %v886, 0
      %v1387 = vsel %vm1379, %v887, 0
      %v1390 = vsel %vm1379, %v888, 0
      %v1393 = vsel %vm1379, %v889, 0
      %v1396 = vsel %vm1379, %v890, 0
      %1398 = vmatpush.msra.mxu0 0.0
      %1399 = vmatpush.msra.mxu0 0.0
      %1400 = vmatpush.msra.mxu0 0.0
      %1401 = vmatpush.msra.mxu0 0.0
      %1402 = vmatpush.msra.mxu0 0.0
      %1403 = vmatpush.msra.mxu0 0.0
      %1404 = vmatpush.msra.mxu0 0.0
      %1405 = vmatpush.msra.mxu0 0.0
      %1406 = vmatpush.msra.mxu0 0.0
      %1407 = vmatpush.msra.mxu0 0.0
      %1408 = vmatpush.msra.mxu0 %v1336
      %1409 = vmatpush.msra.mxu0 %v1335
      %1410 = vmatpush.msra.mxu0 %v1334
      %1411 = vmatpush.msra.mxu0 %v1333
      %1412 = vmatpush.msra.mxu0 %v1332
      %1413 = vmatpush.msra.mxu0 %v1331
      %1414 = vmatmul.f32.gmra.mxu0 %v1381
      %v1415 = vpop.f32.mrf.mxu0
      %v1416 = vadd.f32 %v1352, %v1415
      %1417 = vmatmul.f32.gmra.mxu0 %v1384
      %v1418 = vpop.f32.mrf.mxu0
      %v1419 = vadd.f32 %v1357, %v1418
      %1420 = vmatmul.f32.gmra.mxu0 %v1387
      %v1421 = vpop.f32.mrf.mxu0
      %v1422 = vadd.f32 %v1362, %v1421
      %1423 = vmatmul.f32.gmra.mxu0 %v1390
      %v1424 = vpop.f32.mrf.mxu0
      %v1425 = vadd.f32 %v1367, %v1424
      %1426 = vmatmul.f32.gmra.mxu0 %v1393
      %v1427 = vpop.f32.mrf.mxu0
      %v1428 = vadd.f32 %v1372, %v1427
      %1429 = vmatmul.f32.gmra.mxu0 %v1396
      %v1430 = vpop.f32.mrf.mxu0
      %v1431 = vadd.f32 %v1377, %v1430
      %1432 = vdwg.mxu0
      %v1433 = vmax.f32 %v1416, 0.0
      %v1434 = vmax.f32 %v1419, 0.0
      %v1435 = vmax.f32 %v1422, 0.0
      %v1436 = vmax.f32 %v1425, 0.0
      %v1437 = vmax.f32 %v1428, 0.0
      %v1438 = vmax.f32 %v1431, 0.0
      %v1439 = vld [vmem:[%s9] sm:$0xff]
      %v1440 = vld [vmem:[%s9 + $0x8] sm:$0xff]
      %v1441 = vld [vmem:[%s9 + $0x10] sm:$0x1f]
      %v1442 = vld [vmem:[%s8] sm:$0xff]
      %v1443 = vld [vmem:[%s8 + $0x8] sm:$0xff]
      %v1444 = vld [vmem:[%s8 + $0x10] sm:$0xff]
      %v1445 = vld [vmem:[%s8 + $0x18] sm:$0xff]
      %v1446 = vld [vmem:[%s8 + $0x20] sm:$0xff]
      %v1447 = vld [vmem:[%s8 + $0x28] sm:$0x3]
      %1449 = vset.pattern.permute.xlu0 0
      %1450 = vperm.xlu0 %1449, %v1442
      %v1451 = vpop.permute.xlu0 %1450
      %1454 = vset.pattern.permute.xlu0 0
      %1455 = vperm.xlu0 %1454, %v1443
      %v1456 = vpop.permute.xlu0 %1455
      %1459 = vset.pattern.permute.xlu0 0
      %1460 = vperm.xlu0 %1459, %v1444
      %v1461 = vpop.permute.xlu0 %1460
      %1464 = vset.pattern.permute.xlu0 0
      %1465 = vperm.xlu0 %1464, %v1445
      %v1466 = vpop.permute.xlu0 %1465
      %1469 = vset.pattern.permute.xlu0 0
      %1470 = vperm.xlu0 %1469, %v1446
      %v1471 = vpop.permute.xlu0 %1470
      %1474 = vset.pattern.permute.xlu0 0
      %1475 = vperm.xlu0 %1474, %v1447
      %v1476 = vpop.permute.xlu0 %1475
      %vm1478 = vcmask 367616
      %v1480 = vsel %vm1478, %v1337, 0
      %v1483 = vsel %vm1478, %v1338, 0
      %v1486 = vsel %vm1478, %v1339, 0
      %v1489 = vsel %vm1478, %v1340, 0
      %v1492 = vsel %vm1478, %v1341, 0
      %v1495 = vsel %vm1478, %v1342, 0
      %vm1497 = vcmask 1044480
      %v1499 = vsel %vm1497, %v1438, 0
      %1501 = vmatpush.msra.mxu0 0.0
      %1502 = vmatpush.msra.mxu0 0.0
      %1503 = vmatpush.msra.mxu0 0.0
      %1504 = vmatpush.msra.mxu0 0.0
      %1505 = vmatpush.msra.mxu0 0.0
      %1506 = vmatpush.msra.mxu0 0.0
      %1507 = vmatpush.msra.mxu0 0.0
      %1508 = vmatpush.msra.mxu0 0.0
      %1509 = vmatpush.msra.mxu0 0.0
      %1510 = vmatpush.msra.mxu0 0.0
      %1511 = vmatpush.msra.mxu0 %v1499
      %1512 = vmatpush.msra.mxu0 %v1437
      %1513 = vmatpush.msra.mxu0 %v1436
      %1514 = vmatpush.msra.mxu0 %v1435
      %1515 = vmatpush.msra.mxu0 %v1434
      %1516 = vmatpush.msra.mxu0 %v1433
      %1517 = vmatmul.f32.gmra.mxu0 %v1480
      %v1518 = vpop.f32.mrf.mxu0
      %v1519 = vadd.f32 %v1451, %v1518
      %1520 = vmatmul.f32.gmra.mxu0 %v1483
      %v1521 = vpop.f32.mrf.mxu0
      %v1522 = vadd.f32 %v1456, %v1521
      %1523 = vmatmul.f32.gmra.mxu0 %v1486
      %v1524 = vpop.f32.mrf.mxu0
      %v1525 = vadd.f32 %v1461, %v1524
      %1526 = vmatmul.f32.gmra.mxu0 %v1489
      %v1527 = vpop.f32.mrf.mxu0
      %v1528 = vadd.f32 %v1466, %v1527
      %1529 = vmatmul.f32.gmra.mxu0 %v1492
      %v1530 = vpop.f32.mrf.mxu0
      %v1531 = vadd.f32 %v1471, %v1530
      %1532 = vmatmul.f32.gmra.mxu0 %v1495
      %v1533 = vpop.f32.mrf.mxu0
      %v1534 = vadd.f32 %v1476, %v1533
      %1535 = vdwg.mxu0
      %v1536 = vmax.f32 %v1519, 0.0
      %v1537 = vmax.f32 %v1522, 0.0
      %v1538 = vmax.f32 %v1525, 0.0
      %v1539 = vmax.f32 %v1528, 0.0
      %v1540 = vmax.f32 %v1531, 0.0
      %v1541 = vmax.f32 %v1534, 0.0
      %vm1542 = vcmask 343040
      %v1544 = vsel %vm1542, %v1439, 0
      %v1547 = vsel %vm1542, %v1440, 0
      %v1550 = vsel %vm1542, %v1441, 0
      %vm1552 = vcmask 1041408
      %v1554 = vsel %vm1552, %v1541, 0
      %1556 = vmatpush.msra.mxu0 0.0
      %1557 = vmatpush.msra.mxu0 0.0
      %1558 = vmatpush.msra.mxu0 0.0
      %1559 = vmatpush.msra.mxu0 0.0
      %1560 = vmatpush.msra.mxu0 0.0
      %1561 = vmatpush.msra.mxu0 0.0
      %1562 = vmatpush.msra.mxu0 0.0
      %1563 = vmatpush.msra.mxu0 0.0
      %1564 = vmatpush.msra.mxu0 0.0
      %1565 = vmatpush.msra.mxu0 0.0
      %1566 = vmatpush.msra.mxu0 %v1554
      %1567 = vmatpush.msra.mxu0 %v1540
      %1568 = vmatpush.msra.mxu0 %v1539
      %1569 = vmatpush.msra.mxu0 %v1538
      %1570 = vmatpush.msra.mxu0 %v1537
      %1571 = vmatpush.msra.mxu0 %v1536
      %1572 = vmatmul.f32.gmra.mxu0 %v1544
      %v1573 = vpop.f32.mrf.mxu0
      %v1574 = vadd.f32 0.0, %v1573
      %1575 = vmatmul.f32.gmra.mxu0 %v1547
      %v1576 = vpop.f32.mrf.mxu0
      %v1577 = vadd.f32 0.0, %v1576
      %1578 = vmatmul.f32.gmra.mxu0 %v1550
      %v1579 = vpop.f32.mrf.mxu0
      %v1580 = vadd.f32 0.0, %v1579
      %1581 = vdwg.mxu0
      %v1582 = vld [vmem:[%s2] sm:$0xff]
      %v1583 = vld [vmem:[%s2 + $0x8] sm:$0xff]
      %v1584 = vld [vmem:[%s2 + $0x10] sm:$0xff]
      %v1585 = vld [vmem:[%s2 + $0x18] sm:$0xff]
      %v1586 = vld [vmem:[%s2 + $0x20] sm:$0xff]
      %v1587 = vld [vmem:[%s2 + $0x28] sm:$0xff]
      %v1588 = vld [vmem:[%s2 + $0x30] sm:$0xff]
      %v1589 = vld [vmem:[%s2 + $0x38] sm:$0xff]
      %v1590 = vld [vmem:[%s2 + $0x40] sm:$0xff]
      %v1591 = vld [vmem:[%s2 + $0x48] sm:$0xff]
      %v1592 = vld [vmem:[%s2 + $0x50] sm:$0xff]
      %v1593 = vld [vmem:[%s2 + $0x58] sm:$0xff]
      %v1594 = vld [vmem:[%s2 + $0x60] sm:$0xff]
      %v1595 = vld [vmem:[%s2 + $0x68] sm:$0xff]
      %v1596 = vld [vmem:[%s2 + $0x70] sm:$0xff]
      %v1597 = vld [vmem:[%s2 + $0x78] sm:$0xff]
      %v1598 = vld [vmem:[%s2 + $0x80] sm:$0xff]
      %v1599 = vld [vmem:[%s2 + $0x88] sm:$0xff]
      %v1600 = vld [vmem:[%s2 + $0x90] sm:$0xff]
      %v1601 = vld [vmem:[%s2 + $0x98] sm:$0xff]
      %v1602 = vld [vmem:[%s2 + $0xa0] sm:$0xff]
      %v1603 = vld [vmem:[%s2 + $0xa8] sm:$0xff]
      %v1604 = vld [vmem:[%s2 + $0xb0] sm:$0xff]
      %v1605 = vld [vmem:[%s2 + $0xb8] sm:$0xff]
      %v1606 = vld [vmem:[%s2 + $0xc0] sm:$0xff]
      %v1607 = vld [vmem:[%s2 + $0xc8] sm:$0xff]
      %v1608 = vld [vmem:[%s2 + $0xd0] sm:$0xff]
      %v1609 = vld [vmem:[%s2 + $0xd8] sm:$0xff]
      %v1610 = vld [vmem:[%s2 + $0xe0] sm:$0xff]
      %v1611 = vld [vmem:[%s2 + $0xe8] sm:$0xff]
      %v1612 = vld [vmem:[%s2 + $0xf0] sm:$0xff]
      %v1613 = vld [vmem:[%s2 + $0xf8] sm:$0xff]
      %v1614 = vld [vmem:[%s2 + $0x100] sm:$0xff]
      %v1615 = vld [vmem:[%s2 + $0x108] sm:$0xff]
      %v1616 = vld [vmem:[%s2 + $0x110] sm:$0xff]
      %v1617 = vld [vmem:[%s2 + $0x118] sm:$0xff]
      %v1618 = vld [vmem:[%s2 + $0x120] sm:$0xff]
      %v1619 = vld [vmem:[%s2 + $0x128] sm:$0xff]
      %v1620 = vld [vmem:[%s2 + $0x130] sm:$0xff]
      %v1621 = vld [vmem:[%s2 + $0x138] sm:$0xff]
      %v1622 = vld [vmem:[%s11] sm:$0xff]
      %v1623 = vld [vmem:[%s11 + $0x8] sm:$0xff]
      %v1624 = vld [vmem:[%s11 + $0x10] sm:$0x3]
      %v1625 = vld [vmem:[%s10] sm:$0xff]
      %v1626 = vld [vmem:[%s10 + $0x8] sm:$0xff]
      %v1627 = vld [vmem:[%s10 + $0x10] sm:$0x1f]
      %1629 = vset.pattern.permute.xlu0 0
      %1630 = vperm.xlu0 %1629, %v1625
      %v1631 = vpop.permute.xlu0 %1630
      %1634 = vset.pattern.permute.xlu0 0
      %1635 = vperm.xlu0 %1634, %v1626
      %v1636 = vpop.permute.xlu0 %1635
      %1639 = vset.pattern.permute.xlu0 0
      %1640 = vperm.xlu0 %1639, %v1627
      %v1641 = vpop.permute.xlu0 %1640
      %vm1643 = vcmask 523264
      %v1645 = vsel %vm1643, %v1574, 0
      %v1648 = vsel %vm1643, %v1577, 0
      %v1651 = vsel %vm1643, %v1580, 0
      %1653 = vmatpush.msra.mxu0 0.0
      %1654 = vmatpush.msra.mxu0 0.0
      %1655 = vmatpush.msra.mxu0 0.0
      %1656 = vmatpush.msra.mxu0 0.0
      %1657 = vmatpush.msra.mxu0 0.0
      %1658 = vmatpush.msra.mxu0 0.0
      %1659 = vmatpush.msra.mxu0 0.0
      %1660 = vmatpush.msra.mxu0 0.0
      %1661 = vmatpush.msra.mxu0 %v1617
      %1662 = vmatpush.msra.mxu0 %v1612
      %1663 = vmatpush.msra.mxu0 %v1607
      %1664 = vmatpush.msra.mxu0 %v1602
      %1665 = vmatpush.msra.mxu0 %v1597
      %1666 = vmatpush.msra.mxu0 %v1592
      %1667 = vmatpush.msra.mxu0 %v1587
      %1668 = vmatpush.msra.mxu0 %v1582
      %1669 = vmatmul.f32.gmra.mxu0 %v1645
      %v1670 = vpop.f32.mrf.mxu0
      %v1671 = vadd.f32 %v1631, %v1670
      %1672 = vmatmul.f32.gmra.mxu0 %v1648
      %v1673 = vpop.f32.mrf.mxu0
      %v1674 = vadd.f32 %v1636, %v1673
      %1675 = vmatmul.f32.gmra.mxu0 %v1651
      %v1676 = vpop.f32.mrf.mxu0
      %v1677 = vadd.f32 %v1641, %v1676
      %1678 = vdwg.mxu0
      %1679 = vmatpush.msra.mxu0 0.0
      %1680 = vmatpush.msra.mxu0 0.0
      %1681 = vmatpush.msra.mxu0 0.0
      %1682 = vmatpush.msra.mxu0 0.0
      %1683 = vmatpush.msra.mxu0 0.0
      %1684 = vmatpush.msra.mxu0 0.0
      %1685 = vmatpush.msra.mxu0 0.0
      %1686 = vmatpush.msra.mxu0 0.0
      %1687 = vmatpush.msra.mxu0 %v1618
      %1688 = vmatpush.msra.mxu0 %v1613
      %1689 = vmatpush.msra.mxu0 %v1608
      %1690 = vmatpush.msra.mxu0 %v1603
      %1691 = vmatpush.msra.mxu0 %v1598
      %1692 = vmatpush.msra.mxu0 %v1593
      %1693 = vmatpush.msra.mxu0 %v1588
      %1694 = vmatpush.msra.mxu0 %v1583
      %1695 = vmatmul.f32.gmra.mxu0 %v1645
      %v1696 = vpop.f32.mrf.mxu0
      %v1697 = vadd.f32 %v1631, %v1696
      %1698 = vmatmul.f32.gmra.mxu0 %v1648
      %v1699 = vpop.f32.mrf.mxu0
      %v1700 = vadd.f32 %v1636, %v1699
      %1701 = vmatmul.f32.gmra.mxu0 %v1651
      %v1702 = vpop.f32.mrf.mxu0
      %v1703 = vadd.f32 %v1641, %v1702
      %1704 = vdwg.mxu0
      %1705 = vmatpush.msra.mxu0 0.0
      %1706 = vmatpush.msra.mxu0 0.0
      %1707 = vmatpush.msra.mxu0 0.0
      %1708 = vmatpush.msra.mxu0 0.0
      %1709 = vmatpush.msra.mxu0 0.0
      %1710 = vmatpush.msra.mxu0 0.0
      %1711 = vmatpush.msra.mxu0 0.0
      %1712 = vmatpush.msra.mxu0 0.0
      %1713 = vmatpush.msra.mxu0 %v1619
      %1714 = vmatpush.msra.mxu0 %v1614
      %1715 = vmatpush.msra.mxu0 %v1609
      %1716 = vmatpush.msra.mxu0 %v1604
      %1717 = vmatpush.msra.mxu0 %v1599
      %1718 = vmatpush.msra.mxu0 %v1594
      %1719 = vmatpush.msra.mxu0 %v1589
      %1720 = vmatpush.msra.mxu0 %v1584
      %1721 = vmatmul.f32.gmra.mxu0 %v1645
      %v1722 = vpop.f32.mrf.mxu0
      %v1723 = vadd.f32 %v1631, %v1722
      %1724 = vmatmul.f32.gmra.mxu0 %v1648
      %v1725 = vpop.f32.mrf.mxu0
      %v1726 = vadd.f32 %v1636, %v1725
      %1727 = vmatmul.f32.gmra.mxu0 %v1651
      %v1728 = vpop.f32.mrf.mxu0
      %v1729 = vadd.f32 %v1641, %v1728
      %1730 = vdwg.mxu0
      %1731 = vmatpush.msra.mxu0 0.0
      %1732 = vmatpush.msra.mxu0 0.0
      %1733 = vmatpush.msra.mxu0 0.0
      %1734 = vmatpush.msra.mxu0 0.0
      %1735 = vmatpush.msra.mxu0 0.0
      %1736 = vmatpush.msra.mxu0 0.0
      %1737 = vmatpush.msra.mxu0 0.0
      %1738 = vmatpush.msra.mxu0 0.0
      %1739 = vmatpush.msra.mxu0 %v1620
      %1740 = vmatpush.msra.mxu0 %v1615
      %1741 = vmatpush.msra.mxu0 %v1610
      %1742 = vmatpush.msra.mxu0 %v1605
      %1743 = vmatpush.msra.mxu0 %v1600
      %1744 = vmatpush.msra.mxu0 %v1595
      %1745 = vmatpush.msra.mxu0 %v1590
      %1746 = vmatpush.msra.mxu0 %v1585
      %1747 = vmatmul.f32.gmra.mxu0 %v1645
      %v1748 = vpop.f32.mrf.mxu0
      %v1749 = vadd.f32 %v1631, %v1748
      %1750 = vmatmul.f32.gmra.mxu0 %v1648
      %v1751 = vpop.f32.mrf.mxu0
      %v1752 = vadd.f32 %v1636, %v1751
      %1753 = vmatmul.f32.gmra.mxu0 %v1651
      %v1754 = vpop.f32.mrf.mxu0
      %v1755 = vadd.f32 %v1641, %v1754
      %1756 = vdwg.mxu0
      %1757 = vmatpush.msra.mxu0 0.0
      %1758 = vmatpush.msra.mxu0 0.0
      %1759 = vmatpush.msra.mxu0 0.0
      %1760 = vmatpush.msra.mxu0 0.0
      %1761 = vmatpush.msra.mxu0 0.0
      %1762 = vmatpush.msra.mxu0 0.0
      %1763 = vmatpush.msra.mxu0 0.0
      %1764 = vmatpush.msra.mxu0 0.0
      %1765 = vmatpush.msra.mxu0 %v1621
      %1766 = vmatpush.msra.mxu0 %v1616
      %1767 = vmatpush.msra.mxu0 %v1611
      %1768 = vmatpush.msra.mxu0 %v1606
      %1769 = vmatpush.msra.mxu0 %v1601
      %1770 = vmatpush.msra.mxu0 %v1596
      %1771 = vmatpush.msra.mxu0 %v1591
      %1772 = vmatpush.msra.mxu0 %v1586
      %1773 = vmatmul.f32.gmra.mxu0 %v1645
      %v1774 = vpop.f32.mrf.mxu0
      %v1775 = vadd.f32 %v1631, %v1774
      %1776 = vmatmul.f32.gmra.mxu0 %v1648
      %v1777 = vpop.f32.mrf.mxu0
      %v1778 = vadd.f32 %v1636, %v1777
      %1779 = vmatmul.f32.gmra.mxu0 %v1651
      %v1780 = vpop.f32.mrf.mxu0
      %v1781 = vadd.f32 %v1641, %v1780
      %1782 = vdwg.mxu0
      %v1783 = vmax.f32 %v1671, 0.0
      %v1784 = vmax.f32 %v1697, 0.0
      %v1785 = vmax.f32 %v1723, 0.0
      %v1786 = vmax.f32 %v1749, 0.0
      %v1787 = vmax.f32 %v1775, 0.0
      %v1788 = vmax.f32 %v1674, 0.0
      %v1789 = vmax.f32 %v1700, 0.0
      %v1790 = vmax.f32 %v1726, 0.0
      %v1791 = vmax.f32 %v1752, 0.0
      %v1792 = vmax.f32 %v1778, 0.0
      %v1793 = vmax.f32 %v1677, 0.0
      %v1794 = vmax.f32 %v1703, 0.0
      %v1795 = vmax.f32 %v1729, 0.0
      %v1796 = vmax.f32 %v1755, 0.0
      %v1797 = vmax.f32 %v1781, 0.0
      %v1798 = vld [vmem:[%s13] sm:$0xff]
      %v1799 = vld [vmem:[%s13 + $0x8] sm:$0x7f]
      %v1800 = vld [vmem:[%s12] sm:$0xff]
      %v1801 = vld [vmem:[%s12 + $0x8] sm:$0xff]
      %v1802 = vld [vmem:[%s12 + $0x10] sm:$0x3]
      %1804 = vset.pattern.permute.xlu0 0
      %1805 = vperm.xlu0 %1804, %v1800
      %v1806 = vpop.permute.xlu0 %1805
      %1809 = vset.pattern.permute.xlu0 0
      %1810 = vperm.xlu0 %1809, %v1801
      %v1811 = vpop.permute.xlu0 %1810
      %1814 = vset.pattern.permute.xlu0 0
      %1815 = vperm.xlu0 %1814, %v1802
      %v1816 = vpop.permute.xlu0 %1815
      %vm1818 = vcmask 171008
      %v1820 = vsel %vm1818, %v1622, 0
      %v1823 = vsel %vm1818, %v1623, 0
      %v1826 = vsel %vm1818, %v1624, 0
      %v1829 = vsel %vm1497, %v1793, 0
      %v1832 = vsel %vm1497, %v1794, 0
      %v1835 = vsel %vm1497, %v1795, 0
      %v1838 = vsel %vm1497, %v1796, 0
      %v1841 = vsel %vm1497, %v1797, 0
      %1843 = vmatpush.msra.mxu0 0.0
      %1844 = vmatpush.msra.mxu0 0.0
      %1845 = vmatpush.msra.mxu0 0.0
      %1846 = vmatpush.msra.mxu0 0.0
      %1847 = vmatpush.msra.mxu0 0.0
      %1848 = vmatpush.msra.mxu0 0.0
      %1849 = vmatpush.msra.mxu0 0.0
      %1850 = vmatpush.msra.mxu0 0.0
      %1851 = vmatpush.msra.mxu0 0.0
      %1852 = vmatpush.msra.mxu0 0.0
      %1853 = vmatpush.msra.mxu0 0.0
      %1854 = vmatpush.msra.mxu0 0.0
      %1855 = vmatpush.msra.mxu0 0.0
      %1856 = vmatpush.msra.mxu0 %v1829
      %1857 = vmatpush.msra.mxu0 %v1788
      %1858 = vmatpush.msra.mxu0 %v1783
      %1859 = vmatmul.f32.gmra.mxu0 %v1820
      %v1860 = vpop.f32.mrf.mxu0
      %v1861 = vadd.f32 %v1806, %v1860
      %1862 = vmatmul.f32.gmra.mxu0 %v1823
      %v1863 = vpop.f32.mrf.mxu0
      %v1864 = vadd.f32 %v1811, %v1863
      %1865 = vmatmul.f32.gmra.mxu0 %v1826
      %v1866 = vpop.f32.mrf.mxu0
      %v1867 = vadd.f32 %v1816, %v1866
      %1868 = vdwg.mxu0
      %1869 = vmatpush.msra.mxu0 0.0
      %1870 = vmatpush.msra.mxu0 0.0
      %1871 = vmatpush.msra.mxu0 0.0
      %1872 = vmatpush.msra.mxu0 0.0
      %1873 = vmatpush.msra.mxu0 0.0
      %1874 = vmatpush.msra.mxu0 0.0
      %1875 = vmatpush.msra.mxu0 0.0
      %1876 = vmatpush.msra.mxu0 0.0
      %1877 = vmatpush.msra.mxu0 0.0
      %1878 = vmatpush.msra.mxu0 0.0
      %1879 = vmatpush.msra.mxu0 0.0
      %1880 = vmatpush.msra.mxu0 0.0
      %1881 = vmatpush.msra.mxu0 0.0
      %1882 = vmatpush.msra.mxu0 %v1832
      %1883 = vmatpush.msra.mxu0 %v1789
      %1884 = vmatpush.msra.mxu0 %v1784
      %1885 = vmatmul.f32.gmra.mxu0 %v1820
      %v1886 = vpop.f32.mrf.mxu0
      %v1887 = vadd.f32 %v1806, %v1886
      %1888 = vmatmul.f32.gmra.mxu0 %v1823
      %v1889 = vpop.f32.mrf.mxu0
      %v1890 = vadd.f32 %v1811, %v1889
      %1891 = vmatmul.f32.gmra.mxu0 %v1826
      %v1892 = vpop.f32.mrf.mxu0
      %v1893 = vadd.f32 %v1816, %v1892
      %1894 = vdwg.mxu0
      %1895 = vmatpush.msra.mxu0 0.0
      %1896 = vmatpush.msra.mxu0 0.0
      %1897 = vmatpush.msra.mxu0 0.0
      %1898 = vmatpush.msra.mxu0 0.0
      %1899 = vmatpush.msra.mxu0 0.0
      %1900 = vmatpush.msra.mxu0 0.0
      %1901 = vmatpush.msra.mxu0 0.0
      %1902 = vmatpush.msra.mxu0 0.0
      %1903 = vmatpush.msra.mxu0 0.0
      %1904 = vmatpush.msra.mxu0 0.0
      %1905 = vmatpush.msra.mxu0 0.0
      %1906 = vmatpush.msra.mxu0 0.0
      %1907 = vmatpush.msra.mxu0 0.0
      %1908 = vmatpush.msra.mxu0 %v1835
      %1909 = vmatpush.msra.mxu0 %v1790
      %1910 = vmatpush.msra.mxu0 %v1785
      %1911 = vmatmul.f32.gmra.mxu0 %v1820
      %v1912 = vpop.f32.mrf.mxu0
      %v1913 = vadd.f32 %v1806, %v1912
      %1914 = vmatmul.f32.gmra.mxu0 %v1823
      %v1915 = vpop.f32.mrf.mxu0
      %v1916 = vadd.f32 %v1811, %v1915
      %1917 = vmatmul.f32.gmra.mxu0 %v1826
      %v1918 = vpop.f32.mrf.mxu0
      %v1919 = vadd.f32 %v1816, %v1918
      %1920 = vdwg.mxu0
      %1921 = vmatpush.msra.mxu0 0.0
      %1922 = vmatpush.msra.mxu0 0.0
      %1923 = vmatpush.msra.mxu0 0.0
      %1924 = vmatpush.msra.mxu0 0.0
      %1925 = vmatpush.msra.mxu0 0.0
      %1926 = vmatpush.msra.mxu0 0.0
      %1927 = vmatpush.msra.mxu0 0.0
      %1928 = vmatpush.msra.mxu0 0.0
      %1929 = vmatpush.msra.mxu0 0.0
      %1930 = vmatpush.msra.mxu0 0.0
      %1931 = vmatpush.msra.mxu0 0.0
      %1932 = vmatpush.msra.mxu0 0.0
      %1933 = vmatpush.msra.mxu0 0.0
      %1934 = vmatpush.msra.mxu0 %v1838
      %1935 = vmatpush.msra.mxu0 %v1791
      %1936 = vmatpush.msra.mxu0 %v1786
      %1937 = vmatmul.f32.gmra.mxu0 %v1820
      %v1938 = vpop.f32.mrf.mxu0
      %v1939 = vadd.f32 %v1806, %v1938
      %1940 = vmatmul.f32.gmra.mxu0 %v1823
      %v1941 = vpop.f32.mrf.mxu0
      %v1942 = vadd.f32 %v1811, %v1941
      %1943 = vmatmul.f32.gmra.mxu0 %v1826
      %v1944 = vpop.f32.mrf.mxu0
      %v1945 = vadd.f32 %v1816, %v1944
      %1946 = vdwg.mxu0
      %1947 = vmatpush.msra.mxu0 0.0
      %1948 = vmatpush.msra.mxu0 0.0
      %1949 = vmatpush.msra.mxu0 0.0
      %1950 = vmatpush.msra.mxu0 0.0
      %1951 = vmatpush.msra.mxu0 0.0
      %1952 = vmatpush.msra.mxu0 0.0
      %1953 = vmatpush.msra.mxu0 0.0
      %1954 = vmatpush.msra.mxu0 0.0
      %1955 = vmatpush.msra.mxu0 0.0
      %1956 = vmatpush.msra.mxu0 0.0
      %1957 = vmatpush.msra.mxu0 0.0
      %1958 = vmatpush.msra.mxu0 0.0
      %1959 = vmatpush.msra.mxu0 0.0
      %1960 = vmatpush.msra.mxu0 %v1841
      %1961 = vmatpush.msra.mxu0 %v1792
      %1962 = vmatpush.msra.mxu0 %v1787
      %1963 = vmatmul.f32.gmra.mxu0 %v1820
      %v1964 = vpop.f32.mrf.mxu0
      %v1965 = vadd.f32 %v1806, %v1964
      %1966 = vmatmul.f32.gmra.mxu0 %v1823
      %v1967 = vpop.f32.mrf.mxu0
      %v1968 = vadd.f32 %v1811, %v1967
      %1969 = vmatmul.f32.gmra.mxu0 %v1826
      %v1970 = vpop.f32.mrf.mxu0
      %v1971 = vadd.f32 %v1816, %v1970
      %1972 = vdwg.mxu0
      %v1973 = vmax.f32 %v1861, 0.0
      %v1974 = vmax.f32 %v1887, 0.0
      %v1975 = vmax.f32 %v1913, 0.0
      %v1976 = vmax.f32 %v1939, 0.0
      %v1977 = vmax.f32 %v1965, 0.0
      %v1978 = vmax.f32 %v1864, 0.0
      %v1979 = vmax.f32 %v1890, 0.0
      %v1980 = vmax.f32 %v1916, 0.0
      %v1981 = vmax.f32 %v1942, 0.0
      %v1982 = vmax.f32 %v1968, 0.0
      %v1983 = vmax.f32 %v1867, 0.0
      %v1984 = vmax.f32 %v1893, 0.0
      %v1985 = vmax.f32 %v1919, 0.0
      %v1986 = vmax.f32 %v1945, 0.0
      %v1987 = vmax.f32 %v1971, 0.0
      %v1988 = vld [vmem:[%s15] sm:$0xff]
      %v1989 = vld [vmem:[%s15 + $0x8] sm:$0xf]
      %v1990 = vld [vmem:[%s14] sm:$0xff]
      %v1991 = vld [vmem:[%s14 + $0x8] sm:$0x7f]
      %1993 = vset.pattern.permute.xlu0 0
      %1994 = vperm.xlu0 %1993, %v1990
      %v1995 = vpop.permute.xlu0 %1994
      %1998 = vset.pattern.permute.xlu0 0
      %1999 = vperm.xlu0 %1998, %v1991
      %v2000 = vpop.permute.xlu0 %1999
      %vm2002 = vcmask 146432
      %v2004 = vsel %vm2002, %v1798, 0
      %v2007 = vsel %vm2002, %v1799, 0
      %v2010 = vsel %vm1552, %v1983, 0
      %v2013 = vsel %vm1552, %v1984, 0
      %v2016 = vsel %vm1552, %v1985, 0
      %v2019 = vsel %vm1552, %v1986, 0
      %v2022 = vsel %vm1552, %v1987, 0
      %2024 = vmatpush.msra.mxu0 0.0
      %2025 = vmatpush.msra.mxu0 0.0
      %2026 = vmatpush.msra.mxu0 0.0
      %2027 = vmatpush.msra.mxu0 0.0
      %2028 = vmatpush.msra.mxu0 0.0
      %2029 = vmatpush.msra.mxu0 0.0
      %2030 = vmatpush.msra.mxu0 0.0
      %2031 = vmatpush.msra.mxu0 0.0
      %2032 = vmatpush.msra.mxu0 0.0
      %2033 = vmatpush.msra.mxu0 0.0
      %2034 = vmatpush.msra.mxu0 0.0
      %2035 = vmatpush.msra.mxu0 0.0
      %2036 = vmatpush.msra.mxu0 0.0
      %2037 = vmatpush.msra.mxu0 %v2010
      %2038 = vmatpush.msra.mxu0 %v1978
      %2039 = vmatpush.msra.mxu0 %v1973
      %2040 = vmatmul.f32.gmra.mxu0 %v2004
      %v2041 = vpop.f32.mrf.mxu0
      %v2042 = vadd.f32 %v1995, %v2041
      %2043 = vmatmul.f32.gmra.mxu0 %v2007
      %v2044 = vpop.f32.mrf.mxu0
      %v2045 = vadd.f32 %v2000, %v2044
      %2046 = vdwg.mxu0
      %2047 = vmatpush.msra.mxu0 0.0
      %2048 = vmatpush.msra.mxu0 0.0
      %2049 = vmatpush.msra.mxu0 0.0
      %2050 = vmatpush.msra.mxu0 0.0
      %2051 = vmatpush.msra.mxu0 0.0
      %2052 = vmatpush.msra.mxu0 0.0
      %2053 = vmatpush.msra.mxu0 0.0
      %2054 = vmatpush.msra.mxu0 0.0
      %2055 = vmatpush.msra.mxu0 0.0
      %2056 = vmatpush.msra.mxu0 0.0
      %2057 = vmatpush.msra.mxu0 0.0
      %2058 = vmatpush.msra.mxu0 0.0
      %2059 = vmatpush.msra.mxu0 0.0
      %2060 = vmatpush.msra.mxu0 %v2013
      %2061 = vmatpush.msra.mxu0 %v1979
      %2062 = vmatpush.msra.mxu0 %v1974
      %2063 = vmatmul.f32.gmra.mxu0 %v2004
      %v2064 = vpop.f32.mrf.mxu0
      %v2065 = vadd.f32 %v1995, %v2064
      %2066 = vmatmul.f32.gmra.mxu0 %v2007
      %v2067 = vpop.f32.mrf.mxu0
      %v2068 = vadd.f32 %v2000, %v2067
      %2069 = vdwg.mxu0
      %2070 = vmatpush.msra.mxu0 0.0
      %2071 = vmatpush.msra.mxu0 0.0
      %2072 = vmatpush.msra.mxu0 0.0
      %2073 = vmatpush.msra.mxu0 0.0
      %2074 = vmatpush.msra.mxu0 0.0
      %2075 = vmatpush.msra.mxu0 0.0
      %2076 = vmatpush.msra.mxu0 0.0
      %2077 = vmatpush.msra.mxu0 0.0
      %2078 = vmatpush.msra.mxu0 0.0
      %2079 = vmatpush.msra.mxu0 0.0
      %2080 = vmatpush.msra.mxu0 0.0
      %2081 = vmatpush.msra.mxu0 0.0
      %2082 = vmatpush.msra.mxu0 0.0
      %2083 = vmatpush.msra.mxu0 %v2016
      %2084 = vmatpush.msra.mxu0 %v1980
      %2085 = vmatpush.msra.mxu0 %v1975
      %2086 = vmatmul.f32.gmra.mxu0 %v2004
      %v2087 = vpop.f32.mrf.mxu0
      %v2088 = vadd.f32 %v1995, %v2087
      %2089 = vmatmul.f32.gmra.mxu0 %v2007
      %v2090 = vpop.f32.mrf.mxu0
      %v2091 = vadd.f32 %v2000, %v2090
      %2092 = vdwg.mxu0
      %2093 = vmatpush.msra.mxu0 0.0
      %2094 = vmatpush.msra.mxu0 0.0
      %2095 = vmatpush.msra.mxu0 0.0
      %2096 = vmatpush.msra.mxu0 0.0
      %2097 = vmatpush.msra.mxu0 0.0
      %2098 = vmatpush.msra.mxu0 0.0
      %2099 = vmatpush.msra.mxu0 0.0
      %2100 = vmatpush.msra.mxu0 0.0
      %2101 = vmatpush.msra.mxu0 0.0
      %2102 = vmatpush.msra.mxu0 0.0
      %2103 = vmatpush.msra.mxu0 0.0
      %2104 = vmatpush.msra.mxu0 0.0
      %2105 = vmatpush.msra.mxu0 0.0
      %2106 = vmatpush.msra.mxu0 %v2019
      %2107 = vmatpush.msra.mxu0 %v1981
      %2108 = vmatpush.msra.mxu0 %v1976
      %2109 = vmatmul.f32.gmra.mxu0 %v2004
      %v2110 = vpop.f32.mrf.mxu0
      %v2111 = vadd.f32 %v1995, %v2110
      %2112 = vmatmul.f32.gmra.mxu0 %v2007
      %v2113 = vpop.f32.mrf.mxu0
      %v2114 = vadd.f32 %v2000, %v2113
      %2115 = vdwg.mxu0
      %2116 = vmatpush.msra.mxu0 0.0
      %2117 = vmatpush.msra.mxu0 0.0
      %2118 = vmatpush.msra.mxu0 0.0
      %2119 = vmatpush.msra.mxu0 0.0
      %2120 = vmatpush.msra.mxu0 0.0
      %2121 = vmatpush.msra.mxu0 0.0
      %2122 = vmatpush.msra.mxu0 0.0
      %2123 = vmatpush.msra.mxu0 0.0
      %2124 = vmatpush.msra.mxu0 0.0
      %2125 = vmatpush.msra.mxu0 0.0
      %2126 = vmatpush.msra.mxu0 0.0
      %2127 = vmatpush.msra.mxu0 0.0
      %2128 = vmatpush.msra.mxu0 0.0
      %2129 = vmatpush.msra.mxu0 %v2022
      %2130 = vmatpush.msra.mxu0 %v1982
      %2131 = vmatpush.msra.mxu0 %v1977
      %2132 = vmatmul.f32.gmra.mxu0 %v2004
      %v2133 = vpop.f32.mrf.mxu0
      %v2134 = vadd.f32 %v1995, %v2133
      %2135 = vmatmul.f32.gmra.mxu0 %v2007
      %v2136 = vpop.f32.mrf.mxu0
      %v2137 = vadd.f32 %v2000, %v2136
      %2138 = vdwg.mxu0
      %v2139 = vmax.f32 %v2042, 0.0
      %v2140 = vmax.f32 %v2065, 0.0
      %v2141 = vmax.f32 %v2088, 0.0
      %v2142 = vmax.f32 %v2111, 0.0
      %v2143 = vmax.f32 %v2134, 0.0
      %v2144 = vmax.f32 %v2045, 0.0
      %v2145 = vmax.f32 %v2068, 0.0
      %v2146 = vmax.f32 %v2091, 0.0
      %v2147 = vmax.f32 %v2114, 0.0
      %v2148 = vmax.f32 %v2137, 0.0
      %v2149 = vld [vmem:[%s17] sm:$0xff]
      %v2150 = vld [vmem:[%s17 + $0x8] sm:$0x1]
      %v2151 = vld [vmem:[%s16] sm:$0xff]
      %v2152 = vld [vmem:[%s16 + $0x8] sm:$0xf]
      %2154 = vset.pattern.permute.xlu0 0
      %2155 = vperm.xlu0 %2154, %v2151
      %v2156 = vpop.permute.xlu0 %2155
      %2159 = vset.pattern.permute.xlu0 0
      %2160 = vperm.xlu0 %2159, %v2152
      %v2161 = vpop.permute.xlu0 %2160
      %vm2163 = vcmask 121856
      %v2165 = vsel %vm2163, %v1988, 0
      %v2168 = vsel %vm2163, %v1989, 0
      %vm2170 = vcmask 1046528
      %v2172 = vsel %vm2170, %v2144, 0
      %v2175 = vsel %vm2170, %v2145, 0
      %v2178 = vsel %vm2170, %v2146, 0
      %v2181 = vsel %vm2170, %v2147, 0
      %v2184 = vsel %vm2170, %v2148, 0
      %2186 = vmatpush.msra.mxu0 0.0
      %2187 = vmatpush.msra.mxu0 0.0
      %2188 = vmatpush.msra.mxu0 0.0
      %2189 = vmatpush.msra.mxu0 0.0
      %2190 = vmatpush.msra.mxu0 0.0
      %2191 = vmatpush.msra.mxu0 0.0
      %2192 = vmatpush.msra.mxu0 0.0
      %2193 = vmatpush.msra.mxu0 0.0
      %2194 = vmatpush.msra.mxu0 0.0
      %2195 = vmatpush.msra.mxu0 0.0
      %2196 = vmatpush.msra.mxu0 0.0
      %2197 = vmatpush.msra.mxu0 0.0
      %2198 = vmatpush.msra.mxu0 0.0
      %2199 = vmatpush.msra.mxu0 0.0
      %2200 = vmatpush.msra.mxu0 %v2172
      %2201 = vmatpush.msra.mxu0 %v2139
      %2202 = vmatmul.f32.gmra.mxu0 %v2165
      %v2203 = vpop.f32.mrf.mxu0
      %v2204 = vadd.f32 %v2156, %v2203
      %2205 = vmatmul.f32.gmra.mxu0 %v2168
      %v2206 = vpop.f32.mrf.mxu0
      %v2207 = vadd.f32 %v2161, %v2206
      %2208 = vdwg.mxu0
      %2209 = vmatpush.msra.mxu0 0.0
      %2210 = vmatpush.msra.mxu0 0.0
      %2211 = vmatpush.msra.mxu0 0.0
      %2212 = vmatpush.msra.mxu0 0.0
      %2213 = vmatpush.msra.mxu0 0.0
      %2214 = vmatpush.msra.mxu0 0.0
      %2215 = vmatpush.msra.mxu0 0.0
      %2216 = vmatpush.msra.mxu0 0.0
      %2217 = vmatpush.msra.mxu0 0.0
      %2218 = vmatpush.msra.mxu0 0.0
      %2219 = vmatpush.msra.mxu0 0.0
      %2220 = vmatpush.msra.mxu0 0.0
      %2221 = vmatpush.msra.mxu0 0.0
      %2222 = vmatpush.msra.mxu0 0.0
      %2223 = vmatpush.msra.mxu0 %v2175
      %2224 = vmatpush.msra.mxu0 %v2140
      %2225 = vmatmul.f32.gmra.mxu0 %v2165
      %v2226 = vpop.f32.mrf.mxu0
      %v2227 = vadd.f32 %v2156, %v2226
      %2228 = vmatmul.f32.gmra.mxu0 %v2168
      %v2229 = vpop.f32.mrf.mxu0
      %v2230 = vadd.f32 %v2161, %v2229
      %2231 = vdwg.mxu0
      %2232 = vmatpush.msra.mxu0 0.0
      %2233 = vmatpush.msra.mxu0 0.0
      %2234 = vmatpush.msra.mxu0 0.0
      %2235 = vmatpush.msra.mxu0 0.0
      %2236 = vmatpush.msra.mxu0 0.0
      %2237 = vmatpush.msra.mxu0 0.0
      %2238 = vmatpush.msra.mxu0 0.0
      %2239 = vmatpush.msra.mxu0 0.0
      %2240 = vmatpush.msra.mxu0 0.0
      %2241 = vmatpush.msra.mxu0 0.0
      %2242 = vmatpush.msra.mxu0 0.0
      %2243 = vmatpush.msra.mxu0 0.0
      %2244 = vmatpush.msra.mxu0 0.0
      %2245 = vmatpush.msra.mxu0 0.0
      %2246 = vmatpush.msra.mxu0 %v2178
      %2247 = vmatpush.msra.mxu0 %v2141
      %2248 = vmatmul.f32.gmra.mxu0 %v2165
      %v2249 = vpop.f32.mrf.mxu0
      %v2250 = vadd.f32 %v2156, %v2249
      %2251 = vmatmul.f32.gmra.mxu0 %v2168
      %v2252 = vpop.f32.mrf.mxu0
      %v2253 = vadd.f32 %v2161, %v2252
      %2254 = vdwg.mxu0
      %2255 = vmatpush.msra.mxu0 0.0
      %2256 = vmatpush.msra.mxu0 0.0
      %2257 = vmatpush.msra.mxu0 0.0
      %2258 = vmatpush.msra.mxu0 0.0
      %2259 = vmatpush.msra.mxu0 0.0
      %2260 = vmatpush.msra.mxu0 0.0
      %2261 = vmatpush.msra.mxu0 0.0
      %2262 = vmatpush.msra.mxu0 0.0
      %2263 = vmatpush.msra.mxu0 0.0
      %2264 = vmatpush.msra.mxu0 0.0
      %2265 = vmatpush.msra.mxu0 0.0
      %2266 = vmatpush.msra.mxu0 0.0
      %2267 = vmatpush.msra.mxu0 0.0
      %2268 = vmatpush.msra.mxu0 0.0
      %2269 = vmatpush.msra.mxu0 %v2181
      %2270 = vmatpush.msra.mxu0 %v2142
      %2271 = vmatmul.f32.gmra.mxu0 %v2165
      %v2272 = vpop.f32.mrf.mxu0
      %v2273 = vadd.f32 %v2156, %v2272
      %2274 = vmatmul.f32.gmra.mxu0 %v2168
      %v2275 = vpop.f32.mrf.mxu0
      %v2276 = vadd.f32 %v2161, %v2275
      %2277 = vdwg.mxu0
      %2278 = vmatpush.msra.mxu0 0.0
      %2279 = vmatpush.msra.mxu0 0.0
      %2280 = vmatpush.msra.mxu0 0.0
      %2281 = vmatpush.msra.mxu0 0.0
      %2282 = vmatpush.msra.mxu0 0.0
      %2283 = vmatpush.msra.mxu0 0.0
      %2284 = vmatpush.msra.mxu0 0.0
      %2285 = vmatpush.msra.mxu0 0.0
      %2286 = vmatpush.msra.mxu0 0.0
      %2287 = vmatpush.msra.mxu0 0.0
      %2288 = vmatpush.msra.mxu0 0.0
      %2289 = vmatpush.msra.mxu0 0.0
      %2290 = vmatpush.msra.mxu0 0.0
      %2291 = vmatpush.msra.mxu0 0.0
      %2292 = vmatpush.msra.mxu0 %v2184
      %2293 = vmatpush.msra.mxu0 %v2143
      %2294 = vmatmul.f32.gmra.mxu0 %v2165
      %v2295 = vpop.f32.mrf.mxu0
      %v2296 = vadd.f32 %v2156, %v2295
      %2297 = vmatmul.f32.gmra.mxu0 %v2168
      %v2298 = vpop.f32.mrf.mxu0
      %v2299 = vadd.f32 %v2161, %v2298
      %2300 = vdwg.mxu0
      %v2301 = vmax.f32 %v2204, 0.0
      %v2302 = vmax.f32 %v2227, 0.0
      %v2303 = vmax.f32 %v2250, 0.0
      %v2304 = vmax.f32 %v2273, 0.0
      %v2305 = vmax.f32 %v2296, 0.0
      %v2306 = vmax.f32 %v2207, 0.0
      %v2307 = vmax.f32 %v2230, 0.0
      %v2308 = vmax.f32 %v2253, 0.0
      %v2309 = vmax.f32 %v2276, 0.0
      %v2310 = vmax.f32 %v2299, 0.0
      %v2311 = vld [vmem:[%s18] sm:$0xff]
      %v2312 = vld [vmem:[%s18 + $0x8] sm:$0x1]
      %2314 = vset.pattern.permute.xlu0 0
      %2315 = vperm.xlu0 %2314, %v2311
      %v2316 = vpop.permute.xlu0 %2315
      %2319 = vset.pattern.permute.xlu0 0
      %2320 = vperm.xlu0 %2319, %v2312
      %v2321 = vpop.permute.xlu0 %2320
      %vm2323 = vcmask 97280
      %v2325 = vsel %vm2323, %v2149, 0
      %v2328 = vsel %vm2323, %v2150, 0
      %vm2330 = vcmask 1043456
      %v2332 = vsel %vm2330, %v2306, 0
      %v2335 = vsel %vm2330, %v2307, 0
      %v2338 = vsel %vm2330, %v2308, 0
      %v2341 = vsel %vm2330, %v2309, 0
      %v2344 = vsel %vm2330, %v2310, 0
      %2346 = vmatpush.msra.mxu0 0.0
      %2347 = vmatpush.msra.mxu0 0.0
      %2348 = vmatpush.msra.mxu0 0.0
      %2349 = vmatpush.msra.mxu0 0.0
      %2350 = vmatpush.msra.mxu0 0.0
      %2351 = vmatpush.msra.mxu0 0.0
      %2352 = vmatpush.msra.mxu0 0.0
      %2353 = vmatpush.msra.mxu0 0.0
      %2354 = vmatpush.msra.mxu0 0.0
      %2355 = vmatpush.msra.mxu0 0.0
      %2356 = vmatpush.msra.mxu0 0.0
      %2357 = vmatpush.msra.mxu0 0.0
      %2358 = vmatpush.msra.mxu0 0.0
      %2359 = vmatpush.msra.mxu0 0.0
      %2360 = vmatpush.msra.mxu0 %v2332
      %2361 = vmatpush.msra.mxu0 %v2301
      %2362 = vmatmul.f32.gmra.mxu0 %v2325
      %v2363 = vpop.f32.mrf.mxu0
      %v2364 = vadd.f32 %v2316, %v2363
      %2365 = vmatmul.f32.gmra.mxu0 %v2328
      %v2366 = vpop.f32.mrf.mxu0
      %v2367 = vadd.f32 %v2321, %v2366
      %2368 = vdwg.mxu0
      %2369 = vmatpush.msra.mxu0 0.0
      %2370 = vmatpush.msra.mxu0 0.0
      %2371 = vmatpush.msra.mxu0 0.0
      %2372 = vmatpush.msra.mxu0 0.0
      %2373 = vmatpush.msra.mxu0 0.0
      %2374 = vmatpush.msra.mxu0 0.0
      %2375 = vmatpush.msra.mxu0 0.0
      %2376 = vmatpush.msra.mxu0 0.0
      %2377 = vmatpush.msra.mxu0 0.0
      %2378 = vmatpush.msra.mxu0 0.0
      %2379 = vmatpush.msra.mxu0 0.0
      %2380 = vmatpush.msra.mxu0 0.0
      %2381 = vmatpush.msra.mxu0 0.0
      %2382 = vmatpush.msra.mxu0 0.0
      %2383 = vmatpush.msra.mxu0 %v2335
      %2384 = vmatpush.msra.mxu0 %v2302
      %2385 = vmatmul.f32.gmra.mxu0 %v2325
      %v2386 = vpop.f32.mrf.mxu0
      %v2387 = vadd.f32 %v2316, %v2386
      %2388 = vmatmul.f32.gmra.mxu0 %v2328
      %v2389 = vpop.f32.mrf.mxu0
      %v2390 = vadd.f32 %v2321, %v2389
      %2391 = vdwg.mxu0
      %2392 = vmatpush.msra.mxu0 0.0
      %2393 = vmatpush.msra.mxu0 0.0
      %2394 = vmatpush.msra.mxu0 0.0
      %2395 = vmatpush.msra.mxu0 0.0
      %2396 = vmatpush.msra.mxu0 0.0
      %2397 = vmatpush.msra.mxu0 0.0
      %2398 = vmatpush.msra.mxu0 0.0
      %2399 = vmatpush.msra.mxu0 0.0
      %2400 = vmatpush.msra.mxu0 0.0
      %2401 = vmatpush.msra.mxu0 0.0
      %2402 = vmatpush.msra.mxu0 0.0
      %2403 = vmatpush.msra.mxu0 0.0
      %2404 = vmatpush.msra.mxu0 0.0
      %2405 = vmatpush.msra.mxu0 0.0
      %2406 = vmatpush.msra.mxu0 %v2338
      %2407 = vmatpush.msra.mxu0 %v2303
      %2408 = vmatmul.f32.gmra.mxu0 %v2325
      %v2409 = vpop.f32.mrf.mxu0
      %v2410 = vadd.f32 %v2316, %v2409
      %2411 = vmatmul.f32.gmra.mxu0 %v2328
      %v2412 = vpop.f32.mrf.mxu0
      %v2413 = vadd.f32 %v2321, %v2412
      %2414 = vdwg.mxu0
      %2415 = vmatpush.msra.mxu0 0.0
      %2416 = vmatpush.msra.mxu0 0.0
      %2417 = vmatpush.msra.mxu0 0.0
      %2418 = vmatpush.msra.mxu0 0.0
      %2419 = vmatpush.msra.mxu0 0.0
      %2420 = vmatpush.msra.mxu0 0.0
      %2421 = vmatpush.msra.mxu0 0.0
      %2422 = vmatpush.msra.mxu0 0.0
      %2423 = vmatpush.msra.mxu0 0.0
      %2424 = vmatpush.msra.mxu0 0.0
      %2425 = vmatpush.msra.mxu0 0.0
      %2426 = vmatpush.msra.mxu0 0.0
      %2427 = vmatpush.msra.mxu0 0.0
      %2428 = vmatpush.msra.mxu0 0.0
      %2429 = vmatpush.msra.mxu0 %v2341
      %2430 = vmatpush.msra.mxu0 %v2304
      %2431 = vmatmul.f32.gmra.mxu0 %v2325
      %v2432 = vpop.f32.mrf.mxu0
      %v2433 = vadd.f32 %v2316, %v2432
      %2434 = vmatmul.f32.gmra.mxu0 %v2328
      %v2435 = vpop.f32.mrf.mxu0
      %v2436 = vadd.f32 %v2321, %v2435
      %2437 = vdwg.mxu0
      %2438 = vmatpush.msra.mxu0 0.0
      %2439 = vmatpush.msra.mxu0 0.0
      %2440 = vmatpush.msra.mxu0 0.0
      %2441 = vmatpush.msra.mxu0 0.0
      %2442 = vmatpush.msra.mxu0 0.0
      %2443 = vmatpush.msra.mxu0 0.0
      %2444 = vmatpush.msra.mxu0 0.0
      %2445 = vmatpush.msra.mxu0 0.0
      %2446 = vmatpush.msra.mxu0 0.0
      %2447 = vmatpush.msra.mxu0 0.0
      %2448 = vmatpush.msra.mxu0 0.0
      %2449 = vmatpush.msra.mxu0 0.0
      %2450 = vmatpush.msra.mxu0 0.0
      %2451 = vmatpush.msra.mxu0 0.0
      %2452 = vmatpush.msra.mxu0 %v2344
      %2453 = vmatpush.msra.mxu0 %v2305
      %2454 = vmatmul.f32.gmra.mxu0 %v2325
      %v2455 = vpop.f32.mrf.mxu0
      %v2456 = vadd.f32 %v2316, %v2455
      %2457 = vmatmul.f32.gmra.mxu0 %v2328
      %v2458 = vpop.f32.mrf.mxu0
      %v2459 = vadd.f32 %v2321, %v2458
      %2460 = vdwg.mxu0
      %v2461 = vmax.f32 %v2364, 0.0
      %v2462 = vmax.f32 %v2387, 0.0
      %v2463 = vmax.f32 %v2410, 0.0
      %v2464 = vmax.f32 %v2433, 0.0
      %v2465 = vmax.f32 %v2456, 0.0
      %v2466 = vmax.f32 %v2367, 0.0
      %v2467 = vmax.f32 %v2390, 0.0
      %v2468 = vmax.f32 %v2413, 0.0
      %v2469 = vmax.f32 %v2436, 0.0
      %v2470 = vmax.f32 %v2459, 0.0
      %v2471 = vld [vmem:[%s19] sm:$0xff]
      %v2472 = vld [vmem:[%s19 + $0x8] sm:$0x1]
      %v2473 = vld [vmem:[#allocation2] sm:$0x1]
      %v2474 = vld [vmem:[%s3] sm:$0xff]
      %v2475 = vld [vmem:[%s3 + $0x8] sm:$0xff]
      %v2476 = vld [vmem:[%s3 + $0x90] sm:$0xff]
      %v2477 = vld [vmem:[%s3 + $0x98] sm:$0xff]
      %v2478 = vld [vmem:[%s3 + $0x120] sm:$0xff]
      %v2479 = vld [vmem:[%s3 + $0x128] sm:$0xff]
      %v2480 = vld [vmem:[%s3 + $0x1b0] sm:$0xff]
      %v2481 = vld [vmem:[%s3 + $0x1b8] sm:$0xff]
      %v2482 = vld [vmem:[%s3 + $0x240] sm:$0xff]
      %v2483 = vld [vmem:[%s3 + $0x248] sm:$0xff]
      %v2484 = vld [vmem:[%s3 + $0x2d0] sm:$0xff]
      %v2485 = vld [vmem:[%s3 + $0x2d8] sm:$0xff]
      %v2486 = vld [vmem:[%s3 + $0x360] sm:$0xff]
      %v2487 = vld [vmem:[%s3 + $0x368] sm:$0xff]
      %v2488 = vld [vmem:[%s3 + $0x3f0] sm:$0xff]
      %v2489 = vld [vmem:[%s3 + $0x3f8] sm:$0xff]
      %v2490 = vld [vmem:[%s3 + $0x480] sm:$0xff]
      %v2491 = vld [vmem:[%s3 + $0x488] sm:$0xff]
      %v2492 = vld [vmem:[%s3 + $0x510] sm:$0xff]
      %v2493 = vld [vmem:[%s3 + $0x518] sm:$0xff]
      %v2494 = vld [vmem:[%s3 + $0x5a0] sm:$0xff]
      %v2495 = vld [vmem:[%s3 + $0x5a8] sm:$0xff]
      %v2496 = vld [vmem:[%s3 + $0x630] sm:$0xff]
      %v2497 = vld [vmem:[%s3 + $0x638] sm:$0xff]
      %v2498 = vld [vmem:[%s3 + $0x6c0] sm:$0xff]
      %v2499 = vld [vmem:[%s3 + $0x6c8] sm:$0xff]
      %v2500 = vld [vmem:[%s3 + $0x750] sm:$0xff]
      %v2501 = vld [vmem:[%s3 + $0x758] sm:$0xff]
      %v2502 = vld [vmem:[%s3 + $0x7e0] sm:$0xff]
      %v2503 = vld [vmem:[%s3 + $0x7e8] sm:$0xff]
      %v2504 = vld [vmem:[%s3 + $0x870] sm:$0xff]
      %v2505 = vld [vmem:[%s3 + $0x878] sm:$0xff]
      %v2506 = vld [vmem:[%s3 + $0x900] sm:$0xff]
      %v2507 = vld [vmem:[%s3 + $0x908] sm:$0xff]
      %v2508 = vld [vmem:[%s3 + $0x990] sm:$0xff]
      %v2509 = vld [vmem:[%s3 + $0x998] sm:$0xff]
      %v2510 = vld [vmem:[%s3 + $0xa20] sm:$0xff]
      %v2511 = vld [vmem:[%s3 + $0xa28] sm:$0xff]
      %v2512 = vld [vmem:[%s3 + $0xab0] sm:$0xff]
      %v2513 = vld [vmem:[%s3 + $0xab8] sm:$0xff]
      %v2514 = vld [vmem:[%s3 + $0xb40] sm:$0xff]
      %v2515 = vld [vmem:[%s3 + $0xb48] sm:$0xff]
      %v2516 = vld [vmem:[%s3 + $0xbd0] sm:$0xff]
      %v2517 = vld [vmem:[%s3 + $0xbd8] sm:$0xff]
      %v2518 = vld [vmem:[%s3 + $0xc60] sm:$0xff]
      %v2519 = vld [vmem:[%s3 + $0xc68] sm:$0xff]
      %v2520 = vld [vmem:[%s3 + $0xcf0] sm:$0xff]
      %v2521 = vld [vmem:[%s3 + $0xcf8] sm:$0xff]
      %v2522 = vld [vmem:[%s3 + $0xd80] sm:$0xff]
      %v2523 = vld [vmem:[%s3 + $0xd88] sm:$0xff]
      %v2524 = vld [vmem:[%s3 + $0xe10] sm:$0xff]
      %v2525 = vld [vmem:[%s3 + $0xe18] sm:$0xff]
      %v2526 = vld [vmem:[%s3 + $0xea0] sm:$0xff]
      %v2527 = vld [vmem:[%s3 + $0xea8] sm:$0xff]
      %v2528 = vld [vmem:[%s3 + $0xf30] sm:$0xff]
      %v2529 = vld [vmem:[%s3 + $0xf38] sm:$0xff]
      %v2530 = vld [vmem:[%s3 + $0xfc0] sm:$0xff]
      %v2531 = vld [vmem:[%s3 + $0xfc8] sm:$0xff]
      %v2532 = vld [vmem:[%s3 + $0x1050] sm:$0xff]
      %v2533 = vld [vmem:[%s3 + $0x1058] sm:$0xff]
      %v2534 = vld [vmem:[%s3 + $0x10e0] sm:$0xff]
      %v2535 = vld [vmem:[%s3 + $0x10e8] sm:$0xff]
      %v2536 = vld [vmem:[%s3 + $0x1170] sm:$0xff]
      %v2537 = vld [vmem:[%s3 + $0x1178] sm:$0xff]
      %v2538 = vld [vmem:[%s3 + $0x1200] sm:$0xff]
      %v2539 = vld [vmem:[%s3 + $0x1208] sm:$0xff]
      %v2540 = vld [vmem:[%s3 + $0x1290] sm:$0xff]
      %v2541 = vld [vmem:[%s3 + $0x1298] sm:$0xff]
      %v2542 = vld [vmem:[%s3 + $0x1320] sm:$0xff]
      %v2543 = vld [vmem:[%s3 + $0x1328] sm:$0xff]
      %v2544 = vld [vmem:[%s3 + $0x13b0] sm:$0xff]
      %v2545 = vld [vmem:[%s3 + $0x13b8] sm:$0xff]
      %v2546 = vld [vmem:[%s3 + $0x1440] sm:$0xff]
      %v2547 = vld [vmem:[%s3 + $0x1448] sm:$0xff]
      %v2548 = vld [vmem:[%s3 + $0x14d0] sm:$0xff]
      %v2549 = vld [vmem:[%s3 + $0x14d8] sm:$0xff]
      %v2550 = vld [vmem:[%s3 + $0x1560] sm:$0xff]
      %v2551 = vld [vmem:[%s3 + $0x1568] sm:$0xff]
      %v2552 = vld [vmem:[%s3 + $0x15f0] sm:$0xff]
      %v2553 = vld [vmem:[%s3 + $0x15f8] sm:$0xff]
      %v2554 = vld [vmem:[%s3 + $0x1680] sm:$0xff]
      %v2555 = vld [vmem:[%s3 + $0x1688] sm:$0xff]
      %v2556 = vld [vmem:[%s3 + $0x1710] sm:$0xff]
      %v2557 = vld [vmem:[%s3 + $0x1718] sm:$0xff]
      %v2558 = vld [vmem:[%s3 + $0x17a0] sm:$0xff]
      %v2559 = vld [vmem:[%s3 + $0x17a8] sm:$0xff]
      %v2560 = vld [vmem:[%s3 + $0x1830] sm:$0xff]
      %v2561 = vld [vmem:[%s3 + $0x1838] sm:$0xff]
      %v2562 = vld [vmem:[%s3 + $0x18c0] sm:$0xff]
      %v2563 = vld [vmem:[%s3 + $0x18c8] sm:$0xff]
      %v2564 = vld [vmem:[%s3 + $0x1950] sm:$0xff]
      %v2565 = vld [vmem:[%s3 + $0x1958] sm:$0xff]
      %v2566 = vld [vmem:[%s3 + $0x19e0] sm:$0xff]
      %v2567 = vld [vmem:[%s3 + $0x19e8] sm:$0xff]
      %v2568 = vld [vmem:[%s3 + $0x1a70] sm:$0xff]
      %v2569 = vld [vmem:[%s3 + $0x1a78] sm:$0xff]
      %v2570 = vld [vmem:[%s3 + $0x1b00] sm:$0xff]
      %v2571 = vld [vmem:[%s3 + $0x1b08] sm:$0xff]
      %v2572 = vld [vmem:[%s3 + $0x1b90] sm:$0xff]
      %v2573 = vld [vmem:[%s3 + $0x1b98] sm:$0xff]
      %v2574 = vld [vmem:[%s3 + $0x1c20] sm:$0xff]
      %v2575 = vld [vmem:[%s3 + $0x1c28] sm:$0xff]
      %v2576 = vld [vmem:[%s3 + $0x1cb0] sm:$0xff]
      %v2577 = vld [vmem:[%s3 + $0x1cb8] sm:$0xff]
      %v2578 = vld [vmem:[%s3 + $0x1d40] sm:$0xff]
      %v2579 = vld [vmem:[%s3 + $0x1d48] sm:$0xff]
      %v2580 = vld [vmem:[%s3 + $0x1dd0] sm:$0xff]
      %v2581 = vld [vmem:[%s3 + $0x1dd8] sm:$0xff]
      %v2582 = vld [vmem:[%s3 + $0x1e60] sm:$0xff]
      %v2583 = vld [vmem:[%s3 + $0x1e68] sm:$0xff]
      %v2584 = vld [vmem:[%s3 + $0x1ef0] sm:$0xff]
      %v2585 = vld [vmem:[%s3 + $0x1ef8] sm:$0xff]
      %v2586 = vld [vmem:[%s3 + $0x1f80] sm:$0xff]
      %v2587 = vld [vmem:[%s3 + $0x1f88] sm:$0xff]
      %v2588 = vld [vmem:[%s3 + $0x2010] sm:$0xff]
      %v2589 = vld [vmem:[%s3 + $0x2018] sm:$0xff]
      %v2590 = vld [vmem:[%s3 + $0x20a0] sm:$0xff]
      %v2591 = vld [vmem:[%s3 + $0x20a8] sm:$0xff]
      %v2592 = vld [vmem:[%s3 + $0x2130] sm:$0xff]
      %v2593 = vld [vmem:[%s3 + $0x2138] sm:$0xff]
      %v2594 = vld [vmem:[%s3 + $0x21c0] sm:$0xff]
      %v2595 = vld [vmem:[%s3 + $0x21c8] sm:$0xff]
      %v2596 = vld [vmem:[%s3 + $0x2250] sm:$0xff]
      %v2597 = vld [vmem:[%s3 + $0x2258] sm:$0xff]
      %v2598 = vld [vmem:[%s3 + $0x22e0] sm:$0xff]
      %v2599 = vld [vmem:[%s3 + $0x22e8] sm:$0xff]
      %v2600 = vld [vmem:[%s3 + $0x2370] sm:$0xff]
      %v2601 = vld [vmem:[%s3 + $0x2378] sm:$0xff]
      %v2602 = vld [vmem:[%s3 + $0x2400] sm:$0xff]
      %v2603 = vld [vmem:[%s3 + $0x2408] sm:$0xff]
      %v2604 = vld [vmem:[%s3 + $0x2490] sm:$0xff]
      %v2605 = vld [vmem:[%s3 + $0x2498] sm:$0xff]
      %v2606 = vld [vmem:[%s3 + $0x2520] sm:$0xff]
      %v2607 = vld [vmem:[%s3 + $0x2528] sm:$0xff]
      %v2608 = vld [vmem:[%s3 + $0x25b0] sm:$0xff]
      %v2609 = vld [vmem:[%s3 + $0x25b8] sm:$0xff]
      %v2610 = vld [vmem:[%s3 + $0x2640] sm:$0xff]
      %v2611 = vld [vmem:[%s3 + $0x2648] sm:$0xff]
      %v2612 = vld [vmem:[%s3 + $0x26d0] sm:$0xff]
      %v2613 = vld [vmem:[%s3 + $0x26d8] sm:$0xff]
      %v2614 = vld [vmem:[%s3 + $0x2760] sm:$0xff]
      %v2615 = vld [vmem:[%s3 + $0x2768] sm:$0xff]
      %v2616 = vld [vmem:[%s3 + $0x27f0] sm:$0xff]
      %v2617 = vld [vmem:[%s3 + $0x27f8] sm:$0xff]
      %v2619 = vsel %vm1643, %v2465, 0
      %v2622 = vsel %vm1643, %v2470, 0
      %2624 = vmatpush.msra.mxu0 %v2504
      %2625 = vmatpush.msra.mxu0 %v2502
      %2626 = vmatpush.msra.mxu0 %v2500
      %2627 = vmatpush.msra.mxu0 %v2498
      %2628 = vmatpush.msra.mxu0 %v2496
      %2629 = vmatpush.msra.mxu0 %v2494
      %2630 = vmatpush.msra.mxu0 %v2492
      %2631 = vmatpush.msra.mxu0 %v2490
      %2632 = vmatpush.msra.mxu0 %v2488
      %2633 = vmatpush.msra.mxu0 %v2486
      %2634 = vmatpush.msra.mxu0 %v2484
      %2635 = vmatpush.msra.mxu0 %v2482
      %2636 = vmatpush.msra.mxu0 %v2480
      %2637 = vmatpush.msra.mxu0 %v2478
      %2638 = vmatpush.msra.mxu0 %v2476
      %2639 = vmatpush.msra.mxu0 %v2474
      %2640 = vmatmul.f32.gmra.mxu0 %v2461
      %v2641 = vpop.f32.mrf.mxu0
      %v2642 = vadd.f32 0.0, %v2641
      %2643 = vmatmul.f32.gmra.mxu0 %v2466
      %v2644 = vpop.f32.mrf.mxu0
      %v2645 = vadd.f32 0.0, %v2644
      %2646 = vdwg.mxu0
      %2647 = vmatpush.msra.mxu0 %v2536
      %2648 = vmatpush.msra.mxu0 %v2534
      %2649 = vmatpush.msra.mxu0 %v2532
      %2650 = vmatpush.msra.mxu0 %v2530
      %2651 = vmatpush.msra.mxu0 %v2528
      %2652 = vmatpush.msra.mxu0 %v2526
      %2653 = vmatpush.msra.mxu0 %v2524
      %2654 = vmatpush.msra.mxu0 %v2522
      %2655 = vmatpush.msra.mxu0 %v2520
      %2656 = vmatpush.msra.mxu0 %v2518
      %2657 = vmatpush.msra.mxu0 %v2516
      %2658 = vmatpush.msra.mxu0 %v2514
      %2659 = vmatpush.msra.mxu0 %v2512
      %2660 = vmatpush.msra.mxu0 %v2510
      %2661 = vmatpush.msra.mxu0 %v2508
      %2662 = vmatpush.msra.mxu0 %v2506
      %2663 = vmatmul.f32.gmra.mxu0 %v2462
      %v2664 = vpop.f32.mrf.mxu0
      %v2665 = vadd.f32 %v2642, %v2664
      %2666 = vmatmul.f32.gmra.mxu0 %v2467
      %v2667 = vpop.f32.mrf.mxu0
      %v2668 = vadd.f32 %v2645, %v2667
      %2669 = vdwg.mxu0
      %2670 = vmatpush.msra.mxu0 %v2568
      %2671 = vmatpush.msra.mxu0 %v2566
      %2672 = vmatpush.msra.mxu0 %v2564
      %2673 = vmatpush.msra.mxu0 %v2562
      %2674 = vmatpush.msra.mxu0 %v2560
      %2675 = vmatpush.msra.mxu0 %v2558
      %2676 = vmatpush.msra.mxu0 %v2556
      %2677 = vmatpush.msra.mxu0 %v2554
      %2678 = vmatpush.msra.mxu0 %v2552
      %2679 = vmatpush.msra.mxu0 %v2550
      %2680 = vmatpush.msra.mxu0 %v2548
      %2681 = vmatpush.msra.mxu0 %v2546
      %2682 = vmatpush.msra.mxu0 %v2544
      %2683 = vmatpush.msra.mxu0 %v2542
      %2684 = vmatpush.msra.mxu0 %v2540
      %2685 = vmatpush.msra.mxu0 %v2538
      %2686 = vmatmul.f32.gmra.mxu0 %v2463
      %v2687 = vpop.f32.mrf.mxu0
      %v2688 = vadd.f32 %v2665, %v2687
      %2689 = vmatmul.f32.gmra.mxu0 %v2468
      %v2690 = vpop.f32.mrf.mxu0
      %v2691 = vadd.f32 %v2668, %v2690
      %2692 = vdwg.mxu0
      %2693 = vmatpush.msra.mxu0 %v2600
      %2694 = vmatpush.msra.mxu0 %v2598
      %2695 = vmatpush.msra.mxu0 %v2596
      %2696 = vmatpush.msra.mxu0 %v2594
      %2697 = vmatpush.msra.mxu0 %v2592
      %2698 = vmatpush.msra.mxu0 %v2590
      %2699 = vmatpush.msra.mxu0 %v2588
      %2700 = vmatpush.msra.mxu0 %v2586
      %2701 = vmatpush.msra.mxu0 %v2584
      %2702 = vmatpush.msra.mxu0 %v2582
      %2703 = vmatpush.msra.mxu0 %v2580
      %2704 = vmatpush.msra.mxu0 %v2578
      %2705 = vmatpush.msra.mxu0 %v2576
      %2706 = vmatpush.msra.mxu0 %v2574
      %2707 = vmatpush.msra.mxu0 %v2572
      %2708 = vmatpush.msra.mxu0 %v2570
      %2709 = vmatmul.f32.gmra.mxu0 %v2464
      %v2710 = vpop.f32.mrf.mxu0
      %v2711 = vadd.f32 %v2688, %v2710
      %2712 = vmatmul.f32.gmra.mxu0 %v2469
      %v2713 = vpop.f32.mrf.mxu0
      %v2714 = vadd.f32 %v2691, %v2713
      %2715 = vdwg.mxu0
      %2716 = vmatpush.msra.mxu0 0.0
      %2717 = vmatpush.msra.mxu0 0.0
      %2718 = vmatpush.msra.mxu0 0.0
      %2719 = vmatpush.msra.mxu0 0.0
      %2720 = vmatpush.msra.mxu0 0.0
      %2721 = vmatpush.msra.mxu0 0.0
      %2722 = vmatpush.msra.mxu0 0.0
      %2723 = vmatpush.msra.mxu0 0.0
      %2724 = vmatpush.msra.mxu0 %v2616
      %2725 = vmatpush.msra.mxu0 %v2614
      %2726 = vmatpush.msra.mxu0 %v2612
      %2727 = vmatpush.msra.mxu0 %v2610
      %2728 = vmatpush.msra.mxu0 %v2608
      %2729 = vmatpush.msra.mxu0 %v2606
      %2730 = vmatpush.msra.mxu0 %v2604
      %2731 = vmatpush.msra.mxu0 %v2602
      %2732 = vmatmul.f32.gmra.mxu0 %v2619
      %v2733 = vpop.f32.mrf.mxu0
      %v2734 = vadd.f32 %v2711, %v2733
      %2735 = vmatmul.f32.gmra.mxu0 %v2622
      %v2736 = vpop.f32.mrf.mxu0
      %v2737 = vadd.f32 %v2714, %v2736
      %2738 = vdwg.mxu0
      %2739 = vmatpush.msra.mxu0 %v2505
      %2740 = vmatpush.msra.mxu0 %v2503
      %2741 = vmatpush.msra.mxu0 %v2501
      %2742 = vmatpush.msra.mxu0 %v2499
      %2743 = vmatpush.msra.mxu0 %v2497
      %2744 = vmatpush.msra.mxu0 %v2495
      %2745 = vmatpush.msra.mxu0 %v2493
      %2746 = vmatpush.msra.mxu0 %v2491
      %2747 = vmatpush.msra.mxu0 %v2489
      %2748 = vmatpush.msra.mxu0 %v2487
      %2749 = vmatpush.msra.mxu0 %v2485
      %2750 = vmatpush.msra.mxu0 %v2483
      %2751 = vmatpush.msra.mxu0 %v2481
      %2752 = vmatpush.msra.mxu0 %v2479
      %2753 = vmatpush.msra.mxu0 %v2477
      %2754 = vmatpush.msra.mxu0 %v2475
      %2755 = vmatmul.f32.gmra.mxu0 %v2461
      %v2756 = vpop.f32.mrf.mxu0
      %v2757 = vadd.f32 0.0, %v2756
      %2758 = vmatmul.f32.gmra.mxu0 %v2466
      %v2759 = vpop.f32.mrf.mxu0
      %v2760 = vadd.f32 0.0, %v2759
      %2761 = vdwg.mxu0
      %2762 = vmatpush.msra.mxu0 %v2537
      %2763 = vmatpush.msra.mxu0 %v2535
      %2764 = vmatpush.msra.mxu0 %v2533
      %2765 = vmatpush.msra.mxu0 %v2531
      %2766 = vmatpush.msra.mxu0 %v2529
      %2767 = vmatpush.msra.mxu0 %v2527
      %2768 = vmatpush.msra.mxu0 %v2525
      %2769 = vmatpush.msra.mxu0 %v2523
      %2770 = vmatpush.msra.mxu0 %v2521
      %2771 = vmatpush.msra.mxu0 %v2519
      %2772 = vmatpush.msra.mxu0 %v2517
      %2773 = vmatpush.msra.mxu0 %v2515
      %2774 = vmatpush.msra.mxu0 %v2513
      %2775 = vmatpush.msra.mxu0 %v2511
      %2776 = vmatpush.msra.mxu0 %v2509
      %2777 = vmatpush.msra.mxu0 %v2507
      %2778 = vmatmul.f32.gmra.mxu0 %v2462
      %v2779 = vpop.f32.mrf.mxu0
      %v2780 = vadd.f32 %v2757, %v2779
      %2781 = vmatmul.f32.gmra.mxu0 %v2467
      %v2782 = vpop.f32.mrf.mxu0
      %v2783 = vadd.f32 %v2760, %v2782
      %2784 = vdwg.mxu0
      %2785 = vmatpush.msra.mxu0 %v2569
      %2786 = vmatpush.msra.mxu0 %v2567
      %2787 = vmatpush.msra.mxu0 %v2565
      %2788 = vmatpush.msra.mxu0 %v2563
      %2789 = vmatpush.msra.mxu0 %v2561
      %2790 = vmatpush.msra.mxu0 %v2559
      %2791 = vmatpush.msra.mxu0 %v2557
      %2792 = vmatpush.msra.mxu0 %v2555
      %2793 = vmatpush.msra.mxu0 %v2553
      %2794 = vmatpush.msra.mxu0 %v2551
      %2795 = vmatpush.msra.mxu0 %v2549
      %2796 = vmatpush.msra.mxu0 %v2547
      %2797 = vmatpush.msra.mxu0 %v2545
      %2798 = vmatpush.msra.mxu0 %v2543
      %2799 = vmatpush.msra.mxu0 %v2541
      %2800 = vmatpush.msra.mxu0 %v2539
      %2801 = vmatmul.f32.gmra.mxu0 %v2463
      %v2802 = vpop.f32.mrf.mxu0
      %v2803 = vadd.f32 %v2780, %v2802
      %2804 = vmatmul.f32.gmra.mxu0 %v2468
      %v2805 = vpop.f32.mrf.mxu0
      %v2806 = vadd.f32 %v2783, %v2805
      %2807 = vdwg.mxu0
      %2808 = vmatpush.msra.mxu0 %v2601
      %2809 = vmatpush.msra.mxu0 %v2599
      %2810 = vmatpush.msra.mxu0 %v2597
      %2811 = vmatpush.msra.mxu0 %v2595
      %2812 = vmatpush.msra.mxu0 %v2593
      %2813 = vmatpush.msra.mxu0 %v2591
      %2814 = vmatpush.msra.mxu0 %v2589
      %2815 = vmatpush.msra.mxu0 %v2587
      %2816 = vmatpush.msra.mxu0 %v2585
      %2817 = vmatpush.msra.mxu0 %v2583
      %2818 = vmatpush.msra.mxu0 %v2581
      %2819 = vmatpush.msra.mxu0 %v2579
      %2820 = vmatpush.msra.mxu0 %v2577
      %2821 = vmatpush.msra.mxu0 %v2575
      %2822 = vmatpush.msra.mxu0 %v2573
      %2823 = vmatpush.msra.mxu0 %v2571
      %2824 = vmatmul.f32.gmra.mxu0 %v2464
      %v2825 = vpop.f32.mrf.mxu0
      %v2826 = vadd.f32 %v2803, %v2825
      %2827 = vmatmul.f32.gmra.mxu0 %v2469
      %v2828 = vpop.f32.mrf.mxu0
      %v2829 = vadd.f32 %v2806, %v2828
      %2830 = vdwg.mxu0
      %2831 = vmatpush.msra.mxu0 0.0
      %2832 = vmatpush.msra.mxu0 0.0
      %2833 = vmatpush.msra.mxu0 0.0
      %2834 = vmatpush.msra.mxu0 0.0
      %2835 = vmatpush.msra.mxu0 0.0
      %2836 = vmatpush.msra.mxu0 0.0
      %2837 = vmatpush.msra.mxu0 0.0
      %2838 = vmatpush.msra.mxu0 0.0
      %2839 = vmatpush.msra.mxu0 %v2617
      %2840 = vmatpush.msra.mxu0 %v2615
      %2841 = vmatpush.msra.mxu0 %v2613
      %2842 = vmatpush.msra.mxu0 %v2611
      %2843 = vmatpush.msra.mxu0 %v2609
      %2844 = vmatpush.msra.mxu0 %v2607
      %2845 = vmatpush.msra.mxu0 %v2605
      %2846 = vmatpush.msra.mxu0 %v2603
      %2847 = vmatmul.f32.gmra.mxu0 %v2619
      %v2848 = vpop.f32.mrf.mxu0
      %v2849 = vadd.f32 %v2826, %v2848
      %2850 = vmatmul.f32.gmra.mxu0 %v2622
      %v2851 = vpop.f32.mrf.mxu0
      %v2852 = vadd.f32 %v2829, %v2851
      %2853 = vdwg.mxu0
      %2855 = vset.pattern.permute.xlu0 0
      %2856 = vperm.xlu0 %2855, %v2471
      %v2857 = vpop.permute.xlu0 %2856
      %2860 = vset.pattern.permute.xlu0 0
      %2861 = vperm.xlu0 %2860, %v2472
      %v2862 = vpop.permute.xlu0 %2861
      %v2864 = vmul.f32 %v2734, %v2857
      %v2865 = vmul.f32 %v2849, %v2857
      %v2866 = vmul.f32 %v2737, %v2862
      %v2867 = vmul.f32 %v2852, %v2862
      %vm2868 = vcmask 1040384
      %v2869 = vsel %vm2868, %v2866, 0.0
      %v2870 = vadd.f32 %v2864, %v2869
      %v2871 = vrot.slane %v2870, 4
      %v2872 = vadd.f32 %v2870, %v2871
      %v2873 = vrot.slane %v2872, 2
      %v2874 = vadd.f32 %v2872, %v2873
      %v2875 = vrot.slane %v2874, 1
      %v2876 = vadd.f32 %v2874, %v2875
      %v2877 = vsel %vm2868, %v2867, 0.0
      %v2878 = vadd.f32 %v2865, %v2877
      %v2879 = vrot.slane %v2878, 4
      %v2880 = vadd.f32 %v2878, %v2879
      %v2881 = vrot.slane %v2880, 2
      %v2882 = vadd.f32 %v2880, %v2881
      %v2883 = vrot.slane %v2882, 1
      %v2884 = vadd.f32 %v2882, %v2883
      %2886 = vset.pattern.permute.xlu0 0
      %2887 = vperm.xlu0 %2886, %v2473
      %v2888 = vpop.permute.xlu0 %2887
      %v2890 = vperm.slane %v2888, 0
      %v2891 = vadd.f32 %v2876, %v2890
      %v2892 = vadd.f32 %v2884, %v2890
      %v2893 = vxor.u32 %v2891, 2147483648
      %v2894 = vxor.u32 %v2892, 2147483648
      %v2895 = vmul.f32 %v2893, 1.442695
      %v2896 = vpow.pop %v2895
      %v2897 = vmul.f32 %v2894, 1.442695
      %v2898 = vpow.pop %v2897
      %v2899 = vadd.f32 %v2896, 1.0
      %v2900 = vadd.f32 %v2898, 1.0
      %v2901 = vrcp.pop %v2899
      %v2902 = vmul.f32 %v2899, %v2901
      %v2903 = vsub.f32 1.0, %v2902
      %v2904 = vmul.f32 %v2901, %v2903
      %v2905 = vadd.f32 %v2901, %v2904
      %vm2906 = vweird.f32 %v2899
      %vm2907 = vweird.f32 %v2901
      %vm2908 = vmor %vm2906, %vm2907
      %v2909 = vsel %vm2908, %v2901, %v2905
      %v2910 = vand.u32 2147483647, %v2899
      %vm2911 = vcmp.eq.f32.partialorder %v2910, 8.507059e+37
      %v2912 = vand.u32 %v2899, 2147483648
      %v2913 = vor.u32 1.1754944e-38, %v2912
      %v2914 = vsel %vm2911, %v2913, %v2909
      %v2915 = vmul.f32 1.0, %v2914
      %v2916 = vrcp.pop %v2900
      %v2917 = vmul.f32 %v2900, %v2916
      %v2918 = vsub.f32 1.0, %v2917
      %v2919 = vmul.f32 %v2916, %v2918
      %v2920 = vadd.f32 %v2916, %v2919
      %vm2921 = vweird.f32 %v2900
      %vm2922 = vweird.f32 %v2916
      %vm2923 = vmor %vm2921, %vm2922
      %v2924 = vsel %vm2923, %v2916, %v2920
      %v2925 = vand.u32 2147483647, %v2900
      %vm2926 = vcmp.eq.f32.partialorder %v2925, 8.507059e+37
      %v2927 = vand.u32 %v2900, 2147483648
      %v2928 = vor.u32 1.1754944e-38, %v2927
      %v2929 = vsel %vm2926, %v2928, %v2924
      %v2930 = vmul.f32 1.0, %v2929
      %v2933 = vrot.slane %v2930, 7
      %v2934 = vsel %vm2868, %v2915, %v2933
      %v2936 = vlaneseq
      %vm2937 = vcmp.ge.s32.totalorder %v2936, 0
      %vm2938 = vcmp.lt.s32.totalorder %v2936, 256
      %vm2939 = vmand %vm2937, %vm2938
      %2940 = vst.msk [vmem:[%s656] sm:$0x3] %vm2939, %v2934
      %v2941 = vld [vmem:[%s3 + $0x10] sm:$0xff]
      %v2942 = vld [vmem:[%s3 + $0x18] sm:$0xff]
      %v2943 = vld [vmem:[%s3 + $0xa0] sm:$0xff]
      %v2944 = vld [vmem:[%s3 + $0xa8] sm:$0xff]
      %v2945 = vld [vmem:[%s3 + $0x130] sm:$0xff]
      %v2946 = vld [vmem:[%s3 + $0x138] sm:$0xff]
      %v2947 = vld [vmem:[%s3 + $0x1c0] sm:$0xff]
      %v2948 = vld [vmem:[%s3 + $0x1c8] sm:$0xff]
      %v2949 = vld [vmem:[%s3 + $0x250] sm:$0xff]
      %v2950 = vld [vmem:[%s3 + $0x258] sm:$0xff]
      %v2951 = vld [vmem:[%s3 + $0x2e0] sm:$0xff]
      %v2952 = vld [vmem:[%s3 + $0x2e8] sm:$0xff]
      %v2953 = vld [vmem:[%s3 + $0x370] sm:$0xff]
      %v2954 = vld [vmem:[%s3 + $0x378] sm:$0xff]
      %v2955 = vld [vmem:[%s3 + $0x400] sm:$0xff]
      %v2956 = vld [vmem:[%s3 + $0x408] sm:$0xff]
      %v2957 = vld [vmem:[%s3 + $0x490] sm:$0xff]
      %v2958 = vld [vmem:[%s3 + $0x498] sm:$0xff]
      %v2959 = vld [vmem:[%s3 + $0x520] sm:$0xff]
      %v2960 = vld [vmem:[%s3 + $0x528] sm:$0xff]
      %v2961 = vld [vmem:[%s3 + $0x5b0] sm:$0xff]
      %v2962 = vld [vmem:[%s3 + $0x5b8] sm:$0xff]
      %v2963 = vld [vmem:[%s3 + $0x640] sm:$0xff]
      %v2964 = vld [vmem:[%s3 + $0x648] sm:$0xff]
      %v2965 = vld [vmem:[%s3 + $0x6d0] sm:$0xff]
      %v2966 = vld [vmem:[%s3 + $0x6d8] sm:$0xff]
      %v2967 = vld [vmem:[%s3 + $0x760] sm:$0xff]
      %v2968 = vld [vmem:[%s3 + $0x768] sm:$0xff]
      %v2969 = vld [vmem:[%s3 + $0x7f0] sm:$0xff]
      %v2970 = vld [vmem:[%s3 + $0x7f8] sm:$0xff]
      %v2971 = vld [vmem:[%s3 + $0x880] sm:$0xff]
      %v2972 = vld [vmem:[%s3 + $0x888] sm:$0xff]
      %v2973 = vld [vmem:[%s3 + $0x910] sm:$0xff]
      %v2974 = vld [vmem:[%s3 + $0x918] sm:$0xff]
      %v2975 = vld [vmem:[%s3 + $0x9a0] sm:$0xff]
      %v2976 = vld [vmem:[%s3 + $0x9a8] sm:$0xff]
      %v2977 = vld [vmem:[%s3 + $0xa30] sm:$0xff]
      %v2978 = vld [vmem:[%s3 + $0xa38] sm:$0xff]
      %v2979 = vld [vmem:[%s3 + $0xac0] sm:$0xff]
      %v2980 = vld [vmem:[%s3 + $0xac8] sm:$0xff]
      %v2981 = vld [vmem:[%s3 + $0xb50] sm:$0xff]
      %v2982 = vld [vmem:[%s3 + $0xb58] sm:$0xff]
      %v2983 = vld [vmem:[%s3 + $0xbe0] sm:$0xff]
      %v2984 = vld [vmem:[%s3 + $0xbe8] sm:$0xff]
      %v2985 = vld [vmem:[%s3 + $0xc70] sm:$0xff]
      %v2986 = vld [vmem:[%s3 + $0xc78] sm:$0xff]
      %v2987 = vld [vmem:[%s3 + $0xd00] sm:$0xff]
      %v2988 = vld [vmem:[%s3 + $0xd08] sm:$0xff]
      %v2989 = vld [vmem:[%s3 + $0xd90] sm:$0xff]
      %v2990 = vld [vmem:[%s3 + $0xd98] sm:$0xff]
      %v2991 = vld [vmem:[%s3 + $0xe20] sm:$0xff]
      %v2992 = vld [vmem:[%s3 + $0xe28] sm:$0xff]
      %v2993 = vld [vmem:[%s3 + $0xeb0] sm:$0xff]
      %v2994 = vld [vmem:[%s3 + $0xeb8] sm:$0xff]
      %v2995 = vld [vmem:[%s3 + $0xf40] sm:$0xff]
      %v2996 = vld [vmem:[%s3 + $0xf48] sm:$0xff]
      %v2997 = vld [vmem:[%s3 + $0xfd0] sm:$0xff]
      %v2998 = vld [vmem:[%s3 + $0xfd8] sm:$0xff]
      %v2999 = vld [vmem:[%s3 + $0x1060] sm:$0xff]
      %v3000 = vld [vmem:[%s3 + $0x1068] sm:$0xff]
      %v3001 = vld [vmem:[%s3 + $0x10f0] sm:$0xff]
      %v3002 = vld [vmem:[%s3 + $0x10f8] sm:$0xff]
      %v3003 = vld [vmem:[%s3 + $0x1180] sm:$0xff]
      %v3004 = vld [vmem:[%s3 + $0x1188] sm:$0xff]
      %v3005 = vld [vmem:[%s3 + $0x1210] sm:$0xff]
      %v3006 = vld [vmem:[%s3 + $0x1218] sm:$0xff]
      %v3007 = vld [vmem:[%s3 + $0x12a0] sm:$0xff]
      %v3008 = vld [vmem:[%s3 + $0x12a8] sm:$0xff]
      %v3009 = vld [vmem:[%s3 + $0x1330] sm:$0xff]
      %v3010 = vld [vmem:[%s3 + $0x1338] sm:$0xff]
      %v3011 = vld [vmem:[%s3 + $0x13c0] sm:$0xff]
      %v3012 = vld [vmem:[%s3 + $0x13c8] sm:$0xff]
      %v3013 = vld [vmem:[%s3 + $0x1450] sm:$0xff]
      %v3014 = vld [vmem:[%s3 + $0x1458] sm:$0xff]
      %v3015 = vld [vmem:[%s3 + $0x14e0] sm:$0xff]
      %v3016 = vld [vmem:[%s3 + $0x14e8] sm:$0xff]
      %v3017 = vld [vmem:[%s3 + $0x1570] sm:$0xff]
      %v3018 = vld [vmem:[%s3 + $0x1578] sm:$0xff]
      %v3019 = vld [vmem:[%s3 + $0x1600] sm:$0xff]
      %v3020 = vld [vmem:[%s3 + $0x1608] sm:$0xff]
      %v3021 = vld [vmem:[%s3 + $0x1690] sm:$0xff]
      %v3022 = vld [vmem:[%s3 + $0x1698] sm:$0xff]
      %v3023 = vld [vmem:[%s3 + $0x1720] sm:$0xff]
      %v3024 = vld [vmem:[%s3 + $0x1728] sm:$0xff]
      %v3025 = vld [vmem:[%s3 + $0x17b0] sm:$0xff]
      %v3026 = vld [vmem:[%s3 + $0x17b8] sm:$0xff]
      %v3027 = vld [vmem:[%s3 + $0x1840] sm:$0xff]
      %v3028 = vld [vmem:[%s3 + $0x1848] sm:$0xff]
      %v3029 = vld [vmem:[%s3 + $0x18d0] sm:$0xff]
      %v3030 = vld [vmem:[%s3 + $0x18d8] sm:$0xff]
      %v3031 = vld [vmem:[%s3 + $0x1960] sm:$0xff]
      %v3032 = vld [vmem:[%s3 + $0x1968] sm:$0xff]
      %v3033 = vld [vmem:[%s3 + $0x19f0] sm:$0xff]
      %v3034 = vld [vmem:[%s3 + $0x19f8] sm:$0xff]
      %v3035 = vld [vmem:[%s3 + $0x1a80] sm:$0xff]
      %v3036 = vld [vmem:[%s3 + $0x1a88] sm:$0xff]
      %v3037 = vld [vmem:[%s3 + $0x1b10] sm:$0xff]
      %v3038 = vld [vmem:[%s3 + $0x1b18] sm:$0xff]
      %v3039 = vld [vmem:[%s3 + $0x1ba0] sm:$0xff]
      %v3040 = vld [vmem:[%s3 + $0x1ba8] sm:$0xff]
      %v3041 = vld [vmem:[%s3 + $0x1c30] sm:$0xff]
      %v3042 = vld [vmem:[%s3 + $0x1c38] sm:$0xff]
      %v3043 = vld [vmem:[%s3 + $0x1cc0] sm:$0xff]
      %v3044 = vld [vmem:[%s3 + $0x1cc8] sm:$0xff]
      %v3045 = vld [vmem:[%s3 + $0x1d50] sm:$0xff]
      %v3046 = vld [vmem:[%s3 + $0x1d58] sm:$0xff]
      %v3047 = vld [vmem:[%s3 + $0x1de0] sm:$0xff]
      %v3048 = vld [vmem:[%s3 + $0x1de8] sm:$0xff]
      %v3049 = vld [vmem:[%s3 + $0x1e70] sm:$0xff]
      %v3050 = vld [vmem:[%s3 + $0x1e78] sm:$0xff]
      %v3051 = vld [vmem:[%s3 + $0x1f00] sm:$0xff]
      %v3052 = vld [vmem:[%s3 + $0x1f08] sm:$0xff]
      %v3053 = vld [vmem:[%s3 + $0x1f90] sm:$0xff]
      %v3054 = vld [vmem:[%s3 + $0x1f98] sm:$0xff]
      %v3055 = vld [vmem:[%s3 + $0x2020] sm:$0xff]
      %v3056 = vld [vmem:[%s3 + $0x2028] sm:$0xff]
      %v3057 = vld [vmem:[%s3 + $0x20b0] sm:$0xff]
      %v3058 = vld [vmem:[%s3 + $0x20b8] sm:$0xff]
      %v3059 = vld [vmem:[%s3 + $0x2140] sm:$0xff]
      %v3060 = vld [vmem:[%s3 + $0x2148] sm:$0xff]
      %v3061 = vld [vmem:[%s3 + $0x21d0] sm:$0xff]
      %v3062 = vld [vmem:[%s3 + $0x21d8] sm:$0xff]
      %v3063 = vld [vmem:[%s3 + $0x2260] sm:$0xff]
      %v3064 = vld [vmem:[%s3 + $0x2268] sm:$0xff]
      %v3065 = vld [vmem:[%s3 + $0x22f0] sm:$0xff]
      %v3066 = vld [vmem:[%s3 + $0x22f8] sm:$0xff]
      %v3067 = vld [vmem:[%s3 + $0x2380] sm:$0xff]
      %v3068 = vld [vmem:[%s3 + $0x2388] sm:$0xff]
      %v3069 = vld [vmem:[%s3 + $0x2410] sm:$0xff]
      %v3070 = vld [vmem:[%s3 + $0x2418] sm:$0xff]
      %v3071 = vld [vmem:[%s3 + $0x24a0] sm:$0xff]
      %v3072 = vld [vmem:[%s3 + $0x24a8] sm:$0xff]
      %v3073 = vld [vmem:[%s3 + $0x2530] sm:$0xff]
      %v3074 = vld [vmem:[%s3 + $0x2538] sm:$0xff]
      %v3075 = vld [vmem:[%s3 + $0x25c0] sm:$0xff]
      %v3076 = vld [vmem:[%s3 + $0x25c8] sm:$0xff]
      %v3077 = vld [vmem:[%s3 + $0x2650] sm:$0xff]
      %v3078 = vld [vmem:[%s3 + $0x2658] sm:$0xff]
      %v3079 = vld [vmem:[%s3 + $0x26e0] sm:$0xff]
      %v3080 = vld [vmem:[%s3 + $0x26e8] sm:$0xff]
      %v3081 = vld [vmem:[%s3 + $0x2770] sm:$0xff]
      %v3082 = vld [vmem:[%s3 + $0x2778] sm:$0xff]
      %v3083 = vld [vmem:[%s3 + $0x2800] sm:$0xff]
      %v3084 = vld [vmem:[%s3 + $0x2808] sm:$0xff]
      %3085 = vmatpush.msra.mxu0 %v2971
      %3086 = vmatpush.msra.mxu0 %v2969
      %3087 = vmatpush.msra.mxu0 %v2967
      %3088 = vmatpush.msra.mxu0 %v2965
      %3089 = vmatpush.msra.mxu0 %v2963
      %3090 = vmatpush.msra.mxu0 %v2961
      %3091 = vmatpush.msra.mxu0 %v2959
      %3092 = vmatpush.msra.mxu0 %v2957
      %3093 = vmatpush.msra.mxu0 %v2955
      %3094 = vmatpush.msra.mxu0 %v2953
      %3095 = vmatpush.msra.mxu0 %v2951
      %3096 = vmatpush.msra.mxu0 %v2949
      %3097 = vmatpush.msra.mxu0 %v2947
      %3098 = vmatpush.msra.mxu0 %v2945
      %3099 = vmatpush.msra.mxu0 %v2943
      %3100 = vmatpush.msra.mxu0 %v2941
      %3101 = vmatmul.f32.gmra.mxu0 %v2461
      %v3102 = vpop.f32.mrf.mxu0
      %v3103 = vadd.f32 0.0, %v3102
      %3104 = vmatmul.f32.gmra.mxu0 %v2466
      %v3105 = vpop.f32.mrf.mxu0
      %v3106 = vadd.f32 0.0, %v3105
      %3107 = vdwg.mxu0
      %3108 = vmatpush.msra.mxu0 %v3003
      %3109 = vmatpush.msra.mxu0 %v3001
      %3110 = vmatpush.msra.mxu0 %v2999
      %3111 = vmatpush.msra.mxu0 %v2997
      %3112 = vmatpush.msra.mxu0 %v2995
      %3113 = vmatpush.msra.mxu0 %v2993
      %3114 = vmatpush.msra.mxu0 %v2991
      %3115 = vmatpush.msra.mxu0 %v2989
      %3116 = vmatpush.msra.mxu0 %v2987
      %3117 = vmatpush.msra.mxu0 %v2985
      %3118 = vmatpush.msra.mxu0 %v2983
      %3119 = vmatpush.msra.mxu0 %v2981
      %3120 = vmatpush.msra.mxu0 %v2979
      %3121 = vmatpush.msra.mxu0 %v2977
      %3122 = vmatpush.msra.mxu0 %v2975
      %3123 = vmatpush.msra.mxu0 %v2973
      %3124 = vmatmul.f32.gmra.mxu0 %v2462
      %v3125 = vpop.f32.mrf.mxu0
      %v3126 = vadd.f32 %v3103, %v3125
      %3127 = vmatmul.f32.gmra.mxu0 %v2467
      %v3128 = vpop.f32.mrf.mxu0
      %v3129 = vadd.f32 %v3106, %v3128
      %3130 = vdwg.mxu0
      %3131 = vmatpush.msra.mxu0 %v3035
      %3132 = vmatpush.msra.mxu0 %v3033
      %3133 = vmatpush.msra.mxu0 %v3031
      %3134 = vmatpush.msra.mxu0 %v3029
      %3135 = vmatpush.msra.mxu0 %v3027
      %3136 = vmatpush.msra.mxu0 %v3025
      %3137 = vmatpush.msra.mxu0 %v3023
      %3138 = vmatpush.msra.mxu0 %v3021
      %3139 = vmatpush.msra.mxu0 %v3019
      %3140 = vmatpush.msra.mxu0 %v3017
      %3141 = vmatpush.msra.mxu0 %v3015
      %3142 = vmatpush.msra.mxu0 %v3013
      %3143 = vmatpush.msra.mxu0 %v3011
      %3144 = vmatpush.msra.mxu0 %v3009
      %3145 = vmatpush.msra.mxu0 %v3007
      %3146 = vmatpush.msra.mxu0 %v3005
      %3147 = vmatmul.f32.gmra.mxu0 %v2463
      %v3148 = vpop.f32.mrf.mxu0
      %v3149 = vadd.f32 %v3126, %v3148
      %3150 = vmatmul.f32.gmra.mxu0 %v2468
      %v3151 = vpop.f32.mrf.mxu0
      %v3152 = vadd.f32 %v3129, %v3151
      %3153 = vdwg.mxu0
      %3154 = vmatpush.msra.mxu0 %v3067
      %3155 = vmatpush.msra.mxu0 %v3065
      %3156 = vmatpush.msra.mxu0 %v3063
      %3157 = vmatpush.msra.mxu0 %v3061
      %3158 = vmatpush.msra.mxu0 %v3059
      %3159 = vmatpush.msra.mxu0 %v3057
      %3160 = vmatpush.msra.mxu0 %v3055
      %3161 = vmatpush.msra.mxu0 %v3053
      %3162 = vmatpush.msra.mxu0 %v3051
      %3163 = vmatpush.msra.mxu0 %v3049
      %3164 = vmatpush.msra.mxu0 %v3047
      %3165 = vmatpush.msra.mxu0 %v3045
      %3166 = vmatpush.msra.mxu0 %v3043
      %3167 = vmatpush.msra.mxu0 %v3041
      %3168 = vmatpush.msra.mxu0 %v3039
      %3169 = vmatpush.msra.mxu0 %v3037
      %3170 = vmatmul.f32.gmra.mxu0 %v2464
      %v3171 = vpop.f32.mrf.mxu0
      %v3172 = vadd.f32 %v3149, %v3171
      %3173 = vmatmul.f32.gmra.mxu0 %v2469
      %v3174 = vpop.f32.mrf.mxu0
      %v3175 = vadd.f32 %v3152, %v3174
      %3176 = vdwg.mxu0
      %3177 = vmatpush.msra.mxu0 0.0
      %3178 = vmatpush.msra.mxu0 0.0
      %3179 = vmatpush.msra.mxu0 0.0
      %3180 = vmatpush.msra.mxu0 0.0
      %3181 = vmatpush.msra.mxu0 0.0
      %3182 = vmatpush.msra.mxu0 0.0
      %3183 = vmatpush.msra.mxu0 0.0
      %3184 = vmatpush.msra.mxu0 0.0
      %3185 = vmatpush.msra.mxu0 %v3083
      %3186 = vmatpush.msra.mxu0 %v3081
      %3187 = vmatpush.msra.mxu0 %v3079
      %3188 = vmatpush.msra.mxu0 %v3077
      %3189 = vmatpush.msra.mxu0 %v3075
      %3190 = vmatpush.msra.mxu0 %v3073
      %3191 = vmatpush.msra.mxu0 %v3071
      %3192 = vmatpush.msra.mxu0 %v3069
      %3193 = vmatmul.f32.gmra.mxu0 %v2619
      %v3194 = vpop.f32.mrf.mxu0
      %v3195 = vadd.f32 %v3172, %v3194
      %3196 = vmatmul.f32.gmra.mxu0 %v2622
      %v3197 = vpop.f32.mrf.mxu0
      %v3198 = vadd.f32 %v3175, %v3197
      %3199 = vdwg.mxu0
      %3200 = vmatpush.msra.mxu0 %v2972
      %3201 = vmatpush.msra.mxu0 %v2970
      %3202 = vmatpush.msra.mxu0 %v2968
      %3203 = vmatpush.msra.mxu0 %v2966
      %3204 = vmatpush.msra.mxu0 %v2964
      %3205 = vmatpush.msra.mxu0 %v2962
      %3206 = vmatpush.msra.mxu0 %v2960
      %3207 = vmatpush.msra.mxu0 %v2958
      %3208 = vmatpush.msra.mxu0 %v2956
      %3209 = vmatpush.msra.mxu0 %v2954
      %3210 = vmatpush.msra.mxu0 %v2952
      %3211 = vmatpush.msra.mxu0 %v2950
      %3212 = vmatpush.msra.mxu0 %v2948
      %3213 = vmatpush.msra.mxu0 %v2946
      %3214 = vmatpush.msra.mxu0 %v2944
      %3215 = vmatpush.msra.mxu0 %v2942
      %3216 = vmatmul.f32.gmra.mxu0 %v2461
      %v3217 = vpop.f32.mrf.mxu0
      %v3218 = vadd.f32 0.0, %v3217
      %3219 = vmatmul.f32.gmra.mxu0 %v2466
      %v3220 = vpop.f32.mrf.mxu0
      %v3221 = vadd.f32 0.0, %v3220
      %3222 = vdwg.mxu0
      %3223 = vmatpush.msra.mxu0 %v3004
      %3224 = vmatpush.msra.mxu0 %v3002
      %3225 = vmatpush.msra.mxu0 %v3000
      %3226 = vmatpush.msra.mxu0 %v2998
      %3227 = vmatpush.msra.mxu0 %v2996
      %3228 = vmatpush.msra.mxu0 %v2994
      %3229 = vmatpush.msra.mxu0 %v2992
      %3230 = vmatpush.msra.mxu0 %v2990
      %3231 = vmatpush.msra.mxu0 %v2988
      %3232 = vmatpush.msra.mxu0 %v2986
      %3233 = vmatpush.msra.mxu0 %v2984
      %3234 = vmatpush.msra.mxu0 %v2982
      %3235 = vmatpush.msra.mxu0 %v2980
      %3236 = vmatpush.msra.mxu0 %v2978
      %3237 = vmatpush.msra.mxu0 %v2976
      %3238 = vmatpush.msra.mxu0 %v2974
      %3239 = vmatmul.f32.gmra.mxu0 %v2462
      %v3240 = vpop.f32.mrf.mxu0
      %v3241 = vadd.f32 %v3218, %v3240
      %3242 = vmatmul.f32.gmra.mxu0 %v2467
      %v3243 = vpop.f32.mrf.mxu0
      %v3244 = vadd.f32 %v3221, %v3243
      %3245 = vdwg.mxu0
      %3246 = vmatpush.msra.mxu0 %v3036
      %3247 = vmatpush.msra.mxu0 %v3034
      %3248 = vmatpush.msra.mxu0 %v3032
      %3249 = vmatpush.msra.mxu0 %v3030
      %3250 = vmatpush.msra.mxu0 %v3028
      %3251 = vmatpush.msra.mxu0 %v3026
      %3252 = vmatpush.msra.mxu0 %v3024
      %3253 = vmatpush.msra.mxu0 %v3022
      %3254 = vmatpush.msra.mxu0 %v3020
      %3255 = vmatpush.msra.mxu0 %v3018
      %3256 = vmatpush.msra.mxu0 %v3016
      %3257 = vmatpush.msra.mxu0 %v3014
      %3258 = vmatpush.msra.mxu0 %v3012
      %3259 = vmatpush.msra.mxu0 %v3010
      %3260 = vmatpush.msra.mxu0 %v3008
      %3261 = vmatpush.msra.mxu0 %v3006
      %3262 = vmatmul.f32.gmra.mxu0 %v2463
      %v3263 = vpop.f32.mrf.mxu0
      %v3264 = vadd.f32 %v3241, %v3263
      %3265 = vmatmul.f32.gmra.mxu0 %v2468
      %v3266 = vpop.f32.mrf.mxu0
      %v3267 = vadd.f32 %v3244, %v3266
      %3268 = vdwg.mxu0
      %3269 = vmatpush.msra.mxu0 %v3068
      %3270 = vmatpush.msra.mxu0 %v3066
      %3271 = vmatpush.msra.mxu0 %v3064
      %3272 = vmatpush.msra.mxu0 %v3062
      %3273 = vmatpush.msra.mxu0 %v3060
      %3274 = vmatpush.msra.mxu0 %v3058
      %3275 = vmatpush.msra.mxu0 %v3056
      %3276 = vmatpush.msra.mxu0 %v3054
      %3277 = vmatpush.msra.mxu0 %v3052
      %3278 = vmatpush.msra.mxu0 %v3050
      %3279 = vmatpush.msra.mxu0 %v3048
      %3280 = vmatpush.msra.mxu0 %v3046
      %3281 = vmatpush.msra.mxu0 %v3044
      %3282 = vmatpush.msra.mxu0 %v3042
      %3283 = vmatpush.msra.mxu0 %v3040
      %3284 = vmatpush.msra.mxu0 %v3038
      %3285 = vmatmul.f32.gmra.mxu0 %v2464
      %v3286 = vpop.f32.mrf.mxu0
      %v3287 = vadd.f32 %v3264, %v3286
      %3288 = vmatmul.f32.gmra.mxu0 %v2469
      %v3289 = vpop.f32.mrf.mxu0
      %v3290 = vadd.f32 %v3267, %v3289
      %3291 = vdwg.mxu0
      %3292 = vmatpush.msra.mxu0 0.0
      %3293 = vmatpush.msra.mxu0 0.0
      %3294 = vmatpush.msra.mxu0 0.0
      %3295 = vmatpush.msra.mxu0 0.0
      %3296 = vmatpush.msra.mxu0 0.0
      %3297 = vmatpush.msra.mxu0 0.0
      %3298 = vmatpush.msra.mxu0 0.0
      %3299 = vmatpush.msra.mxu0 0.0
      %3300 = vmatpush.msra.mxu0 %v3084
      %3301 = vmatpush.msra.mxu0 %v3082
      %3302 = vmatpush.msra.mxu0 %v3080
      %3303 = vmatpush.msra.mxu0 %v3078
      %3304 = vmatpush.msra.mxu0 %v3076
      %3305 = vmatpush.msra.mxu0 %v3074
      %3306 = vmatpush.msra.mxu0 %v3072
      %3307 = vmatpush.msra.mxu0 %v3070
      %3308 = vmatmul.f32.gmra.mxu0 %v2619
      %v3309 = vpop.f32.mrf.mxu0
      %v3310 = vadd.f32 %v3287, %v3309
      %3311 = vmatmul.f32.gmra.mxu0 %v2622
      %v3312 = vpop.f32.mrf.mxu0
      %v3313 = vadd.f32 %v3290, %v3312
      %3314 = vdwg.mxu0
      %v3315 = vmul.f32 %v3195, %v2857
      %v3316 = vmul.f32 %v3310, %v2857
      %v3317 = vmul.f32 %v3198, %v2862
      %v3318 = vmul.f32 %v3313, %v2862
      %v3319 = vsel %vm2868, %v3317, 0.0
      %v3320 = vadd.f32 %v3315, %v3319
      %v3321 = vrot.slane %v3320, 4
      %v3322 = vadd.f32 %v3320, %v3321
      %v3323 = vrot.slane %v3322, 2
      %v3324 = vadd.f32 %v3322, %v3323
      %v3325 = vrot.slane %v3324, 1
      %v3326 = vadd.f32 %v3324, %v3325
      %v3327 = vsel %vm2868, %v3318, 0.0
      %v3328 = vadd.f32 %v3316, %v3327
      %v3329 = vrot.slane %v3328, 4
      %v3330 = vadd.f32 %v3328, %v3329
      %v3331 = vrot.slane %v3330, 2
      %v3332 = vadd.f32 %v3330, %v3331
      %v3333 = vrot.slane %v3332, 1
      %v3334 = vadd.f32 %v3332, %v3333
      %v3335 = vadd.f32 %v3326, %v2890
      %v3336 = vadd.f32 %v3334, %v2890
      %v3337 = vxor.u32 %v3335, 2147483648
      %v3338 = vxor.u32 %v3336, 2147483648
      %v3339 = vmul.f32 %v3337, 1.442695
      %v3340 = vpow.pop %v3339
      %v3341 = vmul.f32 %v3338, 1.442695
      %v3342 = vpow.pop %v3341
      %v3343 = vadd.f32 %v3340, 1.0
      %v3344 = vadd.f32 %v3342, 1.0
      %v3345 = vrcp.pop %v3343
      %v3346 = vmul.f32 %v3343, %v3345
      %v3347 = vsub.f32 1.0, %v3346
      %v3348 = vmul.f32 %v3345, %v3347
      %v3349 = vadd.f32 %v3345, %v3348
      %vm3350 = vweird.f32 %v3343
      %vm3351 = vweird.f32 %v3345
      %vm3352 = vmor %vm3350, %vm3351
      %v3353 = vsel %vm3352, %v3345, %v3349
      %v3354 = vand.u32 2147483647, %v3343
      %vm3355 = vcmp.eq.f32.partialorder %v3354, 8.507059e+37
      %v3356 = vand.u32 %v3343, 2147483648
      %v3357 = vor.u32 1.1754944e-38, %v3356
      %v3358 = vsel %vm3355, %v3357, %v3353
      %v3359 = vmul.f32 1.0, %v3358
      %v3360 = vrcp.pop %v3344
      %v3361 = vmul.f32 %v3344, %v3360
      %v3362 = vsub.f32 1.0, %v3361
      %v3363 = vmul.f32 %v3360, %v3362
      %v3364 = vadd.f32 %v3360, %v3363
      %vm3365 = vweird.f32 %v3344
      %vm3366 = vweird.f32 %v3360
      %vm3367 = vmor %vm3365, %vm3366
      %v3368 = vsel %vm3367, %v3360, %v3364
      %v3369 = vand.u32 2147483647, %v3344
      %vm3370 = vcmp.eq.f32.partialorder %v3369, 8.507059e+37
      %v3371 = vand.u32 %v3344, 2147483648
      %v3372 = vor.u32 1.1754944e-38, %v3371
      %v3373 = vsel %vm3370, %v3372, %v3368
      %v3374 = vmul.f32 1.0, %v3373
      %v3377 = vrot.slane %v3374, 7
      %v3378 = vsel %vm2868, %v3359, %v3377
      %3380 = vst.msk [vmem:[%s656 + $0x2] sm:$0x3] %vm2939, %v3378
      %v3381 = vld [vmem:[%s3 + $0x20] sm:$0xff]
      %v3382 = vld [vmem:[%s3 + $0x28] sm:$0xff]
      %v3383 = vld [vmem:[%s3 + $0xb0] sm:$0xff]
      %v3384 = vld [vmem:[%s3 + $0xb8] sm:$0xff]
      %v3385 = vld [vmem:[%s3 + $0x140] sm:$0xff]
      %v3386 = vld [vmem:[%s3 + $0x148] sm:$0xff]
      %v3387 = vld [vmem:[%s3 + $0x1d0] sm:$0xff]
      %v3388 = vld [vmem:[%s3 + $0x1d8] sm:$0xff]
      %v3389 = vld [vmem:[%s3 + $0x260] sm:$0xff]
      %v3390 = vld [vmem:[%s3 + $0x268] sm:$0xff]
      %v3391 = vld [vmem:[%s3 + $0x2f0] sm:$0xff]
      %v3392 = vld [vmem:[%s3 + $0x2f8] sm:$0xff]
      %v3393 = vld [vmem:[%s3 + $0x380] sm:$0xff]
      %v3394 = vld [vmem:[%s3 + $0x388] sm:$0xff]
      %v3395 = vld [vmem:[%s3 + $0x410] sm:$0xff]
      %v3396 = vld [vmem:[%s3 + $0x418] sm:$0xff]
      %v3397 = vld [vmem:[%s3 + $0x4a0] sm:$0xff]
      %v3398 = vld [vmem:[%s3 + $0x4a8] sm:$0xff]
      %v3399 = vld [vmem:[%s3 + $0x530] sm:$0xff]
      %v3400 = vld [vmem:[%s3 + $0x538] sm:$0xff]
      %v3401 = vld [vmem:[%s3 + $0x5c0] sm:$0xff]
      %v3402 = vld [vmem:[%s3 + $0x5c8] sm:$0xff]
      %v3403 = vld [vmem:[%s3 + $0x650] sm:$0xff]
      %v3404 = vld [vmem:[%s3 + $0x658] sm:$0xff]
      %v3405 = vld [vmem:[%s3 + $0x6e0] sm:$0xff]
      %v3406 = vld [vmem:[%s3 + $0x6e8] sm:$0xff]
      %v3407 = vld [vmem:[%s3 + $0x770] sm:$0xff]
      %v3408 = vld [vmem:[%s3 + $0x778] sm:$0xff]
      %v3409 = vld [vmem:[%s3 + $0x800] sm:$0xff]
      %v3410 = vld [vmem:[%s3 + $0x808] sm:$0xff]
      %v3411 = vld [vmem:[%s3 + $0x890] sm:$0xff]
      %v3412 = vld [vmem:[%s3 + $0x898] sm:$0xff]
      %v3413 = vld [vmem:[%s3 + $0x920] sm:$0xff]
      %v3414 = vld [vmem:[%s3 + $0x928] sm:$0xff]
      %v3415 = vld [vmem:[%s3 + $0x9b0] sm:$0xff]
      %v3416 = vld [vmem:[%s3 + $0x9b8] sm:$0xff]
      %v3417 = vld [vmem:[%s3 + $0xa40] sm:$0xff]
      %v3418 = vld [vmem:[%s3 + $0xa48] sm:$0xff]
      %v3419 = vld [vmem:[%s3 + $0xad0] sm:$0xff]
      %v3420 = vld [vmem:[%s3 + $0xad8] sm:$0xff]
      %v3421 = vld [vmem:[%s3 + $0xb60] sm:$0xff]
      %v3422 = vld [vmem:[%s3 + $0xb68] sm:$0xff]
      %v3423 = vld [vmem:[%s3 + $0xbf0] sm:$0xff]
      %v3424 = vld [vmem:[%s3 + $0xbf8] sm:$0xff]
      %v3425 = vld [vmem:[%s3 + $0xc80] sm:$0xff]
      %v3426 = vld [vmem:[%s3 + $0xc88] sm:$0xff]
      %v3427 = vld [vmem:[%s3 + $0xd10] sm:$0xff]
      %v3428 = vld [vmem:[%s3 + $0xd18] sm:$0xff]
      %v3429 = vld [vmem:[%s3 + $0xda0] sm:$0xff]
      %v3430 = vld [vmem:[%s3 + $0xda8] sm:$0xff]
      %v3431 = vld [vmem:[%s3 + $0xe30] sm:$0xff]
      %v3432 = vld [vmem:[%s3 + $0xe38] sm:$0xff]
      %v3433 = vld [vmem:[%s3 + $0xec0] sm:$0xff]
      %v3434 = vld [vmem:[%s3 + $0xec8] sm:$0xff]
      %v3435 = vld [vmem:[%s3 + $0xf50] sm:$0xff]
      %v3436 = vld [vmem:[%s3 + $0xf58] sm:$0xff]
      %v3437 = vld [vmem:[%s3 + $0xfe0] sm:$0xff]
      %v3438 = vld [vmem:[%s3 + $0xfe8] sm:$0xff]
      %v3439 = vld [vmem:[%s3 + $0x1070] sm:$0xff]
      %v3440 = vld [vmem:[%s3 + $0x1078] sm:$0xff]
      %v3441 = vld [vmem:[%s3 + $0x1100] sm:$0xff]
      %v3442 = vld [vmem:[%s3 + $0x1108] sm:$0xff]
      %v3443 = vld [vmem:[%s3 + $0x1190] sm:$0xff]
      %v3444 = vld [vmem:[%s3 + $0x1198] sm:$0xff]
      %v3445 = vld [vmem:[%s3 + $0x1220] sm:$0xff]
      %v3446 = vld [vmem:[%s3 + $0x1228] sm:$0xff]
      %v3447 = vld [vmem:[%s3 + $0x12b0] sm:$0xff]
      %v3448 = vld [vmem:[%s3 + $0x12b8] sm:$0xff]
      %v3449 = vld [vmem:[%s3 + $0x1340] sm:$0xff]
      %v3450 = vld [vmem:[%s3 + $0x1348] sm:$0xff]
      %v3451 = vld [vmem:[%s3 + $0x13d0] sm:$0xff]
      %v3452 = vld [vmem:[%s3 + $0x13d8] sm:$0xff]
      %v3453 = vld [vmem:[%s3 + $0x1460] sm:$0xff]
      %v3454 = vld [vmem:[%s3 + $0x1468] sm:$0xff]
      %v3455 = vld [vmem:[%s3 + $0x14f0] sm:$0xff]
      %v3456 = vld [vmem:[%s3 + $0x14f8] sm:$0xff]
      %v3457 = vld [vmem:[%s3 + $0x1580] sm:$0xff]
      %v3458 = vld [vmem:[%s3 + $0x1588] sm:$0xff]
      %v3459 = vld [vmem:[%s3 + $0x1610] sm:$0xff]
      %v3460 = vld [vmem:[%s3 + $0x1618] sm:$0xff]
      %v3461 = vld [vmem:[%s3 + $0x16a0] sm:$0xff]
      %v3462 = vld [vmem:[%s3 + $0x16a8] sm:$0xff]
      %v3463 = vld [vmem:[%s3 + $0x1730] sm:$0xff]
      %v3464 = vld [vmem:[%s3 + $0x1738] sm:$0xff]
      %v3465 = vld [vmem:[%s3 + $0x17c0] sm:$0xff]
      %v3466 = vld [vmem:[%s3 + $0x17c8] sm:$0xff]
      %v3467 = vld [vmem:[%s3 + $0x1850] sm:$0xff]
      %v3468 = vld [vmem:[%s3 + $0x1858] sm:$0xff]
      %v3469 = vld [vmem:[%s3 + $0x18e0] sm:$0xff]
      %v3470 = vld [vmem:[%s3 + $0x18e8] sm:$0xff]
      %v3471 = vld [vmem:[%s3 + $0x1970] sm:$0xff]
      %v3472 = vld [vmem:[%s3 + $0x1978] sm:$0xff]
      %v3473 = vld [vmem:[%s3 + $0x1a00] sm:$0xff]
      %v3474 = vld [vmem:[%s3 + $0x1a08] sm:$0xff]
      %v3475 = vld [vmem:[%s3 + $0x1a90] sm:$0xff]
      %v3476 = vld [vmem:[%s3 + $0x1a98] sm:$0xff]
      %v3477 = vld [vmem:[%s3 + $0x1b20] sm:$0xff]
      %v3478 = vld [vmem:[%s3 + $0x1b28] sm:$0xff]
      %v3479 = vld [vmem:[%s3 + $0x1bb0] sm:$0xff]
      %v3480 = vld [vmem:[%s3 + $0x1bb8] sm:$0xff]
      %v3481 = vld [vmem:[%s3 + $0x1c40] sm:$0xff]
      %v3482 = vld [vmem:[%s3 + $0x1c48] sm:$0xff]
      %v3483 = vld [vmem:[%s3 + $0x1cd0] sm:$0xff]
      %v3484 = vld [vmem:[%s3 + $0x1cd8] sm:$0xff]
      %v3485 = vld [vmem:[%s3 + $0x1d60] sm:$0xff]
      %v3486 = vld [vmem:[%s3 + $0x1d68] sm:$0xff]
      %v3487 = vld [vmem:[%s3 + $0x1df0] sm:$0xff]
      %v3488 = vld [vmem:[%s3 + $0x1df8] sm:$0xff]
      %v3489 = vld [vmem:[%s3 + $0x1e80] sm:$0xff]
      %v3490 = vld [vmem:[%s3 + $0x1e88] sm:$0xff]
      %v3491 = vld [vmem:[%s3 + $0x1f10] sm:$0xff]
      %v3492 = vld [vmem:[%s3 + $0x1f18] sm:$0xff]
      %v3493 = vld [vmem:[%s3 + $0x1fa0] sm:$0xff]
      %v3494 = vld [vmem:[%s3 + $0x1fa8] sm:$0xff]
      %v3495 = vld [vmem:[%s3 + $0x2030] sm:$0xff]
      %v3496 = vld [vmem:[%s3 + $0x2038] sm:$0xff]
      %v3497 = vld [vmem:[%s3 + $0x20c0] sm:$0xff]
      %v3498 = vld [vmem:[%s3 + $0x20c8] sm:$0xff]
      %v3499 = vld [vmem:[%s3 + $0x2150] sm:$0xff]
      %v3500 = vld [vmem:[%s3 + $0x2158] sm:$0xff]
      %v3501 = vld [vmem:[%s3 + $0x21e0] sm:$0xff]
      %v3502 = vld [vmem:[%s3 + $0x21e8] sm:$0xff]
      %v3503 = vld [vmem:[%s3 + $0x2270] sm:$0xff]
      %v3504 = vld [vmem:[%s3 + $0x2278] sm:$0xff]
      %v3505 = vld [vmem:[%s3 + $0x2300] sm:$0xff]
      %v3506 = vld [vmem:[%s3 + $0x2308] sm:$0xff]
      %v3507 = vld [vmem:[%s3 + $0x2390] sm:$0xff]
      %v3508 = vld [vmem:[%s3 + $0x2398] sm:$0xff]
      %v3509 = vld [vmem:[%s3 + $0x2420] sm:$0xff]
      %v3510 = vld [vmem:[%s3 + $0x2428] sm:$0xff]
      %v3511 = vld [vmem:[%s3 + $0x24b0] sm:$0xff]
      %v3512 = vld [vmem:[%s3 + $0x24b8] sm:$0xff]
      %v3513 = vld [vmem:[%s3 + $0x2540] sm:$0xff]
      %v3514 = vld [vmem:[%s3 + $0x2548] sm:$0xff]
      %v3515 = vld [vmem:[%s3 + $0x25d0] sm:$0xff]
      %v3516 = vld [vmem:[%s3 + $0x25d8] sm:$0xff]
      %v3517 = vld [vmem:[%s3 + $0x2660] sm:$0xff]
      %v3518 = vld [vmem:[%s3 + $0x2668] sm:$0xff]
      %v3519 = vld [vmem:[%s3 + $0x26f0] sm:$0xff]
      %v3520 = vld [vmem:[%s3 + $0x26f8] sm:$0xff]
      %v3521 = vld [vmem:[%s3 + $0x2780] sm:$0xff]
      %v3522 = vld [vmem:[%s3 + $0x2788] sm:$0xff]
      %v3523 = vld [vmem:[%s3 + $0x2810] sm:$0xff]
      %v3524 = vld [vmem:[%s3 + $0x2818] sm:$0xff]
      %3525 = vmatpush.msra.mxu0 %v3411
      %3526 = vmatpush.msra.mxu0 %v3409
      %3527 = vmatpush.msra.mxu0 %v3407
      %3528 = vmatpush.msra.mxu0 %v3405
      %3529 = vmatpush.msra.mxu0 %v3403
      %3530 = vmatpush.msra.mxu0 %v3401
      %3531 = vmatpush.msra.mxu0 %v3399
      %3532 = vmatpush.msra.mxu0 %v3397
      %3533 = vmatpush.msra.mxu0 %v3395
      %3534 = vmatpush.msra.mxu0 %v3393
      %3535 = vmatpush.msra.mxu0 %v3391
      %3536 = vmatpush.msra.mxu0 %v3389
      %3537 = vmatpush.msra.mxu0 %v3387
      %3538 = vmatpush.msra.mxu0 %v3385
      %3539 = vmatpush.msra.mxu0 %v3383
      %3540 = vmatpush.msra.mxu0 %v3381
      %3541 = vmatmul.f32.gmra.mxu0 %v2461
      %v3542 = vpop.f32.mrf.mxu0
      %v3543 = vadd.f32 0.0, %v3542
      %3544 = vmatmul.f32.gmra.mxu0 %v2466
      %v3545 = vpop.f32.mrf.mxu0
      %v3546 = vadd.f32 0.0, %v3545
      %3547 = vdwg.mxu0
      %3548 = vmatpush.msra.mxu0 %v3443
      %3549 = vmatpush.msra.mxu0 %v3441
      %3550 = vmatpush.msra.mxu0 %v3439
      %3551 = vmatpush.msra.mxu0 %v3437
      %3552 = vmatpush.msra.mxu0 %v3435
      %3553 = vmatpush.msra.mxu0 %v3433
      %3554 = vmatpush.msra.mxu0 %v3431
      %3555 = vmatpush.msra.mxu0 %v3429
      %3556 = vmatpush.msra.mxu0 %v3427
      %3557 = vmatpush.msra.mxu0 %v3425
      %3558 = vmatpush.msra.mxu0 %v3423
      %3559 = vmatpush.msra.mxu0 %v3421
      %3560 = vmatpush.msra.mxu0 %v3419
      %3561 = vmatpush.msra.mxu0 %v3417
      %3562 = vmatpush.msra.mxu0 %v3415
      %3563 = vmatpush.msra.mxu0 %v3413
      %3564 = vmatmul.f32.gmra.mxu0 %v2462
      %v3565 = vpop.f32.mrf.mxu0
      %v3566 = vadd.f32 %v3543, %v3565
      %3567 = vmatmul.f32.gmra.mxu0 %v2467
      %v3568 = vpop.f32.mrf.mxu0
      %v3569 = vadd.f32 %v3546, %v3568
      %3570 = vdwg.mxu0
      %3571 = vmatpush.msra.mxu0 %v3475
      %3572 = vmatpush.msra.mxu0 %v3473
      %3573 = vmatpush.msra.mxu0 %v3471
      %3574 = vmatpush.msra.mxu0 %v3469
      %3575 = vmatpush.msra.mxu0 %v3467
      %3576 = vmatpush.msra.mxu0 %v3465
      %3577 = vmatpush.msra.mxu0 %v3463
      %3578 = vmatpush.msra.mxu0 %v3461
      %3579 = vmatpush.msra.mxu0 %v3459
      %3580 = vmatpush.msra.mxu0 %v3457
      %3581 = vmatpush.msra.mxu0 %v3455
      %3582 = vmatpush.msra.mxu0 %v3453
      %3583 = vmatpush.msra.mxu0 %v3451
      %3584 = vmatpush.msra.mxu0 %v3449
      %3585 = vmatpush.msra.mxu0 %v3447
      %3586 = vmatpush.msra.mxu0 %v3445
      %3587 = vmatmul.f32.gmra.mxu0 %v2463
      %v3588 = vpop.f32.mrf.mxu0
      %v3589 = vadd.f32 %v3566, %v3588
      %3590 = vmatmul.f32.gmra.mxu0 %v2468
      %v3591 = vpop.f32.mrf.mxu0
      %v3592 = vadd.f32 %v3569, %v3591
      %3593 = vdwg.mxu0
      %3594 = vmatpush.msra.mxu0 %v3507
      %3595 = vmatpush.msra.mxu0 %v3505
      %3596 = vmatpush.msra.mxu0 %v3503
      %3597 = vmatpush.msra.mxu0 %v3501
      %3598 = vmatpush.msra.mxu0 %v3499
      %3599 = vmatpush.msra.mxu0 %v3497
      %3600 = vmatpush.msra.mxu0 %v3495
      %3601 = vmatpush.msra.mxu0 %v3493
      %3602 = vmatpush.msra.mxu0 %v3491
      %3603 = vmatpush.msra.mxu0 %v3489
      %3604 = vmatpush.msra.mxu0 %v3487
      %3605 = vmatpush.msra.mxu0 %v3485
      %3606 = vmatpush.msra.mxu0 %v3483
      %3607 = vmatpush.msra.mxu0 %v3481
      %3608 = vmatpush.msra.mxu0 %v3479
      %3609 = vmatpush.msra.mxu0 %v3477
      %3610 = vmatmul.f32.gmra.mxu0 %v2464
      %v3611 = vpop.f32.mrf.mxu0
      %v3612 = vadd.f32 %v3589, %v3611
      %3613 = vmatmul.f32.gmra.mxu0 %v2469
      %v3614 = vpop.f32.mrf.mxu0
      %v3615 = vadd.f32 %v3592, %v3614
      %3616 = vdwg.mxu0
      %3617 = vmatpush.msra.mxu0 0.0
      %3618 = vmatpush.msra.mxu0 0.0
      %3619 = vmatpush.msra.mxu0 0.0
      %3620 = vmatpush.msra.mxu0 0.0
      %3621 = vmatpush.msra.mxu0 0.0
      %3622 = vmatpush.msra.mxu0 0.0
      %3623 = vmatpush.msra.mxu0 0.0
      %3624 = vmatpush.msra.mxu0 0.0
      %3625 = vmatpush.msra.mxu0 %v3523
      %3626 = vmatpush.msra.mxu0 %v3521
      %3627 = vmatpush.msra.mxu0 %v3519
      %3628 = vmatpush.msra.mxu0 %v3517
      %3629 = vmatpush.msra.mxu0 %v3515
      %3630 = vmatpush.msra.mxu0 %v3513
      %3631 = vmatpush.msra.mxu0 %v3511
      %3632 = vmatpush.msra.mxu0 %v3509
      %3633 = vmatmul.f32.gmra.mxu0 %v2619
      %v3634 = vpop.f32.mrf.mxu0
      %v3635 = vadd.f32 %v3612, %v3634
      %3636 = vmatmul.f32.gmra.mxu0 %v2622
      %v3637 = vpop.f32.mrf.mxu0
      %v3638 = vadd.f32 %v3615, %v3637
      %3639 = vdwg.mxu0
      %3640 = vmatpush.msra.mxu0 %v3412
      %3641 = vmatpush.msra.mxu0 %v3410
      %3642 = vmatpush.msra.mxu0 %v3408
      %3643 = vmatpush.msra.mxu0 %v3406
      %3644 = vmatpush.msra.mxu0 %v3404
      %3645 = vmatpush.msra.mxu0 %v3402
      %3646 = vmatpush.msra.mxu0 %v3400
      %3647 = vmatpush.msra.mxu0 %v3398
      %3648 = vmatpush.msra.mxu0 %v3396
      %3649 = vmatpush.msra.mxu0 %v3394
      %3650 = vmatpush.msra.mxu0 %v3392
      %3651 = vmatpush.msra.mxu0 %v3390
      %3652 = vmatpush.msra.mxu0 %v3388
      %3653 = vmatpush.msra.mxu0 %v3386
      %3654 = vmatpush.msra.mxu0 %v3384
      %3655 = vmatpush.msra.mxu0 %v3382
      %3656 = vmatmul.f32.gmra.mxu0 %v2461
      %v3657 = vpop.f32.mrf.mxu0
      %v3658 = vadd.f32 0.0, %v3657
      %3659 = vmatmul.f32.gmra.mxu0 %v2466
      %v3660 = vpop.f32.mrf.mxu0
      %v3661 = vadd.f32 0.0, %v3660
      %3662 = vdwg.mxu0
      %3663 = vmatpush.msra.mxu0 %v3444
      %3664 = vmatpush.msra.mxu0 %v3442
      %3665 = vmatpush.msra.mxu0 %v3440
      %3666 = vmatpush.msra.mxu0 %v3438
      %3667 = vmatpush.msra.mxu0 %v3436
      %3668 = vmatpush.msra.mxu0 %v3434
      %3669 = vmatpush.msra.mxu0 %v3432
      %3670 = vmatpush.msra.mxu0 %v3430
      %3671 = vmatpush.msra.mxu0 %v3428
      %3672 = vmatpush.msra.mxu0 %v3426
      %3673 = vmatpush.msra.mxu0 %v3424
      %3674 = vmatpush.msra.mxu0 %v3422
      %3675 = vmatpush.msra.mxu0 %v3420
      %3676 = vmatpush.msra.mxu0 %v3418
      %3677 = vmatpush.msra.mxu0 %v3416
      %3678 = vmatpush.msra.mxu0 %v3414
      %3679 = vmatmul.f32.gmra.mxu0 %v2462
      %v3680 = vpop.f32.mrf.mxu0
      %v3681 = vadd.f32 %v3658, %v3680
      %3682 = vmatmul.f32.gmra.mxu0 %v2467
      %v3683 = vpop.f32.mrf.mxu0
      %v3684 = vadd.f32 %v3661, %v3683
      %3685 = vdwg.mxu0
      %3686 = vmatpush.msra.mxu0 %v3476
      %3687 = vmatpush.msra.mxu0 %v3474
      %3688 = vmatpush.msra.mxu0 %v3472
      %3689 = vmatpush.msra.mxu0 %v3470
      %3690 = vmatpush.msra.mxu0 %v3468
      %3691 = vmatpush.msra.mxu0 %v3466
      %3692 = vmatpush.msra.mxu0 %v3464
      %3693 = vmatpush.msra.mxu0 %v3462
      %3694 = vmatpush.msra.mxu0 %v3460
      %3695 = vmatpush.msra.mxu0 %v3458
      %3696 = vmatpush.msra.mxu0 %v3456
      %3697 = vmatpush.msra.mxu0 %v3454
      %3698 = vmatpush.msra.mxu0 %v3452
      %3699 = vmatpush.msra.mxu0 %v3450
      %3700 = vmatpush.msra.mxu0 %v3448
      %3701 = vmatpush.msra.mxu0 %v3446
      %3702 = vmatmul.f32.gmra.mxu0 %v2463
      %v3703 = vpop.f32.mrf.mxu0
      %v3704 = vadd.f32 %v3681, %v3703
      %3705 = vmatmul.f32.gmra.mxu0 %v2468
      %v3706 = vpop.f32.mrf.mxu0
      %v3707 = vadd.f32 %v3684, %v3706
      %3708 = vdwg.mxu0
      %3709 = vmatpush.msra.mxu0 %v3508
      %3710 = vmatpush.msra.mxu0 %v3506
      %3711 = vmatpush.msra.mxu0 %v3504
      %3712 = vmatpush.msra.mxu0 %v3502
      %3713 = vmatpush.msra.mxu0 %v3500
      %3714 = vmatpush.msra.mxu0 %v3498
      %3715 = vmatpush.msra.mxu0 %v3496
      %3716 = vmatpush.msra.mxu0 %v3494
      %3717 = vmatpush.msra.mxu0 %v3492
      %3718 = vmatpush.msra.mxu0 %v3490
      %3719 = vmatpush.msra.mxu0 %v3488
      %3720 = vmatpush.msra.mxu0 %v3486
      %3721 = vmatpush.msra.mxu0 %v3484
      %3722 = vmatpush.msra.mxu0 %v3482
      %3723 = vmatpush.msra.mxu0 %v3480
      %3724 = vmatpush.msra.mxu0 %v3478
      %3725 = vmatmul.f32.gmra.mxu0 %v2464
      %v3726 = vpop.f32.mrf.mxu0
      %v3727 = vadd.f32 %v3704, %v3726
      %3728 = vmatmul.f32.gmra.mxu0 %v2469
      %v3729 = vpop.f32.mrf.mxu0
      %v3730 = vadd.f32 %v3707, %v3729
      %3731 = vdwg.mxu0
      %3732 = vmatpush.msra.mxu0 0.0
      %3733 = vmatpush.msra.mxu0 0.0
      %3734 = vmatpush.msra.mxu0 0.0
      %3735 = vmatpush.msra.mxu0 0.0
      %3736 = vmatpush.msra.mxu0 0.0
      %3737 = vmatpush.msra.mxu0 0.0
      %3738 = vmatpush.msra.mxu0 0.0
      %3739 = vmatpush.msra.mxu0 0.0
      %3740 = vmatpush.msra.mxu0 %v3524
      %3741 = vmatpush.msra.mxu0 %v3522
      %3742 = vmatpush.msra.mxu0 %v3520
      %3743 = vmatpush.msra.mxu0 %v3518
      %3744 = vmatpush.msra.mxu0 %v3516
      %3745 = vmatpush.msra.mxu0 %v3514
      %3746 = vmatpush.msra.mxu0 %v3512
      %3747 = vmatpush.msra.mxu0 %v3510
      %3748 = vmatmul.f32.gmra.mxu0 %v2619
      %v3749 = vpop.f32.mrf.mxu0
      %v3750 = vadd.f32 %v3727, %v3749
      %3751 = vmatmul.f32.gmra.mxu0 %v2622
      %v3752 = vpop.f32.mrf.mxu0
      %v3753 = vadd.f32 %v3730, %v3752
      %3754 = vdwg.mxu0
      %v3755 = vmul.f32 %v3635, %v2857
      %v3756 = vmul.f32 %v3750, %v2857
      %v3757 = vmul.f32 %v3638, %v2862
      %v3758 = vmul.f32 %v3753, %v2862
      %v3759 = vsel %vm2868, %v3757, 0.0
      %v3760 = vadd.f32 %v3755, %v3759
      %v3761 = vrot.slane %v3760, 4
      %v3762 = vadd.f32 %v3760, %v3761
      %v3763 = vrot.slane %v3762, 2
      %v3764 = vadd.f32 %v3762, %v3763
      %v3765 = vrot.slane %v3764, 1
      %v3766 = vadd.f32 %v3764, %v3765
      %v3767 = vsel %vm2868, %v3758, 0.0
      %v3768 = vadd.f32 %v3756, %v3767
      %v3769 = vrot.slane %v3768, 4
      %v3770 = vadd.f32 %v3768, %v3769
      %v3771 = vrot.slane %v3770, 2
      %v3772 = vadd.f32 %v3770, %v3771
      %v3773 = vrot.slane %v3772, 1
      %v3774 = vadd.f32 %v3772, %v3773
      %v3775 = vadd.f32 %v3766, %v2890
      %v3776 = vadd.f32 %v3774, %v2890
      %v3777 = vxor.u32 %v3775, 2147483648
      %v3778 = vxor.u32 %v3776, 2147483648
      %v3779 = vmul.f32 %v3777, 1.442695
      %v3780 = vpow.pop %v3779
      %v3781 = vmul.f32 %v3778, 1.442695
      %v3782 = vpow.pop %v3781
      %v3783 = vadd.f32 %v3780, 1.0
      %v3784 = vadd.f32 %v3782, 1.0
      %v3785 = vrcp.pop %v3783
      %v3786 = vmul.f32 %v3783, %v3785
      %v3787 = vsub.f32 1.0, %v3786
      %v3788 = vmul.f32 %v3785, %v3787
      %v3789 = vadd.f32 %v3785, %v3788
      %vm3790 = vweird.f32 %v3783
      %vm3791 = vweird.f32 %v3785
      %vm3792 = vmor %vm3790, %vm3791
      %v3793 = vsel %vm3792, %v3785, %v3789
      %v3794 = vand.u32 2147483647, %v3783
      %vm3795 = vcmp.eq.f32.partialorder %v3794, 8.507059e+37
      %v3796 = vand.u32 %v3783, 2147483648
      %v3797 = vor.u32 1.1754944e-38, %v3796
      %v3798 = vsel %vm3795, %v3797, %v3793
      %v3799 = vmul.f32 1.0, %v3798
      %v3800 = vrcp.pop %v3784
      %v3801 = vmul.f32 %v3784, %v3800
      %v3802 = vsub.f32 1.0, %v3801
      %v3803 = vmul.f32 %v3800, %v3802
      %v3804 = vadd.f32 %v3800, %v3803
      %vm3805 = vweird.f32 %v3784
      %vm3806 = vweird.f32 %v3800
      %vm3807 = vmor %vm3805, %vm3806
      %v3808 = vsel %vm3807, %v3800, %v3804
      %v3809 = vand.u32 2147483647, %v3784
      %vm3810 = vcmp.eq.f32.partialorder %v3809, 8.507059e+37
      %v3811 = vand.u32 %v3784, 2147483648
      %v3812 = vor.u32 1.1754944e-38, %v3811
      %v3813 = vsel %vm3810, %v3812, %v3808
      %v3814 = vmul.f32 1.0, %v3813
      %v3817 = vrot.slane %v3814, 7
      %v3818 = vsel %vm2868, %v3799, %v3817
      %3820 = vst.msk [vmem:[%s656 + $0x4] sm:$0x3] %vm2939, %v3818
      %v3821 = vld [vmem:[%s3 + $0x30] sm:$0xff]
      %v3822 = vld [vmem:[%s3 + $0x38] sm:$0xff]
      %v3823 = vld [vmem:[%s3 + $0xc0] sm:$0xff]
      %v3824 = vld [vmem:[%s3 + $0xc8] sm:$0xff]
      %v3825 = vld [vmem:[%s3 + $0x150] sm:$0xff]
      %v3826 = vld [vmem:[%s3 + $0x158] sm:$0xff]
      %v3827 = vld [vmem:[%s3 + $0x1e0] sm:$0xff]
      %v3828 = vld [vmem:[%s3 + $0x1e8] sm:$0xff]
      %v3829 = vld [vmem:[%s3 + $0x270] sm:$0xff]
      %v3830 = vld [vmem:[%s3 + $0x278] sm:$0xff]
      %v3831 = vld [vmem:[%s3 + $0x300] sm:$0xff]
      %v3832 = vld [vmem:[%s3 + $0x308] sm:$0xff]
      %v3833 = vld [vmem:[%s3 + $0x390] sm:$0xff]
      %v3834 = vld [vmem:[%s3 + $0x398] sm:$0xff]
      %v3835 = vld [vmem:[%s3 + $0x420] sm:$0xff]
      %v3836 = vld [vmem:[%s3 + $0x428] sm:$0xff]
      %v3837 = vld [vmem:[%s3 + $0x4b0] sm:$0xff]
      %v3838 = vld [vmem:[%s3 + $0x4b8] sm:$0xff]
      %v3839 = vld [vmem:[%s3 + $0x540] sm:$0xff]
      %v3840 = vld [vmem:[%s3 + $0x548] sm:$0xff]
      %v3841 = vld [vmem:[%s3 + $0x5d0] sm:$0xff]
      %v3842 = vld [vmem:[%s3 + $0x5d8] sm:$0xff]
      %v3843 = vld [vmem:[%s3 + $0x660] sm:$0xff]
      %v3844 = vld [vmem:[%s3 + $0x668] sm:$0xff]
      %v3845 = vld [vmem:[%s3 + $0x6f0] sm:$0xff]
      %v3846 = vld [vmem:[%s3 + $0x6f8] sm:$0xff]
      %v3847 = vld [vmem:[%s3 + $0x780] sm:$0xff]
      %v3848 = vld [vmem:[%s3 + $0x788] sm:$0xff]
      %v3849 = vld [vmem:[%s3 + $0x810] sm:$0xff]
      %v3850 = vld [vmem:[%s3 + $0x818] sm:$0xff]
      %v3851 = vld [vmem:[%s3 + $0x8a0] sm:$0xff]
      %v3852 = vld [vmem:[%s3 + $0x8a8] sm:$0xff]
      %v3853 = vld [vmem:[%s3 + $0x930] sm:$0xff]
      %v3854 = vld [vmem:[%s3 + $0x938] sm:$0xff]
      %v3855 = vld [vmem:[%s3 + $0x9c0] sm:$0xff]
      %v3856 = vld [vmem:[%s3 + $0x9c8] sm:$0xff]
      %v3857 = vld [vmem:[%s3 + $0xa50] sm:$0xff]
      %v3858 = vld [vmem:[%s3 + $0xa58] sm:$0xff]
      %v3859 = vld [vmem:[%s3 + $0xae0] sm:$0xff]
      %v3860 = vld [vmem:[%s3 + $0xae8] sm:$0xff]
      %v3861 = vld [vmem:[%s3 + $0xb70] sm:$0xff]
      %v3862 = vld [vmem:[%s3 + $0xb78] sm:$0xff]
      %v3863 = vld [vmem:[%s3 + $0xc00] sm:$0xff]
      %v3864 = vld [vmem:[%s3 + $0xc08] sm:$0xff]
      %v3865 = vld [vmem:[%s3 + $0xc90] sm:$0xff]
      %v3866 = vld [vmem:[%s3 + $0xc98] sm:$0xff]
      %v3867 = vld [vmem:[%s3 + $0xd20] sm:$0xff]
      %v3868 = vld [vmem:[%s3 + $0xd28] sm:$0xff]
      %v3869 = vld [vmem:[%s3 + $0xdb0] sm:$0xff]
      %v3870 = vld [vmem:[%s3 + $0xdb8] sm:$0xff]
      %v3871 = vld [vmem:[%s3 + $0xe40] sm:$0xff]
      %v3872 = vld [vmem:[%s3 + $0xe48] sm:$0xff]
      %v3873 = vld [vmem:[%s3 + $0xed0] sm:$0xff]
      %v3874 = vld [vmem:[%s3 + $0xed8] sm:$0xff]
      %v3875 = vld [vmem:[%s3 + $0xf60] sm:$0xff]
      %v3876 = vld [vmem:[%s3 + $0xf68] sm:$0xff]
      %v3877 = vld [vmem:[%s3 + $0xff0] sm:$0xff]
      %v3878 = vld [vmem:[%s3 + $0xff8] sm:$0xff]
      %v3879 = vld [vmem:[%s3 + $0x1080] sm:$0xff]
      %v3880 = vld [vmem:[%s3 + $0x1088] sm:$0xff]
      %v3881 = vld [vmem:[%s3 + $0x1110] sm:$0xff]
      %v3882 = vld [vmem:[%s3 + $0x1118] sm:$0xff]
      %v3883 = vld [vmem:[%s3 + $0x11a0] sm:$0xff]
      %v3884 = vld [vmem:[%s3 + $0x11a8] sm:$0xff]
      %v3885 = vld [vmem:[%s3 + $0x1230] sm:$0xff]
      %v3886 = vld [vmem:[%s3 + $0x1238] sm:$0xff]
      %v3887 = vld [vmem:[%s3 + $0x12c0] sm:$0xff]
      %v3888 = vld [vmem:[%s3 + $0x12c8] sm:$0xff]
      %v3889 = vld [vmem:[%s3 + $0x1350] sm:$0xff]
      %v3890 = vld [vmem:[%s3 + $0x1358] sm:$0xff]
      %v3891 = vld [vmem:[%s3 + $0x13e0] sm:$0xff]
      %v3892 = vld [vmem:[%s3 + $0x13e8] sm:$0xff]
      %v3893 = vld [vmem:[%s3 + $0x1470] sm:$0xff]
      %v3894 = vld [vmem:[%s3 + $0x1478] sm:$0xff]
      %v3895 = vld [vmem:[%s3 + $0x1500] sm:$0xff]
      %v3896 = vld [vmem:[%s3 + $0x1508] sm:$0xff]
      %v3897 = vld [vmem:[%s3 + $0x1590] sm:$0xff]
      %v3898 = vld [vmem:[%s3 + $0x1598] sm:$0xff]
      %v3899 = vld [vmem:[%s3 + $0x1620] sm:$0xff]
      %v3900 = vld [vmem:[%s3 + $0x1628] sm:$0xff]
      %v3901 = vld [vmem:[%s3 + $0x16b0] sm:$0xff]
      %v3902 = vld [vmem:[%s3 + $0x16b8] sm:$0xff]
      %v3903 = vld [vmem:[%s3 + $0x1740] sm:$0xff]
      %v3904 = vld [vmem:[%s3 + $0x1748] sm:$0xff]
      %v3905 = vld [vmem:[%s3 + $0x17d0] sm:$0xff]
      %v3906 = vld [vmem:[%s3 + $0x17d8] sm:$0xff]
      %v3907 = vld [vmem:[%s3 + $0x1860] sm:$0xff]
      %v3908 = vld [vmem:[%s3 + $0x1868] sm:$0xff]
      %v3909 = vld [vmem:[%s3 + $0x18f0] sm:$0xff]
      %v3910 = vld [vmem:[%s3 + $0x18f8] sm:$0xff]
      %v3911 = vld [vmem:[%s3 + $0x1980] sm:$0xff]
      %v3912 = vld [vmem:[%s3 + $0x1988] sm:$0xff]
      %v3913 = vld [vmem:[%s3 + $0x1a10] sm:$0xff]
      %v3914 = vld [vmem:[%s3 + $0x1a18] sm:$0xff]
      %v3915 = vld [vmem:[%s3 + $0x1aa0] sm:$0xff]
      %v3916 = vld [vmem:[%s3 + $0x1aa8] sm:$0xff]
      %v3917 = vld [vmem:[%s3 + $0x1b30] sm:$0xff]
      %v3918 = vld [vmem:[%s3 + $0x1b38] sm:$0xff]
      %v3919 = vld [vmem:[%s3 + $0x1bc0] sm:$0xff]
      %v3920 = vld [vmem:[%s3 + $0x1bc8] sm:$0xff]
      %v3921 = vld [vmem:[%s3 + $0x1c50] sm:$0xff]
      %v3922 = vld [vmem:[%s3 + $0x1c58] sm:$0xff]
      %v3923 = vld [vmem:[%s3 + $0x1ce0] sm:$0xff]
      %v3924 = vld [vmem:[%s3 + $0x1ce8] sm:$0xff]
      %v3925 = vld [vmem:[%s3 + $0x1d70] sm:$0xff]
      %v3926 = vld [vmem:[%s3 + $0x1d78] sm:$0xff]
      %v3927 = vld [vmem:[%s3 + $0x1e00] sm:$0xff]
      %v3928 = vld [vmem:[%s3 + $0x1e08] sm:$0xff]
      %v3929 = vld [vmem:[%s3 + $0x1e90] sm:$0xff]
      %v3930 = vld [vmem:[%s3 + $0x1e98] sm:$0xff]
      %v3931 = vld [vmem:[%s3 + $0x1f20] sm:$0xff]
      %v3932 = vld [vmem:[%s3 + $0x1f28] sm:$0xff]
      %v3933 = vld [vmem:[%s3 + $0x1fb0] sm:$0xff]
      %v3934 = vld [vmem:[%s3 + $0x1fb8] sm:$0xff]
      %v3935 = vld [vmem:[%s3 + $0x2040] sm:$0xff]
      %v3936 = vld [vmem:[%s3 + $0x2048] sm:$0xff]
      %v3937 = vld [vmem:[%s3 + $0x20d0] sm:$0xff]
      %v3938 = vld [vmem:[%s3 + $0x20d8] sm:$0xff]
      %v3939 = vld [vmem:[%s3 + $0x2160] sm:$0xff]
      %v3940 = vld [vmem:[%s3 + $0x2168] sm:$0xff]
      %v3941 = vld [vmem:[%s3 + $0x21f0] sm:$0xff]
      %v3942 = vld [vmem:[%s3 + $0x21f8] sm:$0xff]
      %v3943 = vld [vmem:[%s3 + $0x2280] sm:$0xff]
      %v3944 = vld [vmem:[%s3 + $0x2288] sm:$0xff]
      %v3945 = vld [vmem:[%s3 + $0x2310] sm:$0xff]
      %v3946 = vld [vmem:[%s3 + $0x2318] sm:$0xff]
      %v3947 = vld [vmem:[%s3 + $0x23a0] sm:$0xff]
      %v3948 = vld [vmem:[%s3 + $0x23a8] sm:$0xff]
      %v3949 = vld [vmem:[%s3 + $0x2430] sm:$0xff]
      %v3950 = vld [vmem:[%s3 + $0x2438] sm:$0xff]
      %v3951 = vld [vmem:[%s3 + $0x24c0] sm:$0xff]
      %v3952 = vld [vmem:[%s3 + $0x24c8] sm:$0xff]
      %v3953 = vld [vmem:[%s3 + $0x2550] sm:$0xff]
      %v3954 = vld [vmem:[%s3 + $0x2558] sm:$0xff]
      %v3955 = vld [vmem:[%s3 + $0x25e0] sm:$0xff]
      %v3956 = vld [vmem:[%s3 + $0x25e8] sm:$0xff]
      %v3957 = vld [vmem:[%s3 + $0x2670] sm:$0xff]
      %v3958 = vld [vmem:[%s3 + $0x2678] sm:$0xff]
      %v3959 = vld [vmem:[%s3 + $0x2700] sm:$0xff]
      %v3960 = vld [vmem:[%s3 + $0x2708] sm:$0xff]
      %v3961 = vld [vmem:[%s3 + $0x2790] sm:$0xff]
      %v3962 = vld [vmem:[%s3 + $0x2798] sm:$0xff]
      %v3963 = vld [vmem:[%s3 + $0x2820] sm:$0xff]
      %v3964 = vld [vmem:[%s3 + $0x2828] sm:$0xff]
      %3965 = vmatpush.msra.mxu0 %v3851
      %3966 = vmatpush.msra.mxu0 %v3849
      %3967 = vmatpush.msra.mxu0 %v3847
      %3968 = vmatpush.msra.mxu0 %v3845
      %3969 = vmatpush.msra.mxu0 %v3843
      %3970 = vmatpush.msra.mxu0 %v3841
      %3971 = vmatpush.msra.mxu0 %v3839
      %3972 = vmatpush.msra.mxu0 %v3837
      %3973 = vmatpush.msra.mxu0 %v3835
      %3974 = vmatpush.msra.mxu0 %v3833
      %3975 = vmatpush.msra.mxu0 %v3831
      %3976 = vmatpush.msra.mxu0 %v3829
      %3977 = vmatpush.msra.mxu0 %v3827
      %3978 = vmatpush.msra.mxu0 %v3825
      %3979 = vmatpush.msra.mxu0 %v3823
      %3980 = vmatpush.msra.mxu0 %v3821
      %3981 = vmatmul.f32.gmra.mxu0 %v2461
      %v3982 = vpop.f32.mrf.mxu0
      %v3983 = vadd.f32 0.0, %v3982
      %3984 = vmatmul.f32.gmra.mxu0 %v2466
      %v3985 = vpop.f32.mrf.mxu0
      %v3986 = vadd.f32 0.0, %v3985
      %3987 = vdwg.mxu0
      %3988 = vmatpush.msra.mxu0 %v3883
      %3989 = vmatpush.msra.mxu0 %v3881
      %3990 = vmatpush.msra.mxu0 %v3879
      %3991 = vmatpush.msra.mxu0 %v3877
      %3992 = vmatpush.msra.mxu0 %v3875
      %3993 = vmatpush.msra.mxu0 %v3873
      %3994 = vmatpush.msra.mxu0 %v3871
      %3995 = vmatpush.msra.mxu0 %v3869
      %3996 = vmatpush.msra.mxu0 %v3867
      %3997 = vmatpush.msra.mxu0 %v3865
      %3998 = vmatpush.msra.mxu0 %v3863
      %3999 = vmatpush.msra.mxu0 %v3861
      %4000 = vmatpush.msra.mxu0 %v3859
      %4001 = vmatpush.msra.mxu0 %v3857
      %4002 = vmatpush.msra.mxu0 %v3855
      %4003 = vmatpush.msra.mxu0 %v3853
      %4004 = vmatmul.f32.gmra.mxu0 %v2462
      %v4005 = vpop.f32.mrf.mxu0
      %v4006 = vadd.f32 %v3983, %v4005
      %4007 = vmatmul.f32.gmra.mxu0 %v2467
      %v4008 = vpop.f32.mrf.mxu0
      %v4009 = vadd.f32 %v3986, %v4008
      %4010 = vdwg.mxu0
      %4011 = vmatpush.msra.mxu0 %v3915
      %4012 = vmatpush.msra.mxu0 %v3913
      %4013 = vmatpush.msra.mxu0 %v3911
      %4014 = vmatpush.msra.mxu0 %v3909
      %4015 = vmatpush.msra.mxu0 %v3907
      %4016 = vmatpush.msra.mxu0 %v3905
      %4017 = vmatpush.msra.mxu0 %v3903
      %4018 = vmatpush.msra.mxu0 %v3901
      %4019 = vmatpush.msra.mxu0 %v3899
      %4020 = vmatpush.msra.mxu0 %v3897
      %4021 = vmatpush.msra.mxu0 %v3895
      %4022 = vmatpush.msra.mxu0 %v3893
      %4023 = vmatpush.msra.mxu0 %v3891
      %4024 = vmatpush.msra.mxu0 %v3889
      %4025 = vmatpush.msra.mxu0 %v3887
      %4026 = vmatpush.msra.mxu0 %v3885
      %4027 = vmatmul.f32.gmra.mxu0 %v2463
      %v4028 = vpop.f32.mrf.mxu0
      %v4029 = vadd.f32 %v4006, %v4028
      %4030 = vmatmul.f32.gmra.mxu0 %v2468
      %v4031 = vpop.f32.mrf.mxu0
      %v4032 = vadd.f32 %v4009, %v4031
      %4033 = vdwg.mxu0
      %4034 = vmatpush.msra.mxu0 %v3947
      %4035 = vmatpush.msra.mxu0 %v3945
      %4036 = vmatpush.msra.mxu0 %v3943
      %4037 = vmatpush.msra.mxu0 %v3941
      %4038 = vmatpush.msra.mxu0 %v3939
      %4039 = vmatpush.msra.mxu0 %v3937
      %4040 = vmatpush.msra.mxu0 %v3935
      %4041 = vmatpush.msra.mxu0 %v3933
      %4042 = vmatpush.msra.mxu0 %v3931
      %4043 = vmatpush.msra.mxu0 %v3929
      %4044 = vmatpush.msra.mxu0 %v3927
      %4045 = vmatpush.msra.mxu0 %v3925
      %4046 = vmatpush.msra.mxu0 %v3923
      %4047 = vmatpush.msra.mxu0 %v3921
      %4048 = vmatpush.msra.mxu0 %v3919
      %4049 = vmatpush.msra.mxu0 %v3917
      %4050 = vmatmul.f32.gmra.mxu0 %v2464
      %v4051 = vpop.f32.mrf.mxu0
      %v4052 = vadd.f32 %v4029, %v4051
      %4053 = vmatmul.f32.gmra.mxu0 %v2469
      %v4054 = vpop.f32.mrf.mxu0
      %v4055 = vadd.f32 %v4032, %v4054
      %4056 = vdwg.mxu0
      %4057 = vmatpush.msra.mxu0 0.0
      %4058 = vmatpush.msra.mxu0 0.0
      %4059 = vmatpush.msra.mxu0 0.0
      %4060 = vmatpush.msra.mxu0 0.0
      %4061 = vmatpush.msra.mxu0 0.0
      %4062 = vmatpush.msra.mxu0 0.0
      %4063 = vmatpush.msra.mxu0 0.0
      %4064 = vmatpush.msra.mxu0 0.0
      %4065 = vmatpush.msra.mxu0 %v3963
      %4066 = vmatpush.msra.mxu0 %v3961
      %4067 = vmatpush.msra.mxu0 %v3959
      %4068 = vmatpush.msra.mxu0 %v3957
      %4069 = vmatpush.msra.mxu0 %v3955
      %4070 = vmatpush.msra.mxu0 %v3953
      %4071 = vmatpush.msra.mxu0 %v3951
      %4072 = vmatpush.msra.mxu0 %v3949
      %4073 = vmatmul.f32.gmra.mxu0 %v2619
      %v4074 = vpop.f32.mrf.mxu0
      %v4075 = vadd.f32 %v4052, %v4074
      %4076 = vmatmul.f32.gmra.mxu0 %v2622
      %v4077 = vpop.f32.mrf.mxu0
      %v4078 = vadd.f32 %v4055, %v4077
      %4079 = vdwg.mxu0
      %4080 = vmatpush.msra.mxu0 %v3852
      %4081 = vmatpush.msra.mxu0 %v3850
      %4082 = vmatpush.msra.mxu0 %v3848
      %4083 = vmatpush.msra.mxu0 %v3846
      %4084 = vmatpush.msra.mxu0 %v3844
      %4085 = vmatpush.msra.mxu0 %v3842
      %4086 = vmatpush.msra.mxu0 %v3840
      %4087 = vmatpush.msra.mxu0 %v3838
      %4088 = vmatpush.msra.mxu0 %v3836
      %4089 = vmatpush.msra.mxu0 %v3834
      %4090 = vmatpush.msra.mxu0 %v3832
      %4091 = vmatpush.msra.mxu0 %v3830
      %4092 = vmatpush.msra.mxu0 %v3828
      %4093 = vmatpush.msra.mxu0 %v3826
      %4094 = vmatpush.msra.mxu0 %v3824
      %4095 = vmatpush.msra.mxu0 %v3822
      %4096 = vmatmul.f32.gmra.mxu0 %v2461
      %v4097 = vpop.f32.mrf.mxu0
      %v4098 = vadd.f32 0.0, %v4097
      %4099 = vmatmul.f32.gmra.mxu0 %v2466
      %v4100 = vpop.f32.mrf.mxu0
      %v4101 = vadd.f32 0.0, %v4100
      %4102 = vdwg.mxu0
      %4103 = vmatpush.msra.mxu0 %v3884
      %4104 = vmatpush.msra.mxu0 %v3882
      %4105 = vmatpush.msra.mxu0 %v3880
      %4106 = vmatpush.msra.mxu0 %v3878
      %4107 = vmatpush.msra.mxu0 %v3876
      %4108 = vmatpush.msra.mxu0 %v3874
      %4109 = vmatpush.msra.mxu0 %v3872
      %4110 = vmatpush.msra.mxu0 %v3870
      %4111 = vmatpush.msra.mxu0 %v3868
      %4112 = vmatpush.msra.mxu0 %v3866
      %4113 = vmatpush.msra.mxu0 %v3864
      %4114 = vmatpush.msra.mxu0 %v3862
      %4115 = vmatpush.msra.mxu0 %v3860
      %4116 = vmatpush.msra.mxu0 %v3858
      %4117 = vmatpush.msra.mxu0 %v3856
      %4118 = vmatpush.msra.mxu0 %v3854
      %4119 = vmatmul.f32.gmra.mxu0 %v2462
      %v4120 = vpop.f32.mrf.mxu0
      %v4121 = vadd.f32 %v4098, %v4120
      %4122 = vmatmul.f32.gmra.mxu0 %v2467
      %v4123 = vpop.f32.mrf.mxu0
      %v4124 = vadd.f32 %v4101, %v4123
      %4125 = vdwg.mxu0
      %4126 = vmatpush.msra.mxu0 %v3916
      %4127 = vmatpush.msra.mxu0 %v3914
      %4128 = vmatpush.msra.mxu0 %v3912
      %4129 = vmatpush.msra.mxu0 %v3910
      %4130 = vmatpush.msra.mxu0 %v3908
      %4131 = vmatpush.msra.mxu0 %v3906
      %4132 = vmatpush.msra.mxu0 %v3904
      %4133 = vmatpush.msra.mxu0 %v3902
      %4134 = vmatpush.msra.mxu0 %v3900
      %4135 = vmatpush.msra.mxu0 %v3898
      %4136 = vmatpush.msra.mxu0 %v3896
      %4137 = vmatpush.msra.mxu0 %v3894
      %4138 = vmatpush.msra.mxu0 %v3892
      %4139 = vmatpush.msra.mxu0 %v3890
      %4140 = vmatpush.msra.mxu0 %v3888
      %4141 = vmatpush.msra.mxu0 %v3886
      %4142 = vmatmul.f32.gmra.mxu0 %v2463
      %v4143 = vpop.f32.mrf.mxu0
      %v4144 = vadd.f32 %v4121, %v4143
      %4145 = vmatmul.f32.gmra.mxu0 %v2468
      %v4146 = vpop.f32.mrf.mxu0
      %v4147 = vadd.f32 %v4124, %v4146
      %4148 = vdwg.mxu0
      %4149 = vmatpush.msra.mxu0 %v3948
      %4150 = vmatpush.msra.mxu0 %v3946
      %4151 = vmatpush.msra.mxu0 %v3944
      %4152 = vmatpush.msra.mxu0 %v3942
      %4153 = vmatpush.msra.mxu0 %v3940
      %4154 = vmatpush.msra.mxu0 %v3938
      %4155 = vmatpush.msra.mxu0 %v3936
      %4156 = vmatpush.msra.mxu0 %v3934
      %4157 = vmatpush.msra.mxu0 %v3932
      %4158 = vmatpush.msra.mxu0 %v3930
      %4159 = vmatpush.msra.mxu0 %v3928
      %4160 = vmatpush.msra.mxu0 %v3926
      %4161 = vmatpush.msra.mxu0 %v3924
      %4162 = vmatpush.msra.mxu0 %v3922
      %4163 = vmatpush.msra.mxu0 %v3920
      %4164 = vmatpush.msra.mxu0 %v3918
      %4165 = vmatmul.f32.gmra.mxu0 %v2464
      %v4166 = vpop.f32.mrf.mxu0
      %v4167 = vadd.f32 %v4144, %v4166
      %4168 = vmatmul.f32.gmra.mxu0 %v2469
      %v4169 = vpop.f32.mrf.mxu0
      %v4170 = vadd.f32 %v4147, %v4169
      %4171 = vdwg.mxu0
      %4172 = vmatpush.msra.mxu0 0.0
      %4173 = vmatpush.msra.mxu0 0.0
      %4174 = vmatpush.msra.mxu0 0.0
      %4175 = vmatpush.msra.mxu0 0.0
      %4176 = vmatpush.msra.mxu0 0.0
      %4177 = vmatpush.msra.mxu0 0.0
      %4178 = vmatpush.msra.mxu0 0.0
      %4179 = vmatpush.msra.mxu0 0.0
      %4180 = vmatpush.msra.mxu0 %v3964
      %4181 = vmatpush.msra.mxu0 %v3962
      %4182 = vmatpush.msra.mxu0 %v3960
      %4183 = vmatpush.msra.mxu0 %v3958
      %4184 = vmatpush.msra.mxu0 %v3956
      %4185 = vmatpush.msra.mxu0 %v3954
      %4186 = vmatpush.msra.mxu0 %v3952
      %4187 = vmatpush.msra.mxu0 %v3950
      %4188 = vmatmul.f32.gmra.mxu0 %v2619
      %v4189 = vpop.f32.mrf.mxu0
      %v4190 = vadd.f32 %v4167, %v4189
      %4191 = vmatmul.f32.gmra.mxu0 %v2622
      %v4192 = vpop.f32.mrf.mxu0
      %v4193 = vadd.f32 %v4170, %v4192
      %4194 = vdwg.mxu0
      %v4195 = vmul.f32 %v4075, %v2857
      %v4196 = vmul.f32 %v4190, %v2857
      %v4197 = vmul.f32 %v4078, %v2862
      %v4198 = vmul.f32 %v4193, %v2862
      %v4199 = vsel %vm2868, %v4197, 0.0
      %v4200 = vadd.f32 %v4195, %v4199
      %v4201 = vrot.slane %v4200, 4
      %v4202 = vadd.f32 %v4200, %v4201
      %v4203 = vrot.slane %v4202, 2
      %v4204 = vadd.f32 %v4202, %v4203
      %v4205 = vrot.slane %v4204, 1
      %v4206 = vadd.f32 %v4204, %v4205
      %v4207 = vsel %vm2868, %v4198, 0.0
      %v4208 = vadd.f32 %v4196, %v4207
      %v4209 = vrot.slane %v4208, 4
      %v4210 = vadd.f32 %v4208, %v4209
      %v4211 = vrot.slane %v4210, 2
      %v4212 = vadd.f32 %v4210, %v4211
      %v4213 = vrot.slane %v4212, 1
      %v4214 = vadd.f32 %v4212, %v4213
      %v4215 = vadd.f32 %v4206, %v2890
      %v4216 = vadd.f32 %v4214, %v2890
      %v4217 = vxor.u32 %v4215, 2147483648
      %v4218 = vxor.u32 %v4216, 2147483648
      %v4219 = vmul.f32 %v4217, 1.442695
      %v4220 = vpow.pop %v4219
      %v4221 = vmul.f32 %v4218, 1.442695
      %v4222 = vpow.pop %v4221
      %v4223 = vadd.f32 %v4220, 1.0
      %v4224 = vadd.f32 %v4222, 1.0
      %v4225 = vrcp.pop %v4223
      %v4226 = vmul.f32 %v4223, %v4225
      %v4227 = vsub.f32 1.0, %v4226
      %v4228 = vmul.f32 %v4225, %v4227
      %v4229 = vadd.f32 %v4225, %v4228
      %vm4230 = vweird.f32 %v4223
      %vm4231 = vweird.f32 %v4225
      %vm4232 = vmor %vm4230, %vm4231
      %v4233 = vsel %vm4232, %v4225, %v4229
      %v4234 = vand.u32 2147483647, %v4223
      %vm4235 = vcmp.eq.f32.partialorder %v4234, 8.507059e+37
      %v4236 = vand.u32 %v4223, 2147483648
      %v4237 = vor.u32 1.1754944e-38, %v4236
      %v4238 = vsel %vm4235, %v4237, %v4233
      %v4239 = vmul.f32 1.0, %v4238
      %v4240 = vrcp.pop %v4224
      %v4241 = vmul.f32 %v4224, %v4240
      %v4242 = vsub.f32 1.0, %v4241
      %v4243 = vmul.f32 %v4240, %v4242
      %v4244 = vadd.f32 %v4240, %v4243
      %vm4245 = vweird.f32 %v4224
      %vm4246 = vweird.f32 %v4240
      %vm4247 = vmor %vm4245, %vm4246
      %v4248 = vsel %vm4247, %v4240, %v4244
      %v4249 = vand.u32 2147483647, %v4224
      %vm4250 = vcmp.eq.f32.partialorder %v4249, 8.507059e+37
      %v4251 = vand.u32 %v4224, 2147483648
      %v4252 = vor.u32 1.1754944e-38, %v4251
      %v4253 = vsel %vm4250, %v4252, %v4248
      %v4254 = vmul.f32 1.0, %v4253
      %v4257 = vrot.slane %v4254, 7
      %v4258 = vsel %vm2868, %v4239, %v4257
      %4260 = vst.msk [vmem:[%s656 + $0x6] sm:$0x3] %vm2939, %v4258
      %v4261 = vld [vmem:[%s3 + $0x40] sm:$0xff]
      %v4262 = vld [vmem:[%s3 + $0x48] sm:$0xff]
      %v4263 = vld [vmem:[%s3 + $0xd0] sm:$0xff]
      %v4264 = vld [vmem:[%s3 + $0xd8] sm:$0xff]
      %v4265 = vld [vmem:[%s3 + $0x160] sm:$0xff]
      %v4266 = vld [vmem:[%s3 + $0x168] sm:$0xff]
      %v4267 = vld [vmem:[%s3 + $0x1f0] sm:$0xff]
      %v4268 = vld [vmem:[%s3 + $0x1f8] sm:$0xff]
      %v4269 = vld [vmem:[%s3 + $0x280] sm:$0xff]
      %v4270 = vld [vmem:[%s3 + $0x288] sm:$0xff]
      %v4271 = vld [vmem:[%s3 + $0x310] sm:$0xff]
      %v4272 = vld [vmem:[%s3 + $0x318] sm:$0xff]
      %v4273 = vld [vmem:[%s3 + $0x3a0] sm:$0xff]
      %v4274 = vld [vmem:[%s3 + $0x3a8] sm:$0xff]
      %v4275 = vld [vmem:[%s3 + $0x430] sm:$0xff]
      %v4276 = vld [vmem:[%s3 + $0x438] sm:$0xff]
      %v4277 = vld [vmem:[%s3 + $0x4c0] sm:$0xff]
      %v4278 = vld [vmem:[%s3 + $0x4c8] sm:$0xff]
      %v4279 = vld [vmem:[%s3 + $0x550] sm:$0xff]
      %v4280 = vld [vmem:[%s3 + $0x558] sm:$0xff]
      %v4281 = vld [vmem:[%s3 + $0x5e0] sm:$0xff]
      %v4282 = vld [vmem:[%s3 + $0x5e8] sm:$0xff]
      %v4283 = vld [vmem:[%s3 + $0x670] sm:$0xff]
      %v4284 = vld [vmem:[%s3 + $0x678] sm:$0xff]
      %v4285 = vld [vmem:[%s3 + $0x700] sm:$0xff]
      %v4286 = vld [vmem:[%s3 + $0x708] sm:$0xff]
      %v4287 = vld [vmem:[%s3 + $0x790] sm:$0xff]
      %v4288 = vld [vmem:[%s3 + $0x798] sm:$0xff]
      %v4289 = vld [vmem:[%s3 + $0x820] sm:$0xff]
      %v4290 = vld [vmem:[%s3 + $0x828] sm:$0xff]
      %v4291 = vld [vmem:[%s3 + $0x8b0] sm:$0xff]
      %v4292 = vld [vmem:[%s3 + $0x8b8] sm:$0xff]
      %v4293 = vld [vmem:[%s3 + $0x940] sm:$0xff]
      %v4294 = vld [vmem:[%s3 + $0x948] sm:$0xff]
      %v4295 = vld [vmem:[%s3 + $0x9d0] sm:$0xff]
      %v4296 = vld [vmem:[%s3 + $0x9d8] sm:$0xff]
      %v4297 = vld [vmem:[%s3 + $0xa60] sm:$0xff]
      %v4298 = vld [vmem:[%s3 + $0xa68] sm:$0xff]
      %v4299 = vld [vmem:[%s3 + $0xaf0] sm:$0xff]
      %v4300 = vld [vmem:[%s3 + $0xaf8] sm:$0xff]
      %v4301 = vld [vmem:[%s3 + $0xb80] sm:$0xff]
      %v4302 = vld [vmem:[%s3 + $0xb88] sm:$0xff]
      %v4303 = vld [vmem:[%s3 + $0xc10] sm:$0xff]
      %v4304 = vld [vmem:[%s3 + $0xc18] sm:$0xff]
      %v4305 = vld [vmem:[%s3 + $0xca0] sm:$0xff]
      %v4306 = vld [vmem:[%s3 + $0xca8] sm:$0xff]
      %v4307 = vld [vmem:[%s3 + $0xd30] sm:$0xff]
      %v4308 = vld [vmem:[%s3 + $0xd38] sm:$0xff]
      %v4309 = vld [vmem:[%s3 + $0xdc0] sm:$0xff]
      %v4310 = vld [vmem:[%s3 + $0xdc8] sm:$0xff]
      %v4311 = vld [vmem:[%s3 + $0xe50] sm:$0xff]
      %v4312 = vld [vmem:[%s3 + $0xe58] sm:$0xff]
      %v4313 = vld [vmem:[%s3 + $0xee0] sm:$0xff]
      %v4314 = vld [vmem:[%s3 + $0xee8] sm:$0xff]
      %v4315 = vld [vmem:[%s3 + $0xf70] sm:$0xff]
      %v4316 = vld [vmem:[%s3 + $0xf78] sm:$0xff]
      %v4317 = vld [vmem:[%s3 + $0x1000] sm:$0xff]
      %v4318 = vld [vmem:[%s3 + $0x1008] sm:$0xff]
      %v4319 = vld [vmem:[%s3 + $0x1090] sm:$0xff]
      %v4320 = vld [vmem:[%s3 + $0x1098] sm:$0xff]
      %v4321 = vld [vmem:[%s3 + $0x1120] sm:$0xff]
      %v4322 = vld [vmem:[%s3 + $0x1128] sm:$0xff]
      %v4323 = vld [vmem:[%s3 + $0x11b0] sm:$0xff]
      %v4324 = vld [vmem:[%s3 + $0x11b8] sm:$0xff]
      %v4325 = vld [vmem:[%s3 + $0x1240] sm:$0xff]
      %v4326 = vld [vmem:[%s3 + $0x1248] sm:$0xff]
      %v4327 = vld [vmem:[%s3 + $0x12d0] sm:$0xff]
      %v4328 = vld [vmem:[%s3 + $0x12d8] sm:$0xff]
      %v4329 = vld [vmem:[%s3 + $0x1360] sm:$0xff]
      %v4330 = vld [vmem:[%s3 + $0x1368] sm:$0xff]
      %v4331 = vld [vmem:[%s3 + $0x13f0] sm:$0xff]
      %v4332 = vld [vmem:[%s3 + $0x13f8] sm:$0xff]
      %v4333 = vld [vmem:[%s3 + $0x1480] sm:$0xff]
      %v4334 = vld [vmem:[%s3 + $0x1488] sm:$0xff]
      %v4335 = vld [vmem:[%s3 + $0x1510] sm:$0xff]
      %v4336 = vld [vmem:[%s3 + $0x1518] sm:$0xff]
      %v4337 = vld [vmem:[%s3 + $0x15a0] sm:$0xff]
      %v4338 = vld [vmem:[%s3 + $0x15a8] sm:$0xff]
      %v4339 = vld [vmem:[%s3 + $0x1630] sm:$0xff]
      %v4340 = vld [vmem:[%s3 + $0x1638] sm:$0xff]
      %v4341 = vld [vmem:[%s3 + $0x16c0] sm:$0xff]
      %v4342 = vld [vmem:[%s3 + $0x16c8] sm:$0xff]
      %v4343 = vld [vmem:[%s3 + $0x1750] sm:$0xff]
      %v4344 = vld [vmem:[%s3 + $0x1758] sm:$0xff]
      %v4345 = vld [vmem:[%s3 + $0x17e0] sm:$0xff]
      %v4346 = vld [vmem:[%s3 + $0x17e8] sm:$0xff]
      %v4347 = vld [vmem:[%s3 + $0x1870] sm:$0xff]
      %v4348 = vld [vmem:[%s3 + $0x1878] sm:$0xff]
      %v4349 = vld [vmem:[%s3 + $0x1900] sm:$0xff]
      %v4350 = vld [vmem:[%s3 + $0x1908] sm:$0xff]
      %v4351 = vld [vmem:[%s3 + $0x1990] sm:$0xff]
      %v4352 = vld [vmem:[%s3 + $0x1998] sm:$0xff]
      %v4353 = vld [vmem:[%s3 + $0x1a20] sm:$0xff]
      %v4354 = vld [vmem:[%s3 + $0x1a28] sm:$0xff]
      %v4355 = vld [vmem:[%s3 + $0x1ab0] sm:$0xff]
      %v4356 = vld [vmem:[%s3 + $0x1ab8] sm:$0xff]
      %v4357 = vld [vmem:[%s3 + $0x1b40] sm:$0xff]
      %v4358 = vld [vmem:[%s3 + $0x1b48] sm:$0xff]
      %v4359 = vld [vmem:[%s3 + $0x1bd0] sm:$0xff]
      %v4360 = vld [vmem:[%s3 + $0x1bd8] sm:$0xff]
      %v4361 = vld [vmem:[%s3 + $0x1c60] sm:$0xff]
      %v4362 = vld [vmem:[%s3 + $0x1c68] sm:$0xff]
      %v4363 = vld [vmem:[%s3 + $0x1cf0] sm:$0xff]
      %v4364 = vld [vmem:[%s3 + $0x1cf8] sm:$0xff]
      %v4365 = vld [vmem:[%s3 + $0x1d80] sm:$0xff]
      %v4366 = vld [vmem:[%s3 + $0x1d88] sm:$0xff]
      %v4367 = vld [vmem:[%s3 + $0x1e10] sm:$0xff]
      %v4368 = vld [vmem:[%s3 + $0x1e18] sm:$0xff]
      %v4369 = vld [vmem:[%s3 + $0x1ea0] sm:$0xff]
      %v4370 = vld [vmem:[%s3 + $0x1ea8] sm:$0xff]
      %v4371 = vld [vmem:[%s3 + $0x1f30] sm:$0xff]
      %v4372 = vld [vmem:[%s3 + $0x1f38] sm:$0xff]
      %v4373 = vld [vmem:[%s3 + $0x1fc0] sm:$0xff]
      %v4374 = vld [vmem:[%s3 + $0x1fc8] sm:$0xff]
      %v4375 = vld [vmem:[%s3 + $0x2050] sm:$0xff]
      %v4376 = vld [vmem:[%s3 + $0x2058] sm:$0xff]
      %v4377 = vld [vmem:[%s3 + $0x20e0] sm:$0xff]
      %v4378 = vld [vmem:[%s3 + $0x20e8] sm:$0xff]
      %v4379 = vld [vmem:[%s3 + $0x2170] sm:$0xff]
      %v4380 = vld [vmem:[%s3 + $0x2178] sm:$0xff]
      %v4381 = vld [vmem:[%s3 + $0x2200] sm:$0xff]
      %v4382 = vld [vmem:[%s3 + $0x2208] sm:$0xff]
      %v4383 = vld [vmem:[%s3 + $0x2290] sm:$0xff]
      %v4384 = vld [vmem:[%s3 + $0x2298] sm:$0xff]
      %v4385 = vld [vmem:[%s3 + $0x2320] sm:$0xff]
      %v4386 = vld [vmem:[%s3 + $0x2328] sm:$0xff]
      %v4387 = vld [vmem:[%s3 + $0x23b0] sm:$0xff]
      %v4388 = vld [vmem:[%s3 + $0x23b8] sm:$0xff]
      %v4389 = vld [vmem:[%s3 + $0x2440] sm:$0xff]
      %v4390 = vld [vmem:[%s3 + $0x2448] sm:$0xff]
      %v4391 = vld [vmem:[%s3 + $0x24d0] sm:$0xff]
      %v4392 = vld [vmem:[%s3 + $0x24d8] sm:$0xff]
      %v4393 = vld [vmem:[%s3 + $0x2560] sm:$0xff]
      %v4394 = vld [vmem:[%s3 + $0x2568] sm:$0xff]
      %v4395 = vld [vmem:[%s3 + $0x25f0] sm:$0xff]
      %v4396 = vld [vmem:[%s3 + $0x25f8] sm:$0xff]
      %v4397 = vld [vmem:[%s3 + $0x2680] sm:$0xff]
      %v4398 = vld [vmem:[%s3 + $0x2688] sm:$0xff]
      %v4399 = vld [vmem:[%s3 + $0x2710] sm:$0xff]
      %v4400 = vld [vmem:[%s3 + $0x2718] sm:$0xff]
      %v4401 = vld [vmem:[%s3 + $0x27a0] sm:$0xff]
      %v4402 = vld [vmem:[%s3 + $0x27a8] sm:$0xff]
      %v4403 = vld [vmem:[%s3 + $0x2830] sm:$0xff]
      %v4404 = vld [vmem:[%s3 + $0x2838] sm:$0xff]
      %4405 = vmatpush.msra.mxu0 %v4291
      %4406 = vmatpush.msra.mxu0 %v4289
      %4407 = vmatpush.msra.mxu0 %v4287
      %4408 = vmatpush.msra.mxu0 %v4285
      %4409 = vmatpush.msra.mxu0 %v4283
      %4410 = vmatpush.msra.mxu0 %v4281
      %4411 = vmatpush.msra.mxu0 %v4279
      %4412 = vmatpush.msra.mxu0 %v4277
      %4413 = vmatpush.msra.mxu0 %v4275
      %4414 = vmatpush.msra.mxu0 %v4273
      %4415 = vmatpush.msra.mxu0 %v4271
      %4416 = vmatpush.msra.mxu0 %v4269
      %4417 = vmatpush.msra.mxu0 %v4267
      %4418 = vmatpush.msra.mxu0 %v4265
      %4419 = vmatpush.msra.mxu0 %v4263
      %4420 = vmatpush.msra.mxu0 %v4261
      %4421 = vmatmul.f32.gmra.mxu0 %v2461
      %v4422 = vpop.f32.mrf.mxu0
      %v4423 = vadd.f32 0.0, %v4422
      %4424 = vmatmul.f32.gmra.mxu0 %v2466
      %v4425 = vpop.f32.mrf.mxu0
      %v4426 = vadd.f32 0.0, %v4425
      %4427 = vdwg.mxu0
      %4428 = vmatpush.msra.mxu0 %v4323
      %4429 = vmatpush.msra.mxu0 %v4321
      %4430 = vmatpush.msra.mxu0 %v4319
      %4431 = vmatpush.msra.mxu0 %v4317
      %4432 = vmatpush.msra.mxu0 %v4315
      %4433 = vmatpush.msra.mxu0 %v4313
      %4434 = vmatpush.msra.mxu0 %v4311
      %4435 = vmatpush.msra.mxu0 %v4309
      %4436 = vmatpush.msra.mxu0 %v4307
      %4437 = vmatpush.msra.mxu0 %v4305
      %4438 = vmatpush.msra.mxu0 %v4303
      %4439 = vmatpush.msra.mxu0 %v4301
      %4440 = vmatpush.msra.mxu0 %v4299
      %4441 = vmatpush.msra.mxu0 %v4297
      %4442 = vmatpush.msra.mxu0 %v4295
      %4443 = vmatpush.msra.mxu0 %v4293
      %4444 = vmatmul.f32.gmra.mxu0 %v2462
      %v4445 = vpop.f32.mrf.mxu0
      %v4446 = vadd.f32 %v4423, %v4445
      %4447 = vmatmul.f32.gmra.mxu0 %v2467
      %v4448 = vpop.f32.mrf.mxu0
      %v4449 = vadd.f32 %v4426, %v4448
      %4450 = vdwg.mxu0
      %4451 = vmatpush.msra.mxu0 %v4355
      %4452 = vmatpush.msra.mxu0 %v4353
      %4453 = vmatpush.msra.mxu0 %v4351
      %4454 = vmatpush.msra.mxu0 %v4349
      %4455 = vmatpush.msra.mxu0 %v4347
      %4456 = vmatpush.msra.mxu0 %v4345
      %4457 = vmatpush.msra.mxu0 %v4343
      %4458 = vmatpush.msra.mxu0 %v4341
      %4459 = vmatpush.msra.mxu0 %v4339
      %4460 = vmatpush.msra.mxu0 %v4337
      %4461 = vmatpush.msra.mxu0 %v4335
      %4462 = vmatpush.msra.mxu0 %v4333
      %4463 = vmatpush.msra.mxu0 %v4331
      %4464 = vmatpush.msra.mxu0 %v4329
      %4465 = vmatpush.msra.mxu0 %v4327
      %4466 = vmatpush.msra.mxu0 %v4325
      %4467 = vmatmul.f32.gmra.mxu0 %v2463
      %v4468 = vpop.f32.mrf.mxu0
      %v4469 = vadd.f32 %v4446, %v4468
      %4470 = vmatmul.f32.gmra.mxu0 %v2468
      %v4471 = vpop.f32.mrf.mxu0
      %v4472 = vadd.f32 %v4449, %v4471
      %4473 = vdwg.mxu0
      %4474 = vmatpush.msra.mxu0 %v4387
      %4475 = vmatpush.msra.mxu0 %v4385
      %4476 = vmatpush.msra.mxu0 %v4383
      %4477 = vmatpush.msra.mxu0 %v4381
      %4478 = vmatpush.msra.mxu0 %v4379
      %4479 = vmatpush.msra.mxu0 %v4377
      %4480 = vmatpush.msra.mxu0 %v4375
      %4481 = vmatpush.msra.mxu0 %v4373
      %4482 = vmatpush.msra.mxu0 %v4371
      %4483 = vmatpush.msra.mxu0 %v4369
      %4484 = vmatpush.msra.mxu0 %v4367
      %4485 = vmatpush.msra.mxu0 %v4365
      %4486 = vmatpush.msra.mxu0 %v4363
      %4487 = vmatpush.msra.mxu0 %v4361
      %4488 = vmatpush.msra.mxu0 %v4359
      %4489 = vmatpush.msra.mxu0 %v4357
      %4490 = vmatmul.f32.gmra.mxu0 %v2464
      %v4491 = vpop.f32.mrf.mxu0
      %v4492 = vadd.f32 %v4469, %v4491
      %4493 = vmatmul.f32.gmra.mxu0 %v2469
      %v4494 = vpop.f32.mrf.mxu0
      %v4495 = vadd.f32 %v4472, %v4494
      %4496 = vdwg.mxu0
      %4497 = vmatpush.msra.mxu0 0.0
      %4498 = vmatpush.msra.mxu0 0.0
      %4499 = vmatpush.msra.mxu0 0.0
      %4500 = vmatpush.msra.mxu0 0.0
      %4501 = vmatpush.msra.mxu0 0.0
      %4502 = vmatpush.msra.mxu0 0.0
      %4503 = vmatpush.msra.mxu0 0.0
      %4504 = vmatpush.msra.mxu0 0.0
      %4505 = vmatpush.msra.mxu0 %v4403
      %4506 = vmatpush.msra.mxu0 %v4401
      %4507 = vmatpush.msra.mxu0 %v4399
      %4508 = vmatpush.msra.mxu0 %v4397
      %4509 = vmatpush.msra.mxu0 %v4395
      %4510 = vmatpush.msra.mxu0 %v4393
      %4511 = vmatpush.msra.mxu0 %v4391
      %4512 = vmatpush.msra.mxu0 %v4389
      %4513 = vmatmul.f32.gmra.mxu0 %v2619
      %v4514 = vpop.f32.mrf.mxu0
      %v4515 = vadd.f32 %v4492, %v4514
      %4516 = vmatmul.f32.gmra.mxu0 %v2622
      %v4517 = vpop.f32.mrf.mxu0
      %v4518 = vadd.f32 %v4495, %v4517
      %4519 = vdwg.mxu0
      %4520 = vmatpush.msra.mxu0 %v4292
      %4521 = vmatpush.msra.mxu0 %v4290
      %4522 = vmatpush.msra.mxu0 %v4288
      %4523 = vmatpush.msra.mxu0 %v4286
      %4524 = vmatpush.msra.mxu0 %v4284
      %4525 = vmatpush.msra.mxu0 %v4282
      %4526 = vmatpush.msra.mxu0 %v4280
      %4527 = vmatpush.msra.mxu0 %v4278
      %4528 = vmatpush.msra.mxu0 %v4276
      %4529 = vmatpush.msra.mxu0 %v4274
      %4530 = vmatpush.msra.mxu0 %v4272
      %4531 = vmatpush.msra.mxu0 %v4270
      %4532 = vmatpush.msra.mxu0 %v4268
      %4533 = vmatpush.msra.mxu0 %v4266
      %4534 = vmatpush.msra.mxu0 %v4264
      %4535 = vmatpush.msra.mxu0 %v4262
      %4536 = vmatmul.f32.gmra.mxu0 %v2461
      %v4537 = vpop.f32.mrf.mxu0
      %v4538 = vadd.f32 0.0, %v4537
      %4539 = vmatmul.f32.gmra.mxu0 %v2466
      %v4540 = vpop.f32.mrf.mxu0
      %v4541 = vadd.f32 0.0, %v4540
      %4542 = vdwg.mxu0
      %4543 = vmatpush.msra.mxu0 %v4324
      %4544 = vmatpush.msra.mxu0 %v4322
      %4545 = vmatpush.msra.mxu0 %v4320
      %4546 = vmatpush.msra.mxu0 %v4318
      %4547 = vmatpush.msra.mxu0 %v4316
      %4548 = vmatpush.msra.mxu0 %v4314
      %4549 = vmatpush.msra.mxu0 %v4312
      %4550 = vmatpush.msra.mxu0 %v4310
      %4551 = vmatpush.msra.mxu0 %v4308
      %4552 = vmatpush.msra.mxu0 %v4306
      %4553 = vmatpush.msra.mxu0 %v4304
      %4554 = vmatpush.msra.mxu0 %v4302
      %4555 = vmatpush.msra.mxu0 %v4300
      %4556 = vmatpush.msra.mxu0 %v4298
      %4557 = vmatpush.msra.mxu0 %v4296
      %4558 = vmatpush.msra.mxu0 %v4294
      %4559 = vmatmul.f32.gmra.mxu0 %v2462
      %v4560 = vpop.f32.mrf.mxu0
      %v4561 = vadd.f32 %v4538, %v4560
      %4562 = vmatmul.f32.gmra.mxu0 %v2467
      %v4563 = vpop.f32.mrf.mxu0
      %v4564 = vadd.f32 %v4541, %v4563
      %4565 = vdwg.mxu0
      %4566 = vmatpush.msra.mxu0 %v4356
      %4567 = vmatpush.msra.mxu0 %v4354
      %4568 = vmatpush.msra.mxu0 %v4352
      %4569 = vmatpush.msra.mxu0 %v4350
      %4570 = vmatpush.msra.mxu0 %v4348
      %4571 = vmatpush.msra.mxu0 %v4346
      %4572 = vmatpush.msra.mxu0 %v4344
      %4573 = vmatpush.msra.mxu0 %v4342
      %4574 = vmatpush.msra.mxu0 %v4340
      %4575 = vmatpush.msra.mxu0 %v4338
      %4576 = vmatpush.msra.mxu0 %v4336
      %4577 = vmatpush.msra.mxu0 %v4334
      %4578 = vmatpush.msra.mxu0 %v4332
      %4579 = vmatpush.msra.mxu0 %v4330
      %4580 = vmatpush.msra.mxu0 %v4328
      %4581 = vmatpush.msra.mxu0 %v4326
      %4582 = vmatmul.f32.gmra.mxu0 %v2463
      %v4583 = vpop.f32.mrf.mxu0
      %v4584 = vadd.f32 %v4561, %v4583
      %4585 = vmatmul.f32.gmra.mxu0 %v2468
      %v4586 = vpop.f32.mrf.mxu0
      %v4587 = vadd.f32 %v4564, %v4586
      %4588 = vdwg.mxu0
      %4589 = vmatpush.msra.mxu0 %v4388
      %4590 = vmatpush.msra.mxu0 %v4386
      %4591 = vmatpush.msra.mxu0 %v4384
      %4592 = vmatpush.msra.mxu0 %v4382
      %4593 = vmatpush.msra.mxu0 %v4380
      %4594 = vmatpush.msra.mxu0 %v4378
      %4595 = vmatpush.msra.mxu0 %v4376
      %4596 = vmatpush.msra.mxu0 %v4374
      %4597 = vmatpush.msra.mxu0 %v4372
      %4598 = vmatpush.msra.mxu0 %v4370
      %4599 = vmatpush.msra.mxu0 %v4368
      %4600 = vmatpush.msra.mxu0 %v4366
      %4601 = vmatpush.msra.mxu0 %v4364
      %4602 = vmatpush.msra.mxu0 %v4362
      %4603 = vmatpush.msra.mxu0 %v4360
      %4604 = vmatpush.msra.mxu0 %v4358
      %4605 = vmatmul.f32.gmra.mxu0 %v2464
      %v4606 = vpop.f32.mrf.mxu0
      %v4607 = vadd.f32 %v4584, %v4606
      %4608 = vmatmul.f32.gmra.mxu0 %v2469
      %v4609 = vpop.f32.mrf.mxu0
      %v4610 = vadd.f32 %v4587, %v4609
      %4611 = vdwg.mxu0
      %4612 = vmatpush.msra.mxu0 0.0
      %4613 = vmatpush.msra.mxu0 0.0
      %4614 = vmatpush.msra.mxu0 0.0
      %4615 = vmatpush.msra.mxu0 0.0
      %4616 = vmatpush.msra.mxu0 0.0
      %4617 = vmatpush.msra.mxu0 0.0
      %4618 = vmatpush.msra.mxu0 0.0
      %4619 = vmatpush.msra.mxu0 0.0
      %4620 = vmatpush.msra.mxu0 %v4404
      %4621 = vmatpush.msra.mxu0 %v4402
      %4622 = vmatpush.msra.mxu0 %v4400
      %4623 = vmatpush.msra.mxu0 %v4398
      %4624 = vmatpush.msra.mxu0 %v4396
      %4625 = vmatpush.msra.mxu0 %v4394
      %4626 = vmatpush.msra.mxu0 %v4392
      %4627 = vmatpush.msra.mxu0 %v4390
      %4628 = vmatmul.f32.gmra.mxu0 %v2619
      %v4629 = vpop.f32.mrf.mxu0
      %v4630 = vadd.f32 %v4607, %v4629
      %4631 = vmatmul.f32.gmra.mxu0 %v2622
      %v4632 = vpop.f32.mrf.mxu0
      %v4633 = vadd.f32 %v4610, %v4632
      %4634 = vdwg.mxu0
      %v4635 = vmul.f32 %v4515, %v2857
      %v4636 = vmul.f32 %v4630, %v2857
      %v4637 = vmul.f32 %v4518, %v2862
      %v4638 = vmul.f32 %v4633, %v2862
      %v4639 = vsel %vm2868, %v4637, 0.0
      %v4640 = vadd.f32 %v4635, %v4639
      %v4641 = vrot.slane %v4640, 4
      %v4642 = vadd.f32 %v4640, %v4641
      %v4643 = vrot.slane %v4642, 2
      %v4644 = vadd.f32 %v4642, %v4643
      %v4645 = vrot.slane %v4644, 1
      %v4646 = vadd.f32 %v4644, %v4645
      %v4647 = vsel %vm2868, %v4638, 0.0
      %v4648 = vadd.f32 %v4636, %v4647
      %v4649 = vrot.slane %v4648, 4
      %v4650 = vadd.f32 %v4648, %v4649
      %v4651 = vrot.slane %v4650, 2
      %v4652 = vadd.f32 %v4650, %v4651
      %v4653 = vrot.slane %v4652, 1
      %v4654 = vadd.f32 %v4652, %v4653
      %v4655 = vadd.f32 %v4646, %v2890
      %v4656 = vadd.f32 %v4654, %v2890
      %v4657 = vxor.u32 %v4655, 2147483648
      %v4658 = vxor.u32 %v4656, 2147483648
      %v4659 = vmul.f32 %v4657, 1.442695
      %v4660 = vpow.pop %v4659
      %v4661 = vmul.f32 %v4658, 1.442695
      %v4662 = vpow.pop %v4661
      %v4663 = vadd.f32 %v4660, 1.0
      %v4664 = vadd.f32 %v4662, 1.0
      %v4665 = vrcp.pop %v4663
      %v4666 = vmul.f32 %v4663, %v4665
      %v4667 = vsub.f32 1.0, %v4666
      %v4668 = vmul.f32 %v4665, %v4667
      %v4669 = vadd.f32 %v4665, %v4668
      %vm4670 = vweird.f32 %v4663
      %vm4671 = vweird.f32 %v4665
      %vm4672 = vmor %vm4670, %vm4671
      %v4673 = vsel %vm4672, %v4665, %v4669
      %v4674 = vand.u32 2147483647, %v4663
      %vm4675 = vcmp.eq.f32.partialorder %v4674, 8.507059e+37
      %v4676 = vand.u32 %v4663, 2147483648
      %v4677 = vor.u32 1.1754944e-38, %v4676
      %v4678 = vsel %vm4675, %v4677, %v4673
      %v4679 = vmul.f32 1.0, %v4678
      %v4680 = vrcp.pop %v4664
      %v4681 = vmul.f32 %v4664, %v4680
      %v4682 = vsub.f32 1.0, %v4681
      %v4683 = vmul.f32 %v4680, %v4682
      %v4684 = vadd.f32 %v4680, %v4683
      %vm4685 = vweird.f32 %v4664
      %vm4686 = vweird.f32 %v4680
      %vm4687 = vmor %vm4685, %vm4686
      %v4688 = vsel %vm4687, %v4680, %v4684
      %v4689 = vand.u32 2147483647, %v4664
      %vm4690 = vcmp.eq.f32.partialorder %v4689, 8.507059e+37
      %v4691 = vand.u32 %v4664, 2147483648
      %v4692 = vor.u32 1.1754944e-38, %v4691
      %v4693 = vsel %vm4690, %v4692, %v4688
      %v4694 = vmul.f32 1.0, %v4693
      %v4697 = vrot.slane %v4694, 7
      %v4698 = vsel %vm2868, %v4679, %v4697
      %4700 = vst.msk [vmem:[%s656 + $0x8] sm:$0x3] %vm2939, %v4698
      %v4701 = vld [vmem:[%s3 + $0x50] sm:$0xff]
      %v4702 = vld [vmem:[%s3 + $0x58] sm:$0xff]
      %v4703 = vld [vmem:[%s3 + $0xe0] sm:$0xff]
      %v4704 = vld [vmem:[%s3 + $0xe8] sm:$0xff]
      %v4705 = vld [vmem:[%s3 + $0x170] sm:$0xff]
      %v4706 = vld [vmem:[%s3 + $0x178] sm:$0xff]
      %v4707 = vld [vmem:[%s3 + $0x200] sm:$0xff]
      %v4708 = vld [vmem:[%s3 + $0x208] sm:$0xff]
      %v4709 = vld [vmem:[%s3 + $0x290] sm:$0xff]
      %v4710 = vld [vmem:[%s3 + $0x298] sm:$0xff]
      %v4711 = vld [vmem:[%s3 + $0x320] sm:$0xff]
      %v4712 = vld [vmem:[%s3 + $0x328] sm:$0xff]
      %v4713 = vld [vmem:[%s3 + $0x3b0] sm:$0xff]
      %v4714 = vld [vmem:[%s3 + $0x3b8] sm:$0xff]
      %v4715 = vld [vmem:[%s3 + $0x440] sm:$0xff]
      %v4716 = vld [vmem:[%s3 + $0x448] sm:$0xff]
      %v4717 = vld [vmem:[%s3 + $0x4d0] sm:$0xff]
      %v4718 = vld [vmem:[%s3 + $0x4d8] sm:$0xff]
      %v4719 = vld [vmem:[%s3 + $0x560] sm:$0xff]
      %v4720 = vld [vmem:[%s3 + $0x568] sm:$0xff]
      %v4721 = vld [vmem:[%s3 + $0x5f0] sm:$0xff]
      %v4722 = vld [vmem:[%s3 + $0x5f8] sm:$0xff]
      %v4723 = vld [vmem:[%s3 + $0x680] sm:$0xff]
      %v4724 = vld [vmem:[%s3 + $0x688] sm:$0xff]
      %v4725 = vld [vmem:[%s3 + $0x710] sm:$0xff]
      %v4726 = vld [vmem:[%s3 + $0x718] sm:$0xff]
      %v4727 = vld [vmem:[%s3 + $0x7a0] sm:$0xff]
      %v4728 = vld [vmem:[%s3 + $0x7a8] sm:$0xff]
      %v4729 = vld [vmem:[%s3 + $0x830] sm:$0xff]
      %v4730 = vld [vmem:[%s3 + $0x838] sm:$0xff]
      %v4731 = vld [vmem:[%s3 + $0x8c0] sm:$0xff]
      %v4732 = vld [vmem:[%s3 + $0x8c8] sm:$0xff]
      %v4733 = vld [vmem:[%s3 + $0x950] sm:$0xff]
      %v4734 = vld [vmem:[%s3 + $0x958] sm:$0xff]
      %v4735 = vld [vmem:[%s3 + $0x9e0] sm:$0xff]
      %v4736 = vld [vmem:[%s3 + $0x9e8] sm:$0xff]
      %v4737 = vld [vmem:[%s3 + $0xa70] sm:$0xff]
      %v4738 = vld [vmem:[%s3 + $0xa78] sm:$0xff]
      %v4739 = vld [vmem:[%s3 + $0xb00] sm:$0xff]
      %v4740 = vld [vmem:[%s3 + $0xb08] sm:$0xff]
      %v4741 = vld [vmem:[%s3 + $0xb90] sm:$0xff]
      %v4742 = vld [vmem:[%s3 + $0xb98] sm:$0xff]
      %v4743 = vld [vmem:[%s3 + $0xc20] sm:$0xff]
      %v4744 = vld [vmem:[%s3 + $0xc28] sm:$0xff]
      %v4745 = vld [vmem:[%s3 + $0xcb0] sm:$0xff]
      %v4746 = vld [vmem:[%s3 + $0xcb8] sm:$0xff]
      %v4747 = vld [vmem:[%s3 + $0xd40] sm:$0xff]
      %v4748 = vld [vmem:[%s3 + $0xd48] sm:$0xff]
      %v4749 = vld [vmem:[%s3 + $0xdd0] sm:$0xff]
      %v4750 = vld [vmem:[%s3 + $0xdd8] sm:$0xff]
      %v4751 = vld [vmem:[%s3 + $0xe60] sm:$0xff]
      %v4752 = vld [vmem:[%s3 + $0xe68] sm:$0xff]
      %v4753 = vld [vmem:[%s3 + $0xef0] sm:$0xff]
      %v4754 = vld [vmem:[%s3 + $0xef8] sm:$0xff]
      %v4755 = vld [vmem:[%s3 + $0xf80] sm:$0xff]
      %v4756 = vld [vmem:[%s3 + $0xf88] sm:$0xff]
      %v4757 = vld [vmem:[%s3 + $0x1010] sm:$0xff]
      %v4758 = vld [vmem:[%s3 + $0x1018] sm:$0xff]
      %v4759 = vld [vmem:[%s3 + $0x10a0] sm:$0xff]
      %v4760 = vld [vmem:[%s3 + $0x10a8] sm:$0xff]
      %v4761 = vld [vmem:[%s3 + $0x1130] sm:$0xff]
      %v4762 = vld [vmem:[%s3 + $0x1138] sm:$0xff]
      %v4763 = vld [vmem:[%s3 + $0x11c0] sm:$0xff]
      %v4764 = vld [vmem:[%s3 + $0x11c8] sm:$0xff]
      %v4765 = vld [vmem:[%s3 + $0x1250] sm:$0xff]
      %v4766 = vld [vmem:[%s3 + $0x1258] sm:$0xff]
      %v4767 = vld [vmem:[%s3 + $0x12e0] sm:$0xff]
      %v4768 = vld [vmem:[%s3 + $0x12e8] sm:$0xff]
      %v4769 = vld [vmem:[%s3 + $0x1370] sm:$0xff]
      %v4770 = vld [vmem:[%s3 + $0x1378] sm:$0xff]
      %v4771 = vld [vmem:[%s3 + $0x1400] sm:$0xff]
      %v4772 = vld [vmem:[%s3 + $0x1408] sm:$0xff]
      %v4773 = vld [vmem:[%s3 + $0x1490] sm:$0xff]
      %v4774 = vld [vmem:[%s3 + $0x1498] sm:$0xff]
      %v4775 = vld [vmem:[%s3 + $0x1520] sm:$0xff]
      %v4776 = vld [vmem:[%s3 + $0x1528] sm:$0xff]
      %v4777 = vld [vmem:[%s3 + $0x15b0] sm:$0xff]
      %v4778 = vld [vmem:[%s3 + $0x15b8] sm:$0xff]
      %v4779 = vld [vmem:[%s3 + $0x1640] sm:$0xff]
      %v4780 = vld [vmem:[%s3 + $0x1648] sm:$0xff]
      %v4781 = vld [vmem:[%s3 + $0x16d0] sm:$0xff]
      %v4782 = vld [vmem:[%s3 + $0x16d8] sm:$0xff]
      %v4783 = vld [vmem:[%s3 + $0x1760] sm:$0xff]
      %v4784 = vld [vmem:[%s3 + $0x1768] sm:$0xff]
      %v4785 = vld [vmem:[%s3 + $0x17f0] sm:$0xff]
      %v4786 = vld [vmem:[%s3 + $0x17f8] sm:$0xff]
      %v4787 = vld [vmem:[%s3 + $0x1880] sm:$0xff]
      %v4788 = vld [vmem:[%s3 + $0x1888] sm:$0xff]
      %v4789 = vld [vmem:[%s3 + $0x1910] sm:$0xff]
      %v4790 = vld [vmem:[%s3 + $0x1918] sm:$0xff]
      %v4791 = vld [vmem:[%s3 + $0x19a0] sm:$0xff]
      %v4792 = vld [vmem:[%s3 + $0x19a8] sm:$0xff]
      %v4793 = vld [vmem:[%s3 + $0x1a30] sm:$0xff]
      %v4794 = vld [vmem:[%s3 + $0x1a38] sm:$0xff]
      %v4795 = vld [vmem:[%s3 + $0x1ac0] sm:$0xff]
      %v4796 = vld [vmem:[%s3 + $0x1ac8] sm:$0xff]
      %v4797 = vld [vmem:[%s3 + $0x1b50] sm:$0xff]
      %v4798 = vld [vmem:[%s3 + $0x1b58] sm:$0xff]
      %v4799 = vld [vmem:[%s3 + $0x1be0] sm:$0xff]
      %v4800 = vld [vmem:[%s3 + $0x1be8] sm:$0xff]
      %v4801 = vld [vmem:[%s3 + $0x1c70] sm:$0xff]
      %v4802 = vld [vmem:[%s3 + $0x1c78] sm:$0xff]
      %v4803 = vld [vmem:[%s3 + $0x1d00] sm:$0xff]
      %v4804 = vld [vmem:[%s3 + $0x1d08] sm:$0xff]
      %v4805 = vld [vmem:[%s3 + $0x1d90] sm:$0xff]
      %v4806 = vld [vmem:[%s3 + $0x1d98] sm:$0xff]
      %v4807 = vld [vmem:[%s3 + $0x1e20] sm:$0xff]
      %v4808 = vld [vmem:[%s3 + $0x1e28] sm:$0xff]
      %v4809 = vld [vmem:[%s3 + $0x1eb0] sm:$0xff]
      %v4810 = vld [vmem:[%s3 + $0x1eb8] sm:$0xff]
      %v4811 = vld [vmem:[%s3 + $0x1f40] sm:$0xff]
      %v4812 = vld [vmem:[%s3 + $0x1f48] sm:$0xff]
      %v4813 = vld [vmem:[%s3 + $0x1fd0] sm:$0xff]
      %v4814 = vld [vmem:[%s3 + $0x1fd8] sm:$0xff]
      %v4815 = vld [vmem:[%s3 + $0x2060] sm:$0xff]
      %v4816 = vld [vmem:[%s3 + $0x2068] sm:$0xff]
      %v4817 = vld [vmem:[%s3 + $0x20f0] sm:$0xff]
      %v4818 = vld [vmem:[%s3 + $0x20f8] sm:$0xff]
      %v4819 = vld [vmem:[%s3 + $0x2180] sm:$0xff]
      %v4820 = vld [vmem:[%s3 + $0x2188] sm:$0xff]
      %v4821 = vld [vmem:[%s3 + $0x2210] sm:$0xff]
      %v4822 = vld [vmem:[%s3 + $0x2218] sm:$0xff]
      %v4823 = vld [vmem:[%s3 + $0x22a0] sm:$0xff]
      %v4824 = vld [vmem:[%s3 + $0x22a8] sm:$0xff]
      %v4825 = vld [vmem:[%s3 + $0x2330] sm:$0xff]
      %v4826 = vld [vmem:[%s3 + $0x2338] sm:$0xff]
      %v4827 = vld [vmem:[%s3 + $0x23c0] sm:$0xff]
      %v4828 = vld [vmem:[%s3 + $0x23c8] sm:$0xff]
      %v4829 = vld [vmem:[%s3 + $0x2450] sm:$0xff]
      %v4830 = vld [vmem:[%s3 + $0x2458] sm:$0xff]
      %v4831 = vld [vmem:[%s3 + $0x24e0] sm:$0xff]
      %v4832 = vld [vmem:[%s3 + $0x24e8] sm:$0xff]
      %v4833 = vld [vmem:[%s3 + $0x2570] sm:$0xff]
      %v4834 = vld [vmem:[%s3 + $0x2578] sm:$0xff]
      %v4835 = vld [vmem:[%s3 + $0x2600] sm:$0xff]
      %v4836 = vld [vmem:[%s3 + $0x2608] sm:$0xff]
      %v4837 = vld [vmem:[%s3 + $0x2690] sm:$0xff]
      %v4838 = vld [vmem:[%s3 + $0x2698] sm:$0xff]
      %v4839 = vld [vmem:[%s3 + $0x2720] sm:$0xff]
      %v4840 = vld [vmem:[%s3 + $0x2728] sm:$0xff]
      %v4841 = vld [vmem:[%s3 + $0x27b0] sm:$0xff]
      %v4842 = vld [vmem:[%s3 + $0x27b8] sm:$0xff]
      %v4843 = vld [vmem:[%s3 + $0x2840] sm:$0xff]
      %v4844 = vld [vmem:[%s3 + $0x2848] sm:$0xff]
      %4845 = vmatpush.msra.mxu0 %v4731
      %4846 = vmatpush.msra.mxu0 %v4729
      %4847 = vmatpush.msra.mxu0 %v4727
      %4848 = vmatpush.msra.mxu0 %v4725
      %4849 = vmatpush.msra.mxu0 %v4723
      %4850 = vmatpush.msra.mxu0 %v4721
      %4851 = vmatpush.msra.mxu0 %v4719
      %4852 = vmatpush.msra.mxu0 %v4717
      %4853 = vmatpush.msra.mxu0 %v4715
      %4854 = vmatpush.msra.mxu0 %v4713
      %4855 = vmatpush.msra.mxu0 %v4711
      %4856 = vmatpush.msra.mxu0 %v4709
      %4857 = vmatpush.msra.mxu0 %v4707
      %4858 = vmatpush.msra.mxu0 %v4705
      %4859 = vmatpush.msra.mxu0 %v4703
      %4860 = vmatpush.msra.mxu0 %v4701
      %4861 = vmatmul.f32.gmra.mxu0 %v2461
      %v4862 = vpop.f32.mrf.mxu0
      %v4863 = vadd.f32 0.0, %v4862
      %4864 = vmatmul.f32.gmra.mxu0 %v2466
      %v4865 = vpop.f32.mrf.mxu0
      %v4866 = vadd.f32 0.0, %v4865
      %4867 = vdwg.mxu0
      %4868 = vmatpush.msra.mxu0 %v4763
      %4869 = vmatpush.msra.mxu0 %v4761
      %4870 = vmatpush.msra.mxu0 %v4759
      %4871 = vmatpush.msra.mxu0 %v4757
      %4872 = vmatpush.msra.mxu0 %v4755
      %4873 = vmatpush.msra.mxu0 %v4753
      %4874 = vmatpush.msra.mxu0 %v4751
      %4875 = vmatpush.msra.mxu0 %v4749
      %4876 = vmatpush.msra.mxu0 %v4747
      %4877 = vmatpush.msra.mxu0 %v4745
      %4878 = vmatpush.msra.mxu0 %v4743
      %4879 = vmatpush.msra.mxu0 %v4741
      %4880 = vmatpush.msra.mxu0 %v4739
      %4881 = vmatpush.msra.mxu0 %v4737
      %4882 = vmatpush.msra.mxu0 %v4735
      %4883 = vmatpush.msra.mxu0 %v4733
      %4884 = vmatmul.f32.gmra.mxu0 %v2462
      %v4885 = vpop.f32.mrf.mxu0
      %v4886 = vadd.f32 %v4863, %v4885
      %4887 = vmatmul.f32.gmra.mxu0 %v2467
      %v4888 = vpop.f32.mrf.mxu0
      %v4889 = vadd.f32 %v4866, %v4888
      %4890 = vdwg.mxu0
      %4891 = vmatpush.msra.mxu0 %v4795
      %4892 = vmatpush.msra.mxu0 %v4793
      %4893 = vmatpush.msra.mxu0 %v4791
      %4894 = vmatpush.msra.mxu0 %v4789
      %4895 = vmatpush.msra.mxu0 %v4787
      %4896 = vmatpush.msra.mxu0 %v4785
      %4897 = vmatpush.msra.mxu0 %v4783
      %4898 = vmatpush.msra.mxu0 %v4781
      %4899 = vmatpush.msra.mxu0 %v4779
      %4900 = vmatpush.msra.mxu0 %v4777
      %4901 = vmatpush.msra.mxu0 %v4775
      %4902 = vmatpush.msra.mxu0 %v4773
      %4903 = vmatpush.msra.mxu0 %v4771
      %4904 = vmatpush.msra.mxu0 %v4769
      %4905 = vmatpush.msra.mxu0 %v4767
      %4906 = vmatpush.msra.mxu0 %v4765
      %4907 = vmatmul.f32.gmra.mxu0 %v2463
      %v4908 = vpop.f32.mrf.mxu0
      %v4909 = vadd.f32 %v4886, %v4908
      %4910 = vmatmul.f32.gmra.mxu0 %v2468
      %v4911 = vpop.f32.mrf.mxu0
      %v4912 = vadd.f32 %v4889, %v4911
      %4913 = vdwg.mxu0
      %4914 = vmatpush.msra.mxu0 %v4827
      %4915 = vmatpush.msra.mxu0 %v4825
      %4916 = vmatpush.msra.mxu0 %v4823
      %4917 = vmatpush.msra.mxu0 %v4821
      %4918 = vmatpush.msra.mxu0 %v4819
      %4919 = vmatpush.msra.mxu0 %v4817
      %4920 = vmatpush.msra.mxu0 %v4815
      %4921 = vmatpush.msra.mxu0 %v4813
      %4922 = vmatpush.msra.mxu0 %v4811
      %4923 = vmatpush.msra.mxu0 %v4809
      %4924 = vmatpush.msra.mxu0 %v4807
      %4925 = vmatpush.msra.mxu0 %v4805
      %4926 = vmatpush.msra.mxu0 %v4803
      %4927 = vmatpush.msra.mxu0 %v4801
      %4928 = vmatpush.msra.mxu0 %v4799
      %4929 = vmatpush.msra.mxu0 %v4797
      %4930 = vmatmul.f32.gmra.mxu0 %v2464
      %v4931 = vpop.f32.mrf.mxu0
      %v4932 = vadd.f32 %v4909, %v4931
      %4933 = vmatmul.f32.gmra.mxu0 %v2469
      %v4934 = vpop.f32.mrf.mxu0
      %v4935 = vadd.f32 %v4912, %v4934
      %4936 = vdwg.mxu0
      %4937 = vmatpush.msra.mxu0 0.0
      %4938 = vmatpush.msra.mxu0 0.0
      %4939 = vmatpush.msra.mxu0 0.0
      %4940 = vmatpush.msra.mxu0 0.0
      %4941 = vmatpush.msra.mxu0 0.0
      %4942 = vmatpush.msra.mxu0 0.0
      %4943 = vmatpush.msra.mxu0 0.0
      %4944 = vmatpush.msra.mxu0 0.0
      %4945 = vmatpush.msra.mxu0 %v4843
      %4946 = vmatpush.msra.mxu0 %v4841
      %4947 = vmatpush.msra.mxu0 %v4839
      %4948 = vmatpush.msra.mxu0 %v4837
      %4949 = vmatpush.msra.mxu0 %v4835
      %4950 = vmatpush.msra.mxu0 %v4833
      %4951 = vmatpush.msra.mxu0 %v4831
      %4952 = vmatpush.msra.mxu0 %v4829
      %4953 = vmatmul.f32.gmra.mxu0 %v2619
      %v4954 = vpop.f32.mrf.mxu0
      %v4955 = vadd.f32 %v4932, %v4954
      %4956 = vmatmul.f32.gmra.mxu0 %v2622
      %v4957 = vpop.f32.mrf.mxu0
      %v4958 = vadd.f32 %v4935, %v4957
      %4959 = vdwg.mxu0
      %4960 = vmatpush.msra.mxu0 %v4732
      %4961 = vmatpush.msra.mxu0 %v4730
      %4962 = vmatpush.msra.mxu0 %v4728
      %4963 = vmatpush.msra.mxu0 %v4726
      %4964 = vmatpush.msra.mxu0 %v4724
      %4965 = vmatpush.msra.mxu0 %v4722
      %4966 = vmatpush.msra.mxu0 %v4720
      %4967 = vmatpush.msra.mxu0 %v4718
      %4968 = vmatpush.msra.mxu0 %v4716
      %4969 = vmatpush.msra.mxu0 %v4714
      %4970 = vmatpush.msra.mxu0 %v4712
      %4971 = vmatpush.msra.mxu0 %v4710
      %4972 = vmatpush.msra.mxu0 %v4708
      %4973 = vmatpush.msra.mxu0 %v4706
      %4974 = vmatpush.msra.mxu0 %v4704
      %4975 = vmatpush.msra.mxu0 %v4702
      %4976 = vmatmul.f32.gmra.mxu0 %v2461
      %v4977 = vpop.f32.mrf.mxu0
      %v4978 = vadd.f32 0.0, %v4977
      %4979 = vmatmul.f32.gmra.mxu0 %v2466
      %v4980 = vpop.f32.mrf.mxu0
      %v4981 = vadd.f32 0.0, %v4980
      %4982 = vdwg.mxu0
      %4983 = vmatpush.msra.mxu0 %v4764
      %4984 = vmatpush.msra.mxu0 %v4762
      %4985 = vmatpush.msra.mxu0 %v4760
      %4986 = vmatpush.msra.mxu0 %v4758
      %4987 = vmatpush.msra.mxu0 %v4756
      %4988 = vmatpush.msra.mxu0 %v4754
      %4989 = vmatpush.msra.mxu0 %v4752
      %4990 = vmatpush.msra.mxu0 %v4750
      %4991 = vmatpush.msra.mxu0 %v4748
      %4992 = vmatpush.msra.mxu0 %v4746
      %4993 = vmatpush.msra.mxu0 %v4744
      %4994 = vmatpush.msra.mxu0 %v4742
      %4995 = vmatpush.msra.mxu0 %v4740
      %4996 = vmatpush.msra.mxu0 %v4738
      %4997 = vmatpush.msra.mxu0 %v4736
      %4998 = vmatpush.msra.mxu0 %v4734
      %4999 = vmatmul.f32.gmra.mxu0 %v2462
      %v5000 = vpop.f32.mrf.mxu0
      %v5001 = vadd.f32 %v4978, %v5000
      %5002 = vmatmul.f32.gmra.mxu0 %v2467
      %v5003 = vpop.f32.mrf.mxu0
      %v5004 = vadd.f32 %v4981, %v5003
      %5005 = vdwg.mxu0
      %5006 = vmatpush.msra.mxu0 %v4796
      %5007 = vmatpush.msra.mxu0 %v4794
      %5008 = vmatpush.msra.mxu0 %v4792
      %5009 = vmatpush.msra.mxu0 %v4790
      %5010 = vmatpush.msra.mxu0 %v4788
      %5011 = vmatpush.msra.mxu0 %v4786
      %5012 = vmatpush.msra.mxu0 %v4784
      %5013 = vmatpush.msra.mxu0 %v4782
      %5014 = vmatpush.msra.mxu0 %v4780
      %5015 = vmatpush.msra.mxu0 %v4778
      %5016 = vmatpush.msra.mxu0 %v4776
      %5017 = vmatpush.msra.mxu0 %v4774
      %5018 = vmatpush.msra.mxu0 %v4772
      %5019 = vmatpush.msra.mxu0 %v4770
      %5020 = vmatpush.msra.mxu0 %v4768
      %5021 = vmatpush.msra.mxu0 %v4766
      %5022 = vmatmul.f32.gmra.mxu0 %v2463
      %v5023 = vpop.f32.mrf.mxu0
      %v5024 = vadd.f32 %v5001, %v5023
      %5025 = vmatmul.f32.gmra.mxu0 %v2468
      %v5026 = vpop.f32.mrf.mxu0
      %v5027 = vadd.f32 %v5004, %v5026
      %5028 = vdwg.mxu0
      %5029 = vmatpush.msra.mxu0 %v4828
      %5030 = vmatpush.msra.mxu0 %v4826
      %5031 = vmatpush.msra.mxu0 %v4824
      %5032 = vmatpush.msra.mxu0 %v4822
      %5033 = vmatpush.msra.mxu0 %v4820
      %5034 = vmatpush.msra.mxu0 %v4818
      %5035 = vmatpush.msra.mxu0 %v4816
      %5036 = vmatpush.msra.mxu0 %v4814
      %5037 = vmatpush.msra.mxu0 %v4812
      %5038 = vmatpush.msra.mxu0 %v4810
      %5039 = vmatpush.msra.mxu0 %v4808
      %5040 = vmatpush.msra.mxu0 %v4806
      %5041 = vmatpush.msra.mxu0 %v4804
      %5042 = vmatpush.msra.mxu0 %v4802
      %5043 = vmatpush.msra.mxu0 %v4800
      %5044 = vmatpush.msra.mxu0 %v4798
      %5045 = vmatmul.f32.gmra.mxu0 %v2464
      %v5046 = vpop.f32.mrf.mxu0
      %v5047 = vadd.f32 %v5024, %v5046
      %5048 = vmatmul.f32.gmra.mxu0 %v2469
      %v5049 = vpop.f32.mrf.mxu0
      %v5050 = vadd.f32 %v5027, %v5049
      %5051 = vdwg.mxu0
      %5052 = vmatpush.msra.mxu0 0.0
      %5053 = vmatpush.msra.mxu0 0.0
      %5054 = vmatpush.msra.mxu0 0.0
      %5055 = vmatpush.msra.mxu0 0.0
      %5056 = vmatpush.msra.mxu0 0.0
      %5057 = vmatpush.msra.mxu0 0.0
      %5058 = vmatpush.msra.mxu0 0.0
      %5059 = vmatpush.msra.mxu0 0.0
      %5060 = vmatpush.msra.mxu0 %v4844
      %5061 = vmatpush.msra.mxu0 %v4842
      %5062 = vmatpush.msra.mxu0 %v4840
      %5063 = vmatpush.msra.mxu0 %v4838
      %5064 = vmatpush.msra.mxu0 %v4836
      %5065 = vmatpush.msra.mxu0 %v4834
      %5066 = vmatpush.msra.mxu0 %v4832
      %5067 = vmatpush.msra.mxu0 %v4830
      %5068 = vmatmul.f32.gmra.mxu0 %v2619
      %v5069 = vpop.f32.mrf.mxu0
      %v5070 = vadd.f32 %v5047, %v5069
      %5071 = vmatmul.f32.gmra.mxu0 %v2622
      %v5072 = vpop.f32.mrf.mxu0
      %v5073 = vadd.f32 %v5050, %v5072
      %5074 = vdwg.mxu0
      %v5075 = vmul.f32 %v4955, %v2857
      %v5076 = vmul.f32 %v5070, %v2857
      %v5077 = vmul.f32 %v4958, %v2862
      %v5078 = vmul.f32 %v5073, %v2862
      %v5079 = vsel %vm2868, %v5077, 0.0
      %v5080 = vadd.f32 %v5075, %v5079
      %v5081 = vrot.slane %v5080, 4
      %v5082 = vadd.f32 %v5080, %v5081
      %v5083 = vrot.slane %v5082, 2
      %v5084 = vadd.f32 %v5082, %v5083
      %v5085 = vrot.slane %v5084, 1
      %v5086 = vadd.f32 %v5084, %v5085
      %v5087 = vsel %vm2868, %v5078, 0.0
      %v5088 = vadd.f32 %v5076, %v5087
      %v5089 = vrot.slane %v5088, 4
      %v5090 = vadd.f32 %v5088, %v5089
      %v5091 = vrot.slane %v5090, 2
      %v5092 = vadd.f32 %v5090, %v5091
      %v5093 = vrot.slane %v5092, 1
      %v5094 = vadd.f32 %v5092, %v5093
      %v5095 = vadd.f32 %v5086, %v2890
      %v5096 = vadd.f32 %v5094, %v2890
      %v5097 = vxor.u32 %v5095, 2147483648
      %v5098 = vxor.u32 %v5096, 2147483648
      %v5099 = vmul.f32 %v5097, 1.442695
      %v5100 = vpow.pop %v5099
      %v5101 = vmul.f32 %v5098, 1.442695
      %v5102 = vpow.pop %v5101
      %v5103 = vadd.f32 %v5100, 1.0
      %v5104 = vadd.f32 %v5102, 1.0
      %v5105 = vrcp.pop %v5103
      %v5106 = vmul.f32 %v5103, %v5105
      %v5107 = vsub.f32 1.0, %v5106
      %v5108 = vmul.f32 %v5105, %v5107
      %v5109 = vadd.f32 %v5105, %v5108
      %vm5110 = vweird.f32 %v5103
      %vm5111 = vweird.f32 %v5105
      %vm5112 = vmor %vm5110, %vm5111
      %v5113 = vsel %vm5112, %v5105, %v5109
      %v5114 = vand.u32 2147483647, %v5103
      %vm5115 = vcmp.eq.f32.partialorder %v5114, 8.507059e+37
      %v5116 = vand.u32 %v5103, 2147483648
      %v5117 = vor.u32 1.1754944e-38, %v5116
      %v5118 = vsel %vm5115, %v5117, %v5113
      %v5119 = vmul.f32 1.0, %v5118
      %v5120 = vrcp.pop %v5104
      %v5121 = vmul.f32 %v5104, %v5120
      %v5122 = vsub.f32 1.0, %v5121
      %v5123 = vmul.f32 %v5120, %v5122
      %v5124 = vadd.f32 %v5120, %v5123
      %vm5125 = vweird.f32 %v5104
      %vm5126 = vweird.f32 %v5120
      %vm5127 = vmor %vm5125, %vm5126
      %v5128 = vsel %vm5127, %v5120, %v5124
      %v5129 = vand.u32 2147483647, %v5104
      %vm5130 = vcmp.eq.f32.partialorder %v5129, 8.507059e+37
      %v5131 = vand.u32 %v5104, 2147483648
      %v5132 = vor.u32 1.1754944e-38, %v5131
      %v5133 = vsel %vm5130, %v5132, %v5128
      %v5134 = vmul.f32 1.0, %v5133
      %v5137 = vrot.slane %v5134, 7
      %v5138 = vsel %vm2868, %v5119, %v5137
      %5140 = vst.msk [vmem:[%s656 + $0xa] sm:$0x3] %vm2939, %v5138
      %v5141 = vld [vmem:[%s3 + $0x60] sm:$0xff]
      %v5142 = vld [vmem:[%s3 + $0x68] sm:$0xff]
      %v5143 = vld [vmem:[%s3 + $0xf0] sm:$0xff]
      %v5144 = vld [vmem:[%s3 + $0xf8] sm:$0xff]
      %v5145 = vld [vmem:[%s3 + $0x180] sm:$0xff]
      %v5146 = vld [vmem:[%s3 + $0x188] sm:$0xff]
      %v5147 = vld [vmem:[%s3 + $0x210] sm:$0xff]
      %v5148 = vld [vmem:[%s3 + $0x218] sm:$0xff]
      %v5149 = vld [vmem:[%s3 + $0x2a0] sm:$0xff]
      %v5150 = vld [vmem:[%s3 + $0x2a8] sm:$0xff]
      %v5151 = vld [vmem:[%s3 + $0x330] sm:$0xff]
      %v5152 = vld [vmem:[%s3 + $0x338] sm:$0xff]
      %v5153 = vld [vmem:[%s3 + $0x3c0] sm:$0xff]
      %v5154 = vld [vmem:[%s3 + $0x3c8] sm:$0xff]
      %v5155 = vld [vmem:[%s3 + $0x450] sm:$0xff]
      %v5156 = vld [vmem:[%s3 + $0x458] sm:$0xff]
      %v5157 = vld [vmem:[%s3 + $0x4e0] sm:$0xff]
      %v5158 = vld [vmem:[%s3 + $0x4e8] sm:$0xff]
      %v5159 = vld [vmem:[%s3 + $0x570] sm:$0xff]
      %v5160 = vld [vmem:[%s3 + $0x578] sm:$0xff]
      %v5161 = vld [vmem:[%s3 + $0x600] sm:$0xff]
      %v5162 = vld [vmem:[%s3 + $0x608] sm:$0xff]
      %v5163 = vld [vmem:[%s3 + $0x690] sm:$0xff]
      %v5164 = vld [vmem:[%s3 + $0x698] sm:$0xff]
      %v5165 = vld [vmem:[%s3 + $0x720] sm:$0xff]
      %v5166 = vld [vmem:[%s3 + $0x728] sm:$0xff]
      %v5167 = vld [vmem:[%s3 + $0x7b0] sm:$0xff]
      %v5168 = vld [vmem:[%s3 + $0x7b8] sm:$0xff]
      %v5169 = vld [vmem:[%s3 + $0x840] sm:$0xff]
      %v5170 = vld [vmem:[%s3 + $0x848] sm:$0xff]
      %v5171 = vld [vmem:[%s3 + $0x8d0] sm:$0xff]
      %v5172 = vld [vmem:[%s3 + $0x8d8] sm:$0xff]
      %v5173 = vld [vmem:[%s3 + $0x960] sm:$0xff]
      %v5174 = vld [vmem:[%s3 + $0x968] sm:$0xff]
      %v5175 = vld [vmem:[%s3 + $0x9f0] sm:$0xff]
      %v5176 = vld [vmem:[%s3 + $0x9f8] sm:$0xff]
      %v5177 = vld [vmem:[%s3 + $0xa80] sm:$0xff]
      %v5178 = vld [vmem:[%s3 + $0xa88] sm:$0xff]
      %v5179 = vld [vmem:[%s3 + $0xb10] sm:$0xff]
      %v5180 = vld [vmem:[%s3 + $0xb18] sm:$0xff]
      %v5181 = vld [vmem:[%s3 + $0xba0] sm:$0xff]
      %v5182 = vld [vmem:[%s3 + $0xba8] sm:$0xff]
      %v5183 = vld [vmem:[%s3 + $0xc30] sm:$0xff]
      %v5184 = vld [vmem:[%s3 + $0xc38] sm:$0xff]
      %v5185 = vld [vmem:[%s3 + $0xcc0] sm:$0xff]
      %v5186 = vld [vmem:[%s3 + $0xcc8] sm:$0xff]
      %v5187 = vld [vmem:[%s3 + $0xd50] sm:$0xff]
      %v5188 = vld [vmem:[%s3 + $0xd58] sm:$0xff]
      %v5189 = vld [vmem:[%s3 + $0xde0] sm:$0xff]
      %v5190 = vld [vmem:[%s3 + $0xde8] sm:$0xff]
      %v5191 = vld [vmem:[%s3 + $0xe70] sm:$0xff]
      %v5192 = vld [vmem:[%s3 + $0xe78] sm:$0xff]
      %v5193 = vld [vmem:[%s3 + $0xf00] sm:$0xff]
      %v5194 = vld [vmem:[%s3 + $0xf08] sm:$0xff]
      %v5195 = vld [vmem:[%s3 + $0xf90] sm:$0xff]
      %v5196 = vld [vmem:[%s3 + $0xf98] sm:$0xff]
      %v5197 = vld [vmem:[%s3 + $0x1020] sm:$0xff]
      %v5198 = vld [vmem:[%s3 + $0x1028] sm:$0xff]
      %v5199 = vld [vmem:[%s3 + $0x10b0] sm:$0xff]
      %v5200 = vld [vmem:[%s3 + $0x10b8] sm:$0xff]
      %v5201 = vld [vmem:[%s3 + $0x1140] sm:$0xff]
      %v5202 = vld [vmem:[%s3 + $0x1148] sm:$0xff]
      %v5203 = vld [vmem:[%s3 + $0x11d0] sm:$0xff]
      %v5204 = vld [vmem:[%s3 + $0x11d8] sm:$0xff]
      %v5205 = vld [vmem:[%s3 + $0x1260] sm:$0xff]
      %v5206 = vld [vmem:[%s3 + $0x1268] sm:$0xff]
      %v5207 = vld [vmem:[%s3 + $0x12f0] sm:$0xff]
      %v5208 = vld [vmem:[%s3 + $0x12f8] sm:$0xff]
      %v5209 = vld [vmem:[%s3 + $0x1380] sm:$0xff]
      %v5210 = vld [vmem:[%s3 + $0x1388] sm:$0xff]
      %v5211 = vld [vmem:[%s3 + $0x1410] sm:$0xff]
      %v5212 = vld [vmem:[%s3 + $0x1418] sm:$0xff]
      %v5213 = vld [vmem:[%s3 + $0x14a0] sm:$0xff]
      %v5214 = vld [vmem:[%s3 + $0x14a8] sm:$0xff]
      %v5215 = vld [vmem:[%s3 + $0x1530] sm:$0xff]
      %v5216 = vld [vmem:[%s3 + $0x1538] sm:$0xff]
      %v5217 = vld [vmem:[%s3 + $0x15c0] sm:$0xff]
      %v5218 = vld [vmem:[%s3 + $0x15c8] sm:$0xff]
      %v5219 = vld [vmem:[%s3 + $0x1650] sm:$0xff]
      %v5220 = vld [vmem:[%s3 + $0x1658] sm:$0xff]
      %v5221 = vld [vmem:[%s3 + $0x16e0] sm:$0xff]
      %v5222 = vld [vmem:[%s3 + $0x16e8] sm:$0xff]
      %v5223 = vld [vmem:[%s3 + $0x1770] sm:$0xff]
      %v5224 = vld [vmem:[%s3 + $0x1778] sm:$0xff]
      %v5225 = vld [vmem:[%s3 + $0x1800] sm:$0xff]
      %v5226 = vld [vmem:[%s3 + $0x1808] sm:$0xff]
      %v5227 = vld [vmem:[%s3 + $0x1890] sm:$0xff]
      %v5228 = vld [vmem:[%s3 + $0x1898] sm:$0xff]
      %v5229 = vld [vmem:[%s3 + $0x1920] sm:$0xff]
      %v5230 = vld [vmem:[%s3 + $0x1928] sm:$0xff]
      %v5231 = vld [vmem:[%s3 + $0x19b0] sm:$0xff]
      %v5232 = vld [vmem:[%s3 + $0x19b8] sm:$0xff]
      %v5233 = vld [vmem:[%s3 + $0x1a40] sm:$0xff]
      %v5234 = vld [vmem:[%s3 + $0x1a48] sm:$0xff]
      %v5235 = vld [vmem:[%s3 + $0x1ad0] sm:$0xff]
      %v5236 = vld [vmem:[%s3 + $0x1ad8] sm:$0xff]
      %v5237 = vld [vmem:[%s3 + $0x1b60] sm:$0xff]
      %v5238 = vld [vmem:[%s3 + $0x1b68] sm:$0xff]
      %v5239 = vld [vmem:[%s3 + $0x1bf0] sm:$0xff]
      %v5240 = vld [vmem:[%s3 + $0x1bf8] sm:$0xff]
      %v5241 = vld [vmem:[%s3 + $0x1c80] sm:$0xff]
      %v5242 = vld [vmem:[%s3 + $0x1c88] sm:$0xff]
      %v5243 = vld [vmem:[%s3 + $0x1d10] sm:$0xff]
      %v5244 = vld [vmem:[%s3 + $0x1d18] sm:$0xff]
      %v5245 = vld [vmem:[%s3 + $0x1da0] sm:$0xff]
      %v5246 = vld [vmem:[%s3 + $0x1da8] sm:$0xff]
      %v5247 = vld [vmem:[%s3 + $0x1e30] sm:$0xff]
      %v5248 = vld [vmem:[%s3 + $0x1e38] sm:$0xff]
      %v5249 = vld [vmem:[%s3 + $0x1ec0] sm:$0xff]
      %v5250 = vld [vmem:[%s3 + $0x1ec8] sm:$0xff]
      %v5251 = vld [vmem:[%s3 + $0x1f50] sm:$0xff]
      %v5252 = vld [vmem:[%s3 + $0x1f58] sm:$0xff]
      %v5253 = vld [vmem:[%s3 + $0x1fe0] sm:$0xff]
      %v5254 = vld [vmem:[%s3 + $0x1fe8] sm:$0xff]
      %v5255 = vld [vmem:[%s3 + $0x2070] sm:$0xff]
      %v5256 = vld [vmem:[%s3 + $0x2078] sm:$0xff]
      %v5257 = vld [vmem:[%s3 + $0x2100] sm:$0xff]
      %v5258 = vld [vmem:[%s3 + $0x2108] sm:$0xff]
      %v5259 = vld [vmem:[%s3 + $0x2190] sm:$0xff]
      %v5260 = vld [vmem:[%s3 + $0x2198] sm:$0xff]
      %v5261 = vld [vmem:[%s3 + $0x2220] sm:$0xff]
      %v5262 = vld [vmem:[%s3 + $0x2228] sm:$0xff]
      %v5263 = vld [vmem:[%s3 + $0x22b0] sm:$0xff]
      %v5264 = vld [vmem:[%s3 + $0x22b8] sm:$0xff]
      %v5265 = vld [vmem:[%s3 + $0x2340] sm:$0xff]
      %v5266 = vld [vmem:[%s3 + $0x2348] sm:$0xff]
      %v5267 = vld [vmem:[%s3 + $0x23d0] sm:$0xff]
      %v5268 = vld [vmem:[%s3 + $0x23d8] sm:$0xff]
      %v5269 = vld [vmem:[%s3 + $0x2460] sm:$0xff]
      %v5270 = vld [vmem:[%s3 + $0x2468] sm:$0xff]
      %v5271 = vld [vmem:[%s3 + $0x24f0] sm:$0xff]
      %v5272 = vld [vmem:[%s3 + $0x24f8] sm:$0xff]
      %v5273 = vld [vmem:[%s3 + $0x2580] sm:$0xff]
      %v5274 = vld [vmem:[%s3 + $0x2588] sm:$0xff]
      %v5275 = vld [vmem:[%s3 + $0x2610] sm:$0xff]
      %v5276 = vld [vmem:[%s3 + $0x2618] sm:$0xff]
      %v5277 = vld [vmem:[%s3 + $0x26a0] sm:$0xff]
      %v5278 = vld [vmem:[%s3 + $0x26a8] sm:$0xff]
      %v5279 = vld [vmem:[%s3 + $0x2730] sm:$0xff]
      %v5280 = vld [vmem:[%s3 + $0x2738] sm:$0xff]
      %v5281 = vld [vmem:[%s3 + $0x27c0] sm:$0xff]
      %v5282 = vld [vmem:[%s3 + $0x27c8] sm:$0xff]
      %v5283 = vld [vmem:[%s3 + $0x2850] sm:$0xff]
      %v5284 = vld [vmem:[%s3 + $0x2858] sm:$0xff]
      %5285 = vmatpush.msra.mxu0 %v5171
      %5286 = vmatpush.msra.mxu0 %v5169
      %5287 = vmatpush.msra.mxu0 %v5167
      %5288 = vmatpush.msra.mxu0 %v5165
      %5289 = vmatpush.msra.mxu0 %v5163
      %5290 = vmatpush.msra.mxu0 %v5161
      %5291 = vmatpush.msra.mxu0 %v5159
      %5292 = vmatpush.msra.mxu0 %v5157
      %5293 = vmatpush.msra.mxu0 %v5155
      %5294 = vmatpush.msra.mxu0 %v5153
      %5295 = vmatpush.msra.mxu0 %v5151
      %5296 = vmatpush.msra.mxu0 %v5149
      %5297 = vmatpush.msra.mxu0 %v5147
      %5298 = vmatpush.msra.mxu0 %v5145
      %5299 = vmatpush.msra.mxu0 %v5143
      %5300 = vmatpush.msra.mxu0 %v5141
      %5301 = vmatmul.f32.gmra.mxu0 %v2461
      %v5302 = vpop.f32.mrf.mxu0
      %v5303 = vadd.f32 0.0, %v5302
      %5304 = vmatmul.f32.gmra.mxu0 %v2466
      %v5305 = vpop.f32.mrf.mxu0
      %v5306 = vadd.f32 0.0, %v5305
      %5307 = vdwg.mxu0
      %5308 = vmatpush.msra.mxu0 %v5203
      %5309 = vmatpush.msra.mxu0 %v5201
      %5310 = vmatpush.msra.mxu0 %v5199
      %5311 = vmatpush.msra.mxu0 %v5197
      %5312 = vmatpush.msra.mxu0 %v5195
      %5313 = vmatpush.msra.mxu0 %v5193
      %5314 = vmatpush.msra.mxu0 %v5191
      %5315 = vmatpush.msra.mxu0 %v5189
      %5316 = vmatpush.msra.mxu0 %v5187
      %5317 = vmatpush.msra.mxu0 %v5185
      %5318 = vmatpush.msra.mxu0 %v5183
      %5319 = vmatpush.msra.mxu0 %v5181
      %5320 = vmatpush.msra.mxu0 %v5179
      %5321 = vmatpush.msra.mxu0 %v5177
      %5322 = vmatpush.msra.mxu0 %v5175
      %5323 = vmatpush.msra.mxu0 %v5173
      %5324 = vmatmul.f32.gmra.mxu0 %v2462
      %v5325 = vpop.f32.mrf.mxu0
      %v5326 = vadd.f32 %v5303, %v5325
      %5327 = vmatmul.f32.gmra.mxu0 %v2467
      %v5328 = vpop.f32.mrf.mxu0
      %v5329 = vadd.f32 %v5306, %v5328
      %5330 = vdwg.mxu0
      %5331 = vmatpush.msra.mxu0 %v5235
      %5332 = vmatpush.msra.mxu0 %v5233
      %5333 = vmatpush.msra.mxu0 %v5231
      %5334 = vmatpush.msra.mxu0 %v5229
      %5335 = vmatpush.msra.mxu0 %v5227
      %5336 = vmatpush.msra.mxu0 %v5225
      %5337 = vmatpush.msra.mxu0 %v5223
      %5338 = vmatpush.msra.mxu0 %v5221
      %5339 = vmatpush.msra.mxu0 %v5219
      %5340 = vmatpush.msra.mxu0 %v5217
      %5341 = vmatpush.msra.mxu0 %v5215
      %5342 = vmatpush.msra.mxu0 %v5213
      %5343 = vmatpush.msra.mxu0 %v5211
      %5344 = vmatpush.msra.mxu0 %v5209
      %5345 = vmatpush.msra.mxu0 %v5207
      %5346 = vmatpush.msra.mxu0 %v5205
      %5347 = vmatmul.f32.gmra.mxu0 %v2463
      %v5348 = vpop.f32.mrf.mxu0
      %v5349 = vadd.f32 %v5326, %v5348
      %5350 = vmatmul.f32.gmra.mxu0 %v2468
      %v5351 = vpop.f32.mrf.mxu0
      %v5352 = vadd.f32 %v5329, %v5351
      %5353 = vdwg.mxu0
      %5354 = vmatpush.msra.mxu0 %v5267
      %5355 = vmatpush.msra.mxu0 %v5265
      %5356 = vmatpush.msra.mxu0 %v5263
      %5357 = vmatpush.msra.mxu0 %v5261
      %5358 = vmatpush.msra.mxu0 %v5259
      %5359 = vmatpush.msra.mxu0 %v5257
      %5360 = vmatpush.msra.mxu0 %v5255
      %5361 = vmatpush.msra.mxu0 %v5253
      %5362 = vmatpush.msra.mxu0 %v5251
      %5363 = vmatpush.msra.mxu0 %v5249
      %5364 = vmatpush.msra.mxu0 %v5247
      %5365 = vmatpush.msra.mxu0 %v5245
      %5366 = vmatpush.msra.mxu0 %v5243
      %5367 = vmatpush.msra.mxu0 %v5241
      %5368 = vmatpush.msra.mxu0 %v5239
      %5369 = vmatpush.msra.mxu0 %v5237
      %5370 = vmatmul.f32.gmra.mxu0 %v2464
      %v5371 = vpop.f32.mrf.mxu0
      %v5372 = vadd.f32 %v5349, %v5371
      %5373 = vmatmul.f32.gmra.mxu0 %v2469
      %v5374 = vpop.f32.mrf.mxu0
      %v5375 = vadd.f32 %v5352, %v5374
      %5376 = vdwg.mxu0
      %5377 = vmatpush.msra.mxu0 0.0
      %5378 = vmatpush.msra.mxu0 0.0
      %5379 = vmatpush.msra.mxu0 0.0
      %5380 = vmatpush.msra.mxu0 0.0
      %5381 = vmatpush.msra.mxu0 0.0
      %5382 = vmatpush.msra.mxu0 0.0
      %5383 = vmatpush.msra.mxu0 0.0
      %5384 = vmatpush.msra.mxu0 0.0
      %5385 = vmatpush.msra.mxu0 %v5283
      %5386 = vmatpush.msra.mxu0 %v5281
      %5387 = vmatpush.msra.mxu0 %v5279
      %5388 = vmatpush.msra.mxu0 %v5277
      %5389 = vmatpush.msra.mxu0 %v5275
      %5390 = vmatpush.msra.mxu0 %v5273
      %5391 = vmatpush.msra.mxu0 %v5271
      %5392 = vmatpush.msra.mxu0 %v5269
      %5393 = vmatmul.f32.gmra.mxu0 %v2619
      %v5394 = vpop.f32.mrf.mxu0
      %v5395 = vadd.f32 %v5372, %v5394
      %5396 = vmatmul.f32.gmra.mxu0 %v2622
      %v5397 = vpop.f32.mrf.mxu0
      %v5398 = vadd.f32 %v5375, %v5397
      %5399 = vdwg.mxu0
      %5400 = vmatpush.msra.mxu0 %v5172
      %5401 = vmatpush.msra.mxu0 %v5170
      %5402 = vmatpush.msra.mxu0 %v5168
      %5403 = vmatpush.msra.mxu0 %v5166
      %5404 = vmatpush.msra.mxu0 %v5164
      %5405 = vmatpush.msra.mxu0 %v5162
      %5406 = vmatpush.msra.mxu0 %v5160
      %5407 = vmatpush.msra.mxu0 %v5158
      %5408 = vmatpush.msra.mxu0 %v5156
      %5409 = vmatpush.msra.mxu0 %v5154
      %5410 = vmatpush.msra.mxu0 %v5152
      %5411 = vmatpush.msra.mxu0 %v5150
      %5412 = vmatpush.msra.mxu0 %v5148
      %5413 = vmatpush.msra.mxu0 %v5146
      %5414 = vmatpush.msra.mxu0 %v5144
      %5415 = vmatpush.msra.mxu0 %v5142
      %5416 = vmatmul.f32.gmra.mxu0 %v2461
      %v5417 = vpop.f32.mrf.mxu0
      %v5418 = vadd.f32 0.0, %v5417
      %5419 = vmatmul.f32.gmra.mxu0 %v2466
      %v5420 = vpop.f32.mrf.mxu0
      %v5421 = vadd.f32 0.0, %v5420
      %5422 = vdwg.mxu0
      %5423 = vmatpush.msra.mxu0 %v5204
      %5424 = vmatpush.msra.mxu0 %v5202
      %5425 = vmatpush.msra.mxu0 %v5200
      %5426 = vmatpush.msra.mxu0 %v5198
      %5427 = vmatpush.msra.mxu0 %v5196
      %5428 = vmatpush.msra.mxu0 %v5194
      %5429 = vmatpush.msra.mxu0 %v5192
      %5430 = vmatpush.msra.mxu0 %v5190
      %5431 = vmatpush.msra.mxu0 %v5188
      %5432 = vmatpush.msra.mxu0 %v5186
      %5433 = vmatpush.msra.mxu0 %v5184
      %5434 = vmatpush.msra.mxu0 %v5182
      %5435 = vmatpush.msra.mxu0 %v5180
      %5436 = vmatpush.msra.mxu0 %v5178
      %5437 = vmatpush.msra.mxu0 %v5176
      %5438 = vmatpush.msra.mxu0 %v5174
      %5439 = vmatmul.f32.gmra.mxu0 %v2462
      %v5440 = vpop.f32.mrf.mxu0
      %v5441 = vadd.f32 %v5418, %v5440
      %5442 = vmatmul.f32.gmra.mxu0 %v2467
      %v5443 = vpop.f32.mrf.mxu0
      %v5444 = vadd.f32 %v5421, %v5443
      %5445 = vdwg.mxu0
      %5446 = vmatpush.msra.mxu0 %v5236
      %5447 = vmatpush.msra.mxu0 %v5234
      %5448 = vmatpush.msra.mxu0 %v5232
      %5449 = vmatpush.msra.mxu0 %v5230
      %5450 = vmatpush.msra.mxu0 %v5228
      %5451 = vmatpush.msra.mxu0 %v5226
      %5452 = vmatpush.msra.mxu0 %v5224
      %5453 = vmatpush.msra.mxu0 %v5222
      %5454 = vmatpush.msra.mxu0 %v5220
      %5455 = vmatpush.msra.mxu0 %v5218
      %5456 = vmatpush.msra.mxu0 %v5216
      %5457 = vmatpush.msra.mxu0 %v5214
      %5458 = vmatpush.msra.mxu0 %v5212
      %5459 = vmatpush.msra.mxu0 %v5210
      %5460 = vmatpush.msra.mxu0 %v5208
      %5461 = vmatpush.msra.mxu0 %v5206
      %5462 = vmatmul.f32.gmra.mxu0 %v2463
      %v5463 = vpop.f32.mrf.mxu0
      %v5464 = vadd.f32 %v5441, %v5463
      %5465 = vmatmul.f32.gmra.mxu0 %v2468
      %v5466 = vpop.f32.mrf.mxu0
      %v5467 = vadd.f32 %v5444, %v5466
      %5468 = vdwg.mxu0
      %5469 = vmatpush.msra.mxu0 %v5268
      %5470 = vmatpush.msra.mxu0 %v5266
      %5471 = vmatpush.msra.mxu0 %v5264
      %5472 = vmatpush.msra.mxu0 %v5262
      %5473 = vmatpush.msra.mxu0 %v5260
      %5474 = vmatpush.msra.mxu0 %v5258
      %5475 = vmatpush.msra.mxu0 %v5256
      %5476 = vmatpush.msra.mxu0 %v5254
      %5477 = vmatpush.msra.mxu0 %v5252
      %5478 = vmatpush.msra.mxu0 %v5250
      %5479 = vmatpush.msra.mxu0 %v5248
      %5480 = vmatpush.msra.mxu0 %v5246
      %5481 = vmatpush.msra.mxu0 %v5244
      %5482 = vmatpush.msra.mxu0 %v5242
      %5483 = vmatpush.msra.mxu0 %v5240
      %5484 = vmatpush.msra.mxu0 %v5238
      %5485 = vmatmul.f32.gmra.mxu0 %v2464
      %v5486 = vpop.f32.mrf.mxu0
      %v5487 = vadd.f32 %v5464, %v5486
      %5488 = vmatmul.f32.gmra.mxu0 %v2469
      %v5489 = vpop.f32.mrf.mxu0
      %v5490 = vadd.f32 %v5467, %v5489
      %5491 = vdwg.mxu0
      %5492 = vmatpush.msra.mxu0 0.0
      %5493 = vmatpush.msra.mxu0 0.0
      %5494 = vmatpush.msra.mxu0 0.0
      %5495 = vmatpush.msra.mxu0 0.0
      %5496 = vmatpush.msra.mxu0 0.0
      %5497 = vmatpush.msra.mxu0 0.0
      %5498 = vmatpush.msra.mxu0 0.0
      %5499 = vmatpush.msra.mxu0 0.0
      %5500 = vmatpush.msra.mxu0 %v5284
      %5501 = vmatpush.msra.mxu0 %v5282
      %5502 = vmatpush.msra.mxu0 %v5280
      %5503 = vmatpush.msra.mxu0 %v5278
      %5504 = vmatpush.msra.mxu0 %v5276
      %5505 = vmatpush.msra.mxu0 %v5274
      %5506 = vmatpush.msra.mxu0 %v5272
      %5507 = vmatpush.msra.mxu0 %v5270
      %5508 = vmatmul.f32.gmra.mxu0 %v2619
      %v5509 = vpop.f32.mrf.mxu0
      %v5510 = vadd.f32 %v5487, %v5509
      %5511 = vmatmul.f32.gmra.mxu0 %v2622
      %v5512 = vpop.f32.mrf.mxu0
      %v5513 = vadd.f32 %v5490, %v5512
      %5514 = vdwg.mxu0
      %v5515 = vmul.f32 %v5395, %v2857
      %v5516 = vmul.f32 %v5510, %v2857
      %v5517 = vmul.f32 %v5398, %v2862
      %v5518 = vmul.f32 %v5513, %v2862
      %v5519 = vsel %vm2868, %v5517, 0.0
      %v5520 = vadd.f32 %v5515, %v5519
      %v5521 = vrot.slane %v5520, 4
      %v5522 = vadd.f32 %v5520, %v5521
      %v5523 = vrot.slane %v5522, 2
      %v5524 = vadd.f32 %v5522, %v5523
      %v5525 = vrot.slane %v5524, 1
      %v5526 = vadd.f32 %v5524, %v5525
      %v5527 = vsel %vm2868, %v5518, 0.0
      %v5528 = vadd.f32 %v5516, %v5527
      %v5529 = vrot.slane %v5528, 4
      %v5530 = vadd.f32 %v5528, %v5529
      %v5531 = vrot.slane %v5530, 2
      %v5532 = vadd.f32 %v5530, %v5531
      %v5533 = vrot.slane %v5532, 1
      %v5534 = vadd.f32 %v5532, %v5533
      %v5535 = vadd.f32 %v5526, %v2890
      %v5536 = vadd.f32 %v5534, %v2890
      %v5537 = vxor.u32 %v5535, 2147483648
      %v5538 = vxor.u32 %v5536, 2147483648
      %v5539 = vmul.f32 %v5537, 1.442695
      %v5540 = vpow.pop %v5539
      %v5541 = vmul.f32 %v5538, 1.442695
      %v5542 = vpow.pop %v5541
      %v5543 = vadd.f32 %v5540, 1.0
      %v5544 = vadd.f32 %v5542, 1.0
      %v5545 = vrcp.pop %v5543
      %v5546 = vmul.f32 %v5543, %v5545
      %v5547 = vsub.f32 1.0, %v5546
      %v5548 = vmul.f32 %v5545, %v5547
      %v5549 = vadd.f32 %v5545, %v5548
      %vm5550 = vweird.f32 %v5543
      %vm5551 = vweird.f32 %v5545
      %vm5552 = vmor %vm5550, %vm5551
      %v5553 = vsel %vm5552, %v5545, %v5549
      %v5554 = vand.u32 2147483647, %v5543
      %vm5555 = vcmp.eq.f32.partialorder %v5554, 8.507059e+37
      %v5556 = vand.u32 %v5543, 2147483648
      %v5557 = vor.u32 1.1754944e-38, %v5556
      %v5558 = vsel %vm5555, %v5557, %v5553
      %v5559 = vmul.f32 1.0, %v5558
      %v5560 = vrcp.pop %v5544
      %v5561 = vmul.f32 %v5544, %v5560
      %v5562 = vsub.f32 1.0, %v5561
      %v5563 = vmul.f32 %v5560, %v5562
      %v5564 = vadd.f32 %v5560, %v5563
      %vm5565 = vweird.f32 %v5544
      %vm5566 = vweird.f32 %v5560
      %vm5567 = vmor %vm5565, %vm5566
      %v5568 = vsel %vm5567, %v5560, %v5564
      %v5569 = vand.u32 2147483647, %v5544
      %vm5570 = vcmp.eq.f32.partialorder %v5569, 8.507059e+37
      %v5571 = vand.u32 %v5544, 2147483648
      %v5572 = vor.u32 1.1754944e-38, %v5571
      %v5573 = vsel %vm5570, %v5572, %v5568
      %v5574 = vmul.f32 1.0, %v5573
      %v5577 = vrot.slane %v5574, 7
      %v5578 = vsel %vm2868, %v5559, %v5577
      %5580 = vst.msk [vmem:[%s656 + $0xc] sm:$0x3] %vm2939, %v5578
      %v5581 = vld [vmem:[%s3 + $0x70] sm:$0xff]
      %v5582 = vld [vmem:[%s3 + $0x78] sm:$0xff]
      %v5583 = vld [vmem:[%s3 + $0x100] sm:$0xff]
      %v5584 = vld [vmem:[%s3 + $0x108] sm:$0xff]
      %v5585 = vld [vmem:[%s3 + $0x190] sm:$0xff]
      %v5586 = vld [vmem:[%s3 + $0x198] sm:$0xff]
      %v5587 = vld [vmem:[%s3 + $0x220] sm:$0xff]
      %v5588 = vld [vmem:[%s3 + $0x228] sm:$0xff]
      %v5589 = vld [vmem:[%s3 + $0x2b0] sm:$0xff]
      %v5590 = vld [vmem:[%s3 + $0x2b8] sm:$0xff]
      %v5591 = vld [vmem:[%s3 + $0x340] sm:$0xff]
      %v5592 = vld [vmem:[%s3 + $0x348] sm:$0xff]
      %v5593 = vld [vmem:[%s3 + $0x3d0] sm:$0xff]
      %v5594 = vld [vmem:[%s3 + $0x3d8] sm:$0xff]
      %v5595 = vld [vmem:[%s3 + $0x460] sm:$0xff]
      %v5596 = vld [vmem:[%s3 + $0x468] sm:$0xff]
      %v5597 = vld [vmem:[%s3 + $0x4f0] sm:$0xff]
      %v5598 = vld [vmem:[%s3 + $0x4f8] sm:$0xff]
      %v5599 = vld [vmem:[%s3 + $0x580] sm:$0xff]
      %v5600 = vld [vmem:[%s3 + $0x588] sm:$0xff]
      %v5601 = vld [vmem:[%s3 + $0x610] sm:$0xff]
      %v5602 = vld [vmem:[%s3 + $0x618] sm:$0xff]
      %v5603 = vld [vmem:[%s3 + $0x6a0] sm:$0xff]
      %v5604 = vld [vmem:[%s3 + $0x6a8] sm:$0xff]
      %v5605 = vld [vmem:[%s3 + $0x730] sm:$0xff]
      %v5606 = vld [vmem:[%s3 + $0x738] sm:$0xff]
      %v5607 = vld [vmem:[%s3 + $0x7c0] sm:$0xff]
      %v5608 = vld [vmem:[%s3 + $0x7c8] sm:$0xff]
      %v5609 = vld [vmem:[%s3 + $0x850] sm:$0xff]
      %v5610 = vld [vmem:[%s3 + $0x858] sm:$0xff]
      %v5611 = vld [vmem:[%s3 + $0x8e0] sm:$0xff]
      %v5612 = vld [vmem:[%s3 + $0x8e8] sm:$0xff]
      %v5613 = vld [vmem:[%s3 + $0x970] sm:$0xff]
      %v5614 = vld [vmem:[%s3 + $0x978] sm:$0xff]
      %v5615 = vld [vmem:[%s3 + $0xa00] sm:$0xff]
      %v5616 = vld [vmem:[%s3 + $0xa08] sm:$0xff]
      %v5617 = vld [vmem:[%s3 + $0xa90] sm:$0xff]
      %v5618 = vld [vmem:[%s3 + $0xa98] sm:$0xff]
      %v5619 = vld [vmem:[%s3 + $0xb20] sm:$0xff]
      %v5620 = vld [vmem:[%s3 + $0xb28] sm:$0xff]
      %v5621 = vld [vmem:[%s3 + $0xbb0] sm:$0xff]
      %v5622 = vld [vmem:[%s3 + $0xbb8] sm:$0xff]
      %v5623 = vld [vmem:[%s3 + $0xc40] sm:$0xff]
      %v5624 = vld [vmem:[%s3 + $0xc48] sm:$0xff]
      %v5625 = vld [vmem:[%s3 + $0xcd0] sm:$0xff]
      %v5626 = vld [vmem:[%s3 + $0xcd8] sm:$0xff]
      %v5627 = vld [vmem:[%s3 + $0xd60] sm:$0xff]
      %v5628 = vld [vmem:[%s3 + $0xd68] sm:$0xff]
      %v5629 = vld [vmem:[%s3 + $0xdf0] sm:$0xff]
      %v5630 = vld [vmem:[%s3 + $0xdf8] sm:$0xff]
      %v5631 = vld [vmem:[%s3 + $0xe80] sm:$0xff]
      %v5632 = vld [vmem:[%s3 + $0xe88] sm:$0xff]
      %v5633 = vld [vmem:[%s3 + $0xf10] sm:$0xff]
      %v5634 = vld [vmem:[%s3 + $0xf18] sm:$0xff]
      %v5635 = vld [vmem:[%s3 + $0xfa0] sm:$0xff]
      %v5636 = vld [vmem:[%s3 + $0xfa8] sm:$0xff]
      %v5637 = vld [vmem:[%s3 + $0x1030] sm:$0xff]
      %v5638 = vld [vmem:[%s3 + $0x1038] sm:$0xff]
      %v5639 = vld [vmem:[%s3 + $0x10c0] sm:$0xff]
      %v5640 = vld [vmem:[%s3 + $0x10c8] sm:$0xff]
      %v5641 = vld [vmem:[%s3 + $0x1150] sm:$0xff]
      %v5642 = vld [vmem:[%s3 + $0x1158] sm:$0xff]
      %v5643 = vld [vmem:[%s3 + $0x11e0] sm:$0xff]
      %v5644 = vld [vmem:[%s3 + $0x11e8] sm:$0xff]
      %v5645 = vld [vmem:[%s3 + $0x1270] sm:$0xff]
      %v5646 = vld [vmem:[%s3 + $0x1278] sm:$0xff]
      %v5647 = vld [vmem:[%s3 + $0x1300] sm:$0xff]
      %v5648 = vld [vmem:[%s3 + $0x1308] sm:$0xff]
      %v5649 = vld [vmem:[%s3 + $0x1390] sm:$0xff]
      %v5650 = vld [vmem:[%s3 + $0x1398] sm:$0xff]
      %v5651 = vld [vmem:[%s3 + $0x1420] sm:$0xff]
      %v5652 = vld [vmem:[%s3 + $0x1428] sm:$0xff]
      %v5653 = vld [vmem:[%s3 + $0x14b0] sm:$0xff]
      %v5654 = vld [vmem:[%s3 + $0x14b8] sm:$0xff]
      %v5655 = vld [vmem:[%s3 + $0x1540] sm:$0xff]
      %v5656 = vld [vmem:[%s3 + $0x1548] sm:$0xff]
      %v5657 = vld [vmem:[%s3 + $0x15d0] sm:$0xff]
      %v5658 = vld [vmem:[%s3 + $0x15d8] sm:$0xff]
      %v5659 = vld [vmem:[%s3 + $0x1660] sm:$0xff]
      %v5660 = vld [vmem:[%s3 + $0x1668] sm:$0xff]
      %v5661 = vld [vmem:[%s3 + $0x16f0] sm:$0xff]
      %v5662 = vld [vmem:[%s3 + $0x16f8] sm:$0xff]
      %v5663 = vld [vmem:[%s3 + $0x1780] sm:$0xff]
      %v5664 = vld [vmem:[%s3 + $0x1788] sm:$0xff]
      %v5665 = vld [vmem:[%s3 + $0x1810] sm:$0xff]
      %v5666 = vld [vmem:[%s3 + $0x1818] sm:$0xff]
      %v5667 = vld [vmem:[%s3 + $0x18a0] sm:$0xff]
      %v5668 = vld [vmem:[%s3 + $0x18a8] sm:$0xff]
      %v5669 = vld [vmem:[%s3 + $0x1930] sm:$0xff]
      %v5670 = vld [vmem:[%s3 + $0x1938] sm:$0xff]
      %v5671 = vld [vmem:[%s3 + $0x19c0] sm:$0xff]
      %v5672 = vld [vmem:[%s3 + $0x19c8] sm:$0xff]
      %v5673 = vld [vmem:[%s3 + $0x1a50] sm:$0xff]
      %v5674 = vld [vmem:[%s3 + $0x1a58] sm:$0xff]
      %v5675 = vld [vmem:[%s3 + $0x1ae0] sm:$0xff]
      %v5676 = vld [vmem:[%s3 + $0x1ae8] sm:$0xff]
      %v5677 = vld [vmem:[%s3 + $0x1b70] sm:$0xff]
      %v5678 = vld [vmem:[%s3 + $0x1b78] sm:$0xff]
      %v5679 = vld [vmem:[%s3 + $0x1c00] sm:$0xff]
      %v5680 = vld [vmem:[%s3 + $0x1c08] sm:$0xff]
      %v5681 = vld [vmem:[%s3 + $0x1c90] sm:$0xff]
      %v5682 = vld [vmem:[%s3 + $0x1c98] sm:$0xff]
      %v5683 = vld [vmem:[%s3 + $0x1d20] sm:$0xff]
      %v5684 = vld [vmem:[%s3 + $0x1d28] sm:$0xff]
      %v5685 = vld [vmem:[%s3 + $0x1db0] sm:$0xff]
      %v5686 = vld [vmem:[%s3 + $0x1db8] sm:$0xff]
      %v5687 = vld [vmem:[%s3 + $0x1e40] sm:$0xff]
      %v5688 = vld [vmem:[%s3 + $0x1e48] sm:$0xff]
      %v5689 = vld [vmem:[%s3 + $0x1ed0] sm:$0xff]
      %v5690 = vld [vmem:[%s3 + $0x1ed8] sm:$0xff]
      %v5691 = vld [vmem:[%s3 + $0x1f60] sm:$0xff]
      %v5692 = vld [vmem:[%s3 + $0x1f68] sm:$0xff]
      %v5693 = vld [vmem:[%s3 + $0x1ff0] sm:$0xff]
      %v5694 = vld [vmem:[%s3 + $0x1ff8] sm:$0xff]
      %v5695 = vld [vmem:[%s3 + $0x2080] sm:$0xff]
      %v5696 = vld [vmem:[%s3 + $0x2088] sm:$0xff]
      %v5697 = vld [vmem:[%s3 + $0x2110] sm:$0xff]
      %v5698 = vld [vmem:[%s3 + $0x2118] sm:$0xff]
      %v5699 = vld [vmem:[%s3 + $0x21a0] sm:$0xff]
      %v5700 = vld [vmem:[%s3 + $0x21a8] sm:$0xff]
      %v5701 = vld [vmem:[%s3 + $0x2230] sm:$0xff]
      %v5702 = vld [vmem:[%s3 + $0x2238] sm:$0xff]
      %v5703 = vld [vmem:[%s3 + $0x22c0] sm:$0xff]
      %v5704 = vld [vmem:[%s3 + $0x22c8] sm:$0xff]
      %v5705 = vld [vmem:[%s3 + $0x2350] sm:$0xff]
      %v5706 = vld [vmem:[%s3 + $0x2358] sm:$0xff]
      %v5707 = vld [vmem:[%s3 + $0x23e0] sm:$0xff]
      %v5708 = vld [vmem:[%s3 + $0x23e8] sm:$0xff]
      %v5709 = vld [vmem:[%s3 + $0x2470] sm:$0xff]
      %v5710 = vld [vmem:[%s3 + $0x2478] sm:$0xff]
      %v5711 = vld [vmem:[%s3 + $0x2500] sm:$0xff]
      %v5712 = vld [vmem:[%s3 + $0x2508] sm:$0xff]
      %v5713 = vld [vmem:[%s3 + $0x2590] sm:$0xff]
      %v5714 = vld [vmem:[%s3 + $0x2598] sm:$0xff]
      %v5715 = vld [vmem:[%s3 + $0x2620] sm:$0xff]
      %v5716 = vld [vmem:[%s3 + $0x2628] sm:$0xff]
      %v5717 = vld [vmem:[%s3 + $0x26b0] sm:$0xff]
      %v5718 = vld [vmem:[%s3 + $0x26b8] sm:$0xff]
      %v5719 = vld [vmem:[%s3 + $0x2740] sm:$0xff]
      %v5720 = vld [vmem:[%s3 + $0x2748] sm:$0xff]
      %v5721 = vld [vmem:[%s3 + $0x27d0] sm:$0xff]
      %v5722 = vld [vmem:[%s3 + $0x27d8] sm:$0xff]
      %v5723 = vld [vmem:[%s3 + $0x2860] sm:$0xff]
      %v5724 = vld [vmem:[%s3 + $0x2868] sm:$0xff]
      %5725 = vmatpush.msra.mxu0 %v5611
      %5726 = vmatpush.msra.mxu0 %v5609
      %5727 = vmatpush.msra.mxu0 %v5607
      %5728 = vmatpush.msra.mxu0 %v5605
      %5729 = vmatpush.msra.mxu0 %v5603
      %5730 = vmatpush.msra.mxu0 %v5601
      %5731 = vmatpush.msra.mxu0 %v5599
      %5732 = vmatpush.msra.mxu0 %v5597
      %5733 = vmatpush.msra.mxu0 %v5595
      %5734 = vmatpush.msra.mxu0 %v5593
      %5735 = vmatpush.msra.mxu0 %v5591
      %5736 = vmatpush.msra.mxu0 %v5589
      %5737 = vmatpush.msra.mxu0 %v5587
      %5738 = vmatpush.msra.mxu0 %v5585
      %5739 = vmatpush.msra.mxu0 %v5583
      %5740 = vmatpush.msra.mxu0 %v5581
      %5741 = vmatmul.f32.gmra.mxu0 %v2461
      %v5742 = vpop.f32.mrf.mxu0
      %v5743 = vadd.f32 0.0, %v5742
      %5744 = vmatmul.f32.gmra.mxu0 %v2466
      %v5745 = vpop.f32.mrf.mxu0
      %v5746 = vadd.f32 0.0, %v5745
      %5747 = vdwg.mxu0
      %5748 = vmatpush.msra.mxu0 %v5643
      %5749 = vmatpush.msra.mxu0 %v5641
      %5750 = vmatpush.msra.mxu0 %v5639
      %5751 = vmatpush.msra.mxu0 %v5637
      %5752 = vmatpush.msra.mxu0 %v5635
      %5753 = vmatpush.msra.mxu0 %v5633
      %5754 = vmatpush.msra.mxu0 %v5631
      %5755 = vmatpush.msra.mxu0 %v5629
      %5756 = vmatpush.msra.mxu0 %v5627
      %5757 = vmatpush.msra.mxu0 %v5625
      %5758 = vmatpush.msra.mxu0 %v5623
      %5759 = vmatpush.msra.mxu0 %v5621
      %5760 = vmatpush.msra.mxu0 %v5619
      %5761 = vmatpush.msra.mxu0 %v5617
      %5762 = vmatpush.msra.mxu0 %v5615
      %5763 = vmatpush.msra.mxu0 %v5613
      %5764 = vmatmul.f32.gmra.mxu0 %v2462
      %v5765 = vpop.f32.mrf.mxu0
      %v5766 = vadd.f32 %v5743, %v5765
      %5767 = vmatmul.f32.gmra.mxu0 %v2467
      %v5768 = vpop.f32.mrf.mxu0
      %v5769 = vadd.f32 %v5746, %v5768
      %5770 = vdwg.mxu0
      %5771 = vmatpush.msra.mxu0 %v5675
      %5772 = vmatpush.msra.mxu0 %v5673
      %5773 = vmatpush.msra.mxu0 %v5671
      %5774 = vmatpush.msra.mxu0 %v5669
      %5775 = vmatpush.msra.mxu0 %v5667
      %5776 = vmatpush.msra.mxu0 %v5665
      %5777 = vmatpush.msra.mxu0 %v5663
      %5778 = vmatpush.msra.mxu0 %v5661
      %5779 = vmatpush.msra.mxu0 %v5659
      %5780 = vmatpush.msra.mxu0 %v5657
      %5781 = vmatpush.msra.mxu0 %v5655
      %5782 = vmatpush.msra.mxu0 %v5653
      %5783 = vmatpush.msra.mxu0 %v5651
      %5784 = vmatpush.msra.mxu0 %v5649
      %5785 = vmatpush.msra.mxu0 %v5647
      %5786 = vmatpush.msra.mxu0 %v5645
      %5787 = vmatmul.f32.gmra.mxu0 %v2463
      %v5788 = vpop.f32.mrf.mxu0
      %v5789 = vadd.f32 %v5766, %v5788
      %5790 = vmatmul.f32.gmra.mxu0 %v2468
      %v5791 = vpop.f32.mrf.mxu0
      %v5792 = vadd.f32 %v5769, %v5791
      %5793 = vdwg.mxu0
      %5794 = vmatpush.msra.mxu0 %v5707
      %5795 = vmatpush.msra.mxu0 %v5705
      %5796 = vmatpush.msra.mxu0 %v5703
      %5797 = vmatpush.msra.mxu0 %v5701
      %5798 = vmatpush.msra.mxu0 %v5699
      %5799 = vmatpush.msra.mxu0 %v5697
      %5800 = vmatpush.msra.mxu0 %v5695
      %5801 = vmatpush.msra.mxu0 %v5693
      %5802 = vmatpush.msra.mxu0 %v5691
      %5803 = vmatpush.msra.mxu0 %v5689
      %5804 = vmatpush.msra.mxu0 %v5687
      %5805 = vmatpush.msra.mxu0 %v5685
      %5806 = vmatpush.msra.mxu0 %v5683
      %5807 = vmatpush.msra.mxu0 %v5681
      %5808 = vmatpush.msra.mxu0 %v5679
      %5809 = vmatpush.msra.mxu0 %v5677
      %5810 = vmatmul.f32.gmra.mxu0 %v2464
      %v5811 = vpop.f32.mrf.mxu0
      %v5812 = vadd.f32 %v5789, %v5811
      %5813 = vmatmul.f32.gmra.mxu0 %v2469
      %v5814 = vpop.f32.mrf.mxu0
      %v5815 = vadd.f32 %v5792, %v5814
      %5816 = vdwg.mxu0
      %5817 = vmatpush.msra.mxu0 0.0
      %5818 = vmatpush.msra.mxu0 0.0
      %5819 = vmatpush.msra.mxu0 0.0
      %5820 = vmatpush.msra.mxu0 0.0
      %5821 = vmatpush.msra.mxu0 0.0
      %5822 = vmatpush.msra.mxu0 0.0
      %5823 = vmatpush.msra.mxu0 0.0
      %5824 = vmatpush.msra.mxu0 0.0
      %5825 = vmatpush.msra.mxu0 %v5723
      %5826 = vmatpush.msra.mxu0 %v5721
      %5827 = vmatpush.msra.mxu0 %v5719
      %5828 = vmatpush.msra.mxu0 %v5717
      %5829 = vmatpush.msra.mxu0 %v5715
      %5830 = vmatpush.msra.mxu0 %v5713
      %5831 = vmatpush.msra.mxu0 %v5711
      %5832 = vmatpush.msra.mxu0 %v5709
      %5833 = vmatmul.f32.gmra.mxu0 %v2619
      %v5834 = vpop.f32.mrf.mxu0
      %v5835 = vadd.f32 %v5812, %v5834
      %5836 = vmatmul.f32.gmra.mxu0 %v2622
      %v5837 = vpop.f32.mrf.mxu0
      %v5838 = vadd.f32 %v5815, %v5837
      %5839 = vdwg.mxu0
      %5840 = vmatpush.msra.mxu0 %v5612
      %5841 = vmatpush.msra.mxu0 %v5610
      %5842 = vmatpush.msra.mxu0 %v5608
      %5843 = vmatpush.msra.mxu0 %v5606
      %5844 = vmatpush.msra.mxu0 %v5604
      %5845 = vmatpush.msra.mxu0 %v5602
      %5846 = vmatpush.msra.mxu0 %v5600
      %5847 = vmatpush.msra.mxu0 %v5598
      %5848 = vmatpush.msra.mxu0 %v5596
      %5849 = vmatpush.msra.mxu0 %v5594
      %5850 = vmatpush.msra.mxu0 %v5592
      %5851 = vmatpush.msra.mxu0 %v5590
      %5852 = vmatpush.msra.mxu0 %v5588
      %5853 = vmatpush.msra.mxu0 %v5586
      %5854 = vmatpush.msra.mxu0 %v5584
      %5855 = vmatpush.msra.mxu0 %v5582
      %5856 = vmatmul.f32.gmra.mxu0 %v2461
      %v5857 = vpop.f32.mrf.mxu0
      %v5858 = vadd.f32 0.0, %v5857
      %5859 = vmatmul.f32.gmra.mxu0 %v2466
      %v5860 = vpop.f32.mrf.mxu0
      %v5861 = vadd.f32 0.0, %v5860
      %5862 = vdwg.mxu0
      %5863 = vmatpush.msra.mxu0 %v5644
      %5864 = vmatpush.msra.mxu0 %v5642
      %5865 = vmatpush.msra.mxu0 %v5640
      %5866 = vmatpush.msra.mxu0 %v5638
      %5867 = vmatpush.msra.mxu0 %v5636
      %5868 = vmatpush.msra.mxu0 %v5634
      %5869 = vmatpush.msra.mxu0 %v5632
      %5870 = vmatpush.msra.mxu0 %v5630
      %5871 = vmatpush.msra.mxu0 %v5628
      %5872 = vmatpush.msra.mxu0 %v5626
      %5873 = vmatpush.msra.mxu0 %v5624
      %5874 = vmatpush.msra.mxu0 %v5622
      %5875 = vmatpush.msra.mxu0 %v5620
      %5876 = vmatpush.msra.mxu0 %v5618
      %5877 = vmatpush.msra.mxu0 %v5616
      %5878 = vmatpush.msra.mxu0 %v5614
      %5879 = vmatmul.f32.gmra.mxu0 %v2462
      %v5880 = vpop.f32.mrf.mxu0
      %v5881 = vadd.f32 %v5858, %v5880
      %5882 = vmatmul.f32.gmra.mxu0 %v2467
      %v5883 = vpop.f32.mrf.mxu0
      %v5884 = vadd.f32 %v5861, %v5883
      %5885 = vdwg.mxu0
      %5886 = vmatpush.msra.mxu0 %v5676
      %5887 = vmatpush.msra.mxu0 %v5674
      %5888 = vmatpush.msra.mxu0 %v5672
      %5889 = vmatpush.msra.mxu0 %v5670
      %5890 = vmatpush.msra.mxu0 %v5668
      %5891 = vmatpush.msra.mxu0 %v5666
      %5892 = vmatpush.msra.mxu0 %v5664
      %5893 = vmatpush.msra.mxu0 %v5662
      %5894 = vmatpush.msra.mxu0 %v5660
      %5895 = vmatpush.msra.mxu0 %v5658
      %5896 = vmatpush.msra.mxu0 %v5656
      %5897 = vmatpush.msra.mxu0 %v5654
      %5898 = vmatpush.msra.mxu0 %v5652
      %5899 = vmatpush.msra.mxu0 %v5650
      %5900 = vmatpush.msra.mxu0 %v5648
      %5901 = vmatpush.msra.mxu0 %v5646
      %5902 = vmatmul.f32.gmra.mxu0 %v2463
      %v5903 = vpop.f32.mrf.mxu0
      %v5904 = vadd.f32 %v5881, %v5903
      %5905 = vmatmul.f32.gmra.mxu0 %v2468
      %v5906 = vpop.f32.mrf.mxu0
      %v5907 = vadd.f32 %v5884, %v5906
      %5908 = vdwg.mxu0
      %5909 = vmatpush.msra.mxu0 %v5708
      %5910 = vmatpush.msra.mxu0 %v5706
      %5911 = vmatpush.msra.mxu0 %v5704
      %5912 = vmatpush.msra.mxu0 %v5702
      %5913 = vmatpush.msra.mxu0 %v5700
      %5914 = vmatpush.msra.mxu0 %v5698
      %5915 = vmatpush.msra.mxu0 %v5696
      %5916 = vmatpush.msra.mxu0 %v5694
      %5917 = vmatpush.msra.mxu0 %v5692
      %5918 = vmatpush.msra.mxu0 %v5690
      %5919 = vmatpush.msra.mxu0 %v5688
      %5920 = vmatpush.msra.mxu0 %v5686
      %5921 = vmatpush.msra.mxu0 %v5684
      %5922 = vmatpush.msra.mxu0 %v5682
      %5923 = vmatpush.msra.mxu0 %v5680
      %5924 = vmatpush.msra.mxu0 %v5678
      %5925 = vmatmul.f32.gmra.mxu0 %v2464
      %v5926 = vpop.f32.mrf.mxu0
      %v5927 = vadd.f32 %v5904, %v5926
      %5928 = vmatmul.f32.gmra.mxu0 %v2469
      %v5929 = vpop.f32.mrf.mxu0
      %v5930 = vadd.f32 %v5907, %v5929
      %5931 = vdwg.mxu0
      %5932 = vmatpush.msra.mxu0 0.0
      %5933 = vmatpush.msra.mxu0 0.0
      %5934 = vmatpush.msra.mxu0 0.0
      %5935 = vmatpush.msra.mxu0 0.0
      %5936 = vmatpush.msra.mxu0 0.0
      %5937 = vmatpush.msra.mxu0 0.0
      %5938 = vmatpush.msra.mxu0 0.0
      %5939 = vmatpush.msra.mxu0 0.0
      %5940 = vmatpush.msra.mxu0 %v5724
      %5941 = vmatpush.msra.mxu0 %v5722
      %5942 = vmatpush.msra.mxu0 %v5720
      %5943 = vmatpush.msra.mxu0 %v5718
      %5944 = vmatpush.msra.mxu0 %v5716
      %5945 = vmatpush.msra.mxu0 %v5714
      %5946 = vmatpush.msra.mxu0 %v5712
      %5947 = vmatpush.msra.mxu0 %v5710
      %5948 = vmatmul.f32.gmra.mxu0 %v2619
      %v5949 = vpop.f32.mrf.mxu0
      %v5950 = vadd.f32 %v5927, %v5949
      %5951 = vmatmul.f32.gmra.mxu0 %v2622
      %v5952 = vpop.f32.mrf.mxu0
      %v5953 = vadd.f32 %v5930, %v5952
      %5954 = vdwg.mxu0
      %v5955 = vmul.f32 %v5835, %v2857
      %v5956 = vmul.f32 %v5950, %v2857
      %v5957 = vmul.f32 %v5838, %v2862
      %v5958 = vmul.f32 %v5953, %v2862
      %v5959 = vsel %vm2868, %v5957, 0.0
      %v5960 = vadd.f32 %v5955, %v5959
      %v5961 = vrot.slane %v5960, 4
      %v5962 = vadd.f32 %v5960, %v5961
      %v5963 = vrot.slane %v5962, 2
      %v5964 = vadd.f32 %v5962, %v5963
      %v5965 = vrot.slane %v5964, 1
      %v5966 = vadd.f32 %v5964, %v5965
      %v5967 = vsel %vm2868, %v5958, 0.0
      %v5968 = vadd.f32 %v5956, %v5967
      %v5969 = vrot.slane %v5968, 4
      %v5970 = vadd.f32 %v5968, %v5969
      %v5971 = vrot.slane %v5970, 2
      %v5972 = vadd.f32 %v5970, %v5971
      %v5973 = vrot.slane %v5972, 1
      %v5974 = vadd.f32 %v5972, %v5973
      %v5975 = vadd.f32 %v5966, %v2890
      %v5976 = vadd.f32 %v5974, %v2890
      %v5977 = vxor.u32 %v5975, 2147483648
      %v5978 = vxor.u32 %v5976, 2147483648
      %v5979 = vmul.f32 %v5977, 1.442695
      %v5980 = vpow.pop %v5979
      %v5981 = vmul.f32 %v5978, 1.442695
      %v5982 = vpow.pop %v5981
      %v5983 = vadd.f32 %v5980, 1.0
      %v5984 = vadd.f32 %v5982, 1.0
      %v5985 = vrcp.pop %v5983
      %v5986 = vmul.f32 %v5983, %v5985
      %v5987 = vsub.f32 1.0, %v5986
      %v5988 = vmul.f32 %v5985, %v5987
      %v5989 = vadd.f32 %v5985, %v5988
      %vm5990 = vweird.f32 %v5983
      %vm5991 = vweird.f32 %v5985
      %vm5992 = vmor %vm5990, %vm5991
      %v5993 = vsel %vm5992, %v5985, %v5989
      %v5994 = vand.u32 2147483647, %v5983
      %vm5995 = vcmp.eq.f32.partialorder %v5994, 8.507059e+37
      %v5996 = vand.u32 %v5983, 2147483648
      %v5997 = vor.u32 1.1754944e-38, %v5996
      %v5998 = vsel %vm5995, %v5997, %v5993
      %v5999 = vmul.f32 1.0, %v5998
      %v6000 = vrcp.pop %v5984
      %v6001 = vmul.f32 %v5984, %v6000
      %v6002 = vsub.f32 1.0, %v6001
      %v6003 = vmul.f32 %v6000, %v6002
      %v6004 = vadd.f32 %v6000, %v6003
      %vm6005 = vweird.f32 %v5984
      %vm6006 = vweird.f32 %v6000
      %vm6007 = vmor %vm6005, %vm6006
      %v6008 = vsel %vm6007, %v6000, %v6004
      %v6009 = vand.u32 2147483647, %v5984
      %vm6010 = vcmp.eq.f32.partialorder %v6009, 8.507059e+37
      %v6011 = vand.u32 %v5984, 2147483648
      %v6012 = vor.u32 1.1754944e-38, %v6011
      %v6013 = vsel %vm6010, %v6012, %v6008
      %v6014 = vmul.f32 1.0, %v6013
      %v6017 = vrot.slane %v6014, 7
      %v6018 = vsel %vm2868, %v5999, %v6017
      %6020 = vst.msk [vmem:[%s656 + $0xe] sm:$0x3] %vm2939, %v6018
      %v6021 = vld [vmem:[%s3 + $0x80] sm:$0xff]
      %v6022 = vld [vmem:[%s3 + $0x88] sm:$0xff]
      %v6023 = vld [vmem:[%s3 + $0x110] sm:$0xff]
      %v6024 = vld [vmem:[%s3 + $0x118] sm:$0xff]
      %v6025 = vld [vmem:[%s3 + $0x1a0] sm:$0xff]
      %v6026 = vld [vmem:[%s3 + $0x1a8] sm:$0xff]
      %v6027 = vld [vmem:[%s3 + $0x230] sm:$0xff]
      %v6028 = vld [vmem:[%s3 + $0x238] sm:$0xff]
      %v6029 = vld [vmem:[%s3 + $0x2c0] sm:$0xff]
      %v6030 = vld [vmem:[%s3 + $0x2c8] sm:$0xff]
      %v6031 = vld [vmem:[%s3 + $0x350] sm:$0xff]
      %v6032 = vld [vmem:[%s3 + $0x358] sm:$0xff]
      %v6033 = vld [vmem:[%s3 + $0x3e0] sm:$0xff]
      %v6034 = vld [vmem:[%s3 + $0x3e8] sm:$0xff]
      %v6035 = vld [vmem:[%s3 + $0x470] sm:$0xff]
      %v6036 = vld [vmem:[%s3 + $0x478] sm:$0xff]
      %v6037 = vld [vmem:[%s3 + $0x500] sm:$0xff]
      %v6038 = vld [vmem:[%s3 + $0x508] sm:$0xff]
      %v6039 = vld [vmem:[%s3 + $0x590] sm:$0xff]
      %v6040 = vld [vmem:[%s3 + $0x598] sm:$0xff]
      %v6041 = vld [vmem:[%s3 + $0x620] sm:$0xff]
      %v6042 = vld [vmem:[%s3 + $0x628] sm:$0xff]
      %v6043 = vld [vmem:[%s3 + $0x6b0] sm:$0xff]
      %v6044 = vld [vmem:[%s3 + $0x6b8] sm:$0xff]
      %v6045 = vld [vmem:[%s3 + $0x740] sm:$0xff]
      %v6046 = vld [vmem:[%s3 + $0x748] sm:$0xff]
      %v6047 = vld [vmem:[%s3 + $0x7d0] sm:$0xff]
      %v6048 = vld [vmem:[%s3 + $0x7d8] sm:$0xff]
      %v6049 = vld [vmem:[%s3 + $0x860] sm:$0xff]
      %v6050 = vld [vmem:[%s3 + $0x868] sm:$0xff]
      %v6051 = vld [vmem:[%s3 + $0x8f0] sm:$0xff]
      %v6052 = vld [vmem:[%s3 + $0x8f8] sm:$0xff]
      %v6053 = vld [vmem:[%s3 + $0x980] sm:$0xff]
      %v6054 = vld [vmem:[%s3 + $0x988] sm:$0xff]
      %v6055 = vld [vmem:[%s3 + $0xa10] sm:$0xff]
      %v6056 = vld [vmem:[%s3 + $0xa18] sm:$0xff]
      %v6057 = vld [vmem:[%s3 + $0xaa0] sm:$0xff]
      %v6058 = vld [vmem:[%s3 + $0xaa8] sm:$0xff]
      %v6059 = vld [vmem:[%s3 + $0xb30] sm:$0xff]
      %v6060 = vld [vmem:[%s3 + $0xb38] sm:$0xff]
      %v6061 = vld [vmem:[%s3 + $0xbc0] sm:$0xff]
      %v6062 = vld [vmem:[%s3 + $0xbc8] sm:$0xff]
      %v6063 = vld [vmem:[%s3 + $0xc50] sm:$0xff]
      %v6064 = vld [vmem:[%s3 + $0xc58] sm:$0xff]
      %v6065 = vld [vmem:[%s3 + $0xce0] sm:$0xff]
      %v6066 = vld [vmem:[%s3 + $0xce8] sm:$0xff]
      %v6067 = vld [vmem:[%s3 + $0xd70] sm:$0xff]
      %v6068 = vld [vmem:[%s3 + $0xd78] sm:$0xff]
      %v6069 = vld [vmem:[%s3 + $0xe00] sm:$0xff]
      %v6070 = vld [vmem:[%s3 + $0xe08] sm:$0xff]
      %v6071 = vld [vmem:[%s3 + $0xe90] sm:$0xff]
      %v6072 = vld [vmem:[%s3 + $0xe98] sm:$0xff]
      %v6073 = vld [vmem:[%s3 + $0xf20] sm:$0xff]
      %v6074 = vld [vmem:[%s3 + $0xf28] sm:$0xff]
      %v6075 = vld [vmem:[%s3 + $0xfb0] sm:$0xff]
      %v6076 = vld [vmem:[%s3 + $0xfb8] sm:$0xff]
      %v6077 = vld [vmem:[%s3 + $0x1040] sm:$0xff]
      %v6078 = vld [vmem:[%s3 + $0x1048] sm:$0xff]
      %v6079 = vld [vmem:[%s3 + $0x10d0] sm:$0xff]
      %v6080 = vld [vmem:[%s3 + $0x10d8] sm:$0xff]
      %v6081 = vld [vmem:[%s3 + $0x1160] sm:$0xff]
      %v6082 = vld [vmem:[%s3 + $0x1168] sm:$0xff]
      %v6083 = vld [vmem:[%s3 + $0x11f0] sm:$0xff]
      %v6084 = vld [vmem:[%s3 + $0x11f8] sm:$0xff]
      %v6085 = vld [vmem:[%s3 + $0x1280] sm:$0xff]
      %v6086 = vld [vmem:[%s3 + $0x1288] sm:$0xff]
      %v6087 = vld [vmem:[%s3 + $0x1310] sm:$0xff]
      %v6088 = vld [vmem:[%s3 + $0x1318] sm:$0xff]
      %v6089 = vld [vmem:[%s3 + $0x13a0] sm:$0xff]
      %v6090 = vld [vmem:[%s3 + $0x13a8] sm:$0xff]
      %v6091 = vld [vmem:[%s3 + $0x1430] sm:$0xff]
      %v6092 = vld [vmem:[%s3 + $0x1438] sm:$0xff]
      %v6093 = vld [vmem:[%s3 + $0x14c0] sm:$0xff]
      %v6094 = vld [vmem:[%s3 + $0x14c8] sm:$0xff]
      %v6095 = vld [vmem:[%s3 + $0x1550] sm:$0xff]
      %v6096 = vld [vmem:[%s3 + $0x1558] sm:$0xff]
      %v6097 = vld [vmem:[%s3 + $0x15e0] sm:$0xff]
      %v6098 = vld [vmem:[%s3 + $0x15e8] sm:$0xff]
      %v6099 = vld [vmem:[%s3 + $0x1670] sm:$0xff]
      %v6100 = vld [vmem:[%s3 + $0x1678] sm:$0xff]
      %v6101 = vld [vmem:[%s3 + $0x1700] sm:$0xff]
      %v6102 = vld [vmem:[%s3 + $0x1708] sm:$0xff]
      %v6103 = vld [vmem:[%s3 + $0x1790] sm:$0xff]
      %v6104 = vld [vmem:[%s3 + $0x1798] sm:$0xff]
      %v6105 = vld [vmem:[%s3 + $0x1820] sm:$0xff]
      %v6106 = vld [vmem:[%s3 + $0x1828] sm:$0xff]
      %v6107 = vld [vmem:[%s3 + $0x18b0] sm:$0xff]
      %v6108 = vld [vmem:[%s3 + $0x18b8] sm:$0xff]
      %v6109 = vld [vmem:[%s3 + $0x1940] sm:$0xff]
      %v6110 = vld [vmem:[%s3 + $0x1948] sm:$0xff]
      %v6111 = vld [vmem:[%s3 + $0x19d0] sm:$0xff]
      %v6112 = vld [vmem:[%s3 + $0x19d8] sm:$0xff]
      %v6113 = vld [vmem:[%s3 + $0x1a60] sm:$0xff]
      %v6114 = vld [vmem:[%s3 + $0x1a68] sm:$0xff]
      %v6115 = vld [vmem:[%s3 + $0x1af0] sm:$0xff]
      %v6116 = vld [vmem:[%s3 + $0x1af8] sm:$0xff]
      %v6117 = vld [vmem:[%s3 + $0x1b80] sm:$0xff]
      %v6118 = vld [vmem:[%s3 + $0x1b88] sm:$0xff]
      %v6119 = vld [vmem:[%s3 + $0x1c10] sm:$0xff]
      %v6120 = vld [vmem:[%s3 + $0x1c18] sm:$0xff]
      %v6121 = vld [vmem:[%s3 + $0x1ca0] sm:$0xff]
      %v6122 = vld [vmem:[%s3 + $0x1ca8] sm:$0xff]
      %v6123 = vld [vmem:[%s3 + $0x1d30] sm:$0xff]
      %v6124 = vld [vmem:[%s3 + $0x1d38] sm:$0xff]
      %v6125 = vld [vmem:[%s3 + $0x1dc0] sm:$0xff]
      %v6126 = vld [vmem:[%s3 + $0x1dc8] sm:$0xff]
      %v6127 = vld [vmem:[%s3 + $0x1e50] sm:$0xff]
      %v6128 = vld [vmem:[%s3 + $0x1e58] sm:$0xff]
      %v6129 = vld [vmem:[%s3 + $0x1ee0] sm:$0xff]
      %v6130 = vld [vmem:[%s3 + $0x1ee8] sm:$0xff]
      %v6131 = vld [vmem:[%s3 + $0x1f70] sm:$0xff]
      %v6132 = vld [vmem:[%s3 + $0x1f78] sm:$0xff]
      %v6133 = vld [vmem:[%s3 + $0x2000] sm:$0xff]
      %v6134 = vld [vmem:[%s3 + $0x2008] sm:$0xff]
      %v6135 = vld [vmem:[%s3 + $0x2090] sm:$0xff]
      %v6136 = vld [vmem:[%s3 + $0x2098] sm:$0xff]
      %v6137 = vld [vmem:[%s3 + $0x2120] sm:$0xff]
      %v6138 = vld [vmem:[%s3 + $0x2128] sm:$0xff]
      %v6139 = vld [vmem:[%s3 + $0x21b0] sm:$0xff]
      %v6140 = vld [vmem:[%s3 + $0x21b8] sm:$0xff]
      %v6141 = vld [vmem:[%s3 + $0x2240] sm:$0xff]
      %v6142 = vld [vmem:[%s3 + $0x2248] sm:$0xff]
      %v6143 = vld [vmem:[%s3 + $0x22d0] sm:$0xff]
      %v6144 = vld [vmem:[%s3 + $0x22d8] sm:$0xff]
      %v6145 = vld [vmem:[%s3 + $0x2360] sm:$0xff]
      %v6146 = vld [vmem:[%s3 + $0x2368] sm:$0xff]
      %v6147 = vld [vmem:[%s3 + $0x23f0] sm:$0xff]
      %v6148 = vld [vmem:[%s3 + $0x23f8] sm:$0xff]
      %v6149 = vld [vmem:[%s3 + $0x2480] sm:$0xff]
      %v6150 = vld [vmem:[%s3 + $0x2488] sm:$0xff]
      %v6151 = vld [vmem:[%s3 + $0x2510] sm:$0xff]
      %v6152 = vld [vmem:[%s3 + $0x2518] sm:$0xff]
      %v6153 = vld [vmem:[%s3 + $0x25a0] sm:$0xff]
      %v6154 = vld [vmem:[%s3 + $0x25a8] sm:$0xff]
      %v6155 = vld [vmem:[%s3 + $0x2630] sm:$0xff]
      %v6156 = vld [vmem:[%s3 + $0x2638] sm:$0xff]
      %v6157 = vld [vmem:[%s3 + $0x26c0] sm:$0xff]
      %v6158 = vld [vmem:[%s3 + $0x26c8] sm:$0xff]
      %v6159 = vld [vmem:[%s3 + $0x2750] sm:$0xff]
      %v6160 = vld [vmem:[%s3 + $0x2758] sm:$0xff]
      %v6161 = vld [vmem:[%s3 + $0x27e0] sm:$0xff]
      %v6162 = vld [vmem:[%s3 + $0x27e8] sm:$0xff]
      %v6163 = vld [vmem:[%s3 + $0x2870] sm:$0xff]
      %v6164 = vld [vmem:[%s3 + $0x2878] sm:$0xff]
      %6165 = vmatpush.msra.mxu0 %v6051
      %6166 = vmatpush.msra.mxu0 %v6049
      %6167 = vmatpush.msra.mxu0 %v6047
      %6168 = vmatpush.msra.mxu0 %v6045
      %6169 = vmatpush.msra.mxu0 %v6043
      %6170 = vmatpush.msra.mxu0 %v6041
      %6171 = vmatpush.msra.mxu0 %v6039
      %6172 = vmatpush.msra.mxu0 %v6037
      %6173 = vmatpush.msra.mxu0 %v6035
      %6174 = vmatpush.msra.mxu0 %v6033
      %6175 = vmatpush.msra.mxu0 %v6031
      %6176 = vmatpush.msra.mxu0 %v6029
      %6177 = vmatpush.msra.mxu0 %v6027
      %6178 = vmatpush.msra.mxu0 %v6025
      %6179 = vmatpush.msra.mxu0 %v6023
      %6180 = vmatpush.msra.mxu0 %v6021
      %6181 = vmatmul.f32.gmra.mxu0 %v2461
      %v6182 = vpop.f32.mrf.mxu0
      %v6183 = vadd.f32 0.0, %v6182
      %6184 = vmatmul.f32.gmra.mxu0 %v2466
      %v6185 = vpop.f32.mrf.mxu0
      %v6186 = vadd.f32 0.0, %v6185
      %6187 = vdwg.mxu0
      %6188 = vmatpush.msra.mxu0 %v6083
      %6189 = vmatpush.msra.mxu0 %v6081
      %6190 = vmatpush.msra.mxu0 %v6079
      %6191 = vmatpush.msra.mxu0 %v6077
      %6192 = vmatpush.msra.mxu0 %v6075
      %6193 = vmatpush.msra.mxu0 %v6073
      %6194 = vmatpush.msra.mxu0 %v6071
      %6195 = vmatpush.msra.mxu0 %v6069
      %6196 = vmatpush.msra.mxu0 %v6067
      %6197 = vmatpush.msra.mxu0 %v6065
      %6198 = vmatpush.msra.mxu0 %v6063
      %6199 = vmatpush.msra.mxu0 %v6061
      %6200 = vmatpush.msra.mxu0 %v6059
      %6201 = vmatpush.msra.mxu0 %v6057
      %6202 = vmatpush.msra.mxu0 %v6055
      %6203 = vmatpush.msra.mxu0 %v6053
      %6204 = vmatmul.f32.gmra.mxu0 %v2462
      %v6205 = vpop.f32.mrf.mxu0
      %v6206 = vadd.f32 %v6183, %v6205
      %6207 = vmatmul.f32.gmra.mxu0 %v2467
      %v6208 = vpop.f32.mrf.mxu0
      %v6209 = vadd.f32 %v6186, %v6208
      %6210 = vdwg.mxu0
      %6211 = vmatpush.msra.mxu0 %v6115
      %6212 = vmatpush.msra.mxu0 %v6113
      %6213 = vmatpush.msra.mxu0 %v6111
      %6214 = vmatpush.msra.mxu0 %v6109
      %6215 = vmatpush.msra.mxu0 %v6107
      %6216 = vmatpush.msra.mxu0 %v6105
      %6217 = vmatpush.msra.mxu0 %v6103
      %6218 = vmatpush.msra.mxu0 %v6101
      %6219 = vmatpush.msra.mxu0 %v6099
      %6220 = vmatpush.msra.mxu0 %v6097
      %6221 = vmatpush.msra.mxu0 %v6095
      %6222 = vmatpush.msra.mxu0 %v6093
      %6223 = vmatpush.msra.mxu0 %v6091
      %6224 = vmatpush.msra.mxu0 %v6089
      %6225 = vmatpush.msra.mxu0 %v6087
      %6226 = vmatpush.msra.mxu0 %v6085
      %6227 = vmatmul.f32.gmra.mxu0 %v2463
      %v6228 = vpop.f32.mrf.mxu0
      %v6229 = vadd.f32 %v6206, %v6228
      %6230 = vmatmul.f32.gmra.mxu0 %v2468
      %v6231 = vpop.f32.mrf.mxu0
      %v6232 = vadd.f32 %v6209, %v6231
      %6233 = vdwg.mxu0
      %6234 = vmatpush.msra.mxu0 %v6147
      %6235 = vmatpush.msra.mxu0 %v6145
      %6236 = vmatpush.msra.mxu0 %v6143
      %6237 = vmatpush.msra.mxu0 %v6141
      %6238 = vmatpush.msra.mxu0 %v6139
      %6239 = vmatpush.msra.mxu0 %v6137
      %6240 = vmatpush.msra.mxu0 %v6135
      %6241 = vmatpush.msra.mxu0 %v6133
      %6242 = vmatpush.msra.mxu0 %v6131
      %6243 = vmatpush.msra.mxu0 %v6129
      %6244 = vmatpush.msra.mxu0 %v6127
      %6245 = vmatpush.msra.mxu0 %v6125
      %6246 = vmatpush.msra.mxu0 %v6123
      %6247 = vmatpush.msra.mxu0 %v6121
      %6248 = vmatpush.msra.mxu0 %v6119
      %6249 = vmatpush.msra.mxu0 %v6117
      %6250 = vmatmul.f32.gmra.mxu0 %v2464
      %v6251 = vpop.f32.mrf.mxu0
      %v6252 = vadd.f32 %v6229, %v6251
      %6253 = vmatmul.f32.gmra.mxu0 %v2469
      %v6254 = vpop.f32.mrf.mxu0
      %v6255 = vadd.f32 %v6232, %v6254
      %6256 = vdwg.mxu0
      %6257 = vmatpush.msra.mxu0 0.0
      %6258 = vmatpush.msra.mxu0 0.0
      %6259 = vmatpush.msra.mxu0 0.0
      %6260 = vmatpush.msra.mxu0 0.0
      %6261 = vmatpush.msra.mxu0 0.0
      %6262 = vmatpush.msra.mxu0 0.0
      %6263 = vmatpush.msra.mxu0 0.0
      %6264 = vmatpush.msra.mxu0 0.0
      %6265 = vmatpush.msra.mxu0 %v6163
      %6266 = vmatpush.msra.mxu0 %v6161
      %6267 = vmatpush.msra.mxu0 %v6159
      %6268 = vmatpush.msra.mxu0 %v6157
      %6269 = vmatpush.msra.mxu0 %v6155
      %6270 = vmatpush.msra.mxu0 %v6153
      %6271 = vmatpush.msra.mxu0 %v6151
      %6272 = vmatpush.msra.mxu0 %v6149
      %6273 = vmatmul.f32.gmra.mxu0 %v2619
      %v6274 = vpop.f32.mrf.mxu0
      %v6275 = vadd.f32 %v6252, %v6274
      %6276 = vmatmul.f32.gmra.mxu0 %v2622
      %v6277 = vpop.f32.mrf.mxu0
      %v6278 = vadd.f32 %v6255, %v6277
      %6279 = vdwg.mxu0
      %6280 = vmatpush.msra.mxu0 %v6052
      %6281 = vmatpush.msra.mxu0 %v6050
      %6282 = vmatpush.msra.mxu0 %v6048
      %6283 = vmatpush.msra.mxu0 %v6046
      %6284 = vmatpush.msra.mxu0 %v6044
      %6285 = vmatpush.msra.mxu0 %v6042
      %6286 = vmatpush.msra.mxu0 %v6040
      %6287 = vmatpush.msra.mxu0 %v6038
      %6288 = vmatpush.msra.mxu0 %v6036
      %6289 = vmatpush.msra.mxu0 %v6034
      %6290 = vmatpush.msra.mxu0 %v6032
      %6291 = vmatpush.msra.mxu0 %v6030
      %6292 = vmatpush.msra.mxu0 %v6028
      %6293 = vmatpush.msra.mxu0 %v6026
      %6294 = vmatpush.msra.mxu0 %v6024
      %6295 = vmatpush.msra.mxu0 %v6022
      %6296 = vmatmul.f32.gmra.mxu0 %v2461
      %v6297 = vpop.f32.mrf.mxu0
      %v6298 = vadd.f32 0.0, %v6297
      %6299 = vmatmul.f32.gmra.mxu0 %v2466
      %v6300 = vpop.f32.mrf.mxu0
      %v6301 = vadd.f32 0.0, %v6300
      %6302 = vdwg.mxu0
      %6303 = vmatpush.msra.mxu0 %v6084
      %6304 = vmatpush.msra.mxu0 %v6082
      %6305 = vmatpush.msra.mxu0 %v6080
      %6306 = vmatpush.msra.mxu0 %v6078
      %6307 = vmatpush.msra.mxu0 %v6076
      %6308 = vmatpush.msra.mxu0 %v6074
      %6309 = vmatpush.msra.mxu0 %v6072
      %6310 = vmatpush.msra.mxu0 %v6070
      %6311 = vmatpush.msra.mxu0 %v6068
      %6312 = vmatpush.msra.mxu0 %v6066
      %6313 = vmatpush.msra.mxu0 %v6064
      %6314 = vmatpush.msra.mxu0 %v6062
      %6315 = vmatpush.msra.mxu0 %v6060
      %6316 = vmatpush.msra.mxu0 %v6058
      %6317 = vmatpush.msra.mxu0 %v6056
      %6318 = vmatpush.msra.mxu0 %v6054
      %6319 = vmatmul.f32.gmra.mxu0 %v2462
      %v6320 = vpop.f32.mrf.mxu0
      %v6321 = vadd.f32 %v6298, %v6320
      %6322 = vmatmul.f32.gmra.mxu0 %v2467
      %v6323 = vpop.f32.mrf.mxu0
      %v6324 = vadd.f32 %v6301, %v6323
      %6325 = vdwg.mxu0
      %6326 = vmatpush.msra.mxu0 %v6116
      %6327 = vmatpush.msra.mxu0 %v6114
      %6328 = vmatpush.msra.mxu0 %v6112
      %6329 = vmatpush.msra.mxu0 %v6110
      %6330 = vmatpush.msra.mxu0 %v6108
      %6331 = vmatpush.msra.mxu0 %v6106
      %6332 = vmatpush.msra.mxu0 %v6104
      %6333 = vmatpush.msra.mxu0 %v6102
      %6334 = vmatpush.msra.mxu0 %v6100
      %6335 = vmatpush.msra.mxu0 %v6098
      %6336 = vmatpush.msra.mxu0 %v6096
      %6337 = vmatpush.msra.mxu0 %v6094
      %6338 = vmatpush.msra.mxu0 %v6092
      %6339 = vmatpush.msra.mxu0 %v6090
      %6340 = vmatpush.msra.mxu0 %v6088
      %6341 = vmatpush.msra.mxu0 %v6086
      %6342 = vmatmul.f32.gmra.mxu0 %v2463
      %v6343 = vpop.f32.mrf.mxu0
      %v6344 = vadd.f32 %v6321, %v6343
      %6345 = vmatmul.f32.gmra.mxu0 %v2468
      %v6346 = vpop.f32.mrf.mxu0
      %v6347 = vadd.f32 %v6324, %v6346
      %6348 = vdwg.mxu0
      %6349 = vmatpush.msra.mxu0 %v6148
      %6350 = vmatpush.msra.mxu0 %v6146
      %6351 = vmatpush.msra.mxu0 %v6144
      %6352 = vmatpush.msra.mxu0 %v6142
      %6353 = vmatpush.msra.mxu0 %v6140
      %6354 = vmatpush.msra.mxu0 %v6138
      %6355 = vmatpush.msra.mxu0 %v6136
      %6356 = vmatpush.msra.mxu0 %v6134
      %6357 = vmatpush.msra.mxu0 %v6132
      %6358 = vmatpush.msra.mxu0 %v6130
      %6359 = vmatpush.msra.mxu0 %v6128
      %6360 = vmatpush.msra.mxu0 %v6126
      %6361 = vmatpush.msra.mxu0 %v6124
      %6362 = vmatpush.msra.mxu0 %v6122
      %6363 = vmatpush.msra.mxu0 %v6120
      %6364 = vmatpush.msra.mxu0 %v6118
      %6365 = vmatmul.f32.gmra.mxu0 %v2464
      %v6366 = vpop.f32.mrf.mxu0
      %v6367 = vadd.f32 %v6344, %v6366
      %6368 = vmatmul.f32.gmra.mxu0 %v2469
      %v6369 = vpop.f32.mrf.mxu0
      %v6370 = vadd.f32 %v6347, %v6369
      %6371 = vdwg.mxu0
      %6372 = vmatpush.msra.mxu0 0.0
      %6373 = vmatpush.msra.mxu0 0.0
      %6374 = vmatpush.msra.mxu0 0.0
      %6375 = vmatpush.msra.mxu0 0.0
      %6376 = vmatpush.msra.mxu0 0.0
      %6377 = vmatpush.msra.mxu0 0.0
      %6378 = vmatpush.msra.mxu0 0.0
      %6379 = vmatpush.msra.mxu0 0.0
      %6380 = vmatpush.msra.mxu0 %v6164
      %6381 = vmatpush.msra.mxu0 %v6162
      %6382 = vmatpush.msra.mxu0 %v6160
      %6383 = vmatpush.msra.mxu0 %v6158
      %6384 = vmatpush.msra.mxu0 %v6156
      %6385 = vmatpush.msra.mxu0 %v6154
      %6386 = vmatpush.msra.mxu0 %v6152
      %6387 = vmatpush.msra.mxu0 %v6150
      %6388 = vmatmul.f32.gmra.mxu0 %v2619
      %v6389 = vpop.f32.mrf.mxu0
      %v6390 = vadd.f32 %v6367, %v6389
      %6391 = vmatmul.f32.gmra.mxu0 %v2622
      %v6392 = vpop.f32.mrf.mxu0
      %v6393 = vadd.f32 %v6370, %v6392
      %6394 = vdwg.mxu0
      %v6395 = vmul.f32 %v6275, %v2857
      %v6396 = vmul.f32 %v6390, %v2857
      %v6397 = vmul.f32 %v6278, %v2862
      %v6398 = vmul.f32 %v6393, %v2862
      %v6399 = vsel %vm2868, %v6397, 0.0
      %v6400 = vadd.f32 %v6395, %v6399
      %v6401 = vrot.slane %v6400, 4
      %v6402 = vadd.f32 %v6400, %v6401
      %v6403 = vrot.slane %v6402, 2
      %v6404 = vadd.f32 %v6402, %v6403
      %v6405 = vrot.slane %v6404, 1
      %v6406 = vadd.f32 %v6404, %v6405
      %v6407 = vsel %vm2868, %v6398, 0.0
      %v6408 = vadd.f32 %v6396, %v6407
      %v6409 = vrot.slane %v6408, 4
      %v6410 = vadd.f32 %v6408, %v6409
      %v6411 = vrot.slane %v6410, 2
      %v6412 = vadd.f32 %v6410, %v6411
      %v6413 = vrot.slane %v6412, 1
      %v6414 = vadd.f32 %v6412, %v6413
      %v6415 = vadd.f32 %v6406, %v2890
      %v6416 = vadd.f32 %v6414, %v2890
      %v6417 = vxor.u32 %v6415, 2147483648
      %v6418 = vxor.u32 %v6416, 2147483648
      %v6419 = vmul.f32 %v6417, 1.442695
      %v6420 = vpow.pop %v6419
      %v6421 = vmul.f32 %v6418, 1.442695
      %v6422 = vpow.pop %v6421
      %v6423 = vadd.f32 %v6420, 1.0
      %v6424 = vadd.f32 %v6422, 1.0
      %v6425 = vrcp.pop %v6423
      %v6426 = vmul.f32 %v6423, %v6425
      %v6427 = vsub.f32 1.0, %v6426
      %v6428 = vmul.f32 %v6425, %v6427
      %v6429 = vadd.f32 %v6425, %v6428
      %vm6430 = vweird.f32 %v6423
      %vm6431 = vweird.f32 %v6425
      %vm6432 = vmor %vm6430, %vm6431
      %v6433 = vsel %vm6432, %v6425, %v6429
      %v6434 = vand.u32 2147483647, %v6423
      %vm6435 = vcmp.eq.f32.partialorder %v6434, 8.507059e+37
      %v6436 = vand.u32 %v6423, 2147483648
      %v6437 = vor.u32 1.1754944e-38, %v6436
      %v6438 = vsel %vm6435, %v6437, %v6433
      %v6439 = vmul.f32 1.0, %v6438
      %v6440 = vrcp.pop %v6424
      %v6441 = vmul.f32 %v6424, %v6440
      %v6442 = vsub.f32 1.0, %v6441
      %v6443 = vmul.f32 %v6440, %v6442
      %v6444 = vadd.f32 %v6440, %v6443
      %vm6445 = vweird.f32 %v6424
      %vm6446 = vweird.f32 %v6440
      %vm6447 = vmor %vm6445, %vm6446
      %v6448 = vsel %vm6447, %v6440, %v6444
      %v6449 = vand.u32 2147483647, %v6424
      %vm6450 = vcmp.eq.f32.partialorder %v6449, 8.507059e+37
      %v6451 = vand.u32 %v6424, 2147483648
      %v6452 = vor.u32 1.1754944e-38, %v6451
      %v6453 = vsel %vm6450, %v6452, %v6448
      %v6454 = vmul.f32 1.0, %v6453
      %v6457 = vrot.slane %v6454, 7
      %v6458 = vsel %vm2868, %v6439, %v6457
      %6460 = vst.msk [vmem:[%s656 + $0x10] sm:$0x3] %vm2939, %v6458
      %p6461 = scmp.lt.s32.totalorder %s34, 7
      %s6462 = scalar_select %p6461, %s34, 7
      %s6463 = smul.addr %s6462, 18
      %s6464 = scalar_lea.vmem %s21, %s6463
      // Predicated region
      $region105: #{decoder_forward.1} parent=103 // pred_check
        %p6465 = pneg %p498
      $region106: #{decoder_forward.1} parent=103 // pred_check_branch
        %6467 = sbr.rel (%p6465) target = $region108
      $region107: #{decoder_forward.1} parent=103 // pred_region
        _
      $region108: #{decoder_forward.1} parent=103 // pred_fallthru
        _
    $region104: #{decoder_forward.1} parent=5 // pred_fallthru
      _
    %p6468 = scmp.le.s32.totalorder 2, %s29
    // Predicated region
    $region109: #{decoder_forward.1} parent=5 // pred_check
      %p6469 = pneg %p6468
    $region110: #{decoder_forward.1} parent=5 // pred_check_branch
      %6471 = sbr.rel (%p6469) target = $region112
    $region111: #{decoder_forward.1} parent=5 // pred_region
      %s6472 = ssub.s32 %s29, 2
      // Predicated region
      $region113: #{decoder_forward.1} parent=111 // pred_check
        %p6473 = pneg %p504
      $region114: #{decoder_forward.1} parent=111 // pred_check_branch
        %6475 = sbr.rel (%p6473) target = $region116
      $region115: #{decoder_forward.1} parent=111 // pred_region
        %p6476 = scmp.lt.s32.totalorder %s35, 7
        %s6477 = scalar_select %p6476, %s35, 7
        %s6478 = smul.addr %s6477, 18
        %s6479 = scalar_lea.vmem %s21, %s6478
      $region116: #{decoder_forward.1} parent=111 // pred_fallthru
        _
    $region112: #{decoder_forward.1} parent=5 // pred_fallthru
      _
  $region6: #{decoder_forward.1} parent=0 // loop_footer
    %s33 = sadd.s32 1, %s29
  $region7: #{decoder_forward.1} parent=0 // loop_footer_branch
    %28 = sbr.rel target = $region3
  $region8: #{decoder_forward.1} parent=0 // loop_exit
    _

</llo_original>
